<compile_context>
chip_gen: v5e
topology: v5e:2x2
jax: 0.10.0
libtpu: 0.0.40
codegen_flags: <defaults>
</compile_context>

<pallas_src>
import math
import functools

import jax
import jax.numpy as jnp
from jax import lax
from jax.experimental import pallas as pl
from jax.experimental.pallas import tpu as pltpu


MM_DTYPE = jnp.bfloat16   # MXU operand dtype; accumulation stays f32.

# Weight-matrix leaf names (pre-cast to bf16 in the wrapper; biases/LN stay f32).
_MATMUL_WEIGHT_KEYS = frozenset(
    {"wqkv", "wo", "wq", "wkv", "lin1_w", "lin2_w", "rel_w", "out_w"})


# --------------------------- in-kernel math helpers -------------------------

def _mm(x, w):
    """x[M,K] @ w[K,N]: cast operands to bf16 at the MXU boundary, f32 accumulate."""
    return jnp.dot(x.astype(MM_DTYPE), w.astype(MM_DTYPE),
                   preferred_element_type=jnp.float32)


def _mm_nt(a, b):
    """a[M,d] @ b[N,d]^T via dot_general (contract last dims; no explicit transpose)."""
    return lax.dot_general(a.astype(MM_DTYPE), b.astype(MM_DTYPE),
                           (((1,), (1,)), ((), ())),
                           preferred_element_type=jnp.float32)


def _layer_norm(v, g, b, eps=1e-5):
    """PyTorch LayerNorm over the last dim (biased variance, eps=1e-5). f32 math."""
    mu = jnp.mean(v, axis=-1, keepdims=True)
    var = jnp.mean(jnp.square(v - mu), axis=-1, keepdims=True)
    return (v - mu) * lax.rsqrt(var + eps) * g + b


def _softmax(s):
    """Row softmax; denominator reciprocal goes to the (otherwise idle) EUP slot."""
    s = s - jnp.max(s, axis=-1, keepdims=True)
    p = jnp.exp(s)
    return p * pl.reciprocal(jnp.sum(p, axis=-1, keepdims=True), approx=True)


def _attention(q, k, v, nhead):
    """q:[Lq,D] attends to k,v:[Lk,D]; heads = static lane slices; out lane-dense."""
    D = q.shape[-1]
    dh = D // nhead
    scale = 1.0 / math.sqrt(dh)
    heads = []
    for h in range(nhead):                       # static (unrolled) head loop
        sl = slice(h * dh, (h + 1) * dh)         # static lane slice -> free
        s = _mm_nt(q[:, sl], k[:, sl]) * scale   # [Lq, Lk], f32
        p = _softmax(s)
        heads.append(_mm(p, v[:, sl]))           # [Lq, dh]
    return jnp.concatenate(heads, axis=-1)       # lane-dense [Lq, D]


def _self_attn(x, ap, nhead):
    D = x.shape[-1]
    qkv = _mm(x, ap["wqkv"]) + ap["bqkv"]        # fused Q|K|V projection [L, 3D]
    q, k, v = qkv[:, :D], qkv[:, D:2 * D], qkv[:, 2 * D:]
    return _mm(_attention(q, k, v, nhead), ap["wo"]) + ap["bo"]


def _cross_attn(x_q, x_kv, ap, nhead):
    D = x_q.shape[-1]
    q = _mm(x_q, ap["wq"]) + ap["bq"]
    kv = _mm(x_kv, ap["wkv"]) + ap["bkv"]        # fused K|V projection [Lk, 2D]
    k, v = kv[:, :D], kv[:, D:]
    return _mm(_attention(q, k, v, nhead), ap["wo"]) + ap["bo"]


def _ffn(x, lp):
    h = jnp.maximum(_mm(x, lp["lin1_w"]) + lp["lin1_b"], 0.0)
    return _mm(h, lp["lin2_w"]) + lp["lin2_b"]


def _encoder_layer(x, lp, nhead):
    x = _layer_norm(x + _self_attn(x, lp["self_attn"], nhead),
                    lp["norm1_g"], lp["norm1_b"])
    x = _layer_norm(x + _ffn(x, lp), lp["norm2_g"], lp["norm2_b"])
    return x


def _decoder_layer(y, mem, lp, nhead):
    y = _layer_norm(y + _self_attn(y, lp["self_attn"], nhead),
                    lp["norm1_g"], lp["norm1_b"])
    y = _layer_norm(y + _cross_attn(y, mem, lp["cross_attn"], nhead),
                    lp["norm2_g"], lp["norm2_b"])
    y = _layer_norm(y + _ffn(y, lp), lp["norm3_g"], lp["norm3_b"])
    return y


def _cast_matmul_weights(tree):
    """Recursively cast matmul-weight leaves to bf16 (biases / LN params stay f32)."""
    if isinstance(tree, dict):
        return {k: (v.astype(MM_DTYPE) if k in _MATMUL_WEIGHT_KEYS
                    else _cast_matmul_weights(v))
                for k, v in tree.items()}
    if isinstance(tree, (list, tuple)):
        return type(tree)(_cast_matmul_weights(v) for v in tree)
    return tree


# ------------------------------ fused forward -------------------------------

def forward(params, src_A, src_B, tgt, nhead):
    # TODO(synk): embedding gathers kept in XLA (jnp.take); for large vocab switch to
    # a Pallas DMA gather with PrefetchScalarGridSpec so the gather overlaps compute.
    ea = jnp.take(params["embed_A"], src_A, axis=0)   # [B, S, D]
    eb = jnp.take(params["embed_B"], src_B, axis=0)   # [B, S, D]
    ec = jnp.take(params["embed_C"], tgt, axis=0)     # [B, T, D]

    B, S, D = ea.shape
    T = ec.shape[1]
    vocab = params["out_w"].shape[1]

    # Ship everything except the embedding tables into the fused kernel; matmul
    # weights go in as bf16 (identical numerics: the MXU consumed bf16 anyway).
    kparams = _cast_matmul_weights(
        {k: v for k, v in params.items() if not k.startswith("embed_")})
    flat, treedef = jax.tree_util.tree_flatten(kparams)

    def kern(ea_ref, eb_ref, ec_ref, *rest):
        param_refs, o_ref = rest[:-1], rest[-1]
        # Rebuild the param pytree of Refs; load each leaf lazily (per layer) to keep
        # the live value set small.
        pref = jax.tree_util.tree_unflatten(treedef, list(param_refs))
        load = lambda t: jax.tree_util.tree_map(lambda r: r[...], t)

        ea_b = ea_ref[0]                                   # [S, D]
        eb_b = eb_ref[0]                                   # [S, D]
        ec_b = ec_ref[0]                                   # [T, D]

        # relationship_vector = Linear(2D -> D)( mean over seq of cat([A, B], -1) )
        combined = jnp.concatenate([ea_b, eb_b], axis=-1)  # [S, 2D]
        rel = _mm(jnp.mean(combined, axis=0, keepdims=True),
                  pref["rel_w"][...]) + pref["rel_b"][...]  # [1, D]

        # encoder memory: A and B along the sequence axis (see interpretation notes).
        x = jnp.concatenate([ea_b, eb_b], axis=0)          # [2S, D]
        for lp in pref["encoder_layers"]:
            x = _encoder_layer(x, load(lp), nhead)

        # memory + relationship_vector broadcast over the memory sequence axis.
        mem = x + rel

        y = ec_b
        for lp in pref["decoder_layers"]:
            y = _decoder_layer(y, mem, load(lp), nhead)

        logits = _mm(y, pref["out_w"][...]) + pref["out_b"][...]   # [T, vocab]
        o_ref[0] = logits.astype(o_ref.dtype)

    in_specs = ([pl.BlockSpec((1, S, D), lambda b: (b, 0, 0)),
                 pl.BlockSpec((1, S, D), lambda b: (b, 0, 0)),
                 pl.BlockSpec((1, T, D), lambda b: (b, 0, 0))]
                + [pl.BlockSpec(a.shape, lambda b, nd=a.ndim: (0,) * nd)
                   for a in flat])

    return pl.pallas_call(
        kern,
        out_shape=jax.ShapeDtypeStruct((B, T, vocab), jnp.float32),
        grid=(B,),
        in_specs=in_specs,
        out_specs=pl.BlockSpec((1, T, vocab), lambda b: (b, 0, 0)),
        compiler_params=pltpu.CompilerParams(
            dimension_semantics=("parallel",)),   # batch axis shards across TCs on v7x
    )(ea, eb, ec, *flat)


# ------------------------------ parameter init ------------------------------

def init_params(key, vocab, d, nhead, n_enc, n_dec, dff):
    keys = iter(jax.random.split(key, 512))

    def nrm(shape, scale=0.05):
        return jax.random.normal(next(keys), shape, jnp.float32) * scale

    def self_attn():
        # Fused Q|K|V projection weight [D, 3D].
        return dict(wqkv=nrm((d, 3 * d)), bqkv=nrm((1, 3 * d)),
                    wo=nrm((d, d)), bo=nrm((1, d)))

    def cross_attn():
        # Q from the decoder stream, fused K|V projection [D, 2D] from memory.
        return dict(wq=nrm((d, d)), bq=nrm((1, d)),
                    wkv=nrm((d, 2 * d)), bkv=nrm((1, 2 * d)),
                    wo=nrm((d, d)), bo=nrm((1, d)))

    def enc_layer():
        return dict(self_attn=self_attn(),
                    lin1_w=nrm((d, dff)), lin1_b=nrm((1, dff)),
                    lin2_w=nrm((dff, d)), lin2_b=nrm((1, d)),
                    norm1_g=jnp.ones((1, d), jnp.float32),
                    norm1_b=jnp.zeros((1, d), jnp.float32),
                    norm2_g=jnp.ones((1, d), jnp.float32),
                    norm2_b=jnp.zeros((1, d), jnp.float32))

    def dec_layer():
        p = enc_layer()
        p["cross_attn"] = cross_attn()
        p["norm3_g"] = jnp.ones((1, d), jnp.float32)
        p["norm3_b"] = jnp.zeros((1, d), jnp.float32)
        return p

    return dict(
        embed_A=nrm((vocab, d), 1.0),
        embed_B=nrm((vocab, d), 1.0),
        embed_C=nrm((vocab, d), 1.0),
        rel_w=nrm((2 * d, d)), rel_b=nrm((1, d)),
        out_w=nrm((d, vocab)), out_b=nrm((1, vocab)),
        encoder_layers=[enc_layer() for _ in range(n_enc)],
        decoder_layers=[dec_layer() for _ in range(n_dec)],
    )


# ----------------------------------- main -----------------------------------

if __name__ == "__main__":
    VOCAB, D_MODEL, NHEAD = 32, 32, 4
    NUM_ENC, NUM_DEC, DFF = 2, 2, 64
    B, S, T = 2, 4, 8          # 2*S == T so the original repeat(1, T, 1) add is consistent

    key = jax.random.PRNGKey(0)
    pkey, k1, k2, k3 = jax.random.split(key, 4)
    params = init_params(pkey, VOCAB, D_MODEL, NHEAD, NUM_ENC, NUM_DEC, DFF)

    src_A = jax.random.randint(k1, (B, S), 0, VOCAB, dtype=jnp.int32)
    src_B = jax.random.randint(k2, (B, S), 0, VOCAB, dtype=jnp.int32)
    tgt = jax.random.randint(k3, (B, T), 0, VOCAB, dtype=jnp.int32)

    fwd = jax.jit(functools.partial(forward, nhead=NHEAD))
    out = jax.block_until_ready(fwd(params, src_A, src_B, tgt))

    assert out.shape == (B, T, VOCAB), out.shape
    assert bool(jnp.all(jnp.isfinite(out)))
    print("KERNEL_OK")
</pallas_src>

<mosaic_0001>
module attributes {stable_mosaic.version = 11 : i64} {
  func.func @kern(%arg0: i32, %arg1: memref<1x4x32xf32, #tpu.memory_space<vmem>>, %arg2: memref<1x4x32xf32, #tpu.memory_space<vmem>>, %arg3: memref<1x8x32xf32, #tpu.memory_space<vmem>>, %arg4: memref<1x64xf32, #tpu.memory_space<vmem>>, %arg5: memref<1x32xf32, #tpu.memory_space<vmem>>, %arg6: memref<1x32xf32, #tpu.memory_space<vmem>>, %arg7: memref<32x64xbf16, #tpu.memory_space<vmem>>, %arg8: memref<32x32xbf16, #tpu.memory_space<vmem>>, %arg9: memref<32x32xbf16, #tpu.memory_space<vmem>>, %arg10: memref<1x64xf32, #tpu.memory_space<vmem>>, %arg11: memref<32x64xbf16, #tpu.memory_space<vmem>>, %arg12: memref<1x32xf32, #tpu.memory_space<vmem>>, %arg13: memref<64x32xbf16, #tpu.memory_space<vmem>>, %arg14: memref<1x32xf32, #tpu.memory_space<vmem>>, %arg15: memref<1x32xf32, #tpu.memory_space<vmem>>, %arg16: memref<1x32xf32, #tpu.memory_space<vmem>>, %arg17: memref<1x32xf32, #tpu.memory_space<vmem>>, %arg18: memref<1x32xf32, #tpu.memory_space<vmem>>, %arg19: memref<1x32xf32, #tpu.memory_space<vmem>>, %arg20: memref<1x32xf32, #tpu.memory_space<vmem>>, %arg21: memref<1x96xf32, #tpu.memory_space<vmem>>, %arg22: memref<32x32xbf16, #tpu.memory_space<vmem>>, %arg23: memref<32x96xbf16, #tpu.memory_space<vmem>>, %arg24: memref<1x64xf32, #tpu.memory_space<vmem>>, %arg25: memref<1x32xf32, #tpu.memory_space<vmem>>, %arg26: memref<1x32xf32, #tpu.memory_space<vmem>>, %arg27: memref<32x64xbf16, #tpu.memory_space<vmem>>, %arg28: memref<32x32xbf16, #tpu.memory_space<vmem>>, %arg29: memref<32x32xbf16, #tpu.memory_space<vmem>>, %arg30: memref<1x64xf32, #tpu.memory_space<vmem>>, %arg31: memref<32x64xbf16, #tpu.memory_space<vmem>>, %arg32: memref<1x32xf32, #tpu.memory_space<vmem>>, %arg33: memref<64x32xbf16, #tpu.memory_space<vmem>>, %arg34: memref<1x32xf32, #tpu.memory_space<vmem>>, %arg35: memref<1x32xf32, #tpu.memory_space<vmem>>, %arg36: memref<1x32xf32, #tpu.memory_space<vmem>>, %arg37: memref<1x32xf32, #tpu.memory_space<vmem>>, %arg38: memref<1x32xf32, #tpu.memory_space<vmem>>, %arg39: memref<1x32xf32, #tpu.memory_space<vmem>>, %arg40: memref<1x32xf32, #tpu.memory_space<vmem>>, %arg41: memref<1x96xf32, #tpu.memory_space<vmem>>, %arg42: memref<32x32xbf16, #tpu.memory_space<vmem>>, %arg43: memref<32x96xbf16, #tpu.memory_space<vmem>>, %arg44: memref<1x64xf32, #tpu.memory_space<vmem>>, %arg45: memref<32x64xbf16, #tpu.memory_space<vmem>>, %arg46: memref<1x32xf32, #tpu.memory_space<vmem>>, %arg47: memref<64x32xbf16, #tpu.memory_space<vmem>>, %arg48: memref<1x32xf32, #tpu.memory_space<vmem>>, %arg49: memref<1x32xf32, #tpu.memory_space<vmem>>, %arg50: memref<1x32xf32, #tpu.memory_space<vmem>>, %arg51: memref<1x32xf32, #tpu.memory_space<vmem>>, %arg52: memref<1x32xf32, #tpu.memory_space<vmem>>, %arg53: memref<1x96xf32, #tpu.memory_space<vmem>>, %arg54: memref<32x32xbf16, #tpu.memory_space<vmem>>, %arg55: memref<32x96xbf16, #tpu.memory_space<vmem>>, %arg56: memref<1x64xf32, #tpu.memory_space<vmem>>, %arg57: memref<32x64xbf16, #tpu.memory_space<vmem>>, %arg58: memref<1x32xf32, #tpu.memory_space<vmem>>, %arg59: memref<64x32xbf16, #tpu.memory_space<vmem>>, %arg60: memref<1x32xf32, #tpu.memory_space<vmem>>, %arg61: memref<1x32xf32, #tpu.memory_space<vmem>>, %arg62: memref<1x32xf32, #tpu.memory_space<vmem>>, %arg63: memref<1x32xf32, #tpu.memory_space<vmem>>, %arg64: memref<1x32xf32, #tpu.memory_space<vmem>>, %arg65: memref<1x96xf32, #tpu.memory_space<vmem>>, %arg66: memref<32x32xbf16, #tpu.memory_space<vmem>>, %arg67: memref<32x96xbf16, #tpu.memory_space<vmem>>, %arg68: memref<1x32xf32, #tpu.memory_space<vmem>>, %arg69: memref<32x32xbf16, #tpu.memory_space<vmem>>, %arg70: memref<1x32xf32, #tpu.memory_space<vmem>>, %arg71: memref<64x32xbf16, #tpu.memory_space<vmem>>, %arg72: memref<1x8x32xf32, #tpu.memory_space<vmem>>) attributes {dimension_semantics = [#tpu.dimension_semantics<parallel>], iteration_bounds = array<i64: 2>, scalar_prefetch = 0 : i64, scratch_operands = 0 : i64, tpu.core_type = #tpu.core_type<tc>, window_params = [{transform_indices = @transform_0, window_bounds = array<i64: 1, 4, 32>}, {transform_indices = @transform_1, window_bounds = array<i64: 1, 4, 32>}, {transform_indices = @transform_2, window_bounds = array<i64: 1, 8, 32>}, {pipeline_mode = #tpu.pipeline_mode<synchronous>, transform_indices = @transform_3, window_bounds = array<i64: 1, 64>}, {pipeline_mode = #tpu.pipeline_mode<synchronous>, transform_indices = @transform_4, window_bounds = array<i64: 1, 32>}, {pipeline_mode = #tpu.pipeline_mode<synchronous>, transform_indices = @transform_5, window_bounds = array<i64: 1, 32>}, {pipeline_mode = #tpu.pipeline_mode<synchronous>, transform_indices = @transform_6, window_bounds = array<i64: 32, 64>}, {pipeline_mode = #tpu.pipeline_mode<synchronous>, transform_indices = @transform_7, window_bounds = array<i64: 32, 32>}, {pipeline_mode = #tpu.pipeline_mode<synchronous>, transform_indices = @transform_8, window_bounds = array<i64: 32, 32>}, {pipeline_mode = #tpu.pipeline_mode<synchronous>, transform_indices = @transform_9, window_bounds = array<i64: 1, 64>}, {pipeline_mode = #tpu.pipeline_mode<synchronous>, transform_indices = @transform_10, window_bounds = array<i64: 32, 64>}, {pipeline_mode = #tpu.pipeline_mode<synchronous>, transform_indices = @transform_11, window_bounds = array<i64: 1, 32>}, {pipeline_mode = #tpu.pipeline_mode<synchronous>, transform_indices = @transform_12, window_bounds = array<i64: 64, 32>}, {pipeline_mode = #tpu.pipeline_mode<synchronous>, transform_indices = @transform_13, window_bounds = array<i64: 1, 32>}, {pipeline_mode = #tpu.pipeline_mode<synchronous>, transform_indices = @transform_14, window_bounds = array<i64: 1, 32>}, {pipeline_mode = #tpu.pipeline_mode<synchronous>, transform_indices = @transform_15, window_bounds = array<i64: 1, 32>}, {pipeline_mode = #tpu.pipeline_mode<synchronous>, transform_indices = @transform_16, window_bounds = array<i64: 1, 32>}, {pipeline_mode = #tpu.pipeline_mode<synchronous>, transform_indices = @transform_17, window_bounds = array<i64: 1, 32>}, {pipeline_mode = #tpu.pipeline_mode<synchronous>, transform_indices = @transform_18, window_bounds = array<i64: 1, 32>}, {pipeline_mode = #tpu.pipeline_mode<synchronous>, transform_indices = @transform_19, window_bounds = array<i64: 1, 32>}, {pipeline_mode = #tpu.pipeline_mode<synchronous>, transform_indices = @transform_20, window_bounds = array<i64: 1, 96>}, {pipeline_mode = #tpu.pipeline_mode<synchronous>, transform_indices = @transform_21, window_bounds = array<i64: 32, 32>}, {pipeline_mode = #tpu.pipeline_mode<synchronous>, transform_indices = @transform_22, window_bounds = array<i64: 32, 96>}, {pipeline_mode = #tpu.pipeline_mode<synchronous>, transform_indices = @transform_23, window_bounds = array<i64: 1, 64>}, {pipeline_mode = #tpu.pipeline_mode<synchronous>, transform_indices = @transform_24, window_bounds = array<i64: 1, 32>}, {pipeline_mode = #tpu.pipeline_mode<synchronous>, transform_indices = @transform_25, window_bounds = array<i64: 1, 32>}, {pipeline_mode = #tpu.pipeline_mode<synchronous>, transform_indices = @transform_26, window_bounds = array<i64: 32, 64>}, {pipeline_mode = #tpu.pipeline_mode<synchronous>, transform_indices = @transform_27, window_bounds = array<i64: 32, 32>}, {pipeline_mode = #tpu.pipeline_mode<synchronous>, transform_indices = @transform_28, window_bounds = array<i64: 32, 32>}, {pipeline_mode = #tpu.pipeline_mode<synchronous>, transform_indices = @transform_29, window_bounds = array<i64: 1, 64>}, {pipeline_mode = #tpu.pipeline_mode<synchronous>, transform_indices = @transform_30, window_bounds = array<i64: 32, 64>}, {pipeline_mode = #tpu.pipeline_mode<synchronous>, transform_indices = @transform_31, window_bounds = array<i64: 1, 32>}, {pipeline_mode = #tpu.pipeline_mode<synchronous>, transform_indices = @transform_32, window_bounds = array<i64: 64, 32>}, {pipeline_mode = #tpu.pipeline_mode<synchronous>, transform_indices = @transform_33, window_bounds = array<i64: 1, 32>}, {pipeline_mode = #tpu.pipeline_mode<synchronous>, transform_indices = @transform_34, window_bounds = array<i64: 1, 32>}, {pipeline_mode = #tpu.pipeline_mode<synchronous>, transform_indices = @transform_35, window_bounds = array<i64: 1, 32>}, {pipeline_mode = #tpu.pipeline_mode<synchronous>, transform_indices = @transform_36, window_bounds = array<i64: 1, 32>}, {pipeline_mode = #tpu.pipeline_mode<synchronous>, transform_indices = @transform_37, window_bounds = array<i64: 1, 32>}, {pipeline_mode = #tpu.pipeline_mode<synchronous>, transform_indices = @transform_38, window_bounds = array<i64: 1, 32>}, {pipeline_mode = #tpu.pipeline_mode<synchronous>, transform_indices = @transform_39, window_bounds = array<i64: 1, 32>}, {pipeline_mode = #tpu.pipeline_mode<synchronous>, transform_indices = @transform_40, window_bounds = array<i64: 1, 96>}, {pipeline_mode = #tpu.pipeline_mode<synchronous>, transform_indices = @transform_41, window_bounds = array<i64: 32, 32>}, {pipeline_mode = #tpu.pipeline_mode<synchronous>, transform_indices = @transform_42, window_bounds = array<i64: 32, 96>}, {pipeline_mode = #tpu.pipeline_mode<synchronous>, transform_indices = @transform_43, window_bounds = array<i64: 1, 64>}, {pipeline_mode = #tpu.pipeline_mode<synchronous>, transform_indices = @transform_44, window_bounds = array<i64: 32, 64>}, {pipeline_mode = #tpu.pipeline_mode<synchronous>, transform_indices = @transform_45, window_bounds = array<i64: 1, 32>}, {pipeline_mode = #tpu.pipeline_mode<synchronous>, transform_indices = @transform_46, window_bounds = array<i64: 64, 32>}, {pipeline_mode = #tpu.pipeline_mode<synchronous>, transform_indices = @transform_47, window_bounds = array<i64: 1, 32>}, {pipeline_mode = #tpu.pipeline_mode<synchronous>, transform_indices = @transform_48, window_bounds = array<i64: 1, 32>}, {pipeline_mode = #tpu.pipeline_mode<synchronous>, transform_indices = @transform_49, window_bounds = array<i64: 1, 32>}, {pipeline_mode = #tpu.pipeline_mode<synchronous>, transform_indices = @transform_50, window_bounds = array<i64: 1, 32>}, {pipeline_mode = #tpu.pipeline_mode<synchronous>, transform_indices = @transform_51, window_bounds = array<i64: 1, 32>}, {pipeline_mode = #tpu.pipeline_mode<synchronous>, transform_indices = @transform_52, window_bounds = array<i64: 1, 96>}, {pipeline_mode = #tpu.pipeline_mode<synchronous>, transform_indices = @transform_53, window_bounds = array<i64: 32, 32>}, {pipeline_mode = #tpu.pipeline_mode<synchronous>, transform_indices = @transform_54, window_bounds = array<i64: 32, 96>}, {pipeline_mode = #tpu.pipeline_mode<synchronous>, transform_indices = @transform_55, window_bounds = array<i64: 1, 64>}, {pipeline_mode = #tpu.pipeline_mode<synchronous>, transform_indices = @transform_56, window_bounds = array<i64: 32, 64>}, {pipeline_mode = #tpu.pipeline_mode<synchronous>, transform_indices = @transform_57, window_bounds = array<i64: 1, 32>}, {pipeline_mode = #tpu.pipeline_mode<synchronous>, transform_indices = @transform_58, window_bounds = array<i64: 64, 32>}, {pipeline_mode = #tpu.pipeline_mode<synchronous>, transform_indices = @transform_59, window_bounds = array<i64: 1, 32>}, {pipeline_mode = #tpu.pipeline_mode<synchronous>, transform_indices = @transform_60, window_bounds = array<i64: 1, 32>}, {pipeline_mode = #tpu.pipeline_mode<synchronous>, transform_indices = @transform_61, window_bounds = array<i64: 1, 32>}, {pipeline_mode = #tpu.pipeline_mode<synchronous>, transform_indices = @transform_62, window_bounds = array<i64: 1, 32>}, {pipeline_mode = #tpu.pipeline_mode<synchronous>, transform_indices = @transform_63, window_bounds = array<i64: 1, 32>}, {pipeline_mode = #tpu.pipeline_mode<synchronous>, transform_indices = @transform_64, window_bounds = array<i64: 1, 96>}, {pipeline_mode = #tpu.pipeline_mode<synchronous>, transform_indices = @transform_65, window_bounds = array<i64: 32, 32>}, {pipeline_mode = #tpu.pipeline_mode<synchronous>, transform_indices = @transform_66, window_bounds = array<i64: 32, 96>}, {pipeline_mode = #tpu.pipeline_mode<synchronous>, transform_indices = @transform_67, window_bounds = array<i64: 1, 32>}, {pipeline_mode = #tpu.pipeline_mode<synchronous>, transform_indices = @transform_68, window_bounds = array<i64: 32, 32>}, {pipeline_mode = #tpu.pipeline_mode<synchronous>, transform_indices = @transform_69, window_bounds = array<i64: 1, 32>}, {pipeline_mode = #tpu.pipeline_mode<synchronous>, transform_indices = @transform_70, window_bounds = array<i64: 64, 32>}, {transform_indices = @transform_71, window_bounds = array<i64: 1, 8, 32>}]} {
    %c0 = arith.constant 0 : index
    %c0_0 = arith.constant 0 : index
    %c0_1 = arith.constant 0 : index
    %0 = vector.load %arg1[%c0, %c0_0, %c0_1] : memref<1x4x32xf32, #tpu.memory_space<vmem>>, vector<1x4x32xf32>
    %1 = vector.shape_cast %0 : vector<1x4x32xf32> to vector<4x32xf32>
    %c0_2 = arith.constant 0 : index
    %c0_3 = arith.constant 0 : index
    %c0_4 = arith.constant 0 : index
    %2 = vector.load %arg2[%c0_2, %c0_3, %c0_4] : memref<1x4x32xf32, #tpu.memory_space<vmem>>, vector<1x4x32xf32>
    %3 = vector.shape_cast %2 : vector<1x4x32xf32> to vector<4x32xf32>
    %c0_5 = arith.constant 0 : index
    %c0_6 = arith.constant 0 : index
    %c0_7 = arith.constant 0 : index
    %4 = vector.load %arg3[%c0_5, %c0_6, %c0_7] : memref<1x8x32xf32, #tpu.memory_space<vmem>>, vector<1x8x32xf32>
    %5 = vector.shape_cast %4 : vector<1x8x32xf32> to vector<8x32xf32>
    %6 = tpu.concatenate %1, %3 in 1 : vector<4x32xf32>, vector<4x32xf32> -> vector<4x64xf32>
    %cst = arith.constant dense<0.000000e+00> : vector<64xf32>
    %7 = vector.multi_reduction <add>, %6, %cst [0] : vector<4x64xf32> to vector<64xf32>
    %8 = vector.shape_cast %7 : vector<64xf32> to vector<1x64xf32>
    %cst_8 = arith.constant 4.000000e+00 : f32
    %9 = vector.broadcast %cst_8 : f32 to vector<1x64xf32>
    %10 = arith.divf %8, %9 : vector<1x64xf32>
    %c0_9 = arith.constant 0 : index
    %c0_10 = arith.constant 0 : index
    %11 = vector.load %arg71[%c0_9, %c0_10] : memref<64x32xbf16, #tpu.memory_space<vmem>>, vector<64x32xbf16>
    %12 = arith.truncf %10 : vector<1x64xf32> to vector<1x64xbf16>
    %cst_11 = arith.constant dense<0.000000e+00> : vector<1x32xf32>
    %13 = tpu.matmul %12, %11, %cst_11 {dimension_numbers = #tpu.dot_dimension_numbers<[1], [0], [0], [1], [0, 0, 1, 1], [], []>} : vector<1x64xbf16>, vector<64x32xbf16>, vector<1x32xf32> -> vector<1x32xf32>
    %c0_12 = arith.constant 0 : index
    %c0_13 = arith.constant 0 : index
    %14 = vector.load %arg70[%c0_12, %c0_13] : memref<1x32xf32, #tpu.memory_space<vmem>>, vector<1x32xf32>
    %15 = arith.addf %13, %14 : vector<1x32xf32>
    %16 = tpu.concatenate %1, %3 in 0 : vector<4x32xf32>, vector<4x32xf32> -> vector<8x32xf32>
    %c0_14 = arith.constant 0 : index
    %c0_15 = arith.constant 0 : index
    %17 = vector.load %arg44[%c0_14, %c0_15] : memref<1x64xf32, #tpu.memory_space<vmem>>, vector<1x64xf32>
    %c0_16 = arith.constant 0 : index
    %c0_17 = arith.constant 0 : index
    %18 = vector.load %arg45[%c0_16, %c0_17] : memref<32x64xbf16, #tpu.memory_space<vmem>>, vector<32x64xbf16>
    %c0_18 = arith.constant 0 : index
    %c0_19 = arith.constant 0 : index
    %19 = vector.load %arg46[%c0_18, %c0_19] : memref<1x32xf32, #tpu.memory_space<vmem>>, vector<1x32xf32>
    %c0_20 = arith.constant 0 : index
    %c0_21 = arith.constant 0 : index
    %20 = vector.load %arg47[%c0_20, %c0_21] : memref<64x32xbf16, #tpu.memory_space<vmem>>, vector<64x32xbf16>
    %c0_22 = arith.constant 0 : index
    %c0_23 = arith.constant 0 : index
    %21 = vector.load %arg48[%c0_22, %c0_23] : memref<1x32xf32, #tpu.memory_space<vmem>>, vector<1x32xf32>
    %c0_24 = arith.constant 0 : index
    %c0_25 = arith.constant 0 : index
    %22 = vector.load %arg49[%c0_24, %c0_25] : memref<1x32xf32, #tpu.memory_space<vmem>>, vector<1x32xf32>
    %c0_26 = arith.constant 0 : index
    %c0_27 = arith.constant 0 : index
    %23 = vector.load %arg50[%c0_26, %c0_27] : memref<1x32xf32, #tpu.memory_space<vmem>>, vector<1x32xf32>
    %c0_28 = arith.constant 0 : index
    %c0_29 = arith.constant 0 : index
    %24 = vector.load %arg51[%c0_28, %c0_29] : memref<1x32xf32, #tpu.memory_space<vmem>>, vector<1x32xf32>
    %c0_30 = arith.constant 0 : index
    %c0_31 = arith.constant 0 : index
    %25 = vector.load %arg52[%c0_30, %c0_31] : memref<1x32xf32, #tpu.memory_space<vmem>>, vector<1x32xf32>
    %c0_32 = arith.constant 0 : index
    %c0_33 = arith.constant 0 : index
    %26 = vector.load %arg53[%c0_32, %c0_33] : memref<1x96xf32, #tpu.memory_space<vmem>>, vector<1x96xf32>
    %c0_34 = arith.constant 0 : index
    %c0_35 = arith.constant 0 : index
    %27 = vector.load %arg54[%c0_34, %c0_35] : memref<32x32xbf16, #tpu.memory_space<vmem>>, vector<32x32xbf16>
    %c0_36 = arith.constant 0 : index
    %c0_37 = arith.constant 0 : index
    %28 = vector.load %arg55[%c0_36, %c0_37] : memref<32x96xbf16, #tpu.memory_space<vmem>>, vector<32x96xbf16>
    %29 = arith.truncf %16 : vector<8x32xf32> to vector<8x32xbf16>
    %cst_38 = arith.constant dense<0.000000e+00> : vector<8x96xf32>
    %30 = tpu.matmul %29, %28, %cst_38 {dimension_numbers = #tpu.dot_dimension_numbers<[1], [0], [0], [1], [0, 0, 1, 1], [], []>} : vector<8x32xbf16>, vector<32x96xbf16>, vector<8x96xf32> -> vector<8x96xf32>
    %31 = vector.broadcast %26 : vector<1x96xf32> to vector<8x96xf32>
    %32 = arith.addf %30, %31 : vector<8x96xf32>
    %33 = vector.extract_strided_slice %32 {offsets = [0, 0], sizes = [8, 32], strides = [1, 1]} : vector<8x96xf32> to vector<8x32xf32>
    %34 = vector.extract_strided_slice %32 {offsets = [0, 32], sizes = [8, 32], strides = [1, 1]} : vector<8x96xf32> to vector<8x32xf32>
    %35 = vector.extract_strided_slice %32 {offsets = [0, 64], sizes = [8, 32], strides = [1, 1]} : vector<8x96xf32> to vector<8x32xf32>
    %36 = vector.extract_strided_slice %33 {offsets = [0, 0], sizes = [8, 8], strides = [1, 1]} : vector<8x32xf32> to vector<8x8xf32>
    %37 = vector.extract_strided_slice %34 {offsets = [0, 0], sizes = [8, 8], strides = [1, 1]} : vector<8x32xf32> to vector<8x8xf32>
    %38 = arith.truncf %36 : vector<8x8xf32> to vector<8x8xbf16>
    %39 = arith.truncf %37 : vector<8x8xf32> to vector<8x8xbf16>
    %cst_39 = arith.constant dense<0.000000e+00> : vector<8x8xf32>
    %40 = tpu.matmul %38, %39, %cst_39 {dimension_numbers = #tpu.dot_dimension_numbers<[1], [1], [0], [0], [0, 0, 1, 0], [], []>} : vector<8x8xbf16>, vector<8x8xbf16>, vector<8x8xf32> -> vector<8x8xf32>
    %cst_40 = arith.constant 0.353553385 : f32
    %41 = vector.broadcast %cst_40 : f32 to vector<8x8xf32>
    %42 = arith.mulf %40, %41 : vector<8x8xf32>
    %cst_41 = arith.constant dense<0xFF800000> : vector<8xf32>
    %43 = vector.multi_reduction <maximumf>, %42, %cst_41 [1] : vector<8x8xf32> to vector<8xf32>
    %44 = vector.shape_cast %43 : vector<8xf32> to vector<8x1xf32>
    %45 = vector.broadcast %44 : vector<8x1xf32> to vector<8x8xf32>
    %46 = arith.subf %42, %45 : vector<8x8xf32>
    %47 = math.exp %46 : vector<8x8xf32>
    %cst_42 = arith.constant dense<0.000000e+00> : vector<8xf32>
    %48 = vector.multi_reduction <add>, %47, %cst_42 [1] : vector<8x8xf32> to vector<8xf32>
    %49 = vector.shape_cast %48 : vector<8xf32> to vector<8x1xf32>
    %50 = tpu.reciprocal %49 {approx = true} : vector<8x1xf32> -> vector<8x1xf32>
    %51 = vector.broadcast %50 : vector<8x1xf32> to vector<8x8xf32>
    %52 = arith.mulf %47, %51 : vector<8x8xf32>
    %53 = vector.extract_strided_slice %35 {offsets = [0, 0], sizes = [8, 8], strides = [1, 1]} : vector<8x32xf32> to vector<8x8xf32>
    %54 = arith.truncf %52 : vector<8x8xf32> to vector<8x8xbf16>
    %55 = arith.truncf %53 : vector<8x8xf32> to vector<8x8xbf16>
    %cst_43 = arith.constant dense<0.000000e+00> : vector<8x8xf32>
    %56 = tpu.matmul %54, %55, %cst_43 {dimension_numbers = #tpu.dot_dimension_numbers<[1], [0], [0], [1], [0, 0, 1, 1], [], []>} : vector<8x8xbf16>, vector<8x8xbf16>, vector<8x8xf32> -> vector<8x8xf32>
    %57 = vector.extract_strided_slice %33 {offsets = [0, 8], sizes = [8, 8], strides = [1, 1]} : vector<8x32xf32> to vector<8x8xf32>
    %58 = vector.extract_strided_slice %34 {offsets = [0, 8], sizes = [8, 8], strides = [1, 1]} : vector<8x32xf32> to vector<8x8xf32>
    %59 = arith.truncf %57 : vector<8x8xf32> to vector<8x8xbf16>
    %60 = arith.truncf %58 : vector<8x8xf32> to vector<8x8xbf16>
    %cst_44 = arith.constant dense<0.000000e+00> : vector<8x8xf32>
    %61 = tpu.matmul %59, %60, %cst_44 {dimension_numbers = #tpu.dot_dimension_numbers<[1], [1], [0], [0], [0, 0, 1, 0], [], []>} : vector<8x8xbf16>, vector<8x8xbf16>, vector<8x8xf32> -> vector<8x8xf32>
    %cst_45 = arith.constant 0.353553385 : f32
    %62 = vector.broadcast %cst_45 : f32 to vector<8x8xf32>
    %63 = arith.mulf %61, %62 : vector<8x8xf32>
    %cst_46 = arith.constant dense<0xFF800000> : vector<8xf32>
    %64 = vector.multi_reduction <maximumf>, %63, %cst_46 [1] : vector<8x8xf32> to vector<8xf32>
    %65 = vector.shape_cast %64 : vector<8xf32> to vector<8x1xf32>
    %66 = vector.broadcast %65 : vector<8x1xf32> to vector<8x8xf32>
    %67 = arith.subf %63, %66 : vector<8x8xf32>
    %68 = math.exp %67 : vector<8x8xf32>
    %cst_47 = arith.constant dense<0.000000e+00> : vector<8xf32>
    %69 = vector.multi_reduction <add>, %68, %cst_47 [1] : vector<8x8xf32> to vector<8xf32>
    %70 = vector.shape_cast %69 : vector<8xf32> to vector<8x1xf32>
    %71 = tpu.reciprocal %70 {approx = true} : vector<8x1xf32> -> vector<8x1xf32>
    %72 = vector.broadcast %71 : vector<8x1xf32> to vector<8x8xf32>
    %73 = arith.mulf %68, %72 : vector<8x8xf32>
    %74 = vector.extract_strided_slice %35 {offsets = [0, 8], sizes = [8, 8], strides = [1, 1]} : vector<8x32xf32> to vector<8x8xf32>
    %75 = arith.truncf %73 : vector<8x8xf32> to vector<8x8xbf16>
    %76 = arith.truncf %74 : vector<8x8xf32> to vector<8x8xbf16>
    %cst_48 = arith.constant dense<0.000000e+00> : vector<8x8xf32>
    %77 = tpu.matmul %75, %76, %cst_48 {dimension_numbers = #tpu.dot_dimension_numbers<[1], [0], [0], [1], [0, 0, 1, 1], [], []>} : vector<8x8xbf16>, vector<8x8xbf16>, vector<8x8xf32> -> vector<8x8xf32>
    %78 = vector.extract_strided_slice %33 {offsets = [0, 16], sizes = [8, 8], strides = [1, 1]} : vector<8x32xf32> to vector<8x8xf32>
    %79 = vector.extract_strided_slice %34 {offsets = [0, 16], sizes = [8, 8], strides = [1, 1]} : vector<8x32xf32> to vector<8x8xf32>
    %80 = arith.truncf %78 : vector<8x8xf32> to vector<8x8xbf16>
    %81 = arith.truncf %79 : vector<8x8xf32> to vector<8x8xbf16>
    %cst_49 = arith.constant dense<0.000000e+00> : vector<8x8xf32>
    %82 = tpu.matmul %80, %81, %cst_49 {dimension_numbers = #tpu.dot_dimension_numbers<[1], [1], [0], [0], [0, 0, 1, 0], [], []>} : vector<8x8xbf16>, vector<8x8xbf16>, vector<8x8xf32> -> vector<8x8xf32>
    %cst_50 = arith.constant 0.353553385 : f32
    %83 = vector.broadcast %cst_50 : f32 to vector<8x8xf32>
    %84 = arith.mulf %82, %83 : vector<8x8xf32>
    %cst_51 = arith.constant dense<0xFF800000> : vector<8xf32>
    %85 = vector.multi_reduction <maximumf>, %84, %cst_51 [1] : vector<8x8xf32> to vector<8xf32>
    %86 = vector.shape_cast %85 : vector<8xf32> to vector<8x1xf32>
    %87 = vector.broadcast %86 : vector<8x1xf32> to vector<8x8xf32>
    %88 = arith.subf %84, %87 : vector<8x8xf32>
    %89 = math.exp %88 : vector<8x8xf32>
    %cst_52 = arith.constant dense<0.000000e+00> : vector<8xf32>
    %90 = vector.multi_reduction <add>, %89, %cst_52 [1] : vector<8x8xf32> to vector<8xf32>
    %91 = vector.shape_cast %90 : vector<8xf32> to vector<8x1xf32>
    %92 = tpu.reciprocal %91 {approx = true} : vector<8x1xf32> -> vector<8x1xf32>
    %93 = vector.broadcast %92 : vector<8x1xf32> to vector<8x8xf32>
    %94 = arith.mulf %89, %93 : vector<8x8xf32>
    %95 = vector.extract_strided_slice %35 {offsets = [0, 16], sizes = [8, 8], strides = [1, 1]} : vector<8x32xf32> to vector<8x8xf32>
    %96 = arith.truncf %94 : vector<8x8xf32> to vector<8x8xbf16>
    %97 = arith.truncf %95 : vector<8x8xf32> to vector<8x8xbf16>
    %cst_53 = arith.constant dense<0.000000e+00> : vector<8x8xf32>
    %98 = tpu.matmul %96, %97, %cst_53 {dimension_numbers = #tpu.dot_dimension_numbers<[1], [0], [0], [1], [0, 0, 1, 1], [], []>} : vector<8x8xbf16>, vector<8x8xbf16>, vector<8x8xf32> -> vector<8x8xf32>
    %99 = vector.extract_strided_slice %33 {offsets = [0, 24], sizes = [8, 8], strides = [1, 1]} : vector<8x32xf32> to vector<8x8xf32>
    %100 = vector.extract_strided_slice %34 {offsets = [0, 24], sizes = [8, 8], strides = [1, 1]} : vector<8x32xf32> to vector<8x8xf32>
    %101 = arith.truncf %99 : vector<8x8xf32> to vector<8x8xbf16>
    %102 = arith.truncf %100 : vector<8x8xf32> to vector<8x8xbf16>
    %cst_54 = arith.constant dense<0.000000e+00> : vector<8x8xf32>
    %103 = tpu.matmul %101, %102, %cst_54 {dimension_numbers = #tpu.dot_dimension_numbers<[1], [1], [0], [0], [0, 0, 1, 0], [], []>} : vector<8x8xbf16>, vector<8x8xbf16>, vector<8x8xf32> -> vector<8x8xf32>
    %cst_55 = arith.constant 0.353553385 : f32
    %104 = vector.broadcast %cst_55 : f32 to vector<8x8xf32>
    %105 = arith.mulf %103, %104 : vector<8x8xf32>
    %cst_56 = arith.constant dense<0xFF800000> : vector<8xf32>
    %106 = vector.multi_reduction <maximumf>, %105, %cst_56 [1] : vector<8x8xf32> to vector<8xf32>
    %107 = vector.shape_cast %106 : vector<8xf32> to vector<8x1xf32>
    %108 = vector.broadcast %107 : vector<8x1xf32> to vector<8x8xf32>
    %109 = arith.subf %105, %108 : vector<8x8xf32>
    %110 = math.exp %109 : vector<8x8xf32>
    %cst_57 = arith.constant dense<0.000000e+00> : vector<8xf32>
    %111 = vector.multi_reduction <add>, %110, %cst_57 [1] : vector<8x8xf32> to vector<8xf32>
    %112 = vector.shape_cast %111 : vector<8xf32> to vector<8x1xf32>
    %113 = tpu.reciprocal %112 {approx = true} : vector<8x1xf32> -> vector<8x1xf32>
    %114 = vector.broadcast %113 : vector<8x1xf32> to vector<8x8xf32>
    %115 = arith.mulf %110, %114 : vector<8x8xf32>
    %116 = vector.extract_strided_slice %35 {offsets = [0, 24], sizes = [8, 8], strides = [1, 1]} : vector<8x32xf32> to vector<8x8xf32>
    %117 = arith.truncf %115 : vector<8x8xf32> to vector<8x8xbf16>
    %118 = arith.truncf %116 : vector<8x8xf32> to vector<8x8xbf16>
    %cst_58 = arith.constant dense<0.000000e+00> : vector<8x8xf32>
    %119 = tpu.matmul %117, %118, %cst_58 {dimension_numbers = #tpu.dot_dimension_numbers<[1], [0], [0], [1], [0, 0, 1, 1], [], []>} : vector<8x8xbf16>, vector<8x8xbf16>, vector<8x8xf32> -> vector<8x8xf32>
    %120 = tpu.concatenate %56, %77, %98, %119 in 1 : vector<8x8xf32>, vector<8x8xf32>, vector<8x8xf32>, vector<8x8xf32> -> vector<8x32xf32>
    %121 = arith.truncf %120 : vector<8x32xf32> to vector<8x32xbf16>
    %cst_59 = arith.constant dense<0.000000e+00> : vector<8x32xf32>
    %122 = tpu.matmul %121, %27, %cst_59 {dimension_numbers = #tpu.dot_dimension_numbers<[1], [0], [0], [1], [0, 0, 1, 1], [], []>} : vector<8x32xbf16>, vector<32x32xbf16>, vector<8x32xf32> -> vector<8x32xf32>
    %123 = vector.broadcast %25 : vector<1x32xf32> to vector<8x32xf32>
    %124 = arith.addf %122, %123 : vector<8x32xf32>
    %125 = arith.addf %16, %124 : vector<8x32xf32>
    %cst_60 = arith.constant dense<0.000000e+00> : vector<8xf32>
    %126 = vector.multi_reduction <add>, %125, %cst_60 [1] : vector<8x32xf32> to vector<8xf32>
    %127 = vector.shape_cast %126 : vector<8xf32> to vector<8x1xf32>
    %cst_61 = arith.constant 3.200000e+01 : f32
    %128 = vector.broadcast %cst_61 : f32 to vector<8x1xf32>
    %129 = arith.divf %127, %128 : vector<8x1xf32>
    %130 = vector.broadcast %129 : vector<8x1xf32> to vector<8x32xf32>
    %131 = arith.subf %125, %130 : vector<8x32xf32>
    %132 = arith.mulf %131, %131 : vector<8x32xf32>
    %cst_62 = arith.constant dense<0.000000e+00> : vector<8xf32>
    %133 = vector.multi_reduction <add>, %132, %cst_62 [1] : vector<8x32xf32> to vector<8xf32>
    %134 = vector.shape_cast %133 : vector<8xf32> to vector<8x1xf32>
    %cst_63 = arith.constant 3.200000e+01 : f32
    %135 = vector.broadcast %cst_63 : f32 to vector<8x1xf32>
    %136 = arith.divf %134, %135 : vector<8x1xf32>
    %137 = vector.broadcast %129 : vector<8x1xf32> to vector<8x32xf32>
    %138 = arith.subf %125, %137 : vector<8x32xf32>
    %cst_64 = arith.constant 9.99999974E-6 : f32
    %139 = vector.broadcast %cst_64 : f32 to vector<8x1xf32>
    %140 = arith.addf %136, %139 : vector<8x1xf32>
    %141 = math.rsqrt %140 : vector<8x1xf32>
    %142 = vector.broadcast %141 : vector<8x1xf32> to vector<8x32xf32>
    %143 = arith.mulf %138, %142 : vector<8x32xf32>
    %144 = vector.broadcast %22 : vector<1x32xf32> to vector<8x32xf32>
    %145 = arith.mulf %143, %144 : vector<8x32xf32>
    %146 = vector.broadcast %21 : vector<1x32xf32> to vector<8x32xf32>
    %147 = arith.addf %145, %146 : vector<8x32xf32>
    %148 = arith.truncf %147 : vector<8x32xf32> to vector<8x32xbf16>
    %cst_65 = arith.constant dense<0.000000e+00> : vector<8x64xf32>
    %149 = tpu.matmul %148, %18, %cst_65 {dimension_numbers = #tpu.dot_dimension_numbers<[1], [0], [0], [1], [0, 0, 1, 1], [], []>} : vector<8x32xbf16>, vector<32x64xbf16>, vector<8x64xf32> -> vector<8x64xf32>
    %150 = vector.broadcast %17 : vector<1x64xf32> to vector<8x64xf32>
    %151 = arith.addf %149, %150 : vector<8x64xf32>
    %cst_66 = arith.constant 0.000000e+00 : f32
    %152 = vector.broadcast %cst_66 : f32 to vector<8x64xf32>
    %153 = arith.maximumf %151, %152 : vector<8x64xf32>
    %154 = arith.truncf %153 : vector<8x64xf32> to vector<8x64xbf16>
    %cst_67 = arith.constant dense<0.000000e+00> : vector<8x32xf32>
    %155 = tpu.matmul %154, %20, %cst_67 {dimension_numbers = #tpu.dot_dimension_numbers<[1], [0], [0], [1], [0, 0, 1, 1], [], []>} : vector<8x64xbf16>, vector<64x32xbf16>, vector<8x32xf32> -> vector<8x32xf32>
    %156 = vector.broadcast %19 : vector<1x32xf32> to vector<8x32xf32>
    %157 = arith.addf %155, %156 : vector<8x32xf32>
    %158 = arith.addf %147, %157 : vector<8x32xf32>
    %cst_68 = arith.constant dense<0.000000e+00> : vector<8xf32>
    %159 = vector.multi_reduction <add>, %158, %cst_68 [1] : vector<8x32xf32> to vector<8xf32>
    %160 = vector.shape_cast %159 : vector<8xf32> to vector<8x1xf32>
    %cst_69 = arith.constant 3.200000e+01 : f32
    %161 = vector.broadcast %cst_69 : f32 to vector<8x1xf32>
    %162 = arith.divf %160, %161 : vector<8x1xf32>
    %163 = vector.broadcast %162 : vector<8x1xf32> to vector<8x32xf32>
    %164 = arith.subf %158, %163 : vector<8x32xf32>
    %165 = arith.mulf %164, %164 : vector<8x32xf32>
    %cst_70 = arith.constant dense<0.000000e+00> : vector<8xf32>
    %166 = vector.multi_reduction <add>, %165, %cst_70 [1] : vector<8x32xf32> to vector<8xf32>
    %167 = vector.shape_cast %166 : vector<8xf32> to vector<8x1xf32>
    %cst_71 = arith.constant 3.200000e+01 : f32
    %168 = vector.broadcast %cst_71 : f32 to vector<8x1xf32>
    %169 = arith.divf %167, %168 : vector<8x1xf32>
    %170 = vector.broadcast %162 : vector<8x1xf32> to vector<8x32xf32>
    %171 = arith.subf %158, %170 : vector<8x32xf32>
    %cst_72 = arith.constant 9.99999974E-6 : f32
    %172 = vector.broadcast %cst_72 : f32 to vector<8x1xf32>
    %173 = arith.addf %169, %172 : vector<8x1xf32>
    %174 = math.rsqrt %173 : vector<8x1xf32>
    %175 = vector.broadcast %174 : vector<8x1xf32> to vector<8x32xf32>
    %176 = arith.mulf %171, %175 : vector<8x32xf32>
    %177 = vector.broadcast %24 : vector<1x32xf32> to vector<8x32xf32>
    %178 = arith.mulf %176, %177 : vector<8x32xf32>
    %179 = vector.broadcast %23 : vector<1x32xf32> to vector<8x32xf32>
    %180 = arith.addf %178, %179 : vector<8x32xf32>
    %c0_73 = arith.constant 0 : index
    %c0_74 = arith.constant 0 : index
    %181 = vector.load %arg56[%c0_73, %c0_74] : memref<1x64xf32, #tpu.memory_space<vmem>>, vector<1x64xf32>
    %c0_75 = arith.constant 0 : index
    %c0_76 = arith.constant 0 : index
    %182 = vector.load %arg57[%c0_75, %c0_76] : memref<32x64xbf16, #tpu.memory_space<vmem>>, vector<32x64xbf16>
    %c0_77 = arith.constant 0 : index
    %c0_78 = arith.constant 0 : index
    %183 = vector.load %arg58[%c0_77, %c0_78] : memref<1x32xf32, #tpu.memory_space<vmem>>, vector<1x32xf32>
    %c0_79 = arith.constant 0 : index
    %c0_80 = arith.constant 0 : index
    %184 = vector.load %arg59[%c0_79, %c0_80] : memref<64x32xbf16, #tpu.memory_space<vmem>>, vector<64x32xbf16>
    %c0_81 = arith.constant 0 : index
    %c0_82 = arith.constant 0 : index
    %185 = vector.load %arg60[%c0_81, %c0_82] : memref<1x32xf32, #tpu.memory_space<vmem>>, vector<1x32xf32>
    %c0_83 = arith.constant 0 : index
    %c0_84 = arith.constant 0 : index
    %186 = vector.load %arg61[%c0_83, %c0_84] : memref<1x32xf32, #tpu.memory_space<vmem>>, vector<1x32xf32>
    %c0_85 = arith.constant 0 : index
    %c0_86 = arith.constant 0 : index
    %187 = vector.load %arg62[%c0_85, %c0_86] : memref<1x32xf32, #tpu.memory_space<vmem>>, vector<1x32xf32>
    %c0_87 = arith.constant 0 : index
    %c0_88 = arith.constant 0 : index
    %188 = vector.load %arg63[%c0_87, %c0_88] : memref<1x32xf32, #tpu.memory_space<vmem>>, vector<1x32xf32>
    %c0_89 = arith.constant 0 : index
    %c0_90 = arith.constant 0 : index
    %189 = vector.load %arg64[%c0_89, %c0_90] : memref<1x32xf32, #tpu.memory_space<vmem>>, vector<1x32xf32>
    %c0_91 = arith.constant 0 : index
    %c0_92 = arith.constant 0 : index
    %190 = vector.load %arg65[%c0_91, %c0_92] : memref<1x96xf32, #tpu.memory_space<vmem>>, vector<1x96xf32>
    %c0_93 = arith.constant 0 : index
    %c0_94 = arith.constant 0 : index
    %191 = vector.load %arg66[%c0_93, %c0_94] : memref<32x32xbf16, #tpu.memory_space<vmem>>, vector<32x32xbf16>
    %c0_95 = arith.constant 0 : index
    %c0_96 = arith.constant 0 : index
    %192 = vector.load %arg67[%c0_95, %c0_96] : memref<32x96xbf16, #tpu.memory_space<vmem>>, vector<32x96xbf16>
    %193 = arith.truncf %180 : vector<8x32xf32> to vector<8x32xbf16>
    %cst_97 = arith.constant dense<0.000000e+00> : vector<8x96xf32>
    %194 = tpu.matmul %193, %192, %cst_97 {dimension_numbers = #tpu.dot_dimension_numbers<[1], [0], [0], [1], [0, 0, 1, 1], [], []>} : vector<8x32xbf16>, vector<32x96xbf16>, vector<8x96xf32> -> vector<8x96xf32>
    %195 = vector.broadcast %190 : vector<1x96xf32> to vector<8x96xf32>
    %196 = arith.addf %194, %195 : vector<8x96xf32>
    %197 = vector.extract_strided_slice %196 {offsets = [0, 0], sizes = [8, 32], strides = [1, 1]} : vector<8x96xf32> to vector<8x32xf32>
    %198 = vector.extract_strided_slice %196 {offsets = [0, 32], sizes = [8, 32], strides = [1, 1]} : vector<8x96xf32> to vector<8x32xf32>
    %199 = vector.extract_strided_slice %196 {offsets = [0, 64], sizes = [8, 32], strides = [1, 1]} : vector<8x96xf32> to vector<8x32xf32>
    %200 = vector.extract_strided_slice %197 {offsets = [0, 0], sizes = [8, 8], strides = [1, 1]} : vector<8x32xf32> to vector<8x8xf32>
    %201 = vector.extract_strided_slice %198 {offsets = [0, 0], sizes = [8, 8], strides = [1, 1]} : vector<8x32xf32> to vector<8x8xf32>
    %202 = arith.truncf %200 : vector<8x8xf32> to vector<8x8xbf16>
    %203 = arith.truncf %201 : vector<8x8xf32> to vector<8x8xbf16>
    %cst_98 = arith.constant dense<0.000000e+00> : vector<8x8xf32>
    %204 = tpu.matmul %202, %203, %cst_98 {dimension_numbers = #tpu.dot_dimension_numbers<[1], [1], [0], [0], [0, 0, 1, 0], [], []>} : vector<8x8xbf16>, vector<8x8xbf16>, vector<8x8xf32> -> vector<8x8xf32>
    %cst_99 = arith.constant 0.353553385 : f32
    %205 = vector.broadcast %cst_99 : f32 to vector<8x8xf32>
    %206 = arith.mulf %204, %205 : vector<8x8xf32>
    %cst_100 = arith.constant dense<0xFF800000> : vector<8xf32>
    %207 = vector.multi_reduction <maximumf>, %206, %cst_100 [1] : vector<8x8xf32> to vector<8xf32>
    %208 = vector.shape_cast %207 : vector<8xf32> to vector<8x1xf32>
    %209 = vector.broadcast %208 : vector<8x1xf32> to vector<8x8xf32>
    %210 = arith.subf %206, %209 : vector<8x8xf32>
    %211 = math.exp %210 : vector<8x8xf32>
    %cst_101 = arith.constant dense<0.000000e+00> : vector<8xf32>
    %212 = vector.multi_reduction <add>, %211, %cst_101 [1] : vector<8x8xf32> to vector<8xf32>
    %213 = vector.shape_cast %212 : vector<8xf32> to vector<8x1xf32>
    %214 = tpu.reciprocal %213 {approx = true} : vector<8x1xf32> -> vector<8x1xf32>
    %215 = vector.broadcast %214 : vector<8x1xf32> to vector<8x8xf32>
    %216 = arith.mulf %211, %215 : vector<8x8xf32>
    %217 = vector.extract_strided_slice %199 {offsets = [0, 0], sizes = [8, 8], strides = [1, 1]} : vector<8x32xf32> to vector<8x8xf32>
    %218 = arith.truncf %216 : vector<8x8xf32> to vector<8x8xbf16>
    %219 = arith.truncf %217 : vector<8x8xf32> to vector<8x8xbf16>
    %cst_102 = arith.constant dense<0.000000e+00> : vector<8x8xf32>
    %220 = tpu.matmul %218, %219, %cst_102 {dimension_numbers = #tpu.dot_dimension_numbers<[1], [0], [0], [1], [0, 0, 1, 1], [], []>} : vector<8x8xbf16>, vector<8x8xbf16>, vector<8x8xf32> -> vector<8x8xf32>
    %221 = vector.extract_strided_slice %197 {offsets = [0, 8], sizes = [8, 8], strides = [1, 1]} : vector<8x32xf32> to vector<8x8xf32>
    %222 = vector.extract_strided_slice %198 {offsets = [0, 8], sizes = [8, 8], strides = [1, 1]} : vector<8x32xf32> to vector<8x8xf32>
    %223 = arith.truncf %221 : vector<8x8xf32> to vector<8x8xbf16>
    %224 = arith.truncf %222 : vector<8x8xf32> to vector<8x8xbf16>
    %cst_103 = arith.constant dense<0.000000e+00> : vector<8x8xf32>
    %225 = tpu.matmul %223, %224, %cst_103 {dimension_numbers = #tpu.dot_dimension_numbers<[1], [1], [0], [0], [0, 0, 1, 0], [], []>} : vector<8x8xbf16>, vector<8x8xbf16>, vector<8x8xf32> -> vector<8x8xf32>
    %cst_104 = arith.constant 0.353553385 : f32
    %226 = vector.broadcast %cst_104 : f32 to vector<8x8xf32>
    %227 = arith.mulf %225, %226 : vector<8x8xf32>
    %cst_105 = arith.constant dense<0xFF800000> : vector<8xf32>
    %228 = vector.multi_reduction <maximumf>, %227, %cst_105 [1] : vector<8x8xf32> to vector<8xf32>
    %229 = vector.shape_cast %228 : vector<8xf32> to vector<8x1xf32>
    %230 = vector.broadcast %229 : vector<8x1xf32> to vector<8x8xf32>
    %231 = arith.subf %227, %230 : vector<8x8xf32>
    %232 = math.exp %231 : vector<8x8xf32>
    %cst_106 = arith.constant dense<0.000000e+00> : vector<8xf32>
    %233 = vector.multi_reduction <add>, %232, %cst_106 [1] : vector<8x8xf32> to vector<8xf32>
    %234 = vector.shape_cast %233 : vector<8xf32> to vector<8x1xf32>
    %235 = tpu.reciprocal %234 {approx = true} : vector<8x1xf32> -> vector<8x1xf32>
    %236 = vector.broadcast %235 : vector<8x1xf32> to vector<8x8xf32>
    %237 = arith.mulf %232, %236 : vector<8x8xf32>
    %238 = vector.extract_strided_slice %199 {offsets = [0, 8], sizes = [8, 8], strides = [1, 1]} : vector<8x32xf32> to vector<8x8xf32>
    %239 = arith.truncf %237 : vector<8x8xf32> to vector<8x8xbf16>
    %240 = arith.truncf %238 : vector<8x8xf32> to vector<8x8xbf16>
    %cst_107 = arith.constant dense<0.000000e+00> : vector<8x8xf32>
    %241 = tpu.matmul %239, %240, %cst_107 {dimension_numbers = #tpu.dot_dimension_numbers<[1], [0], [0], [1], [0, 0, 1, 1], [], []>} : vector<8x8xbf16>, vector<8x8xbf16>, vector<8x8xf32> -> vector<8x8xf32>
    %242 = vector.extract_strided_slice %197 {offsets = [0, 16], sizes = [8, 8], strides = [1, 1]} : vector<8x32xf32> to vector<8x8xf32>
    %243 = vector.extract_strided_slice %198 {offsets = [0, 16], sizes = [8, 8], strides = [1, 1]} : vector<8x32xf32> to vector<8x8xf32>
    %244 = arith.truncf %242 : vector<8x8xf32> to vector<8x8xbf16>
    %245 = arith.truncf %243 : vector<8x8xf32> to vector<8x8xbf16>
    %cst_108 = arith.constant dense<0.000000e+00> : vector<8x8xf32>
    %246 = tpu.matmul %244, %245, %cst_108 {dimension_numbers = #tpu.dot_dimension_numbers<[1], [1], [0], [0], [0, 0, 1, 0], [], []>} : vector<8x8xbf16>, vector<8x8xbf16>, vector<8x8xf32> -> vector<8x8xf32>
    %cst_109 = arith.constant 0.353553385 : f32
    %247 = vector.broadcast %cst_109 : f32 to vector<8x8xf32>
    %248 = arith.mulf %246, %247 : vector<8x8xf32>
    %cst_110 = arith.constant dense<0xFF800000> : vector<8xf32>
    %249 = vector.multi_reduction <maximumf>, %248, %cst_110 [1] : vector<8x8xf32> to vector<8xf32>
    %250 = vector.shape_cast %249 : vector<8xf32> to vector<8x1xf32>
    %251 = vector.broadcast %250 : vector<8x1xf32> to vector<8x8xf32>
    %252 = arith.subf %248, %251 : vector<8x8xf32>
    %253 = math.exp %252 : vector<8x8xf32>
    %cst_111 = arith.constant dense<0.000000e+00> : vector<8xf32>
    %254 = vector.multi_reduction <add>, %253, %cst_111 [1] : vector<8x8xf32> to vector<8xf32>
    %255 = vector.shape_cast %254 : vector<8xf32> to vector<8x1xf32>
    %256 = tpu.reciprocal %255 {approx = true} : vector<8x1xf32> -> vector<8x1xf32>
    %257 = vector.broadcast %256 : vector<8x1xf32> to vector<8x8xf32>
    %258 = arith.mulf %253, %257 : vector<8x8xf32>
    %259 = vector.extract_strided_slice %199 {offsets = [0, 16], sizes = [8, 8], strides = [1, 1]} : vector<8x32xf32> to vector<8x8xf32>
    %260 = arith.truncf %258 : vector<8x8xf32> to vector<8x8xbf16>
    %261 = arith.truncf %259 : vector<8x8xf32> to vector<8x8xbf16>
    %cst_112 = arith.constant dense<0.000000e+00> : vector<8x8xf32>
    %262 = tpu.matmul %260, %261, %cst_112 {dimension_numbers = #tpu.dot_dimension_numbers<[1], [0], [0], [1], [0, 0, 1, 1], [], []>} : vector<8x8xbf16>, vector<8x8xbf16>, vector<8x8xf32> -> vector<8x8xf32>
    %263 = vector.extract_strided_slice %197 {offsets = [0, 24], sizes = [8, 8], strides = [1, 1]} : vector<8x32xf32> to vector<8x8xf32>
    %264 = vector.extract_strided_slice %198 {offsets = [0, 24], sizes = [8, 8], strides = [1, 1]} : vector<8x32xf32> to vector<8x8xf32>
    %265 = arith.truncf %263 : vector<8x8xf32> to vector<8x8xbf16>
    %266 = arith.truncf %264 : vector<8x8xf32> to vector<8x8xbf16>
    %cst_113 = arith.constant dense<0.000000e+00> : vector<8x8xf32>
    %267 = tpu.matmul %265, %266, %cst_113 {dimension_numbers = #tpu.dot_dimension_numbers<[1], [1], [0], [0], [0, 0, 1, 0], [], []>} : vector<8x8xbf16>, vector<8x8xbf16>, vector<8x8xf32> -> vector<8x8xf32>
    %cst_114 = arith.constant 0.353553385 : f32
    %268 = vector.broadcast %cst_114 : f32 to vector<8x8xf32>
    %269 = arith.mulf %267, %268 : vector<8x8xf32>
    %cst_115 = arith.constant dense<0xFF800000> : vector<8xf32>
    %270 = vector.multi_reduction <maximumf>, %269, %cst_115 [1] : vector<8x8xf32> to vector<8xf32>
    %271 = vector.shape_cast %270 : vector<8xf32> to vector<8x1xf32>
    %272 = vector.broadcast %271 : vector<8x1xf32> to vector<8x8xf32>
    %273 = arith.subf %269, %272 : vector<8x8xf32>
    %274 = math.exp %273 : vector<8x8xf32>
    %cst_116 = arith.constant dense<0.000000e+00> : vector<8xf32>
    %275 = vector.multi_reduction <add>, %274, %cst_116 [1] : vector<8x8xf32> to vector<8xf32>
    %276 = vector.shape_cast %275 : vector<8xf32> to vector<8x1xf32>
    %277 = tpu.reciprocal %276 {approx = true} : vector<8x1xf32> -> vector<8x1xf32>
    %278 = vector.broadcast %277 : vector<8x1xf32> to vector<8x8xf32>
    %279 = arith.mulf %274, %278 : vector<8x8xf32>
    %280 = vector.extract_strided_slice %199 {offsets = [0, 24], sizes = [8, 8], strides = [1, 1]} : vector<8x32xf32> to vector<8x8xf32>
    %281 = arith.truncf %279 : vector<8x8xf32> to vector<8x8xbf16>
    %282 = arith.truncf %280 : vector<8x8xf32> to vector<8x8xbf16>
    %cst_117 = arith.constant dense<0.000000e+00> : vector<8x8xf32>
    %283 = tpu.matmul %281, %282, %cst_117 {dimension_numbers = #tpu.dot_dimension_numbers<[1], [0], [0], [1], [0, 0, 1, 1], [], []>} : vector<8x8xbf16>, vector<8x8xbf16>, vector<8x8xf32> -> vector<8x8xf32>
    %284 = tpu.concatenate %220, %241, %262, %283 in 1 : vector<8x8xf32>, vector<8x8xf32>, vector<8x8xf32>, vector<8x8xf32> -> vector<8x32xf32>
    %285 = arith.truncf %284 : vector<8x32xf32> to vector<8x32xbf16>
    %cst_118 = arith.constant dense<0.000000e+00> : vector<8x32xf32>
    %286 = tpu.matmul %285, %191, %cst_118 {dimension_numbers = #tpu.dot_dimension_numbers<[1], [0], [0], [1], [0, 0, 1, 1], [], []>} : vector<8x32xbf16>, vector<32x32xbf16>, vector<8x32xf32> -> vector<8x32xf32>
    %287 = vector.broadcast %189 : vector<1x32xf32> to vector<8x32xf32>
    %288 = arith.addf %286, %287 : vector<8x32xf32>
    %289 = arith.addf %180, %288 : vector<8x32xf32>
    %cst_119 = arith.constant dense<0.000000e+00> : vector<8xf32>
    %290 = vector.multi_reduction <add>, %289, %cst_119 [1] : vector<8x32xf32> to vector<8xf32>
    %291 = vector.shape_cast %290 : vector<8xf32> to vector<8x1xf32>
    %cst_120 = arith.constant 3.200000e+01 : f32
    %292 = vector.broadcast %cst_120 : f32 to vector<8x1xf32>
    %293 = arith.divf %291, %292 : vector<8x1xf32>
    %294 = vector.broadcast %293 : vector<8x1xf32> to vector<8x32xf32>
    %295 = arith.subf %289, %294 : vector<8x32xf32>
    %296 = arith.mulf %295, %295 : vector<8x32xf32>
    %cst_121 = arith.constant dense<0.000000e+00> : vector<8xf32>
    %297 = vector.multi_reduction <add>, %296, %cst_121 [1] : vector<8x32xf32> to vector<8xf32>
    %298 = vector.shape_cast %297 : vector<8xf32> to vector<8x1xf32>
    %cst_122 = arith.constant 3.200000e+01 : f32
    %299 = vector.broadcast %cst_122 : f32 to vector<8x1xf32>
    %300 = arith.divf %298, %299 : vector<8x1xf32>
    %301 = vector.broadcast %293 : vector<8x1xf32> to vector<8x32xf32>
    %302 = arith.subf %289, %301 : vector<8x32xf32>
    %cst_123 = arith.constant 9.99999974E-6 : f32
    %303 = vector.broadcast %cst_123 : f32 to vector<8x1xf32>
    %304 = arith.addf %300, %303 : vector<8x1xf32>
    %305 = math.rsqrt %304 : vector<8x1xf32>
    %306 = vector.broadcast %305 : vector<8x1xf32> to vector<8x32xf32>
    %307 = arith.mulf %302, %306 : vector<8x32xf32>
    %308 = vector.broadcast %186 : vector<1x32xf32> to vector<8x32xf32>
    %309 = arith.mulf %307, %308 : vector<8x32xf32>
    %310 = vector.broadcast %185 : vector<1x32xf32> to vector<8x32xf32>
    %311 = arith.addf %309, %310 : vector<8x32xf32>
    %312 = arith.truncf %311 : vector<8x32xf32> to vector<8x32xbf16>
    %cst_124 = arith.constant dense<0.000000e+00> : vector<8x64xf32>
    %313 = tpu.matmul %312, %182, %cst_124 {dimension_numbers = #tpu.dot_dimension_numbers<[1], [0], [0], [1], [0, 0, 1, 1], [], []>} : vector<8x32xbf16>, vector<32x64xbf16>, vector<8x64xf32> -> vector<8x64xf32>
    %314 = vector.broadcast %181 : vector<1x64xf32> to vector<8x64xf32>
    %315 = arith.addf %313, %314 : vector<8x64xf32>
    %cst_125 = arith.constant 0.000000e+00 : f32
    %316 = vector.broadcast %cst_125 : f32 to vector<8x64xf32>
    %317 = arith.maximumf %315, %316 : vector<8x64xf32>
    %318 = arith.truncf %317 : vector<8x64xf32> to vector<8x64xbf16>
    %cst_126 = arith.constant dense<0.000000e+00> : vector<8x32xf32>
    %319 = tpu.matmul %318, %184, %cst_126 {dimension_numbers = #tpu.dot_dimension_numbers<[1], [0], [0], [1], [0, 0, 1, 1], [], []>} : vector<8x64xbf16>, vector<64x32xbf16>, vector<8x32xf32> -> vector<8x32xf32>
    %320 = vector.broadcast %183 : vector<1x32xf32> to vector<8x32xf32>
    %321 = arith.addf %319, %320 : vector<8x32xf32>
    %322 = arith.addf %311, %321 : vector<8x32xf32>
    %cst_127 = arith.constant dense<0.000000e+00> : vector<8xf32>
    %323 = vector.multi_reduction <add>, %322, %cst_127 [1] : vector<8x32xf32> to vector<8xf32>
    %324 = vector.shape_cast %323 : vector<8xf32> to vector<8x1xf32>
    %cst_128 = arith.constant 3.200000e+01 : f32
    %325 = vector.broadcast %cst_128 : f32 to vector<8x1xf32>
    %326 = arith.divf %324, %325 : vector<8x1xf32>
    %327 = vector.broadcast %326 : vector<8x1xf32> to vector<8x32xf32>
    %328 = arith.subf %322, %327 : vector<8x32xf32>
    %329 = arith.mulf %328, %328 : vector<8x32xf32>
    %cst_129 = arith.constant dense<0.000000e+00> : vector<8xf32>
    %330 = vector.multi_reduction <add>, %329, %cst_129 [1] : vector<8x32xf32> to vector<8xf32>
    %331 = vector.shape_cast %330 : vector<8xf32> to vector<8x1xf32>
    %cst_130 = arith.constant 3.200000e+01 : f32
    %332 = vector.broadcast %cst_130 : f32 to vector<8x1xf32>
    %333 = arith.divf %331, %332 : vector<8x1xf32>
    %334 = vector.broadcast %326 : vector<8x1xf32> to vector<8x32xf32>
    %335 = arith.subf %322, %334 : vector<8x32xf32>
    %cst_131 = arith.constant 9.99999974E-6 : f32
    %336 = vector.broadcast %cst_131 : f32 to vector<8x1xf32>
    %337 = arith.addf %333, %336 : vector<8x1xf32>
    %338 = math.rsqrt %337 : vector<8x1xf32>
    %339 = vector.broadcast %338 : vector<8x1xf32> to vector<8x32xf32>
    %340 = arith.mulf %335, %339 : vector<8x32xf32>
    %341 = vector.broadcast %188 : vector<1x32xf32> to vector<8x32xf32>
    %342 = arith.mulf %340, %341 : vector<8x32xf32>
    %343 = vector.broadcast %187 : vector<1x32xf32> to vector<8x32xf32>
    %344 = arith.addf %342, %343 : vector<8x32xf32>
    %345 = vector.broadcast %15 : vector<1x32xf32> to vector<8x32xf32>
    %346 = arith.addf %344, %345 : vector<8x32xf32>
    %c0_132 = arith.constant 0 : index
    %c0_133 = arith.constant 0 : index
    %347 = vector.load %arg4[%c0_132, %c0_133] : memref<1x64xf32, #tpu.memory_space<vmem>>, vector<1x64xf32>
    %c0_134 = arith.constant 0 : index
    %c0_135 = arith.constant 0 : index
    %348 = vector.load %arg5[%c0_134, %c0_135] : memref<1x32xf32, #tpu.memory_space<vmem>>, vector<1x32xf32>
    %c0_136 = arith.constant 0 : index
    %c0_137 = arith.constant 0 : index
    %349 = vector.load %arg6[%c0_136, %c0_137] : memref<1x32xf32, #tpu.memory_space<vmem>>, vector<1x32xf32>
    %c0_138 = arith.constant 0 : index
    %c0_139 = arith.constant 0 : index
    %350 = vector.load %arg7[%c0_138, %c0_139] : memref<32x64xbf16, #tpu.memory_space<vmem>>, vector<32x64xbf16>
    %c0_140 = arith.constant 0 : index
    %c0_141 = arith.constant 0 : index
    %351 = vector.load %arg8[%c0_140, %c0_141] : memref<32x32xbf16, #tpu.memory_space<vmem>>, vector<32x32xbf16>
    %c0_142 = arith.constant 0 : index
    %c0_143 = arith.constant 0 : index
    %352 = vector.load %arg9[%c0_142, %c0_143] : memref<32x32xbf16, #tpu.memory_space<vmem>>, vector<32x32xbf16>
    %c0_144 = arith.constant 0 : index
    %c0_145 = arith.constant 0 : index
    %353 = vector.load %arg10[%c0_144, %c0_145] : memref<1x64xf32, #tpu.memory_space<vmem>>, vector<1x64xf32>
    %c0_146 = arith.constant 0 : index
    %c0_147 = arith.constant 0 : index
    %354 = vector.load %arg11[%c0_146, %c0_147] : memref<32x64xbf16, #tpu.memory_space<vmem>>, vector<32x64xbf16>
    %c0_148 = arith.constant 0 : index
    %c0_149 = arith.constant 0 : index
    %355 = vector.load %arg12[%c0_148, %c0_149] : memref<1x32xf32, #tpu.memory_space<vmem>>, vector<1x32xf32>
    %c0_150 = arith.constant 0 : index
    %c0_151 = arith.constant 0 : index
    %356 = vector.load %arg13[%c0_150, %c0_151] : memref<64x32xbf16, #tpu.memory_space<vmem>>, vector<64x32xbf16>
    %c0_152 = arith.constant 0 : index
    %c0_153 = arith.constant 0 : index
    %357 = vector.load %arg14[%c0_152, %c0_153] : memref<1x32xf32, #tpu.memory_space<vmem>>, vector<1x32xf32>
    %c0_154 = arith.constant 0 : index
    %c0_155 = arith.constant 0 : index
    %358 = vector.load %arg15[%c0_154, %c0_155] : memref<1x32xf32, #tpu.memory_space<vmem>>, vector<1x32xf32>
    %c0_156 = arith.constant 0 : index
    %c0_157 = arith.constant 0 : index
    %359 = vector.load %arg16[%c0_156, %c0_157] : memref<1x32xf32, #tpu.memory_space<vmem>>, vector<1x32xf32>
    %c0_158 = arith.constant 0 : index
    %c0_159 = arith.constant 0 : index
    %360 = vector.load %arg17[%c0_158, %c0_159] : memref<1x32xf32, #tpu.memory_space<vmem>>, vector<1x32xf32>
    %c0_160 = arith.constant 0 : index
    %c0_161 = arith.constant 0 : index
    %361 = vector.load %arg18[%c0_160, %c0_161] : memref<1x32xf32, #tpu.memory_space<vmem>>, vector<1x32xf32>
    %c0_162 = arith.constant 0 : index
    %c0_163 = arith.constant 0 : index
    %362 = vector.load %arg19[%c0_162, %c0_163] : memref<1x32xf32, #tpu.memory_space<vmem>>, vector<1x32xf32>
    %c0_164 = arith.constant 0 : index
    %c0_165 = arith.constant 0 : index
    %363 = vector.load %arg20[%c0_164, %c0_165] : memref<1x32xf32, #tpu.memory_space<vmem>>, vector<1x32xf32>
    %c0_166 = arith.constant 0 : index
    %c0_167 = arith.constant 0 : index
    %364 = vector.load %arg21[%c0_166, %c0_167] : memref<1x96xf32, #tpu.memory_space<vmem>>, vector<1x96xf32>
    %c0_168 = arith.constant 0 : index
    %c0_169 = arith.constant 0 : index
    %365 = vector.load %arg22[%c0_168, %c0_169] : memref<32x32xbf16, #tpu.memory_space<vmem>>, vector<32x32xbf16>
    %c0_170 = arith.constant 0 : index
    %c0_171 = arith.constant 0 : index
    %366 = vector.load %arg23[%c0_170, %c0_171] : memref<32x96xbf16, #tpu.memory_space<vmem>>, vector<32x96xbf16>
    %367 = arith.truncf %5 : vector<8x32xf32> to vector<8x32xbf16>
    %cst_172 = arith.constant dense<0.000000e+00> : vector<8x96xf32>
    %368 = tpu.matmul %367, %366, %cst_172 {dimension_numbers = #tpu.dot_dimension_numbers<[1], [0], [0], [1], [0, 0, 1, 1], [], []>} : vector<8x32xbf16>, vector<32x96xbf16>, vector<8x96xf32> -> vector<8x96xf32>
    %369 = vector.broadcast %364 : vector<1x96xf32> to vector<8x96xf32>
    %370 = arith.addf %368, %369 : vector<8x96xf32>
    %371 = vector.extract_strided_slice %370 {offsets = [0, 0], sizes = [8, 32], strides = [1, 1]} : vector<8x96xf32> to vector<8x32xf32>
    %372 = vector.extract_strided_slice %370 {offsets = [0, 32], sizes = [8, 32], strides = [1, 1]} : vector<8x96xf32> to vector<8x32xf32>
    %373 = vector.extract_strided_slice %370 {offsets = [0, 64], sizes = [8, 32], strides = [1, 1]} : vector<8x96xf32> to vector<8x32xf32>
    %374 = vector.extract_strided_slice %371 {offsets = [0, 0], sizes = [8, 8], strides = [1, 1]} : vector<8x32xf32> to vector<8x8xf32>
    %375 = vector.extract_strided_slice %372 {offsets = [0, 0], sizes = [8, 8], strides = [1, 1]} : vector<8x32xf32> to vector<8x8xf32>
    %376 = arith.truncf %374 : vector<8x8xf32> to vector<8x8xbf16>
    %377 = arith.truncf %375 : vector<8x8xf32> to vector<8x8xbf16>
    %cst_173 = arith.constant dense<0.000000e+00> : vector<8x8xf32>
    %378 = tpu.matmul %376, %377, %cst_173 {dimension_numbers = #tpu.dot_dimension_numbers<[1], [1], [0], [0], [0, 0, 1, 0], [], []>} : vector<8x8xbf16>, vector<8x8xbf16>, vector<8x8xf32> -> vector<8x8xf32>
    %cst_174 = arith.constant 0.353553385 : f32
    %379 = vector.broadcast %cst_174 : f32 to vector<8x8xf32>
    %380 = arith.mulf %378, %379 : vector<8x8xf32>
    %cst_175 = arith.constant dense<0xFF800000> : vector<8xf32>
    %381 = vector.multi_reduction <maximumf>, %380, %cst_175 [1] : vector<8x8xf32> to vector<8xf32>
    %382 = vector.shape_cast %381 : vector<8xf32> to vector<8x1xf32>
    %383 = vector.broadcast %382 : vector<8x1xf32> to vector<8x8xf32>
    %384 = arith.subf %380, %383 : vector<8x8xf32>
    %385 = math.exp %384 : vector<8x8xf32>
    %cst_176 = arith.constant dense<0.000000e+00> : vector<8xf32>
    %386 = vector.multi_reduction <add>, %385, %cst_176 [1] : vector<8x8xf32> to vector<8xf32>
    %387 = vector.shape_cast %386 : vector<8xf32> to vector<8x1xf32>
    %388 = tpu.reciprocal %387 {approx = true} : vector<8x1xf32> -> vector<8x1xf32>
    %389 = vector.broadcast %388 : vector<8x1xf32> to vector<8x8xf32>
    %390 = arith.mulf %385, %389 : vector<8x8xf32>
    %391 = vector.extract_strided_slice %373 {offsets = [0, 0], sizes = [8, 8], strides = [1, 1]} : vector<8x32xf32> to vector<8x8xf32>
    %392 = arith.truncf %390 : vector<8x8xf32> to vector<8x8xbf16>
    %393 = arith.truncf %391 : vector<8x8xf32> to vector<8x8xbf16>
    %cst_177 = arith.constant dense<0.000000e+00> : vector<8x8xf32>
    %394 = tpu.matmul %392, %393, %cst_177 {dimension_numbers = #tpu.dot_dimension_numbers<[1], [0], [0], [1], [0, 0, 1, 1], [], []>} : vector<8x8xbf16>, vector<8x8xbf16>, vector<8x8xf32> -> vector<8x8xf32>
    %395 = vector.extract_strided_slice %371 {offsets = [0, 8], sizes = [8, 8], strides = [1, 1]} : vector<8x32xf32> to vector<8x8xf32>
    %396 = vector.extract_strided_slice %372 {offsets = [0, 8], sizes = [8, 8], strides = [1, 1]} : vector<8x32xf32> to vector<8x8xf32>
    %397 = arith.truncf %395 : vector<8x8xf32> to vector<8x8xbf16>
    %398 = arith.truncf %396 : vector<8x8xf32> to vector<8x8xbf16>
    %cst_178 = arith.constant dense<0.000000e+00> : vector<8x8xf32>
    %399 = tpu.matmul %397, %398, %cst_178 {dimension_numbers = #tpu.dot_dimension_numbers<[1], [1], [0], [0], [0, 0, 1, 0], [], []>} : vector<8x8xbf16>, vector<8x8xbf16>, vector<8x8xf32> -> vector<8x8xf32>
    %cst_179 = arith.constant 0.353553385 : f32
    %400 = vector.broadcast %cst_179 : f32 to vector<8x8xf32>
    %401 = arith.mulf %399, %400 : vector<8x8xf32>
    %cst_180 = arith.constant dense<0xFF800000> : vector<8xf32>
    %402 = vector.multi_reduction <maximumf>, %401, %cst_180 [1] : vector<8x8xf32> to vector<8xf32>
    %403 = vector.shape_cast %402 : vector<8xf32> to vector<8x1xf32>
    %404 = vector.broadcast %403 : vector<8x1xf32> to vector<8x8xf32>
    %405 = arith.subf %401, %404 : vector<8x8xf32>
    %406 = math.exp %405 : vector<8x8xf32>
    %cst_181 = arith.constant dense<0.000000e+00> : vector<8xf32>
    %407 = vector.multi_reduction <add>, %406, %cst_181 [1] : vector<8x8xf32> to vector<8xf32>
    %408 = vector.shape_cast %407 : vector<8xf32> to vector<8x1xf32>
    %409 = tpu.reciprocal %408 {approx = true} : vector<8x1xf32> -> vector<8x1xf32>
    %410 = vector.broadcast %409 : vector<8x1xf32> to vector<8x8xf32>
    %411 = arith.mulf %406, %410 : vector<8x8xf32>
    %412 = vector.extract_strided_slice %373 {offsets = [0, 8], sizes = [8, 8], strides = [1, 1]} : vector<8x32xf32> to vector<8x8xf32>
    %413 = arith.truncf %411 : vector<8x8xf32> to vector<8x8xbf16>
    %414 = arith.truncf %412 : vector<8x8xf32> to vector<8x8xbf16>
    %cst_182 = arith.constant dense<0.000000e+00> : vector<8x8xf32>
    %415 = tpu.matmul %413, %414, %cst_182 {dimension_numbers = #tpu.dot_dimension_numbers<[1], [0], [0], [1], [0, 0, 1, 1], [], []>} : vector<8x8xbf16>, vector<8x8xbf16>, vector<8x8xf32> -> vector<8x8xf32>
    %416 = vector.extract_strided_slice %371 {offsets = [0, 16], sizes = [8, 8], strides = [1, 1]} : vector<8x32xf32> to vector<8x8xf32>
    %417 = vector.extract_strided_slice %372 {offsets = [0, 16], sizes = [8, 8], strides = [1, 1]} : vector<8x32xf32> to vector<8x8xf32>
    %418 = arith.truncf %416 : vector<8x8xf32> to vector<8x8xbf16>
    %419 = arith.truncf %417 : vector<8x8xf32> to vector<8x8xbf16>
    %cst_183 = arith.constant dense<0.000000e+00> : vector<8x8xf32>
    %420 = tpu.matmul %418, %419, %cst_183 {dimension_numbers = #tpu.dot_dimension_numbers<[1], [1], [0], [0], [0, 0, 1, 0], [], []>} : vector<8x8xbf16>, vector<8x8xbf16>, vector<8x8xf32> -> vector<8x8xf32>
    %cst_184 = arith.constant 0.353553385 : f32
    %421 = vector.broadcast %cst_184 : f32 to vector<8x8xf32>
    %422 = arith.mulf %420, %421 : vector<8x8xf32>
    %cst_185 = arith.constant dense<0xFF800000> : vector<8xf32>
    %423 = vector.multi_reduction <maximumf>, %422, %cst_185 [1] : vector<8x8xf32> to vector<8xf32>
    %424 = vector.shape_cast %423 : vector<8xf32> to vector<8x1xf32>
    %425 = vector.broadcast %424 : vector<8x1xf32> to vector<8x8xf32>
    %426 = arith.subf %422, %425 : vector<8x8xf32>
    %427 = math.exp %426 : vector<8x8xf32>
    %cst_186 = arith.constant dense<0.000000e+00> : vector<8xf32>
    %428 = vector.multi_reduction <add>, %427, %cst_186 [1] : vector<8x8xf32> to vector<8xf32>
    %429 = vector.shape_cast %428 : vector<8xf32> to vector<8x1xf32>
    %430 = tpu.reciprocal %429 {approx = true} : vector<8x1xf32> -> vector<8x1xf32>
    %431 = vector.broadcast %430 : vector<8x1xf32> to vector<8x8xf32>
    %432 = arith.mulf %427, %431 : vector<8x8xf32>
    %433 = vector.extract_strided_slice %373 {offsets = [0, 16], sizes = [8, 8], strides = [1, 1]} : vector<8x32xf32> to vector<8x8xf32>
    %434 = arith.truncf %432 : vector<8x8xf32> to vector<8x8xbf16>
    %435 = arith.truncf %433 : vector<8x8xf32> to vector<8x8xbf16>
    %cst_187 = arith.constant dense<0.000000e+00> : vector<8x8xf32>
    %436 = tpu.matmul %434, %435, %cst_187 {dimension_numbers = #tpu.dot_dimension_numbers<[1], [0], [0], [1], [0, 0, 1, 1], [], []>} : vector<8x8xbf16>, vector<8x8xbf16>, vector<8x8xf32> -> vector<8x8xf32>
    %437 = vector.extract_strided_slice %371 {offsets = [0, 24], sizes = [8, 8], strides = [1, 1]} : vector<8x32xf32> to vector<8x8xf32>
    %438 = vector.extract_strided_slice %372 {offsets = [0, 24], sizes = [8, 8], strides = [1, 1]} : vector<8x32xf32> to vector<8x8xf32>
    %439 = arith.truncf %437 : vector<8x8xf32> to vector<8x8xbf16>
    %440 = arith.truncf %438 : vector<8x8xf32> to vector<8x8xbf16>
    %cst_188 = arith.constant dense<0.000000e+00> : vector<8x8xf32>
    %441 = tpu.matmul %439, %440, %cst_188 {dimension_numbers = #tpu.dot_dimension_numbers<[1], [1], [0], [0], [0, 0, 1, 0], [], []>} : vector<8x8xbf16>, vector<8x8xbf16>, vector<8x8xf32> -> vector<8x8xf32>
    %cst_189 = arith.constant 0.353553385 : f32
    %442 = vector.broadcast %cst_189 : f32 to vector<8x8xf32>
    %443 = arith.mulf %441, %442 : vector<8x8xf32>
    %cst_190 = arith.constant dense<0xFF800000> : vector<8xf32>
    %444 = vector.multi_reduction <maximumf>, %443, %cst_190 [1] : vector<8x8xf32> to vector<8xf32>
    %445 = vector.shape_cast %444 : vector<8xf32> to vector<8x1xf32>
    %446 = vector.broadcast %445 : vector<8x1xf32> to vector<8x8xf32>
    %447 = arith.subf %443, %446 : vector<8x8xf32>
    %448 = math.exp %447 : vector<8x8xf32>
    %cst_191 = arith.constant dense<0.000000e+00> : vector<8xf32>
    %449 = vector.multi_reduction <add>, %448, %cst_191 [1] : vector<8x8xf32> to vector<8xf32>
    %450 = vector.shape_cast %449 : vector<8xf32> to vector<8x1xf32>
    %451 = tpu.reciprocal %450 {approx = true} : vector<8x1xf32> -> vector<8x1xf32>
    %452 = vector.broadcast %451 : vector<8x1xf32> to vector<8x8xf32>
    %453 = arith.mulf %448, %452 : vector<8x8xf32>
    %454 = vector.extract_strided_slice %373 {offsets = [0, 24], sizes = [8, 8], strides = [1, 1]} : vector<8x32xf32> to vector<8x8xf32>
    %455 = arith.truncf %453 : vector<8x8xf32> to vector<8x8xbf16>
    %456 = arith.truncf %454 : vector<8x8xf32> to vector<8x8xbf16>
    %cst_192 = arith.constant dense<0.000000e+00> : vector<8x8xf32>
    %457 = tpu.matmul %455, %456, %cst_192 {dimension_numbers = #tpu.dot_dimension_numbers<[1], [0], [0], [1], [0, 0, 1, 1], [], []>} : vector<8x8xbf16>, vector<8x8xbf16>, vector<8x8xf32> -> vector<8x8xf32>
    %458 = tpu.concatenate %394, %415, %436, %457 in 1 : vector<8x8xf32>, vector<8x8xf32>, vector<8x8xf32>, vector<8x8xf32> -> vector<8x32xf32>
    %459 = arith.truncf %458 : vector<8x32xf32> to vector<8x32xbf16>
    %cst_193 = arith.constant dense<0.000000e+00> : vector<8x32xf32>
    %460 = tpu.matmul %459, %365, %cst_193 {dimension_numbers = #tpu.dot_dimension_numbers<[1], [0], [0], [1], [0, 0, 1, 1], [], []>} : vector<8x32xbf16>, vector<32x32xbf16>, vector<8x32xf32> -> vector<8x32xf32>
    %461 = vector.broadcast %363 : vector<1x32xf32> to vector<8x32xf32>
    %462 = arith.addf %460, %461 : vector<8x32xf32>
    %463 = arith.addf %5, %462 : vector<8x32xf32>
    %cst_194 = arith.constant dense<0.000000e+00> : vector<8xf32>
    %464 = vector.multi_reduction <add>, %463, %cst_194 [1] : vector<8x32xf32> to vector<8xf32>
    %465 = vector.shape_cast %464 : vector<8xf32> to vector<8x1xf32>
    %cst_195 = arith.constant 3.200000e+01 : f32
    %466 = vector.broadcast %cst_195 : f32 to vector<8x1xf32>
    %467 = arith.divf %465, %466 : vector<8x1xf32>
    %468 = vector.broadcast %467 : vector<8x1xf32> to vector<8x32xf32>
    %469 = arith.subf %463, %468 : vector<8x32xf32>
    %470 = arith.mulf %469, %469 : vector<8x32xf32>
    %cst_196 = arith.constant dense<0.000000e+00> : vector<8xf32>
    %471 = vector.multi_reduction <add>, %470, %cst_196 [1] : vector<8x32xf32> to vector<8xf32>
    %472 = vector.shape_cast %471 : vector<8xf32> to vector<8x1xf32>
    %cst_197 = arith.constant 3.200000e+01 : f32
    %473 = vector.broadcast %cst_197 : f32 to vector<8x1xf32>
    %474 = arith.divf %472, %473 : vector<8x1xf32>
    %475 = vector.broadcast %467 : vector<8x1xf32> to vector<8x32xf32>
    %476 = arith.subf %463, %475 : vector<8x32xf32>
    %cst_198 = arith.constant 9.99999974E-6 : f32
    %477 = vector.broadcast %cst_198 : f32 to vector<8x1xf32>
    %478 = arith.addf %474, %477 : vector<8x1xf32>
    %479 = math.rsqrt %478 : vector<8x1xf32>
    %480 = vector.broadcast %479 : vector<8x1xf32> to vector<8x32xf32>
    %481 = arith.mulf %476, %480 : vector<8x32xf32>
    %482 = vector.broadcast %358 : vector<1x32xf32> to vector<8x32xf32>
    %483 = arith.mulf %481, %482 : vector<8x32xf32>
    %484 = vector.broadcast %357 : vector<1x32xf32> to vector<8x32xf32>
    %485 = arith.addf %483, %484 : vector<8x32xf32>
    %486 = arith.truncf %485 : vector<8x32xf32> to vector<8x32xbf16>
    %cst_199 = arith.constant dense<0.000000e+00> : vector<8x32xf32>
    %487 = tpu.matmul %486, %352, %cst_199 {dimension_numbers = #tpu.dot_dimension_numbers<[1], [0], [0], [1], [0, 0, 1, 1], [], []>} : vector<8x32xbf16>, vector<32x32xbf16>, vector<8x32xf32> -> vector<8x32xf32>
    %488 = vector.broadcast %349 : vector<1x32xf32> to vector<8x32xf32>
    %489 = arith.addf %487, %488 : vector<8x32xf32>
    %490 = arith.truncf %346 : vector<8x32xf32> to vector<8x32xbf16>
    %cst_200 = arith.constant dense<0.000000e+00> : vector<8x64xf32>
    %491 = tpu.matmul %490, %350, %cst_200 {dimension_numbers = #tpu.dot_dimension_numbers<[1], [0], [0], [1], [0, 0, 1, 1], [], []>} : vector<8x32xbf16>, vector<32x64xbf16>, vector<8x64xf32> -> vector<8x64xf32>
    %492 = vector.broadcast %347 : vector<1x64xf32> to vector<8x64xf32>
    %493 = arith.addf %491, %492 : vector<8x64xf32>
    %494 = vector.extract_strided_slice %493 {offsets = [0, 0], sizes = [8, 32], strides = [1, 1]} : vector<8x64xf32> to vector<8x32xf32>
    %495 = vector.extract_strided_slice %493 {offsets = [0, 32], sizes = [8, 32], strides = [1, 1]} : vector<8x64xf32> to vector<8x32xf32>
    %496 = vector.extract_strided_slice %489 {offsets = [0, 0], sizes = [8, 8], strides = [1, 1]} : vector<8x32xf32> to vector<8x8xf32>
    %497 = vector.extract_strided_slice %494 {offsets = [0, 0], sizes = [8, 8], strides = [1, 1]} : vector<8x32xf32> to vector<8x8xf32>
    %498 = arith.truncf %496 : vector<8x8xf32> to vector<8x8xbf16>
    %499 = arith.truncf %497 : vector<8x8xf32> to vector<8x8xbf16>
    %cst_201 = arith.constant dense<0.000000e+00> : vector<8x8xf32>
    %500 = tpu.matmul %498, %499, %cst_201 {dimension_numbers = #tpu.dot_dimension_numbers<[1], [1], [0], [0], [0, 0, 1, 0], [], []>} : vector<8x8xbf16>, vector<8x8xbf16>, vector<8x8xf32> -> vector<8x8xf32>
    %cst_202 = arith.constant 0.353553385 : f32
    %501 = vector.broadcast %cst_202 : f32 to vector<8x8xf32>
    %502 = arith.mulf %500, %501 : vector<8x8xf32>
    %cst_203 = arith.constant dense<0xFF800000> : vector<8xf32>
    %503 = vector.multi_reduction <maximumf>, %502, %cst_203 [1] : vector<8x8xf32> to vector<8xf32>
    %504 = vector.shape_cast %503 : vector<8xf32> to vector<8x1xf32>
    %505 = vector.broadcast %504 : vector<8x1xf32> to vector<8x8xf32>
    %506 = arith.subf %502, %505 : vector<8x8xf32>
    %507 = math.exp %506 : vector<8x8xf32>
    %cst_204 = arith.constant dense<0.000000e+00> : vector<8xf32>
    %508 = vector.multi_reduction <add>, %507, %cst_204 [1] : vector<8x8xf32> to vector<8xf32>
    %509 = vector.shape_cast %508 : vector<8xf32> to vector<8x1xf32>
    %510 = tpu.reciprocal %509 {approx = true} : vector<8x1xf32> -> vector<8x1xf32>
    %511 = vector.broadcast %510 : vector<8x1xf32> to vector<8x8xf32>
    %512 = arith.mulf %507, %511 : vector<8x8xf32>
    %513 = vector.extract_strided_slice %495 {offsets = [0, 0], sizes = [8, 8], strides = [1, 1]} : vector<8x32xf32> to vector<8x8xf32>
    %514 = arith.truncf %512 : vector<8x8xf32> to vector<8x8xbf16>
    %515 = arith.truncf %513 : vector<8x8xf32> to vector<8x8xbf16>
    %cst_205 = arith.constant dense<0.000000e+00> : vector<8x8xf32>
    %516 = tpu.matmul %514, %515, %cst_205 {dimension_numbers = #tpu.dot_dimension_numbers<[1], [0], [0], [1], [0, 0, 1, 1], [], []>} : vector<8x8xbf16>, vector<8x8xbf16>, vector<8x8xf32> -> vector<8x8xf32>
    %517 = vector.extract_strided_slice %489 {offsets = [0, 8], sizes = [8, 8], strides = [1, 1]} : vector<8x32xf32> to vector<8x8xf32>
    %518 = vector.extract_strided_slice %494 {offsets = [0, 8], sizes = [8, 8], strides = [1, 1]} : vector<8x32xf32> to vector<8x8xf32>
    %519 = arith.truncf %517 : vector<8x8xf32> to vector<8x8xbf16>
    %520 = arith.truncf %518 : vector<8x8xf32> to vector<8x8xbf16>
    %cst_206 = arith.constant dense<0.000000e+00> : vector<8x8xf32>
    %521 = tpu.matmul %519, %520, %cst_206 {dimension_numbers = #tpu.dot_dimension_numbers<[1], [1], [0], [0], [0, 0, 1, 0], [], []>} : vector<8x8xbf16>, vector<8x8xbf16>, vector<8x8xf32> -> vector<8x8xf32>
    %cst_207 = arith.constant 0.353553385 : f32
    %522 = vector.broadcast %cst_207 : f32 to vector<8x8xf32>
    %523 = arith.mulf %521, %522 : vector<8x8xf32>
    %cst_208 = arith.constant dense<0xFF800000> : vector<8xf32>
    %524 = vector.multi_reduction <maximumf>, %523, %cst_208 [1] : vector<8x8xf32> to vector<8xf32>
    %525 = vector.shape_cast %524 : vector<8xf32> to vector<8x1xf32>
    %526 = vector.broadcast %525 : vector<8x1xf32> to vector<8x8xf32>
    %527 = arith.subf %523, %526 : vector<8x8xf32>
    %528 = math.exp %527 : vector<8x8xf32>
    %cst_209 = arith.constant dense<0.000000e+00> : vector<8xf32>
    %529 = vector.multi_reduction <add>, %528, %cst_209 [1] : vector<8x8xf32> to vector<8xf32>
    %530 = vector.shape_cast %529 : vector<8xf32> to vector<8x1xf32>
    %531 = tpu.reciprocal %530 {approx = true} : vector<8x1xf32> -> vector<8x1xf32>
    %532 = vector.broadcast %531 : vector<8x1xf32> to vector<8x8xf32>
    %533 = arith.mulf %528, %532 : vector<8x8xf32>
    %534 = vector.extract_strided_slice %495 {offsets = [0, 8], sizes = [8, 8], strides = [1, 1]} : vector<8x32xf32> to vector<8x8xf32>
    %535 = arith.truncf %533 : vector<8x8xf32> to vector<8x8xbf16>
    %536 = arith.truncf %534 : vector<8x8xf32> to vector<8x8xbf16>
    %cst_210 = arith.constant dense<0.000000e+00> : vector<8x8xf32>
    %537 = tpu.matmul %535, %536, %cst_210 {dimension_numbers = #tpu.dot_dimension_numbers<[1], [0], [0], [1], [0, 0, 1, 1], [], []>} : vector<8x8xbf16>, vector<8x8xbf16>, vector<8x8xf32> -> vector<8x8xf32>
    %538 = vector.extract_strided_slice %489 {offsets = [0, 16], sizes = [8, 8], strides = [1, 1]} : vector<8x32xf32> to vector<8x8xf32>
    %539 = vector.extract_strided_slice %494 {offsets = [0, 16], sizes = [8, 8], strides = [1, 1]} : vector<8x32xf32> to vector<8x8xf32>
    %540 = arith.truncf %538 : vector<8x8xf32> to vector<8x8xbf16>
    %541 = arith.truncf %539 : vector<8x8xf32> to vector<8x8xbf16>
    %cst_211 = arith.constant dense<0.000000e+00> : vector<8x8xf32>
    %542 = tpu.matmul %540, %541, %cst_211 {dimension_numbers = #tpu.dot_dimension_numbers<[1], [1], [0], [0], [0, 0, 1, 0], [], []>} : vector<8x8xbf16>, vector<8x8xbf16>, vector<8x8xf32> -> vector<8x8xf32>
    %cst_212 = arith.constant 0.353553385 : f32
    %543 = vector.broadcast %cst_212 : f32 to vector<8x8xf32>
    %544 = arith.mulf %542, %543 : vector<8x8xf32>
    %cst_213 = arith.constant dense<0xFF800000> : vector<8xf32>
    %545 = vector.multi_reduction <maximumf>, %544, %cst_213 [1] : vector<8x8xf32> to vector<8xf32>
    %546 = vector.shape_cast %545 : vector<8xf32> to vector<8x1xf32>
    %547 = vector.broadcast %546 : vector<8x1xf32> to vector<8x8xf32>
    %548 = arith.subf %544, %547 : vector<8x8xf32>
    %549 = math.exp %548 : vector<8x8xf32>
    %cst_214 = arith.constant dense<0.000000e+00> : vector<8xf32>
    %550 = vector.multi_reduction <add>, %549, %cst_214 [1] : vector<8x8xf32> to vector<8xf32>
    %551 = vector.shape_cast %550 : vector<8xf32> to vector<8x1xf32>
    %552 = tpu.reciprocal %551 {approx = true} : vector<8x1xf32> -> vector<8x1xf32>
    %553 = vector.broadcast %552 : vector<8x1xf32> to vector<8x8xf32>
    %554 = arith.mulf %549, %553 : vector<8x8xf32>
    %555 = vector.extract_strided_slice %495 {offsets = [0, 16], sizes = [8, 8], strides = [1, 1]} : vector<8x32xf32> to vector<8x8xf32>
    %556 = arith.truncf %554 : vector<8x8xf32> to vector<8x8xbf16>
    %557 = arith.truncf %555 : vector<8x8xf32> to vector<8x8xbf16>
    %cst_215 = arith.constant dense<0.000000e+00> : vector<8x8xf32>
    %558 = tpu.matmul %556, %557, %cst_215 {dimension_numbers = #tpu.dot_dimension_numbers<[1], [0], [0], [1], [0, 0, 1, 1], [], []>} : vector<8x8xbf16>, vector<8x8xbf16>, vector<8x8xf32> -> vector<8x8xf32>
    %559 = vector.extract_strided_slice %489 {offsets = [0, 24], sizes = [8, 8], strides = [1, 1]} : vector<8x32xf32> to vector<8x8xf32>
    %560 = vector.extract_strided_slice %494 {offsets = [0, 24], sizes = [8, 8], strides = [1, 1]} : vector<8x32xf32> to vector<8x8xf32>
    %561 = arith.truncf %559 : vector<8x8xf32> to vector<8x8xbf16>
    %562 = arith.truncf %560 : vector<8x8xf32> to vector<8x8xbf16>
    %cst_216 = arith.constant dense<0.000000e+00> : vector<8x8xf32>
    %563 = tpu.matmul %561, %562, %cst_216 {dimension_numbers = #tpu.dot_dimension_numbers<[1], [1], [0], [0], [0, 0, 1, 0], [], []>} : vector<8x8xbf16>, vector<8x8xbf16>, vector<8x8xf32> -> vector<8x8xf32>
    %cst_217 = arith.constant 0.353553385 : f32
    %564 = vector.broadcast %cst_217 : f32 to vector<8x8xf32>
    %565 = arith.mulf %563, %564 : vector<8x8xf32>
    %cst_218 = arith.constant dense<0xFF800000> : vector<8xf32>
    %566 = vector.multi_reduction <maximumf>, %565, %cst_218 [1] : vector<8x8xf32> to vector<8xf32>
    %567 = vector.shape_cast %566 : vector<8xf32> to vector<8x1xf32>
    %568 = vector.broadcast %567 : vector<8x1xf32> to vector<8x8xf32>
    %569 = arith.subf %565, %568 : vector<8x8xf32>
    %570 = math.exp %569 : vector<8x8xf32>
    %cst_219 = arith.constant dense<0.000000e+00> : vector<8xf32>
    %571 = vector.multi_reduction <add>, %570, %cst_219 [1] : vector<8x8xf32> to vector<8xf32>
    %572 = vector.shape_cast %571 : vector<8xf32> to vector<8x1xf32>
    %573 = tpu.reciprocal %572 {approx = true} : vector<8x1xf32> -> vector<8x1xf32>
    %574 = vector.broadcast %573 : vector<8x1xf32> to vector<8x8xf32>
    %575 = arith.mulf %570, %574 : vector<8x8xf32>
    %576 = vector.extract_strided_slice %495 {offsets = [0, 24], sizes = [8, 8], strides = [1, 1]} : vector<8x32xf32> to vector<8x8xf32>
    %577 = arith.truncf %575 : vector<8x8xf32> to vector<8x8xbf16>
    %578 = arith.truncf %576 : vector<8x8xf32> to vector<8x8xbf16>
    %cst_220 = arith.constant dense<0.000000e+00> : vector<8x8xf32>
    %579 = tpu.matmul %577, %578, %cst_220 {dimension_numbers = #tpu.dot_dimension_numbers<[1], [0], [0], [1], [0, 0, 1, 1], [], []>} : vector<8x8xbf16>, vector<8x8xbf16>, vector<8x8xf32> -> vector<8x8xf32>
    %580 = tpu.concatenate %516, %537, %558, %579 in 1 : vector<8x8xf32>, vector<8x8xf32>, vector<8x8xf32>, vector<8x8xf32> -> vector<8x32xf32>
    %581 = arith.truncf %580 : vector<8x32xf32> to vector<8x32xbf16>
    %cst_221 = arith.constant dense<0.000000e+00> : vector<8x32xf32>
    %582 = tpu.matmul %581, %351, %cst_221 {dimension_numbers = #tpu.dot_dimension_numbers<[1], [0], [0], [1], [0, 0, 1, 1], [], []>} : vector<8x32xbf16>, vector<32x32xbf16>, vector<8x32xf32> -> vector<8x32xf32>
    %583 = vector.broadcast %348 : vector<1x32xf32> to vector<8x32xf32>
    %584 = arith.addf %582, %583 : vector<8x32xf32>
    %585 = arith.addf %485, %584 : vector<8x32xf32>
    %cst_222 = arith.constant dense<0.000000e+00> : vector<8xf32>
    %586 = vector.multi_reduction <add>, %585, %cst_222 [1] : vector<8x32xf32> to vector<8xf32>
    %587 = vector.shape_cast %586 : vector<8xf32> to vector<8x1xf32>
    %cst_223 = arith.constant 3.200000e+01 : f32
    %588 = vector.broadcast %cst_223 : f32 to vector<8x1xf32>
    %589 = arith.divf %587, %588 : vector<8x1xf32>
    %590 = vector.broadcast %589 : vector<8x1xf32> to vector<8x32xf32>
    %591 = arith.subf %585, %590 : vector<8x32xf32>
    %592 = arith.mulf %591, %591 : vector<8x32xf32>
    %cst_224 = arith.constant dense<0.000000e+00> : vector<8xf32>
    %593 = vector.multi_reduction <add>, %592, %cst_224 [1] : vector<8x32xf32> to vector<8xf32>
    %594 = vector.shape_cast %593 : vector<8xf32> to vector<8x1xf32>
    %cst_225 = arith.constant 3.200000e+01 : f32
    %595 = vector.broadcast %cst_225 : f32 to vector<8x1xf32>
    %596 = arith.divf %594, %595 : vector<8x1xf32>
    %597 = vector.broadcast %589 : vector<8x1xf32> to vector<8x32xf32>
    %598 = arith.subf %585, %597 : vector<8x32xf32>
    %cst_226 = arith.constant 9.99999974E-6 : f32
    %599 = vector.broadcast %cst_226 : f32 to vector<8x1xf32>
    %600 = arith.addf %596, %599 : vector<8x1xf32>
    %601 = math.rsqrt %600 : vector<8x1xf32>
    %602 = vector.broadcast %601 : vector<8x1xf32> to vector<8x32xf32>
    %603 = arith.mulf %598, %602 : vector<8x32xf32>
    %604 = vector.broadcast %360 : vector<1x32xf32> to vector<8x32xf32>
    %605 = arith.mulf %603, %604 : vector<8x32xf32>
    %606 = vector.broadcast %359 : vector<1x32xf32> to vector<8x32xf32>
    %607 = arith.addf %605, %606 : vector<8x32xf32>
    %608 = arith.truncf %607 : vector<8x32xf32> to vector<8x32xbf16>
    %cst_227 = arith.constant dense<0.000000e+00> : vector<8x64xf32>
    %609 = tpu.matmul %608, %354, %cst_227 {dimension_numbers = #tpu.dot_dimension_numbers<[1], [0], [0], [1], [0, 0, 1, 1], [], []>} : vector<8x32xbf16>, vector<32x64xbf16>, vector<8x64xf32> -> vector<8x64xf32>
    %610 = vector.broadcast %353 : vector<1x64xf32> to vector<8x64xf32>
    %611 = arith.addf %609, %610 : vector<8x64xf32>
    %cst_228 = arith.constant 0.000000e+00 : f32
    %612 = vector.broadcast %cst_228 : f32 to vector<8x64xf32>
    %613 = arith.maximumf %611, %612 : vector<8x64xf32>
    %614 = arith.truncf %613 : vector<8x64xf32> to vector<8x64xbf16>
    %cst_229 = arith.constant dense<0.000000e+00> : vector<8x32xf32>
    %615 = tpu.matmul %614, %356, %cst_229 {dimension_numbers = #tpu.dot_dimension_numbers<[1], [0], [0], [1], [0, 0, 1, 1], [], []>} : vector<8x64xbf16>, vector<64x32xbf16>, vector<8x32xf32> -> vector<8x32xf32>
    %616 = vector.broadcast %355 : vector<1x32xf32> to vector<8x32xf32>
    %617 = arith.addf %615, %616 : vector<8x32xf32>
    %618 = arith.addf %607, %617 : vector<8x32xf32>
    %cst_230 = arith.constant dense<0.000000e+00> : vector<8xf32>
    %619 = vector.multi_reduction <add>, %618, %cst_230 [1] : vector<8x32xf32> to vector<8xf32>
    %620 = vector.shape_cast %619 : vector<8xf32> to vector<8x1xf32>
    %cst_231 = arith.constant 3.200000e+01 : f32
    %621 = vector.broadcast %cst_231 : f32 to vector<8x1xf32>
    %622 = arith.divf %620, %621 : vector<8x1xf32>
    %623 = vector.broadcast %622 : vector<8x1xf32> to vector<8x32xf32>
    %624 = arith.subf %618, %623 : vector<8x32xf32>
    %625 = arith.mulf %624, %624 : vector<8x32xf32>
    %cst_232 = arith.constant dense<0.000000e+00> : vector<8xf32>
    %626 = vector.multi_reduction <add>, %625, %cst_232 [1] : vector<8x32xf32> to vector<8xf32>
    %627 = vector.shape_cast %626 : vector<8xf32> to vector<8x1xf32>
    %cst_233 = arith.constant 3.200000e+01 : f32
    %628 = vector.broadcast %cst_233 : f32 to vector<8x1xf32>
    %629 = arith.divf %627, %628 : vector<8x1xf32>
    %630 = vector.broadcast %622 : vector<8x1xf32> to vector<8x32xf32>
    %631 = arith.subf %618, %630 : vector<8x32xf32>
    %cst_234 = arith.constant 9.99999974E-6 : f32
    %632 = vector.broadcast %cst_234 : f32 to vector<8x1xf32>
    %633 = arith.addf %629, %632 : vector<8x1xf32>
    %634 = math.rsqrt %633 : vector<8x1xf32>
    %635 = vector.broadcast %634 : vector<8x1xf32> to vector<8x32xf32>
    %636 = arith.mulf %631, %635 : vector<8x32xf32>
    %637 = vector.broadcast %362 : vector<1x32xf32> to vector<8x32xf32>
    %638 = arith.mulf %636, %637 : vector<8x32xf32>
    %639 = vector.broadcast %361 : vector<1x32xf32> to vector<8x32xf32>
    %640 = arith.addf %638, %639 : vector<8x32xf32>
    %c0_235 = arith.constant 0 : index
    %c0_236 = arith.constant 0 : index
    %641 = vector.load %arg24[%c0_235, %c0_236] : memref<1x64xf32, #tpu.memory_space<vmem>>, vector<1x64xf32>
    %c0_237 = arith.constant 0 : index
    %c0_238 = arith.constant 0 : index
    %642 = vector.load %arg25[%c0_237, %c0_238] : memref<1x32xf32, #tpu.memory_space<vmem>>, vector<1x32xf32>
    %c0_239 = arith.constant 0 : index
    %c0_240 = arith.constant 0 : index
    %643 = vector.load %arg26[%c0_239, %c0_240] : memref<1x32xf32, #tpu.memory_space<vmem>>, vector<1x32xf32>
    %c0_241 = arith.constant 0 : index
    %c0_242 = arith.constant 0 : index
    %644 = vector.load %arg27[%c0_241, %c0_242] : memref<32x64xbf16, #tpu.memory_space<vmem>>, vector<32x64xbf16>
    %c0_243 = arith.constant 0 : index
    %c0_244 = arith.constant 0 : index
    %645 = vector.load %arg28[%c0_243, %c0_244] : memref<32x32xbf16, #tpu.memory_space<vmem>>, vector<32x32xbf16>
    %c0_245 = arith.constant 0 : index
    %c0_246 = arith.constant 0 : index
    %646 = vector.load %arg29[%c0_245, %c0_246] : memref<32x32xbf16, #tpu.memory_space<vmem>>, vector<32x32xbf16>
    %c0_247 = arith.constant 0 : index
    %c0_248 = arith.constant 0 : index
    %647 = vector.load %arg30[%c0_247, %c0_248] : memref<1x64xf32, #tpu.memory_space<vmem>>, vector<1x64xf32>
    %c0_249 = arith.constant 0 : index
    %c0_250 = arith.constant 0 : index
    %648 = vector.load %arg31[%c0_249, %c0_250] : memref<32x64xbf16, #tpu.memory_space<vmem>>, vector<32x64xbf16>
    %c0_251 = arith.constant 0 : index
    %c0_252 = arith.constant 0 : index
    %649 = vector.load %arg32[%c0_251, %c0_252] : memref<1x32xf32, #tpu.memory_space<vmem>>, vector<1x32xf32>
    %c0_253 = arith.constant 0 : index
    %c0_254 = arith.constant 0 : index
    %650 = vector.load %arg33[%c0_253, %c0_254] : memref<64x32xbf16, #tpu.memory_space<vmem>>, vector<64x32xbf16>
    %c0_255 = arith.constant 0 : index
    %c0_256 = arith.constant 0 : index
    %651 = vector.load %arg34[%c0_255, %c0_256] : memref<1x32xf32, #tpu.memory_space<vmem>>, vector<1x32xf32>
    %c0_257 = arith.constant 0 : index
    %c0_258 = arith.constant 0 : index
    %652 = vector.load %arg35[%c0_257, %c0_258] : memref<1x32xf32, #tpu.memory_space<vmem>>, vector<1x32xf32>
    %c0_259 = arith.constant 0 : index
    %c0_260 = arith.constant 0 : index
    %653 = vector.load %arg36[%c0_259, %c0_260] : memref<1x32xf32, #tpu.memory_space<vmem>>, vector<1x32xf32>
    %c0_261 = arith.constant 0 : index
    %c0_262 = arith.constant 0 : index
    %654 = vector.load %arg37[%c0_261, %c0_262] : memref<1x32xf32, #tpu.memory_space<vmem>>, vector<1x32xf32>
    %c0_263 = arith.constant 0 : index
    %c0_264 = arith.constant 0 : index
    %655 = vector.load %arg38[%c0_263, %c0_264] : memref<1x32xf32, #tpu.memory_space<vmem>>, vector<1x32xf32>
    %c0_265 = arith.constant 0 : index
    %c0_266 = arith.constant 0 : index
    %656 = vector.load %arg39[%c0_265, %c0_266] : memref<1x32xf32, #tpu.memory_space<vmem>>, vector<1x32xf32>
    %c0_267 = arith.constant 0 : index
    %c0_268 = arith.constant 0 : index
    %657 = vector.load %arg40[%c0_267, %c0_268] : memref<1x32xf32, #tpu.memory_space<vmem>>, vector<1x32xf32>
    %c0_269 = arith.constant 0 : index
    %c0_270 = arith.constant 0 : index
    %658 = vector.load %arg41[%c0_269, %c0_270] : memref<1x96xf32, #tpu.memory_space<vmem>>, vector<1x96xf32>
    %c0_271 = arith.constant 0 : index
    %c0_272 = arith.constant 0 : index
    %659 = vector.load %arg42[%c0_271, %c0_272] : memref<32x32xbf16, #tpu.memory_space<vmem>>, vector<32x32xbf16>
    %c0_273 = arith.constant 0 : index
    %c0_274 = arith.constant 0 : index
    %660 = vector.load %arg43[%c0_273, %c0_274] : memref<32x96xbf16, #tpu.memory_space<vmem>>, vector<32x96xbf16>
    %661 = arith.truncf %640 : vector<8x32xf32> to vector<8x32xbf16>
    %cst_275 = arith.constant dense<0.000000e+00> : vector<8x96xf32>
    %662 = tpu.matmul %661, %660, %cst_275 {dimension_numbers = #tpu.dot_dimension_numbers<[1], [0], [0], [1], [0, 0, 1, 1], [], []>} : vector<8x32xbf16>, vector<32x96xbf16>, vector<8x96xf32> -> vector<8x96xf32>
    %663 = vector.broadcast %658 : vector<1x96xf32> to vector<8x96xf32>
    %664 = arith.addf %662, %663 : vector<8x96xf32>
    %665 = vector.extract_strided_slice %664 {offsets = [0, 0], sizes = [8, 32], strides = [1, 1]} : vector<8x96xf32> to vector<8x32xf32>
    %666 = vector.extract_strided_slice %664 {offsets = [0, 32], sizes = [8, 32], strides = [1, 1]} : vector<8x96xf32> to vector<8x32xf32>
    %667 = vector.extract_strided_slice %664 {offsets = [0, 64], sizes = [8, 32], strides = [1, 1]} : vector<8x96xf32> to vector<8x32xf32>
    %668 = vector.extract_strided_slice %665 {offsets = [0, 0], sizes = [8, 8], strides = [1, 1]} : vector<8x32xf32> to vector<8x8xf32>
    %669 = vector.extract_strided_slice %666 {offsets = [0, 0], sizes = [8, 8], strides = [1, 1]} : vector<8x32xf32> to vector<8x8xf32>
    %670 = arith.truncf %668 : vector<8x8xf32> to vector<8x8xbf16>
    %671 = arith.truncf %669 : vector<8x8xf32> to vector<8x8xbf16>
    %cst_276 = arith.constant dense<0.000000e+00> : vector<8x8xf32>
    %672 = tpu.matmul %670, %671, %cst_276 {dimension_numbers = #tpu.dot_dimension_numbers<[1], [1], [0], [0], [0, 0, 1, 0], [], []>} : vector<8x8xbf16>, vector<8x8xbf16>, vector<8x8xf32> -> vector<8x8xf32>
    %cst_277 = arith.constant 0.353553385 : f32
    %673 = vector.broadcast %cst_277 : f32 to vector<8x8xf32>
    %674 = arith.mulf %672, %673 : vector<8x8xf32>
    %cst_278 = arith.constant dense<0xFF800000> : vector<8xf32>
    %675 = vector.multi_reduction <maximumf>, %674, %cst_278 [1] : vector<8x8xf32> to vector<8xf32>
    %676 = vector.shape_cast %675 : vector<8xf32> to vector<8x1xf32>
    %677 = vector.broadcast %676 : vector<8x1xf32> to vector<8x8xf32>
    %678 = arith.subf %674, %677 : vector<8x8xf32>
    %679 = math.exp %678 : vector<8x8xf32>
    %cst_279 = arith.constant dense<0.000000e+00> : vector<8xf32>
    %680 = vector.multi_reduction <add>, %679, %cst_279 [1] : vector<8x8xf32> to vector<8xf32>
    %681 = vector.shape_cast %680 : vector<8xf32> to vector<8x1xf32>
    %682 = tpu.reciprocal %681 {approx = true} : vector<8x1xf32> -> vector<8x1xf32>
    %683 = vector.broadcast %682 : vector<8x1xf32> to vector<8x8xf32>
    %684 = arith.mulf %679, %683 : vector<8x8xf32>
    %685 = vector.extract_strided_slice %667 {offsets = [0, 0], sizes = [8, 8], strides = [1, 1]} : vector<8x32xf32> to vector<8x8xf32>
    %686 = arith.truncf %684 : vector<8x8xf32> to vector<8x8xbf16>
    %687 = arith.truncf %685 : vector<8x8xf32> to vector<8x8xbf16>
    %cst_280 = arith.constant dense<0.000000e+00> : vector<8x8xf32>
    %688 = tpu.matmul %686, %687, %cst_280 {dimension_numbers = #tpu.dot_dimension_numbers<[1], [0], [0], [1], [0, 0, 1, 1], [], []>} : vector<8x8xbf16>, vector<8x8xbf16>, vector<8x8xf32> -> vector<8x8xf32>
    %689 = vector.extract_strided_slice %665 {offsets = [0, 8], sizes = [8, 8], strides = [1, 1]} : vector<8x32xf32> to vector<8x8xf32>
    %690 = vector.extract_strided_slice %666 {offsets = [0, 8], sizes = [8, 8], strides = [1, 1]} : vector<8x32xf32> to vector<8x8xf32>
    %691 = arith.truncf %689 : vector<8x8xf32> to vector<8x8xbf16>
    %692 = arith.truncf %690 : vector<8x8xf32> to vector<8x8xbf16>
    %cst_281 = arith.constant dense<0.000000e+00> : vector<8x8xf32>
    %693 = tpu.matmul %691, %692, %cst_281 {dimension_numbers = #tpu.dot_dimension_numbers<[1], [1], [0], [0], [0, 0, 1, 0], [], []>} : vector<8x8xbf16>, vector<8x8xbf16>, vector<8x8xf32> -> vector<8x8xf32>
    %cst_282 = arith.constant 0.353553385 : f32
    %694 = vector.broadcast %cst_282 : f32 to vector<8x8xf32>
    %695 = arith.mulf %693, %694 : vector<8x8xf32>
    %cst_283 = arith.constant dense<0xFF800000> : vector<8xf32>
    %696 = vector.multi_reduction <maximumf>, %695, %cst_283 [1] : vector<8x8xf32> to vector<8xf32>
    %697 = vector.shape_cast %696 : vector<8xf32> to vector<8x1xf32>
    %698 = vector.broadcast %697 : vector<8x1xf32> to vector<8x8xf32>
    %699 = arith.subf %695, %698 : vector<8x8xf32>
    %700 = math.exp %699 : vector<8x8xf32>
    %cst_284 = arith.constant dense<0.000000e+00> : vector<8xf32>
    %701 = vector.multi_reduction <add>, %700, %cst_284 [1] : vector<8x8xf32> to vector<8xf32>
    %702 = vector.shape_cast %701 : vector<8xf32> to vector<8x1xf32>
    %703 = tpu.reciprocal %702 {approx = true} : vector<8x1xf32> -> vector<8x1xf32>
    %704 = vector.broadcast %703 : vector<8x1xf32> to vector<8x8xf32>
    %705 = arith.mulf %700, %704 : vector<8x8xf32>
    %706 = vector.extract_strided_slice %667 {offsets = [0, 8], sizes = [8, 8], strides = [1, 1]} : vector<8x32xf32> to vector<8x8xf32>
    %707 = arith.truncf %705 : vector<8x8xf32> to vector<8x8xbf16>
    %708 = arith.truncf %706 : vector<8x8xf32> to vector<8x8xbf16>
    %cst_285 = arith.constant dense<0.000000e+00> : vector<8x8xf32>
    %709 = tpu.matmul %707, %708, %cst_285 {dimension_numbers = #tpu.dot_dimension_numbers<[1], [0], [0], [1], [0, 0, 1, 1], [], []>} : vector<8x8xbf16>, vector<8x8xbf16>, vector<8x8xf32> -> vector<8x8xf32>
    %710 = vector.extract_strided_slice %665 {offsets = [0, 16], sizes = [8, 8], strides = [1, 1]} : vector<8x32xf32> to vector<8x8xf32>
    %711 = vector.extract_strided_slice %666 {offsets = [0, 16], sizes = [8, 8], strides = [1, 1]} : vector<8x32xf32> to vector<8x8xf32>
    %712 = arith.truncf %710 : vector<8x8xf32> to vector<8x8xbf16>
    %713 = arith.truncf %711 : vector<8x8xf32> to vector<8x8xbf16>
    %cst_286 = arith.constant dense<0.000000e+00> : vector<8x8xf32>
    %714 = tpu.matmul %712, %713, %cst_286 {dimension_numbers = #tpu.dot_dimension_numbers<[1], [1], [0], [0], [0, 0, 1, 0], [], []>} : vector<8x8xbf16>, vector<8x8xbf16>, vector<8x8xf32> -> vector<8x8xf32>
    %cst_287 = arith.constant 0.353553385 : f32
    %715 = vector.broadcast %cst_287 : f32 to vector<8x8xf32>
    %716 = arith.mulf %714, %715 : vector<8x8xf32>
    %cst_288 = arith.constant dense<0xFF800000> : vector<8xf32>
    %717 = vector.multi_reduction <maximumf>, %716, %cst_288 [1] : vector<8x8xf32> to vector<8xf32>
    %718 = vector.shape_cast %717 : vector<8xf32> to vector<8x1xf32>
    %719 = vector.broadcast %718 : vector<8x1xf32> to vector<8x8xf32>
    %720 = arith.subf %716, %719 : vector<8x8xf32>
    %721 = math.exp %720 : vector<8x8xf32>
    %cst_289 = arith.constant dense<0.000000e+00> : vector<8xf32>
    %722 = vector.multi_reduction <add>, %721, %cst_289 [1] : vector<8x8xf32> to vector<8xf32>
    %723 = vector.shape_cast %722 : vector<8xf32> to vector<8x1xf32>
    %724 = tpu.reciprocal %723 {approx = true} : vector<8x1xf32> -> vector<8x1xf32>
    %725 = vector.broadcast %724 : vector<8x1xf32> to vector<8x8xf32>
    %726 = arith.mulf %721, %725 : vector<8x8xf32>
    %727 = vector.extract_strided_slice %667 {offsets = [0, 16], sizes = [8, 8], strides = [1, 1]} : vector<8x32xf32> to vector<8x8xf32>
    %728 = arith.truncf %726 : vector<8x8xf32> to vector<8x8xbf16>
    %729 = arith.truncf %727 : vector<8x8xf32> to vector<8x8xbf16>
    %cst_290 = arith.constant dense<0.000000e+00> : vector<8x8xf32>
    %730 = tpu.matmul %728, %729, %cst_290 {dimension_numbers = #tpu.dot_dimension_numbers<[1], [0], [0], [1], [0, 0, 1, 1], [], []>} : vector<8x8xbf16>, vector<8x8xbf16>, vector<8x8xf32> -> vector<8x8xf32>
    %731 = vector.extract_strided_slice %665 {offsets = [0, 24], sizes = [8, 8], strides = [1, 1]} : vector<8x32xf32> to vector<8x8xf32>
    %732 = vector.extract_strided_slice %666 {offsets = [0, 24], sizes = [8, 8], strides = [1, 1]} : vector<8x32xf32> to vector<8x8xf32>
    %733 = arith.truncf %731 : vector<8x8xf32> to vector<8x8xbf16>
    %734 = arith.truncf %732 : vector<8x8xf32> to vector<8x8xbf16>
    %cst_291 = arith.constant dense<0.000000e+00> : vector<8x8xf32>
    %735 = tpu.matmul %733, %734, %cst_291 {dimension_numbers = #tpu.dot_dimension_numbers<[1], [1], [0], [0], [0, 0, 1, 0], [], []>} : vector<8x8xbf16>, vector<8x8xbf16>, vector<8x8xf32> -> vector<8x8xf32>
    %cst_292 = arith.constant 0.353553385 : f32
    %736 = vector.broadcast %cst_292 : f32 to vector<8x8xf32>
    %737 = arith.mulf %735, %736 : vector<8x8xf32>
    %cst_293 = arith.constant dense<0xFF800000> : vector<8xf32>
    %738 = vector.multi_reduction <maximumf>, %737, %cst_293 [1] : vector<8x8xf32> to vector<8xf32>
    %739 = vector.shape_cast %738 : vector<8xf32> to vector<8x1xf32>
    %740 = vector.broadcast %739 : vector<8x1xf32> to vector<8x8xf32>
    %741 = arith.subf %737, %740 : vector<8x8xf32>
    %742 = math.exp %741 : vector<8x8xf32>
    %cst_294 = arith.constant dense<0.000000e+00> : vector<8xf32>
    %743 = vector.multi_reduction <add>, %742, %cst_294 [1] : vector<8x8xf32> to vector<8xf32>
    %744 = vector.shape_cast %743 : vector<8xf32> to vector<8x1xf32>
    %745 = tpu.reciprocal %744 {approx = true} : vector<8x1xf32> -> vector<8x1xf32>
    %746 = vector.broadcast %745 : vector<8x1xf32> to vector<8x8xf32>
    %747 = arith.mulf %742, %746 : vector<8x8xf32>
    %748 = vector.extract_strided_slice %667 {offsets = [0, 24], sizes = [8, 8], strides = [1, 1]} : vector<8x32xf32> to vector<8x8xf32>
    %749 = arith.truncf %747 : vector<8x8xf32> to vector<8x8xbf16>
    %750 = arith.truncf %748 : vector<8x8xf32> to vector<8x8xbf16>
    %cst_295 = arith.constant dense<0.000000e+00> : vector<8x8xf32>
    %751 = tpu.matmul %749, %750, %cst_295 {dimension_numbers = #tpu.dot_dimension_numbers<[1], [0], [0], [1], [0, 0, 1, 1], [], []>} : vector<8x8xbf16>, vector<8x8xbf16>, vector<8x8xf32> -> vector<8x8xf32>
    %752 = tpu.concatenate %688, %709, %730, %751 in 1 : vector<8x8xf32>, vector<8x8xf32>, vector<8x8xf32>, vector<8x8xf32> -> vector<8x32xf32>
    %753 = arith.truncf %752 : vector<8x32xf32> to vector<8x32xbf16>
    %cst_296 = arith.constant dense<0.000000e+00> : vector<8x32xf32>
    %754 = tpu.matmul %753, %659, %cst_296 {dimension_numbers = #tpu.dot_dimension_numbers<[1], [0], [0], [1], [0, 0, 1, 1], [], []>} : vector<8x32xbf16>, vector<32x32xbf16>, vector<8x32xf32> -> vector<8x32xf32>
    %755 = vector.broadcast %657 : vector<1x32xf32> to vector<8x32xf32>
    %756 = arith.addf %754, %755 : vector<8x32xf32>
    %757 = arith.addf %640, %756 : vector<8x32xf32>
    %cst_297 = arith.constant dense<0.000000e+00> : vector<8xf32>
    %758 = vector.multi_reduction <add>, %757, %cst_297 [1] : vector<8x32xf32> to vector<8xf32>
    %759 = vector.shape_cast %758 : vector<8xf32> to vector<8x1xf32>
    %cst_298 = arith.constant 3.200000e+01 : f32
    %760 = vector.broadcast %cst_298 : f32 to vector<8x1xf32>
    %761 = arith.divf %759, %760 : vector<8x1xf32>
    %762 = vector.broadcast %761 : vector<8x1xf32> to vector<8x32xf32>
    %763 = arith.subf %757, %762 : vector<8x32xf32>
    %764 = arith.mulf %763, %763 : vector<8x32xf32>
    %cst_299 = arith.constant dense<0.000000e+00> : vector<8xf32>
    %765 = vector.multi_reduction <add>, %764, %cst_299 [1] : vector<8x32xf32> to vector<8xf32>
    %766 = vector.shape_cast %765 : vector<8xf32> to vector<8x1xf32>
    %cst_300 = arith.constant 3.200000e+01 : f32
    %767 = vector.broadcast %cst_300 : f32 to vector<8x1xf32>
    %768 = arith.divf %766, %767 : vector<8x1xf32>
    %769 = vector.broadcast %761 : vector<8x1xf32> to vector<8x32xf32>
    %770 = arith.subf %757, %769 : vector<8x32xf32>
    %cst_301 = arith.constant 9.99999974E-6 : f32
    %771 = vector.broadcast %cst_301 : f32 to vector<8x1xf32>
    %772 = arith.addf %768, %771 : vector<8x1xf32>
    %773 = math.rsqrt %772 : vector<8x1xf32>
    %774 = vector.broadcast %773 : vector<8x1xf32> to vector<8x32xf32>
    %775 = arith.mulf %770, %774 : vector<8x32xf32>
    %776 = vector.broadcast %652 : vector<1x32xf32> to vector<8x32xf32>
    %777 = arith.mulf %775, %776 : vector<8x32xf32>
    %778 = vector.broadcast %651 : vector<1x32xf32> to vector<8x32xf32>
    %779 = arith.addf %777, %778 : vector<8x32xf32>
    %780 = arith.truncf %779 : vector<8x32xf32> to vector<8x32xbf16>
    %cst_302 = arith.constant dense<0.000000e+00> : vector<8x32xf32>
    %781 = tpu.matmul %780, %646, %cst_302 {dimension_numbers = #tpu.dot_dimension_numbers<[1], [0], [0], [1], [0, 0, 1, 1], [], []>} : vector<8x32xbf16>, vector<32x32xbf16>, vector<8x32xf32> -> vector<8x32xf32>
    %782 = vector.broadcast %643 : vector<1x32xf32> to vector<8x32xf32>
    %783 = arith.addf %781, %782 : vector<8x32xf32>
    %784 = arith.truncf %346 : vector<8x32xf32> to vector<8x32xbf16>
    %cst_303 = arith.constant dense<0.000000e+00> : vector<8x64xf32>
    %785 = tpu.matmul %784, %644, %cst_303 {dimension_numbers = #tpu.dot_dimension_numbers<[1], [0], [0], [1], [0, 0, 1, 1], [], []>} : vector<8x32xbf16>, vector<32x64xbf16>, vector<8x64xf32> -> vector<8x64xf32>
    %786 = vector.broadcast %641 : vector<1x64xf32> to vector<8x64xf32>
    %787 = arith.addf %785, %786 : vector<8x64xf32>
    %788 = vector.extract_strided_slice %787 {offsets = [0, 0], sizes = [8, 32], strides = [1, 1]} : vector<8x64xf32> to vector<8x32xf32>
    %789 = vector.extract_strided_slice %787 {offsets = [0, 32], sizes = [8, 32], strides = [1, 1]} : vector<8x64xf32> to vector<8x32xf32>
    %790 = vector.extract_strided_slice %783 {offsets = [0, 0], sizes = [8, 8], strides = [1, 1]} : vector<8x32xf32> to vector<8x8xf32>
    %791 = vector.extract_strided_slice %788 {offsets = [0, 0], sizes = [8, 8], strides = [1, 1]} : vector<8x32xf32> to vector<8x8xf32>
    %792 = arith.truncf %790 : vector<8x8xf32> to vector<8x8xbf16>
    %793 = arith.truncf %791 : vector<8x8xf32> to vector<8x8xbf16>
    %cst_304 = arith.constant dense<0.000000e+00> : vector<8x8xf32>
    %794 = tpu.matmul %792, %793, %cst_304 {dimension_numbers = #tpu.dot_dimension_numbers<[1], [1], [0], [0], [0, 0, 1, 0], [], []>} : vector<8x8xbf16>, vector<8x8xbf16>, vector<8x8xf32> -> vector<8x8xf32>
    %cst_305 = arith.constant 0.353553385 : f32
    %795 = vector.broadcast %cst_305 : f32 to vector<8x8xf32>
    %796 = arith.mulf %794, %795 : vector<8x8xf32>
    %cst_306 = arith.constant dense<0xFF800000> : vector<8xf32>
    %797 = vector.multi_reduction <maximumf>, %796, %cst_306 [1] : vector<8x8xf32> to vector<8xf32>
    %798 = vector.shape_cast %797 : vector<8xf32> to vector<8x1xf32>
    %799 = vector.broadcast %798 : vector<8x1xf32> to vector<8x8xf32>
    %800 = arith.subf %796, %799 : vector<8x8xf32>
    %801 = math.exp %800 : vector<8x8xf32>
    %cst_307 = arith.constant dense<0.000000e+00> : vector<8xf32>
    %802 = vector.multi_reduction <add>, %801, %cst_307 [1] : vector<8x8xf32> to vector<8xf32>
    %803 = vector.shape_cast %802 : vector<8xf32> to vector<8x1xf32>
    %804 = tpu.reciprocal %803 {approx = true} : vector<8x1xf32> -> vector<8x1xf32>
    %805 = vector.broadcast %804 : vector<8x1xf32> to vector<8x8xf32>
    %806 = arith.mulf %801, %805 : vector<8x8xf32>
    %807 = vector.extract_strided_slice %789 {offsets = [0, 0], sizes = [8, 8], strides = [1, 1]} : vector<8x32xf32> to vector<8x8xf32>
    %808 = arith.truncf %806 : vector<8x8xf32> to vector<8x8xbf16>
    %809 = arith.truncf %807 : vector<8x8xf32> to vector<8x8xbf16>
    %cst_308 = arith.constant dense<0.000000e+00> : vector<8x8xf32>
    %810 = tpu.matmul %808, %809, %cst_308 {dimension_numbers = #tpu.dot_dimension_numbers<[1], [0], [0], [1], [0, 0, 1, 1], [], []>} : vector<8x8xbf16>, vector<8x8xbf16>, vector<8x8xf32> -> vector<8x8xf32>
    %811 = vector.extract_strided_slice %783 {offsets = [0, 8], sizes = [8, 8], strides = [1, 1]} : vector<8x32xf32> to vector<8x8xf32>
    %812 = vector.extract_strided_slice %788 {offsets = [0, 8], sizes = [8, 8], strides = [1, 1]} : vector<8x32xf32> to vector<8x8xf32>
    %813 = arith.truncf %811 : vector<8x8xf32> to vector<8x8xbf16>
    %814 = arith.truncf %812 : vector<8x8xf32> to vector<8x8xbf16>
    %cst_309 = arith.constant dense<0.000000e+00> : vector<8x8xf32>
    %815 = tpu.matmul %813, %814, %cst_309 {dimension_numbers = #tpu.dot_dimension_numbers<[1], [1], [0], [0], [0, 0, 1, 0], [], []>} : vector<8x8xbf16>, vector<8x8xbf16>, vector<8x8xf32> -> vector<8x8xf32>
    %cst_310 = arith.constant 0.353553385 : f32
    %816 = vector.broadcast %cst_310 : f32 to vector<8x8xf32>
    %817 = arith.mulf %815, %816 : vector<8x8xf32>
    %cst_311 = arith.constant dense<0xFF800000> : vector<8xf32>
    %818 = vector.multi_reduction <maximumf>, %817, %cst_311 [1] : vector<8x8xf32> to vector<8xf32>
    %819 = vector.shape_cast %818 : vector<8xf32> to vector<8x1xf32>
    %820 = vector.broadcast %819 : vector<8x1xf32> to vector<8x8xf32>
    %821 = arith.subf %817, %820 : vector<8x8xf32>
    %822 = math.exp %821 : vector<8x8xf32>
    %cst_312 = arith.constant dense<0.000000e+00> : vector<8xf32>
    %823 = vector.multi_reduction <add>, %822, %cst_312 [1] : vector<8x8xf32> to vector<8xf32>
    %824 = vector.shape_cast %823 : vector<8xf32> to vector<8x1xf32>
    %825 = tpu.reciprocal %824 {approx = true} : vector<8x1xf32> -> vector<8x1xf32>
    %826 = vector.broadcast %825 : vector<8x1xf32> to vector<8x8xf32>
    %827 = arith.mulf %822, %826 : vector<8x8xf32>
    %828 = vector.extract_strided_slice %789 {offsets = [0, 8], sizes = [8, 8], strides = [1, 1]} : vector<8x32xf32> to vector<8x8xf32>
    %829 = arith.truncf %827 : vector<8x8xf32> to vector<8x8xbf16>
    %830 = arith.truncf %828 : vector<8x8xf32> to vector<8x8xbf16>
    %cst_313 = arith.constant dense<0.000000e+00> : vector<8x8xf32>
    %831 = tpu.matmul %829, %830, %cst_313 {dimension_numbers = #tpu.dot_dimension_numbers<[1], [0], [0], [1], [0, 0, 1, 1], [], []>} : vector<8x8xbf16>, vector<8x8xbf16>, vector<8x8xf32> -> vector<8x8xf32>
    %832 = vector.extract_strided_slice %783 {offsets = [0, 16], sizes = [8, 8], strides = [1, 1]} : vector<8x32xf32> to vector<8x8xf32>
    %833 = vector.extract_strided_slice %788 {offsets = [0, 16], sizes = [8, 8], strides = [1, 1]} : vector<8x32xf32> to vector<8x8xf32>
    %834 = arith.truncf %832 : vector<8x8xf32> to vector<8x8xbf16>
    %835 = arith.truncf %833 : vector<8x8xf32> to vector<8x8xbf16>
    %cst_314 = arith.constant dense<0.000000e+00> : vector<8x8xf32>
    %836 = tpu.matmul %834, %835, %cst_314 {dimension_numbers = #tpu.dot_dimension_numbers<[1], [1], [0], [0], [0, 0, 1, 0], [], []>} : vector<8x8xbf16>, vector<8x8xbf16>, vector<8x8xf32> -> vector<8x8xf32>
    %cst_315 = arith.constant 0.353553385 : f32
    %837 = vector.broadcast %cst_315 : f32 to vector<8x8xf32>
    %838 = arith.mulf %836, %837 : vector<8x8xf32>
    %cst_316 = arith.constant dense<0xFF800000> : vector<8xf32>
    %839 = vector.multi_reduction <maximumf>, %838, %cst_316 [1] : vector<8x8xf32> to vector<8xf32>
    %840 = vector.shape_cast %839 : vector<8xf32> to vector<8x1xf32>
    %841 = vector.broadcast %840 : vector<8x1xf32> to vector<8x8xf32>
    %842 = arith.subf %838, %841 : vector<8x8xf32>
    %843 = math.exp %842 : vector<8x8xf32>
    %cst_317 = arith.constant dense<0.000000e+00> : vector<8xf32>
    %844 = vector.multi_reduction <add>, %843, %cst_317 [1] : vector<8x8xf32> to vector<8xf32>
    %845 = vector.shape_cast %844 : vector<8xf32> to vector<8x1xf32>
    %846 = tpu.reciprocal %845 {approx = true} : vector<8x1xf32> -> vector<8x1xf32>
    %847 = vector.broadcast %846 : vector<8x1xf32> to vector<8x8xf32>
    %848 = arith.mulf %843, %847 : vector<8x8xf32>
    %849 = vector.extract_strided_slice %789 {offsets = [0, 16], sizes = [8, 8], strides = [1, 1]} : vector<8x32xf32> to vector<8x8xf32>
    %850 = arith.truncf %848 : vector<8x8xf32> to vector<8x8xbf16>
    %851 = arith.truncf %849 : vector<8x8xf32> to vector<8x8xbf16>
    %cst_318 = arith.constant dense<0.000000e+00> : vector<8x8xf32>
    %852 = tpu.matmul %850, %851, %cst_318 {dimension_numbers = #tpu.dot_dimension_numbers<[1], [0], [0], [1], [0, 0, 1, 1], [], []>} : vector<8x8xbf16>, vector<8x8xbf16>, vector<8x8xf32> -> vector<8x8xf32>
    %853 = vector.extract_strided_slice %783 {offsets = [0, 24], sizes = [8, 8], strides = [1, 1]} : vector<8x32xf32> to vector<8x8xf32>
    %854 = vector.extract_strided_slice %788 {offsets = [0, 24], sizes = [8, 8], strides = [1, 1]} : vector<8x32xf32> to vector<8x8xf32>
    %855 = arith.truncf %853 : vector<8x8xf32> to vector<8x8xbf16>
    %856 = arith.truncf %854 : vector<8x8xf32> to vector<8x8xbf16>
    %cst_319 = arith.constant dense<0.000000e+00> : vector<8x8xf32>
    %857 = tpu.matmul %855, %856, %cst_319 {dimension_numbers = #tpu.dot_dimension_numbers<[1], [1], [0], [0], [0, 0, 1, 0], [], []>} : vector<8x8xbf16>, vector<8x8xbf16>, vector<8x8xf32> -> vector<8x8xf32>
    %cst_320 = arith.constant 0.353553385 : f32
    %858 = vector.broadcast %cst_320 : f32 to vector<8x8xf32>
    %859 = arith.mulf %857, %858 : vector<8x8xf32>
    %cst_321 = arith.constant dense<0xFF800000> : vector<8xf32>
    %860 = vector.multi_reduction <maximumf>, %859, %cst_321 [1] : vector<8x8xf32> to vector<8xf32>
    %861 = vector.shape_cast %860 : vector<8xf32> to vector<8x1xf32>
    %862 = vector.broadcast %861 : vector<8x1xf32> to vector<8x8xf32>
    %863 = arith.subf %859, %862 : vector<8x8xf32>
    %864 = math.exp %863 : vector<8x8xf32>
    %cst_322 = arith.constant dense<0.000000e+00> : vector<8xf32>
    %865 = vector.multi_reduction <add>, %864, %cst_322 [1] : vector<8x8xf32> to vector<8xf32>
    %866 = vector.shape_cast %865 : vector<8xf32> to vector<8x1xf32>
    %867 = tpu.reciprocal %866 {approx = true} : vector<8x1xf32> -> vector<8x1xf32>
    %868 = vector.broadcast %867 : vector<8x1xf32> to vector<8x8xf32>
    %869 = arith.mulf %864, %868 : vector<8x8xf32>
    %870 = vector.extract_strided_slice %789 {offsets = [0, 24], sizes = [8, 8], strides = [1, 1]} : vector<8x32xf32> to vector<8x8xf32>
    %871 = arith.truncf %869 : vector<8x8xf32> to vector<8x8xbf16>
    %872 = arith.truncf %870 : vector<8x8xf32> to vector<8x8xbf16>
    %cst_323 = arith.constant dense<0.000000e+00> : vector<8x8xf32>
    %873 = tpu.matmul %871, %872, %cst_323 {dimension_numbers = #tpu.dot_dimension_numbers<[1], [0], [0], [1], [0, 0, 1, 1], [], []>} : vector<8x8xbf16>, vector<8x8xbf16>, vector<8x8xf32> -> vector<8x8xf32>
    %874 = tpu.concatenate %810, %831, %852, %873 in 1 : vector<8x8xf32>, vector<8x8xf32>, vector<8x8xf32>, vector<8x8xf32> -> vector<8x32xf32>
    %875 = arith.truncf %874 : vector<8x32xf32> to vector<8x32xbf16>
    %cst_324 = arith.constant dense<0.000000e+00> : vector<8x32xf32>
    %876 = tpu.matmul %875, %645, %cst_324 {dimension_numbers = #tpu.dot_dimension_numbers<[1], [0], [0], [1], [0, 0, 1, 1], [], []>} : vector<8x32xbf16>, vector<32x32xbf16>, vector<8x32xf32> -> vector<8x32xf32>
    %877 = vector.broadcast %642 : vector<1x32xf32> to vector<8x32xf32>
    %878 = arith.addf %876, %877 : vector<8x32xf32>
    %879 = arith.addf %779, %878 : vector<8x32xf32>
    %cst_325 = arith.constant dense<0.000000e+00> : vector<8xf32>
    %880 = vector.multi_reduction <add>, %879, %cst_325 [1] : vector<8x32xf32> to vector<8xf32>
    %881 = vector.shape_cast %880 : vector<8xf32> to vector<8x1xf32>
    %cst_326 = arith.constant 3.200000e+01 : f32
    %882 = vector.broadcast %cst_326 : f32 to vector<8x1xf32>
    %883 = arith.divf %881, %882 : vector<8x1xf32>
    %884 = vector.broadcast %883 : vector<8x1xf32> to vector<8x32xf32>
    %885 = arith.subf %879, %884 : vector<8x32xf32>
    %886 = arith.mulf %885, %885 : vector<8x32xf32>
    %cst_327 = arith.constant dense<0.000000e+00> : vector<8xf32>
    %887 = vector.multi_reduction <add>, %886, %cst_327 [1] : vector<8x32xf32> to vector<8xf32>
    %888 = vector.shape_cast %887 : vector<8xf32> to vector<8x1xf32>
    %cst_328 = arith.constant 3.200000e+01 : f32
    %889 = vector.broadcast %cst_328 : f32 to vector<8x1xf32>
    %890 = arith.divf %888, %889 : vector<8x1xf32>
    %891 = vector.broadcast %883 : vector<8x1xf32> to vector<8x32xf32>
    %892 = arith.subf %879, %891 : vector<8x32xf32>
    %cst_329 = arith.constant 9.99999974E-6 : f32
    %893 = vector.broadcast %cst_329 : f32 to vector<8x1xf32>
    %894 = arith.addf %890, %893 : vector<8x1xf32>
    %895 = math.rsqrt %894 : vector<8x1xf32>
    %896 = vector.broadcast %895 : vector<8x1xf32> to vector<8x32xf32>
    %897 = arith.mulf %892, %896 : vector<8x32xf32>
    %898 = vector.broadcast %654 : vector<1x32xf32> to vector<8x32xf32>
    %899 = arith.mulf %897, %898 : vector<8x32xf32>
    %900 = vector.broadcast %653 : vector<1x32xf32> to vector<8x32xf32>
    %901 = arith.addf %899, %900 : vector<8x32xf32>
    %902 = arith.truncf %901 : vector<8x32xf32> to vector<8x32xbf16>
    %cst_330 = arith.constant dense<0.000000e+00> : vector<8x64xf32>
    %903 = tpu.matmul %902, %648, %cst_330 {dimension_numbers = #tpu.dot_dimension_numbers<[1], [0], [0], [1], [0, 0, 1, 1], [], []>} : vector<8x32xbf16>, vector<32x64xbf16>, vector<8x64xf32> -> vector<8x64xf32>
    %904 = vector.broadcast %647 : vector<1x64xf32> to vector<8x64xf32>
    %905 = arith.addf %903, %904 : vector<8x64xf32>
    %cst_331 = arith.constant 0.000000e+00 : f32
    %906 = vector.broadcast %cst_331 : f32 to vector<8x64xf32>
    %907 = arith.maximumf %905, %906 : vector<8x64xf32>
    %908 = arith.truncf %907 : vector<8x64xf32> to vector<8x64xbf16>
    %cst_332 = arith.constant dense<0.000000e+00> : vector<8x32xf32>
    %909 = tpu.matmul %908, %650, %cst_332 {dimension_numbers = #tpu.dot_dimension_numbers<[1], [0], [0], [1], [0, 0, 1, 1], [], []>} : vector<8x64xbf16>, vector<64x32xbf16>, vector<8x32xf32> -> vector<8x32xf32>
    %910 = vector.broadcast %649 : vector<1x32xf32> to vector<8x32xf32>
    %911 = arith.addf %909, %910 : vector<8x32xf32>
    %912 = arith.addf %901, %911 : vector<8x32xf32>
    %cst_333 = arith.constant dense<0.000000e+00> : vector<8xf32>
    %913 = vector.multi_reduction <add>, %912, %cst_333 [1] : vector<8x32xf32> to vector<8xf32>
    %914 = vector.shape_cast %913 : vector<8xf32> to vector<8x1xf32>
    %cst_334 = arith.constant 3.200000e+01 : f32
    %915 = vector.broadcast %cst_334 : f32 to vector<8x1xf32>
    %916 = arith.divf %914, %915 : vector<8x1xf32>
    %917 = vector.broadcast %916 : vector<8x1xf32> to vector<8x32xf32>
    %918 = arith.subf %912, %917 : vector<8x32xf32>
    %919 = arith.mulf %918, %918 : vector<8x32xf32>
    %cst_335 = arith.constant dense<0.000000e+00> : vector<8xf32>
    %920 = vector.multi_reduction <add>, %919, %cst_335 [1] : vector<8x32xf32> to vector<8xf32>
    %921 = vector.shape_cast %920 : vector<8xf32> to vector<8x1xf32>
    %cst_336 = arith.constant 3.200000e+01 : f32
    %922 = vector.broadcast %cst_336 : f32 to vector<8x1xf32>
    %923 = arith.divf %921, %922 : vector<8x1xf32>
    %924 = vector.broadcast %916 : vector<8x1xf32> to vector<8x32xf32>
    %925 = arith.subf %912, %924 : vector<8x32xf32>
    %cst_337 = arith.constant 9.99999974E-6 : f32
    %926 = vector.broadcast %cst_337 : f32 to vector<8x1xf32>
    %927 = arith.addf %923, %926 : vector<8x1xf32>
    %928 = math.rsqrt %927 : vector<8x1xf32>
    %929 = vector.broadcast %928 : vector<8x1xf32> to vector<8x32xf32>
    %930 = arith.mulf %925, %929 : vector<8x32xf32>
    %931 = vector.broadcast %656 : vector<1x32xf32> to vector<8x32xf32>
    %932 = arith.mulf %930, %931 : vector<8x32xf32>
    %933 = vector.broadcast %655 : vector<1x32xf32> to vector<8x32xf32>
    %934 = arith.addf %932, %933 : vector<8x32xf32>
    %c0_338 = arith.constant 0 : index
    %c0_339 = arith.constant 0 : index
    %935 = vector.load %arg69[%c0_338, %c0_339] : memref<32x32xbf16, #tpu.memory_space<vmem>>, vector<32x32xbf16>
    %936 = arith.truncf %934 : vector<8x32xf32> to vector<8x32xbf16>
    %cst_340 = arith.constant dense<0.000000e+00> : vector<8x32xf32>
    %937 = tpu.matmul %936, %935, %cst_340 {dimension_numbers = #tpu.dot_dimension_numbers<[1], [0], [0], [1], [0, 0, 1, 1], [], []>} : vector<8x32xbf16>, vector<32x32xbf16>, vector<8x32xf32> -> vector<8x32xf32>
    %c0_341 = arith.constant 0 : index
    %c0_342 = arith.constant 0 : index
    %938 = vector.load %arg68[%c0_341, %c0_342] : memref<1x32xf32, #tpu.memory_space<vmem>>, vector<1x32xf32>
    %939 = vector.broadcast %938 : vector<1x32xf32> to vector<8x32xf32>
    %940 = arith.addf %937, %939 : vector<8x32xf32>
    %c0_343 = arith.constant 0 : index
    %c0_344 = arith.constant 0 : index
    %c0_345 = arith.constant 0 : index
    %941 = vector.load %arg72[%c0_343, %c0_344, %c0_345] : memref<1x8x32xf32, #tpu.memory_space<vmem>>, vector<1x8x32xf32>
    %942 = vector.shape_cast %941 : vector<1x8x32xf32> to vector<8x32xf32>
    %943 = vector.shape_cast %940 : vector<8x32xf32> to vector<1x8x32xf32>
    tpu.vector_store %arg72[%c0_343, %c0_344, %c0_345], %943 {strides = array<i32>} : memref<1x8x32xf32, #tpu.memory_space<vmem>>, vector<1x8x32xf32>,
    return
  }
  func.func @transform_0(%arg0: i32) -> (i32, i32, i32) {
    %c0_i32 = arith.constant 0 : i32
    %c0_i32_0 = arith.constant 0 : i32
    %c0_i32_1 = arith.constant 0 : i32
    return %arg0, %c0_i32, %c0_i32_0 : i32, i32, i32
  }
  func.func @transform_1(%arg0: i32) -> (i32, i32, i32) {
    %c0_i32 = arith.constant 0 : i32
    %c0_i32_0 = arith.constant 0 : i32
    %c0_i32_1 = arith.constant 0 : i32
    return %arg0, %c0_i32, %c0_i32_0 : i32, i32, i32
  }
  func.func @transform_2(%arg0: i32) -> (i32, i32, i32) {
    %c0_i32 = arith.constant 0 : i32
    %c0_i32_0 = arith.constant 0 : i32
    %c0_i32_1 = arith.constant 0 : i32
    return %arg0, %c0_i32, %c0_i32_0 : i32, i32, i32
  }
  func.func @transform_3(%arg0: i32) -> (i32, i32) {
    %c0_i32 = arith.constant 0 : i32
    %c0_i32_0 = arith.constant 0 : i32
    %c0_i32_1 = arith.constant 0 : i32
    return %c0_i32, %c0_i32_0 : i32, i32
  }
  func.func @transform_4(%arg0: i32) -> (i32, i32) {
    %c0_i32 = arith.constant 0 : i32
    %c0_i32_0 = arith.constant 0 : i32
    %c0_i32_1 = arith.constant 0 : i32
    return %c0_i32, %c0_i32_0 : i32, i32
  }
  func.func @transform_5(%arg0: i32) -> (i32, i32) {
    %c0_i32 = arith.constant 0 : i32
    %c0_i32_0 = arith.constant 0 : i32
    %c0_i32_1 = arith.constant 0 : i32
    return %c0_i32, %c0_i32_0 : i32, i32
  }
  func.func @transform_6(%arg0: i32) -> (i32, i32) {
    %c0_i32 = arith.constant 0 : i32
    %c0_i32_0 = arith.constant 0 : i32
    %c0_i32_1 = arith.constant 0 : i32
    return %c0_i32, %c0_i32_0 : i32, i32
  }
  func.func @transform_7(%arg0: i32) -> (i32, i32) {
    %c0_i32 = arith.constant 0 : i32
    %c0_i32_0 = arith.constant 0 : i32
    %c0_i32_1 = arith.constant 0 : i32
    return %c0_i32, %c0_i32_0 : i32, i32
  }
  func.func @transform_8(%arg0: i32) -> (i32, i32) {
    %c0_i32 = arith.constant 0 : i32
    %c0_i32_0 = arith.constant 0 : i32
    %c0_i32_1 = arith.constant 0 : i32
    return %c0_i32, %c0_i32_0 : i32, i32
  }
  func.func @transform_9(%arg0: i32) -> (i32, i32) {
    %c0_i32 = arith.constant 0 : i32
    %c0_i32_0 = arith.constant 0 : i32
    %c0_i32_1 = arith.constant 0 : i32
    return %c0_i32, %c0_i32_0 : i32, i32
  }
  func.func @transform_10(%arg0: i32) -> (i32, i32) {
    %c0_i32 = arith.constant 0 : i32
    %c0_i32_0 = arith.constant 0 : i32
    %c0_i32_1 = arith.constant 0 : i32
    return %c0_i32, %c0_i32_0 : i32, i32
  }
  func.func @transform_11(%arg0: i32) -> (i32, i32) {
    %c0_i32 = arith.constant 0 : i32
    %c0_i32_0 = arith.constant 0 : i32
    %c0_i32_1 = arith.constant 0 : i32
    return %c0_i32, %c0_i32_0 : i32, i32
  }
  func.func @transform_12(%arg0: i32) -> (i32, i32) {
    %c0_i32 = arith.constant 0 : i32
    %c0_i32_0 = arith.constant 0 : i32
    %c0_i32_1 = arith.constant 0 : i32
    return %c0_i32, %c0_i32_0 : i32, i32
  }
  func.func @transform_13(%arg0: i32) -> (i32, i32) {
    %c0_i32 = arith.constant 0 : i32
    %c0_i32_0 = arith.constant 0 : i32
    %c0_i32_1 = arith.constant 0 : i32
    return %c0_i32, %c0_i32_0 : i32, i32
  }
  func.func @transform_14(%arg0: i32) -> (i32, i32) {
    %c0_i32 = arith.constant 0 : i32
    %c0_i32_0 = arith.constant 0 : i32
    %c0_i32_1 = arith.constant 0 : i32
    return %c0_i32, %c0_i32_0 : i32, i32
  }
  func.func @transform_15(%arg0: i32) -> (i32, i32) {
    %c0_i32 = arith.constant 0 : i32
    %c0_i32_0 = arith.constant 0 : i32
    %c0_i32_1 = arith.constant 0 : i32
    return %c0_i32, %c0_i32_0 : i32, i32
  }
  func.func @transform_16(%arg0: i32) -> (i32, i32) {
    %c0_i32 = arith.constant 0 : i32
    %c0_i32_0 = arith.constant 0 : i32
    %c0_i32_1 = arith.constant 0 : i32
    return %c0_i32, %c0_i32_0 : i32, i32
  }
  func.func @transform_17(%arg0: i32) -> (i32, i32) {
    %c0_i32 = arith.constant 0 : i32
    %c0_i32_0 = arith.constant 0 : i32
    %c0_i32_1 = arith.constant 0 : i32
    return %c0_i32, %c0_i32_0 : i32, i32
  }
  func.func @transform_18(%arg0: i32) -> (i32, i32) {
    %c0_i32 = arith.constant 0 : i32
    %c0_i32_0 = arith.constant 0 : i32
    %c0_i32_1 = arith.constant 0 : i32
    return %c0_i32, %c0_i32_0 : i32, i32
  }
  func.func @transform_19(%arg0: i32) -> (i32, i32) {
    %c0_i32 = arith.constant 0 : i32
    %c0_i32_0 = arith.constant 0 : i32
    %c0_i32_1 = arith.constant 0 : i32
    return %c0_i32, %c0_i32_0 : i32, i32
  }
  func.func @transform_20(%arg0: i32) -> (i32, i32) {
    %c0_i32 = arith.constant 0 : i32
    %c0_i32_0 = arith.constant 0 : i32
    %c0_i32_1 = arith.constant 0 : i32
    return %c0_i32, %c0_i32_0 : i32, i32
  }
  func.func @transform_21(%arg0: i32) -> (i32, i32) {
    %c0_i32 = arith.constant 0 : i32
    %c0_i32_0 = arith.constant 0 : i32
    %c0_i32_1 = arith.constant 0 : i32
    return %c0_i32, %c0_i32_0 : i32, i32
  }
  func.func @transform_22(%arg0: i32) -> (i32, i32) {
    %c0_i32 = arith.constant 0 : i32
    %c0_i32_0 = arith.constant 0 : i32
    %c0_i32_1 = arith.constant 0 : i32
    return %c0_i32, %c0_i32_0 : i32, i32
  }
  func.func @transform_23(%arg0: i32) -> (i32, i32) {
    %c0_i32 = arith.constant 0 : i32
    %c0_i32_0 = arith.constant 0 : i32
    %c0_i32_1 = arith.constant 0 : i32
    return %c0_i32, %c0_i32_0 : i32, i32
  }
  func.func @transform_24(%arg0: i32) -> (i32, i32) {
    %c0_i32 = arith.constant 0 : i32
    %c0_i32_0 = arith.constant 0 : i32
    %c0_i32_1 = arith.constant 0 : i32
    return %c0_i32, %c0_i32_0 : i32, i32
  }
  func.func @transform_25(%arg0: i32) -> (i32, i32) {
    %c0_i32 = arith.constant 0 : i32
    %c0_i32_0 = arith.constant 0 : i32
    %c0_i32_1 = arith.constant 0 : i32
    return %c0_i32, %c0_i32_0 : i32, i32
  }
  func.func @transform_26(%arg0: i32) -> (i32, i32) {
    %c0_i32 = arith.constant 0 : i32
    %c0_i32_0 = arith.constant 0 : i32
    %c0_i32_1 = arith.constant 0 : i32
    return %c0_i32, %c0_i32_0 : i32, i32
  }
  func.func @transform_27(%arg0: i32) -> (i32, i32) {
    %c0_i32 = arith.constant 0 : i32
    %c0_i32_0 = arith.constant 0 : i32
    %c0_i32_1 = arith.constant 0 : i32
    return %c0_i32, %c0_i32_0 : i32, i32
  }
  func.func @transform_28(%arg0: i32) -> (i32, i32) {
    %c0_i32 = arith.constant 0 : i32
    %c0_i32_0 = arith.constant 0 : i32
    %c0_i32_1 = arith.constant 0 : i32
    return %c0_i32, %c0_i32_0 : i32, i32
  }
  func.func @transform_29(%arg0: i32) -> (i32, i32) {
    %c0_i32 = arith.constant 0 : i32
    %c0_i32_0 = arith.constant 0 : i32
    %c0_i32_1 = arith.constant 0 : i32
    return %c0_i32, %c0_i32_0 : i32, i32
  }
  func.func @transform_30(%arg0: i32) -> (i32, i32) {
    %c0_i32 = arith.constant 0 : i32
    %c0_i32_0 = arith.constant 0 : i32
    %c0_i32_1 = arith.constant 0 : i32
    return %c0_i32, %c0_i32_0 : i32, i32
  }
  func.func @transform_31(%arg0: i32) -> (i32, i32) {
    %c0_i32 = arith.constant 0 : i32
    %c0_i32_0 = arith.constant 0 : i32
    %c0_i32_1 = arith.constant 0 : i32
    return %c0_i32, %c0_i32_0 : i32, i32
  }
  func.func @transform_32(%arg0: i32) -> (i32, i32) {
    %c0_i32 = arith.constant 0 : i32
    %c0_i32_0 = arith.constant 0 : i32
    %c0_i32_1 = arith.constant 0 : i32
    return %c0_i32, %c0_i32_0 : i32, i32
  }
  func.func @transform_33(%arg0: i32) -> (i32, i32) {
    %c0_i32 = arith.constant 0 : i32
    %c0_i32_0 = arith.constant 0 : i32
    %c0_i32_1 = arith.constant 0 : i32
    return %c0_i32, %c0_i32_0 : i32, i32
  }
  func.func @transform_34(%arg0: i32) -> (i32, i32) {
    %c0_i32 = arith.constant 0 : i32
    %c0_i32_0 = arith.constant 0 : i32
    %c0_i32_1 = arith.constant 0 : i32
    return %c0_i32, %c0_i32_0 : i32, i32
  }
  func.func @transform_35(%arg0: i32) -> (i32, i32) {
    %c0_i32 = arith.constant 0 : i32
    %c0_i32_0 = arith.constant 0 : i32
    %c0_i32_1 = arith.constant 0 : i32
    return %c0_i32, %c0_i32_0 : i32, i32
  }
  func.func @transform_36(%arg0: i32) -> (i32, i32) {
    %c0_i32 = arith.constant 0 : i32
    %c0_i32_0 = arith.constant 0 : i32
    %c0_i32_1 = arith.constant 0 : i32
    return %c0_i32, %c0_i32_0 : i32, i32
  }
  func.func @transform_37(%arg0: i32) -> (i32, i32) {
    %c0_i32 = arith.constant 0 : i32
    %c0_i32_0 = arith.constant 0 : i32
    %c0_i32_1 = arith.constant 0 : i32
    return %c0_i32, %c0_i32_0 : i32, i32
  }
  func.func @transform_38(%arg0: i32) -> (i32, i32) {
    %c0_i32 = arith.constant 0 : i32
    %c0_i32_0 = arith.constant 0 : i32
    %c0_i32_1 = arith.constant 0 : i32
    return %c0_i32, %c0_i32_0 : i32, i32
  }
  func.func @transform_39(%arg0: i32) -> (i32, i32) {
    %c0_i32 = arith.constant 0 : i32
    %c0_i32_0 = arith.constant 0 : i32
    %c0_i32_1 = arith.constant 0 : i32
    return %c0_i32, %c0_i32_0 : i32, i32
  }
  func.func @transform_40(%arg0: i32) -> (i32, i32) {
    %c0_i32 = arith.constant 0 : i32
    %c0_i32_0 = arith.constant 0 : i32
    %c0_i32_1 = arith.constant 0 : i32
    return %c0_i32, %c0_i32_0 : i32, i32
  }
  func.func @transform_41(%arg0: i32) -> (i32, i32) {
    %c0_i32 = arith.constant 0 : i32
    %c0_i32_0 = arith.constant 0 : i32
    %c0_i32_1 = arith.constant 0 : i32
    return %c0_i32, %c0_i32_0 : i32, i32
  }
  func.func @transform_42(%arg0: i32) -> (i32, i32) {
    %c0_i32 = arith.constant 0 : i32
    %c0_i32_0 = arith.constant 0 : i32
    %c0_i32_1 = arith.constant 0 : i32
    return %c0_i32, %c0_i32_0 : i32, i32
  }
  func.func @transform_43(%arg0: i32) -> (i32, i32) {
    %c0_i32 = arith.constant 0 : i32
    %c0_i32_0 = arith.constant 0 : i32
    %c0_i32_1 = arith.constant 0 : i32
    return %c0_i32, %c0_i32_0 : i32, i32
  }
  func.func @transform_44(%arg0: i32) -> (i32, i32) {
    %c0_i32 = arith.constant 0 : i32
    %c0_i32_0 = arith.constant 0 : i32
    %c0_i32_1 = arith.constant 0 : i32
    return %c0_i32, %c0_i32_0 : i32, i32
  }
  func.func @transform_45(%arg0: i32) -> (i32, i32) {
    %c0_i32 = arith.constant 0 : i32
    %c0_i32_0 = arith.constant 0 : i32
    %c0_i32_1 = arith.constant 0 : i32
    return %c0_i32, %c0_i32_0 : i32, i32
  }
  func.func @transform_46(%arg0: i32) -> (i32, i32) {
    %c0_i32 = arith.constant 0 : i32
    %c0_i32_0 = arith.constant 0 : i32
    %c0_i32_1 = arith.constant 0 : i32
    return %c0_i32, %c0_i32_0 : i32, i32
  }
  func.func @transform_47(%arg0: i32) -> (i32, i32) {
    %c0_i32 = arith.constant 0 : i32
    %c0_i32_0 = arith.constant 0 : i32
    %c0_i32_1 = arith.constant 0 : i32
    return %c0_i32, %c0_i32_0 : i32, i32
  }
  func.func @transform_48(%arg0: i32) -> (i32, i32) {
    %c0_i32 = arith.constant 0 : i32
    %c0_i32_0 = arith.constant 0 : i32
    %c0_i32_1 = arith.constant 0 : i32
    return %c0_i32, %c0_i32_0 : i32, i32
  }
  func.func @transform_49(%arg0: i32) -> (i32, i32) {
    %c0_i32 = arith.constant 0 : i32
    %c0_i32_0 = arith.constant 0 : i32
    %c0_i32_1 = arith.constant 0 : i32
    return %c0_i32, %c0_i32_0 : i32, i32
  }
  func.func @transform_50(%arg0: i32) -> (i32, i32) {
    %c0_i32 = arith.constant 0 : i32
    %c0_i32_0 = arith.constant 0 : i32
    %c0_i32_1 = arith.constant 0 : i32
    return %c0_i32, %c0_i32_0 : i32, i32
  }
  func.func @transform_51(%arg0: i32) -> (i32, i32) {
    %c0_i32 = arith.constant 0 : i32
    %c0_i32_0 = arith.constant 0 : i32
    %c0_i32_1 = arith.constant 0 : i32
    return %c0_i32, %c0_i32_0 : i32, i32
  }
  func.func @transform_52(%arg0: i32) -> (i32, i32) {
    %c0_i32 = arith.constant 0 : i32
    %c0_i32_0 = arith.constant 0 : i32
    %c0_i32_1 = arith.constant 0 : i32
    return %c0_i32, %c0_i32_0 : i32, i32
  }
  func.func @transform_53(%arg0: i32) -> (i32, i32) {
    %c0_i32 = arith.constant 0 : i32
    %c0_i32_0 = arith.constant 0 : i32
    %c0_i32_1 = arith.constant 0 : i32
    return %c0_i32, %c0_i32_0 : i32, i32
  }
  func.func @transform_54(%arg0: i32) -> (i32, i32) {
    %c0_i32 = arith.constant 0 : i32
    %c0_i32_0 = arith.constant 0 : i32
    %c0_i32_1 = arith.constant 0 : i32
    return %c0_i32, %c0_i32_0 : i32, i32
  }
  func.func @transform_55(%arg0: i32) -> (i32, i32) {
    %c0_i32 = arith.constant 0 : i32
    %c0_i32_0 = arith.constant 0 : i32
    %c0_i32_1 = arith.constant 0 : i32
    return %c0_i32, %c0_i32_0 : i32, i32
  }
  func.func @transform_56(%arg0: i32) -> (i32, i32) {
    %c0_i32 = arith.constant 0 : i32
    %c0_i32_0 = arith.constant 0 : i32
    %c0_i32_1 = arith.constant 0 : i32
    return %c0_i32, %c0_i32_0 : i32, i32
  }
  func.func @transform_57(%arg0: i32) -> (i32, i32) {
    %c0_i32 = arith.constant 0 : i32
    %c0_i32_0 = arith.constant 0 : i32
    %c0_i32_1 = arith.constant 0 : i32
    return %c0_i32, %c0_i32_0 : i32, i32
  }
  func.func @transform_58(%arg0: i32) -> (i32, i32) {
    %c0_i32 = arith.constant 0 : i32
    %c0_i32_0 = arith.constant 0 : i32
    %c0_i32_1 = arith.constant 0 : i32
    return %c0_i32, %c0_i32_0 : i32, i32
  }
  func.func @transform_59(%arg0: i32) -> (i32, i32) {
    %c0_i32 = arith.constant 0 : i32
    %c0_i32_0 = arith.constant 0 : i32
    %c0_i32_1 = arith.constant 0 : i32
    return %c0_i32, %c0_i32_0 : i32, i32
  }
  func.func @transform_60(%arg0: i32) -> (i32, i32) {
    %c0_i32 = arith.constant 0 : i32
    %c0_i32_0 = arith.constant 0 : i32
    %c0_i32_1 = arith.constant 0 : i32
    return %c0_i32, %c0_i32_0 : i32, i32
  }
  func.func @transform_61(%arg0: i32) -> (i32, i32) {
    %c0_i32 = arith.constant 0 : i32
    %c0_i32_0 = arith.constant 0 : i32
    %c0_i32_1 = arith.constant 0 : i32
    return %c0_i32, %c0_i32_0 : i32, i32
  }
  func.func @transform_62(%arg0: i32) -> (i32, i32) {
    %c0_i32 = arith.constant 0 : i32
    %c0_i32_0 = arith.constant 0 : i32
    %c0_i32_1 = arith.constant 0 : i32
    return %c0_i32, %c0_i32_0 : i32, i32
  }
  func.func @transform_63(%arg0: i32) -> (i32, i32) {
    %c0_i32 = arith.constant 0 : i32
    %c0_i32_0 = arith.constant 0 : i32
    %c0_i32_1 = arith.constant 0 : i32
    return %c0_i32, %c0_i32_0 : i32, i32
  }
  func.func @transform_64(%arg0: i32) -> (i32, i32) {
    %c0_i32 = arith.constant 0 : i32
    %c0_i32_0 = arith.constant 0 : i32
    %c0_i32_1 = arith.constant 0 : i32
    return %c0_i32, %c0_i32_0 : i32, i32
  }
  func.func @transform_65(%arg0: i32) -> (i32, i32) {
    %c0_i32 = arith.constant 0 : i32
    %c0_i32_0 = arith.constant 0 : i32
    %c0_i32_1 = arith.constant 0 : i32
    return %c0_i32, %c0_i32_0 : i32, i32
  }
  func.func @transform_66(%arg0: i32) -> (i32, i32) {
    %c0_i32 = arith.constant 0 : i32
    %c0_i32_0 = arith.constant 0 : i32
    %c0_i32_1 = arith.constant 0 : i32
    return %c0_i32, %c0_i32_0 : i32, i32
  }
  func.func @transform_67(%arg0: i32) -> (i32, i32) {
    %c0_i32 = arith.constant 0 : i32
    %c0_i32_0 = arith.constant 0 : i32
    %c0_i32_1 = arith.constant 0 : i32
    return %c0_i32, %c0_i32_0 : i32, i32
  }
  func.func @transform_68(%arg0: i32) -> (i32, i32) {
    %c0_i32 = arith.constant 0 : i32
    %c0_i32_0 = arith.constant 0 : i32
    %c0_i32_1 = arith.constant 0 : i32
    return %c0_i32, %c0_i32_0 : i32, i32
  }
  func.func @transform_69(%arg0: i32) -> (i32, i32) {
    %c0_i32 = arith.constant 0 : i32
    %c0_i32_0 = arith.constant 0 : i32
    %c0_i32_1 = arith.constant 0 : i32
    return %c0_i32, %c0_i32_0 : i32, i32
  }
  func.func @transform_70(%arg0: i32) -> (i32, i32) {
    %c0_i32 = arith.constant 0 : i32
    %c0_i32_0 = arith.constant 0 : i32
    %c0_i32_1 = arith.constant 0 : i32
    return %c0_i32, %c0_i32_0 : i32, i32
  }
  func.func @transform_71(%arg0: i32) -> (i32, i32, i32) {
    %c0_i32 = arith.constant 0 : i32
    %c0_i32_0 = arith.constant 0 : i32
    %c0_i32_1 = arith.constant 0 : i32
    return %arg0, %c0_i32, %c0_i32_0 : i32, i32, i32
  }
}

</mosaic_0001>

<llo_original>
// kernel: forward.1
$region0: #{forward.1}
  #allocation0 [shape = 'u32[]', space=smem, size = 0x4, offset = 0x4, fixed_abs, tag = 'smem constant byte address 0x4 - core index']
  #allocation1 [shape = 'u32[72,128]{1,0:T(1,128)}', space=vmem, size = 0x9000, scoped, tag = 'internal scratch']
  %s0 = inlined_call_operand.smem [shape: u32[72], index: -1, kind: input, shape index: {}]
  %s1 = sld [smem:[%s0]]
  %s2 = scalar_lea.smem %s0, 1
  %s3 = sld [smem:[%s2]]
  %s4 = scalar_lea.smem %s0, 2
  %s5 = sld [smem:[%s4]]
  %s6 = scalar_lea.smem %s0, 3
  %s7 = sld [smem:[%s6]]
  %s8 = scalar_lea.smem %s0, 4
  %s9 = sld [smem:[%s8]]
  %s10 = scalar_lea.smem %s0, 5
  %s11 = sld [smem:[%s10]]
  %s12 = scalar_lea.smem %s0, 6
  %s13 = sld [smem:[%s12]]
  %s14 = scalar_lea.smem %s0, 7
  %s15 = sld [smem:[%s14]]
  %s16 = scalar_lea.smem %s0, 8
  %s17 = sld [smem:[%s16]]
  %s18 = scalar_lea.smem %s0, 9
  %s19 = sld [smem:[%s18]]
  %s20 = scalar_lea.smem %s0, 10
  %s21 = sld [smem:[%s20]]
  %s22 = scalar_lea.smem %s0, 11
  %s23 = sld [smem:[%s22]]
  %s24 = scalar_lea.smem %s0, 12
  %s25 = sld [smem:[%s24]]
  %s26 = scalar_lea.smem %s0, 13
  %s27 = sld [smem:[%s26]]
  %s28 = scalar_lea.smem %s0, 14
  %s29 = sld [smem:[%s28]]
  %s30 = scalar_lea.smem %s0, 15
  %s31 = sld [smem:[%s30]]
  %s32 = scalar_lea.smem %s0, 16
  %s33 = sld [smem:[%s32]]
  %s34 = scalar_lea.smem %s0, 17
  %s35 = sld [smem:[%s34]]
  %s36 = scalar_lea.smem %s0, 18
  %s37 = sld [smem:[%s36]]
  %s38 = scalar_lea.smem %s0, 19
  %s39 = sld [smem:[%s38]]
  %s40 = scalar_lea.smem %s0, 20
  %s41 = sld [smem:[%s40]]
  %s42 = scalar_lea.smem %s0, 21
  %s43 = sld [smem:[%s42]]
  %s44 = scalar_lea.smem %s0, 22
  %s45 = sld [smem:[%s44]]
  %s46 = scalar_lea.smem %s0, 23
  %s47 = sld [smem:[%s46]]
  %s48 = scalar_lea.smem %s0, 24
  %s49 = sld [smem:[%s48]]
  %s50 = scalar_lea.smem %s0, 25
  %s51 = sld [smem:[%s50]]
  %s52 = scalar_lea.smem %s0, 26
  %s53 = sld [smem:[%s52]]
  %s54 = scalar_lea.smem %s0, 27
  %s55 = sld [smem:[%s54]]
  %s56 = scalar_lea.smem %s0, 28
  %s57 = sld [smem:[%s56]]
  %s58 = scalar_lea.smem %s0, 29
  %s59 = sld [smem:[%s58]]
  %s60 = scalar_lea.smem %s0, 30
  %s61 = sld [smem:[%s60]]
  %s62 = scalar_lea.smem %s0, 31
  %s63 = sld [smem:[%s62]]
  %s64 = scalar_lea.smem %s0, 32
  %s65 = sld [smem:[%s64]]
  %s66 = scalar_lea.smem %s0, 33
  %s67 = sld [smem:[%s66]]
  %s68 = scalar_lea.smem %s0, 34
  %s69 = sld [smem:[%s68]]
  %s70 = scalar_lea.smem %s0, 35
  %s71 = sld [smem:[%s70]]
  %s72 = scalar_lea.smem %s0, 36
  %s73 = sld [smem:[%s72]]
  %s74 = scalar_lea.smem %s0, 37
  %s75 = sld [smem:[%s74]]
  %s76 = scalar_lea.smem %s0, 38
  %s77 = sld [smem:[%s76]]
  %s78 = scalar_lea.smem %s0, 39
  %s79 = sld [smem:[%s78]]
  %s80 = scalar_lea.smem %s0, 40
  %s81 = sld [smem:[%s80]]
  %s82 = scalar_lea.smem %s0, 41
  %s83 = sld [smem:[%s82]]
  %s84 = scalar_lea.smem %s0, 42
  %s85 = sld [smem:[%s84]]
  %s86 = scalar_lea.smem %s0, 43
  %s87 = sld [smem:[%s86]]
  %s88 = scalar_lea.smem %s0, 44
  %s89 = sld [smem:[%s88]]
  %s90 = scalar_lea.smem %s0, 45
  %s91 = sld [smem:[%s90]]
  %s92 = scalar_lea.smem %s0, 46
  %s93 = sld [smem:[%s92]]
  %s94 = scalar_lea.smem %s0, 47
  %s95 = sld [smem:[%s94]]
  %s96 = scalar_lea.smem %s0, 48
  %s97 = sld [smem:[%s96]]
  %s98 = scalar_lea.smem %s0, 49
  %s99 = sld [smem:[%s98]]
  %s100 = scalar_lea.smem %s0, 50
  %s101 = sld [smem:[%s100]]
  %s102 = scalar_lea.smem %s0, 51
  %s103 = sld [smem:[%s102]]
  %s104 = scalar_lea.smem %s0, 52
  %s105 = sld [smem:[%s104]]
  %s106 = scalar_lea.smem %s0, 53
  %s107 = sld [smem:[%s106]]
  %s108 = scalar_lea.smem %s0, 54
  %s109 = sld [smem:[%s108]]
  %s110 = scalar_lea.smem %s0, 55
  %s111 = sld [smem:[%s110]]
  %s112 = scalar_lea.smem %s0, 56
  %s113 = sld [smem:[%s112]]
  %s114 = scalar_lea.smem %s0, 57
  %s115 = sld [smem:[%s114]]
  %s116 = scalar_lea.smem %s0, 58
  %s117 = sld [smem:[%s116]]
  %s118 = scalar_lea.smem %s0, 59
  %s119 = sld [smem:[%s118]]
  %s120 = scalar_lea.smem %s0, 60
  %s121 = sld [smem:[%s120]]
  %s122 = scalar_lea.smem %s0, 61
  %s123 = sld [smem:[%s122]]
  %s124 = scalar_lea.smem %s0, 62
  %s125 = sld [smem:[%s124]]
  %s126 = scalar_lea.smem %s0, 63
  %s127 = sld [smem:[%s126]]
  %s128 = scalar_lea.smem %s0, 64
  %s129 = sld [smem:[%s128]]
  %s130 = scalar_lea.smem %s0, 65
  %s131 = sld [smem:[%s130]]
  %s132 = scalar_lea.smem %s0, 66
  %s133 = sld [smem:[%s132]]
  %s134 = scalar_lea.smem %s0, 67
  %s135 = sld [smem:[%s134]]
  %s136 = scalar_lea.smem %s0, 68
  %s137 = sld [smem:[%s136]]
  %s138 = scalar_lea.smem %s0, 69
  %s139 = sld [smem:[%s138]]
  %s140 = scalar_lea.smem %s0, 70
  %s141 = sld [smem:[%s140]]
  %s142 = scalar_lea.smem %s0, 71
  %s143 = sld [smem:[%s142]]
  %s144 = sld [smem:[#allocation0]]
  $region337: #{forward.1} parent=0
    _
  %s146 = ssub.s32 1, %s144
  %s147 = scalar_select 0, %s146, %s144
  $region1: #{forward.1} parent=0
    #allocation2 [shape = 'u8[512]{0}', space=vmem, size = 0x400, scoped, tag = 'input window, operand 62, single buffered']
    #allocation3 [shape = 's32[2]{0}', space=sflag, size = 0x8, scoped, tag = 'scoped memory for forward.1']
    #allocation4 [shape = 's32[2]{0}', space=sflag, size = 0x8, scoped, tag = 'scoped memory for forward.1']
    #allocation5 [shape = 'u8[512]{0}', space=vmem, size = 0x400, scoped, tag = 'input window, operand 63, single buffered']
    #allocation6 [shape = 's32[1]{0}', space=sflag, size = 0x4, scoped, tag = 'scoped memory for forward.1']
    #allocation7 [shape = 'u8[512]{0}', space=vmem, size = 0x400, scoped, tag = 'input window, operand 64, single buffered']
    #allocation8 [shape = 'u8[512]{0}', space=vmem, size = 0x400, scoped, tag = 'input window, operand 67, single buffered']
    #allocation9 [shape = 's32[1]{0}', space=sflag, size = 0x4, scoped, tag = 'scoped memory for forward.1']
    #allocation10 [shape = 'u8[512]{0}', space=vmem, size = 0x400, scoped, tag = 'input window, operand 69, single buffered']
    #allocation11 [shape = 'u8[8192]{0}', space=vmem, size = 0x2000, scoped, tag = 'output window, operand 0']
    %148 = vsyncpa [#allocation3], 0
    %149 = vsyncpa [#allocation6], 0
    %150 = vsyncpa [#allocation9], 0
    %151 = vsyncpa [#allocation4], 0
    %s152 = scalar_lea.sflag [#allocation4], 1
    %153 = vsyncpa %s152, 0
    loop: start=0, step=1, limit=4
    $region2: #{forward.1} parent=1 // loop_pre_header
      _
    $region3: #{forward.1} parent=1 // loop_header
      %s155 = sphi 0, %s159
      %p156 = scmp.ge.s32.totalorder %s155, 4
      %s165 = sphi 0, %s167
      %s168 = sphi 0, %s165
      %s169 = sphi 0, %s168
      %s185 = sphi 0, %s169
      %s191 = sphi 0, %s193
      %s194 = sphi 0, %s191
      %s195 = sphi 0, %s194
      %s211 = sphi 0, %s195
      %s217 = sphi 0, %s219
      %s220 = sphi 0, %s217
      %s221 = sphi 0, %s220
      %s237 = sphi 0, %s221
      %s241 = sphi 0, %s241
      %s243 = sphi 0, %s241
      %s244 = sphi 0, %s243
      %s258 = sphi 0, %s244
      %s262 = sphi 0, %s262
      %s264 = sphi 0, %s262
      %s265 = sphi 0, %s264
      %s279 = sphi 0, %s265
      %s283 = sphi 0, %s283
      %s285 = sphi 0, %s283
      %s286 = sphi 0, %s285
      %s300 = sphi 0, %s286
      %s304 = sphi 0, %s304
      %s306 = sphi 0, %s304
      %s307 = sphi 0, %s306
      %s321 = sphi 0, %s307
      %s325 = sphi 0, %s325
      %s327 = sphi 0, %s325
      %s328 = sphi 0, %s327
      %s342 = sphi 0, %s328
      %s346 = sphi 0, %s346
      %s348 = sphi 0, %s346
      %s349 = sphi 0, %s348
      %s363 = sphi 0, %s349
      %s367 = sphi 0, %s367
      %s369 = sphi 0, %s367
      %s370 = sphi 0, %s369
      %s384 = sphi 0, %s370
      %s388 = sphi 0, %s388
      %s390 = sphi 0, %s388
      %s391 = sphi 0, %s390
      %s405 = sphi 0, %s391
      %s409 = sphi 0, %s409
      %s411 = sphi 0, %s409
      %s412 = sphi 0, %s411
      %s426 = sphi 0, %s412
      %s430 = sphi 0, %s430
      %s432 = sphi 0, %s430
      %s433 = sphi 0, %s432
      %s447 = sphi 0, %s433
      %s451 = sphi 0, %s451
      %s453 = sphi 0, %s451
      %s454 = sphi 0, %s453
      %s468 = sphi 0, %s454
      %s472 = sphi 0, %s472
      %s474 = sphi 0, %s472
      %s475 = sphi 0, %s474
      %s489 = sphi 0, %s475
      %s493 = sphi 0, %s493
      %s495 = sphi 0, %s493
      %s496 = sphi 0, %s495
      %s510 = sphi 0, %s496
      %s514 = sphi 0, %s514
      %s516 = sphi 0, %s514
      %s517 = sphi 0, %s516
      %s531 = sphi 0, %s517
      %s535 = sphi 0, %s535
      %s537 = sphi 0, %s535
      %s538 = sphi 0, %s537
      %s552 = sphi 0, %s538
      %s556 = sphi 0, %s556
      %s558 = sphi 0, %s556
      %s559 = sphi 0, %s558
      %s573 = sphi 0, %s559
      %s577 = sphi 0, %s577
      %s579 = sphi 0, %s577
      %s580 = sphi 0, %s579
      %s594 = sphi 0, %s580
      %s598 = sphi 0, %s598
      %s600 = sphi 0, %s598
      %s601 = sphi 0, %s600
      %s615 = sphi 0, %s601
      %s619 = sphi 0, %s619
      %s621 = sphi 0, %s619
      %s622 = sphi 0, %s621
      %s636 = sphi 0, %s622
      %s640 = sphi 0, %s640
      %s642 = sphi 0, %s640
      %s643 = sphi 0, %s642
      %s657 = sphi 0, %s643
      %s661 = sphi 0, %s661
      %s663 = sphi 0, %s661
      %s664 = sphi 0, %s663
      %s678 = sphi 0, %s664
      %s682 = sphi 0, %s682
      %s684 = sphi 0, %s682
      %s685 = sphi 0, %s684
      %s699 = sphi 0, %s685
      %s703 = sphi 0, %s703
      %s705 = sphi 0, %s703
      %s706 = sphi 0, %s705
      %s720 = sphi 0, %s706
      %s724 = sphi 0, %s724
      %s726 = sphi 0, %s724
      %s727 = sphi 0, %s726
      %s741 = sphi 0, %s727
      %s745 = sphi 0, %s745
      %s747 = sphi 0, %s745
      %s748 = sphi 0, %s747
      %s762 = sphi 0, %s748
      %s766 = sphi 0, %s766
      %s768 = sphi 0, %s766
      %s769 = sphi 0, %s768
      %s783 = sphi 0, %s769
      %s787 = sphi 0, %s787
      %s789 = sphi 0, %s787
      %s790 = sphi 0, %s789
      %s804 = sphi 0, %s790
      %s808 = sphi 0, %s808
      %s810 = sphi 0, %s808
      %s811 = sphi 0, %s810
      %s825 = sphi 0, %s811
      %s829 = sphi 0, %s829
      %s831 = sphi 0, %s829
      %s832 = sphi 0, %s831
      %s846 = sphi 0, %s832
      %s850 = sphi 0, %s850
      %s852 = sphi 0, %s850
      %s853 = sphi 0, %s852
      %s867 = sphi 0, %s853
      %s871 = sphi 0, %s871
      %s873 = sphi 0, %s871
      %s874 = sphi 0, %s873
      %s888 = sphi 0, %s874
      %s892 = sphi 0, %s892
      %s894 = sphi 0, %s892
      %s895 = sphi 0, %s894
      %s909 = sphi 0, %s895
      %s913 = sphi 0, %s913
      %s915 = sphi 0, %s913
      %s916 = sphi 0, %s915
      %s930 = sphi 0, %s916
      %s934 = sphi 0, %s934
      %s936 = sphi 0, %s934
      %s937 = sphi 0, %s936
      %s951 = sphi 0, %s937
      %s955 = sphi 0, %s955
      %s957 = sphi 0, %s955
      %s958 = sphi 0, %s957
      %s972 = sphi 0, %s958
      %s976 = sphi 0, %s976
      %s978 = sphi 0, %s976
      %s979 = sphi 0, %s978
      %s993 = sphi 0, %s979
      %s997 = sphi 0, %s997
      %s999 = sphi 0, %s997
      %s1000 = sphi 0, %s999
      %s1014 = sphi 0, %s1000
      %s1018 = sphi 0, %s1018
      %s1020 = sphi 0, %s1018
      %s1021 = sphi 0, %s1020
      %s1035 = sphi 0, %s1021
      %s1039 = sphi 0, %s1039
      %s1041 = sphi 0, %s1039
      %s1042 = sphi 0, %s1041
      %s1056 = sphi 0, %s1042
      %s1060 = sphi 0, %s1060
      %s1062 = sphi 0, %s1060
      %s1063 = sphi 0, %s1062
      %s1077 = sphi 0, %s1063
      %s1081 = sphi 0, %s1081
      %s1083 = sphi 0, %s1081
      %s1084 = sphi 0, %s1083
      %s1098 = sphi 0, %s1084
      %s1102 = sphi 0, %s1102
      %s1104 = sphi 0, %s1102
      %s1105 = sphi 0, %s1104
      %s1119 = sphi 0, %s1105
      %s1123 = sphi 0, %s1123
      %s1125 = sphi 0, %s1123
      %s1126 = sphi 0, %s1125
      %s1140 = sphi 0, %s1126
      %s1144 = sphi 0, %s1144
      %s1146 = sphi 0, %s1144
      %s1147 = sphi 0, %s1146
      %s1161 = sphi 0, %s1147
      %s1165 = sphi 0, %s1165
      %s1167 = sphi 0, %s1165
      %s1168 = sphi 0, %s1167
      %s1182 = sphi 0, %s1168
      %s1186 = sphi 0, %s1186
      %s1188 = sphi 0, %s1186
      %s1189 = sphi 0, %s1188
      %s1203 = sphi 0, %s1189
      %s1207 = sphi 0, %s1207
      %s1209 = sphi 0, %s1207
      %s1210 = sphi 0, %s1209
      %s1224 = sphi 0, %s1210
      %s1228 = sphi 0, %s1228
      %s1230 = sphi 0, %s1228
      %s1231 = sphi 0, %s1230
      %s1245 = sphi 0, %s1231
      %s1249 = sphi 0, %s1249
      %s1251 = sphi 0, %s1249
      %s1252 = sphi 0, %s1251
      %s1266 = sphi 0, %s1252
      %s1270 = sphi 0, %s1270
      %s1272 = sphi 0, %s1270
      %s1273 = sphi 0, %s1272
      %s1287 = sphi 0, %s1273
      %s1291 = sphi 0, %s1291
      %s1293 = sphi 0, %s1291
      %s1294 = sphi 0, %s1293
      %s1308 = sphi 0, %s1294
      %s1312 = sphi 0, %s1312
      %s1314 = sphi 0, %s1312
      %s1315 = sphi 0, %s1314
      %s1329 = sphi 0, %s1315
      %s1333 = sphi 0, %s1333
      %s1335 = sphi 0, %s1333
      %s1336 = sphi 0, %s1335
      %s1350 = sphi 0, %s1336
      %s1354 = sphi 0, %s1354
      %s1356 = sphi 0, %s1354
      %s1357 = sphi 0, %s1356
      %s1371 = sphi 0, %s1357
      %s1375 = sphi 0, %s1375
      %s1377 = sphi 0, %s1375
      %s1378 = sphi 0, %s1377
      %s1392 = sphi 0, %s1378
      %s1396 = sphi 0, %s1396
      %s1398 = sphi 0, %s1396
      %s1399 = sphi 0, %s1398
      %s1413 = sphi 0, %s1399
      %s1417 = sphi 0, %s1417
      %s1419 = sphi 0, %s1417
      %s1420 = sphi 0, %s1419
      %s1434 = sphi 0, %s1420
      %s1438 = sphi 0, %s1438
      %s1440 = sphi 0, %s1438
      %s1441 = sphi 0, %s1440
      %s1455 = sphi 0, %s1441
      %s1459 = sphi 0, %s1459
      %s1461 = sphi 0, %s1459
      %s1462 = sphi 0, %s1461
      %s1476 = sphi 0, %s1462
      %s1480 = sphi 0, %s1480
      %s1482 = sphi 0, %s1480
      %s1483 = sphi 0, %s1482
      %s1497 = sphi 0, %s1483
      %s1501 = sphi 0, %s1501
      %s1503 = sphi 0, %s1501
      %s1504 = sphi 0, %s1503
      %s1518 = sphi 0, %s1504
      %s1522 = sphi 0, %s1522
      %s1524 = sphi 0, %s1522
      %s1525 = sphi 0, %s1524
      %s1539 = sphi 0, %s1525
      %s1543 = sphi 0, %s1543
      %s1545 = sphi 0, %s1543
      %s1546 = sphi 0, %s1545
      %s1560 = sphi 0, %s1546
      %s1564 = sphi 0, %s1564
      %s1566 = sphi 0, %s1564
      %s1567 = sphi 0, %s1566
      %s1581 = sphi 0, %s1567
      %s1585 = sphi 0, %s1585
      %s1587 = sphi 0, %s1585
      %s1588 = sphi 0, %s1587
      %s1602 = sphi 0, %s1588
      %s1606 = sphi 0, %s1606
      %s1608 = sphi 0, %s1606
      %s1609 = sphi 0, %s1608
      %s1623 = sphi 0, %s1609
      %s1627 = sphi 0, %s1627
      %s1629 = sphi 0, %s1627
      %s1630 = sphi 0, %s1629
      %s1644 = sphi 0, %s1630
      %s1648 = sphi 0, %s1648
      %s1650 = sphi 0, %s1648
      %s1651 = sphi 0, %s1650
      %s1665 = sphi 0, %s1651
      %s1671 = sphi 0, %s1673
      %s1674 = sphi 0, %s1671
      %s1675 = sphi 0, %s1674
      %s1691 = sphi 0, %s1675
    $region4: #{forward.1} parent=1 // loop_header_branch
      %158 = sbr.rel (%p156) target = $region8
    $region5: #{forward.1} parent=1 // loop_body
      %s160 = ssub.s32 %s155, 1
      %s161 = ssub.s32 %s155, 2
      %s162 = sadd.s32 %s155, 1
      %s163 = ssub.s32 %s155, %s162
      %p164 = scmp.eq.s32.totalorder %s163, 0
      %s166 = sadd.s32 %s165, 1
      %s167 = scalar_select %p164, %s165, %s166
      %p170 = pneg %p164
      %p171 = scmp.eq.s32.totalorder %s155, 1
      %p172 = por %p170, %p171
      %p173 = scmp.ne.s32.totalorder %s165, %s168
      %p174 = scmp.eq.s32.totalorder %s155, 0
      %p175 = por %p173, %p174
      %p176 = scmp.ne.s32.totalorder %s165, %s168
      %p177 = scmp.eq.s32.totalorder %s160, 1
      %p178 = por %p176, %p177
      %p179 = scmp.ne.s32.totalorder %s168, %s169
      %p180 = scmp.eq.s32.totalorder %s160, 0
      %p181 = por %p179, %p180
      %p182 = scmp.ne.s32.totalorder %s168, %s169
      %p183 = scmp.eq.s32.totalorder %s161, 1
      %p184 = por %p182, %p183
      %p186 = scmp.ne.s32.totalorder %s169, %s185
      %p187 = scmp.eq.s32.totalorder %s161, 0
      %p188 = por %p186, %p187
      %s189 = ssub.s32 %s155, %s162
      %p190 = scmp.eq.s32.totalorder %s189, 0
      %s192 = sadd.s32 %s191, 1
      %s193 = scalar_select %p190, %s191, %s192
      %p196 = pneg %p190
      %p197 = scmp.eq.s32.totalorder %s155, 1
      %p198 = por %p196, %p197
      %p199 = scmp.ne.s32.totalorder %s191, %s194
      %p200 = scmp.eq.s32.totalorder %s155, 0
      %p201 = por %p199, %p200
      %p202 = scmp.ne.s32.totalorder %s191, %s194
      %p203 = scmp.eq.s32.totalorder %s160, 1
      %p204 = por %p202, %p203
      %p205 = scmp.ne.s32.totalorder %s194, %s195
      %p206 = scmp.eq.s32.totalorder %s160, 0
      %p207 = por %p205, %p206
      %p208 = scmp.ne.s32.totalorder %s194, %s195
      %p209 = scmp.eq.s32.totalorder %s161, 1
      %p210 = por %p208, %p209
      %p212 = scmp.ne.s32.totalorder %s195, %s211
      %p213 = scmp.eq.s32.totalorder %s161, 0
      %p214 = por %p212, %p213
      %s215 = ssub.s32 %s155, %s162
      %p216 = scmp.eq.s32.totalorder %s215, 0
      %s218 = sadd.s32 %s217, 1
      %s219 = scalar_select %p216, %s217, %s218
      %p222 = pneg %p216
      %p223 = scmp.eq.s32.totalorder %s155, 1
      %p224 = por %p222, %p223
      %p225 = scmp.ne.s32.totalorder %s217, %s220
      %p226 = scmp.eq.s32.totalorder %s155, 0
      %p227 = por %p225, %p226
      %p228 = scmp.ne.s32.totalorder %s217, %s220
      %p229 = scmp.eq.s32.totalorder %s160, 1
      %p230 = por %p228, %p229
      %p231 = scmp.ne.s32.totalorder %s220, %s221
      %p232 = scmp.eq.s32.totalorder %s160, 0
      %p233 = por %p231, %p232
      %p234 = scmp.ne.s32.totalorder %s220, %s221
      %p235 = scmp.eq.s32.totalorder %s161, 1
      %p236 = por %p234, %p235
      %p238 = scmp.ne.s32.totalorder %s221, %s237
      %p239 = scmp.eq.s32.totalorder %s161, 0
      %p240 = por %p238, %p239
      %s242 = sadd.s32 %s241, 1
      %p245 = scmp.eq.s32.totalorder %s155, 1
      %p246 = scmp.ne.s32.totalorder %s241, %s243
      %p247 = scmp.eq.s32.totalorder %s155, 0
      %p248 = por %p246, %p247
      %p249 = scmp.ne.s32.totalorder %s241, %s243
      %p250 = scmp.eq.s32.totalorder %s160, 1
      %p251 = por %p249, %p250
      %p252 = scmp.ne.s32.totalorder %s243, %s244
      %p253 = scmp.eq.s32.totalorder %s160, 0
      %p254 = por %p252, %p253
      %p255 = scmp.ne.s32.totalorder %s243, %s244
      %p256 = scmp.eq.s32.totalorder %s161, 1
      %p257 = por %p255, %p256
      %p259 = scmp.ne.s32.totalorder %s244, %s258
      %p260 = scmp.eq.s32.totalorder %s161, 0
      %p261 = por %p259, %p260
      %s263 = sadd.s32 %s262, 1
      %p266 = scmp.eq.s32.totalorder %s155, 1
      %p267 = scmp.ne.s32.totalorder %s262, %s264
      %p268 = scmp.eq.s32.totalorder %s155, 0
      %p269 = por %p267, %p268
      %p270 = scmp.ne.s32.totalorder %s262, %s264
      %p271 = scmp.eq.s32.totalorder %s160, 1
      %p272 = por %p270, %p271
      %p273 = scmp.ne.s32.totalorder %s264, %s265
      %p274 = scmp.eq.s32.totalorder %s160, 0
      %p275 = por %p273, %p274
      %p276 = scmp.ne.s32.totalorder %s264, %s265
      %p277 = scmp.eq.s32.totalorder %s161, 1
      %p278 = por %p276, %p277
      %p280 = scmp.ne.s32.totalorder %s265, %s279
      %p281 = scmp.eq.s32.totalorder %s161, 0
      %p282 = por %p280, %p281
      %s284 = sadd.s32 %s283, 1
      %p287 = scmp.eq.s32.totalorder %s155, 1
      %p288 = scmp.ne.s32.totalorder %s283, %s285
      %p289 = scmp.eq.s32.totalorder %s155, 0
      %p290 = por %p288, %p289
      %p291 = scmp.ne.s32.totalorder %s283, %s285
      %p292 = scmp.eq.s32.totalorder %s160, 1
      %p293 = por %p291, %p292
      %p294 = scmp.ne.s32.totalorder %s285, %s286
      %p295 = scmp.eq.s32.totalorder %s160, 0
      %p296 = por %p294, %p295
      %p297 = scmp.ne.s32.totalorder %s285, %s286
      %p298 = scmp.eq.s32.totalorder %s161, 1
      %p299 = por %p297, %p298
      %p301 = scmp.ne.s32.totalorder %s286, %s300
      %p302 = scmp.eq.s32.totalorder %s161, 0
      %p303 = por %p301, %p302
      %s305 = sadd.s32 %s304, 1
      %p308 = scmp.eq.s32.totalorder %s155, 1
      %p309 = scmp.ne.s32.totalorder %s304, %s306
      %p310 = scmp.eq.s32.totalorder %s155, 0
      %p311 = por %p309, %p310
      %p312 = scmp.ne.s32.totalorder %s304, %s306
      %p313 = scmp.eq.s32.totalorder %s160, 1
      %p314 = por %p312, %p313
      %p315 = scmp.ne.s32.totalorder %s306, %s307
      %p316 = scmp.eq.s32.totalorder %s160, 0
      %p317 = por %p315, %p316
      %p318 = scmp.ne.s32.totalorder %s306, %s307
      %p319 = scmp.eq.s32.totalorder %s161, 1
      %p320 = por %p318, %p319
      %p322 = scmp.ne.s32.totalorder %s307, %s321
      %p323 = scmp.eq.s32.totalorder %s161, 0
      %p324 = por %p322, %p323
      %s326 = sadd.s32 %s325, 1
      %p329 = scmp.eq.s32.totalorder %s155, 1
      %p330 = scmp.ne.s32.totalorder %s325, %s327
      %p331 = scmp.eq.s32.totalorder %s155, 0
      %p332 = por %p330, %p331
      %p333 = scmp.ne.s32.totalorder %s325, %s327
      %p334 = scmp.eq.s32.totalorder %s160, 1
      %p335 = por %p333, %p334
      %p336 = scmp.ne.s32.totalorder %s327, %s328
      %p337 = scmp.eq.s32.totalorder %s160, 0
      %p338 = por %p336, %p337
      %p339 = scmp.ne.s32.totalorder %s327, %s328
      %p340 = scmp.eq.s32.totalorder %s161, 1
      %p341 = por %p339, %p340
      %p343 = scmp.ne.s32.totalorder %s328, %s342
      %p344 = scmp.eq.s32.totalorder %s161, 0
      %p345 = por %p343, %p344
      %s347 = sadd.s32 %s346, 1
      %p350 = scmp.eq.s32.totalorder %s155, 1
      %p351 = scmp.ne.s32.totalorder %s346, %s348
      %p352 = scmp.eq.s32.totalorder %s155, 0
      %p353 = por %p351, %p352
      %p354 = scmp.ne.s32.totalorder %s346, %s348
      %p355 = scmp.eq.s32.totalorder %s160, 1
      %p356 = por %p354, %p355
      %p357 = scmp.ne.s32.totalorder %s348, %s349
      %p358 = scmp.eq.s32.totalorder %s160, 0
      %p359 = por %p357, %p358
      %p360 = scmp.ne.s32.totalorder %s348, %s349
      %p361 = scmp.eq.s32.totalorder %s161, 1
      %p362 = por %p360, %p361
      %p364 = scmp.ne.s32.totalorder %s349, %s363
      %p365 = scmp.eq.s32.totalorder %s161, 0
      %p366 = por %p364, %p365
      %s368 = sadd.s32 %s367, 1
      %p371 = scmp.eq.s32.totalorder %s155, 1
      %p372 = scmp.ne.s32.totalorder %s367, %s369
      %p373 = scmp.eq.s32.totalorder %s155, 0
      %p374 = por %p372, %p373
      %p375 = scmp.ne.s32.totalorder %s367, %s369
      %p376 = scmp.eq.s32.totalorder %s160, 1
      %p377 = por %p375, %p376
      %p378 = scmp.ne.s32.totalorder %s369, %s370
      %p379 = scmp.eq.s32.totalorder %s160, 0
      %p380 = por %p378, %p379
      %p381 = scmp.ne.s32.totalorder %s369, %s370
      %p382 = scmp.eq.s32.totalorder %s161, 1
      %p383 = por %p381, %p382
      %p385 = scmp.ne.s32.totalorder %s370, %s384
      %p386 = scmp.eq.s32.totalorder %s161, 0
      %p387 = por %p385, %p386
      %s389 = sadd.s32 %s388, 1
      %p392 = scmp.eq.s32.totalorder %s155, 1
      %p393 = scmp.ne.s32.totalorder %s388, %s390
      %p394 = scmp.eq.s32.totalorder %s155, 0
      %p395 = por %p393, %p394
      %p396 = scmp.ne.s32.totalorder %s388, %s390
      %p397 = scmp.eq.s32.totalorder %s160, 1
      %p398 = por %p396, %p397
      %p399 = scmp.ne.s32.totalorder %s390, %s391
      %p400 = scmp.eq.s32.totalorder %s160, 0
      %p401 = por %p399, %p400
      %p402 = scmp.ne.s32.totalorder %s390, %s391
      %p403 = scmp.eq.s32.totalorder %s161, 1
      %p404 = por %p402, %p403
      %p406 = scmp.ne.s32.totalorder %s391, %s405
      %p407 = scmp.eq.s32.totalorder %s161, 0
      %p408 = por %p406, %p407
      %s410 = sadd.s32 %s409, 1
      %p413 = scmp.eq.s32.totalorder %s155, 1
      %p414 = scmp.ne.s32.totalorder %s409, %s411
      %p415 = scmp.eq.s32.totalorder %s155, 0
      %p416 = por %p414, %p415
      %p417 = scmp.ne.s32.totalorder %s409, %s411
      %p418 = scmp.eq.s32.totalorder %s160, 1
      %p419 = por %p417, %p418
      %p420 = scmp.ne.s32.totalorder %s411, %s412
      %p421 = scmp.eq.s32.totalorder %s160, 0
      %p422 = por %p420, %p421
      %p423 = scmp.ne.s32.totalorder %s411, %s412
      %p424 = scmp.eq.s32.totalorder %s161, 1
      %p425 = por %p423, %p424
      %p427 = scmp.ne.s32.totalorder %s412, %s426
      %p428 = scmp.eq.s32.totalorder %s161, 0
      %p429 = por %p427, %p428
      %s431 = sadd.s32 %s430, 1
      %p434 = scmp.eq.s32.totalorder %s155, 1
      %p435 = scmp.ne.s32.totalorder %s430, %s432
      %p436 = scmp.eq.s32.totalorder %s155, 0
      %p437 = por %p435, %p436
      %p438 = scmp.ne.s32.totalorder %s430, %s432
      %p439 = scmp.eq.s32.totalorder %s160, 1
      %p440 = por %p438, %p439
      %p441 = scmp.ne.s32.totalorder %s432, %s433
      %p442 = scmp.eq.s32.totalorder %s160, 0
      %p443 = por %p441, %p442
      %p444 = scmp.ne.s32.totalorder %s432, %s433
      %p445 = scmp.eq.s32.totalorder %s161, 1
      %p446 = por %p444, %p445
      %p448 = scmp.ne.s32.totalorder %s433, %s447
      %p449 = scmp.eq.s32.totalorder %s161, 0
      %p450 = por %p448, %p449
      %s452 = sadd.s32 %s451, 1
      %p455 = scmp.eq.s32.totalorder %s155, 1
      %p456 = scmp.ne.s32.totalorder %s451, %s453
      %p457 = scmp.eq.s32.totalorder %s155, 0
      %p458 = por %p456, %p457
      %p459 = scmp.ne.s32.totalorder %s451, %s453
      %p460 = scmp.eq.s32.totalorder %s160, 1
      %p461 = por %p459, %p460
      %p462 = scmp.ne.s32.totalorder %s453, %s454
      %p463 = scmp.eq.s32.totalorder %s160, 0
      %p464 = por %p462, %p463
      %p465 = scmp.ne.s32.totalorder %s453, %s454
      %p466 = scmp.eq.s32.totalorder %s161, 1
      %p467 = por %p465, %p466
      %p469 = scmp.ne.s32.totalorder %s454, %s468
      %p470 = scmp.eq.s32.totalorder %s161, 0
      %p471 = por %p469, %p470
      %s473 = sadd.s32 %s472, 1
      %p476 = scmp.eq.s32.totalorder %s155, 1
      %p477 = scmp.ne.s32.totalorder %s472, %s474
      %p478 = scmp.eq.s32.totalorder %s155, 0
      %p479 = por %p477, %p478
      %p480 = scmp.ne.s32.totalorder %s472, %s474
      %p481 = scmp.eq.s32.totalorder %s160, 1
      %p482 = por %p480, %p481
      %p483 = scmp.ne.s32.totalorder %s474, %s475
      %p484 = scmp.eq.s32.totalorder %s160, 0
      %p485 = por %p483, %p484
      %p486 = scmp.ne.s32.totalorder %s474, %s475
      %p487 = scmp.eq.s32.totalorder %s161, 1
      %p488 = por %p486, %p487
      %p490 = scmp.ne.s32.totalorder %s475, %s489
      %p491 = scmp.eq.s32.totalorder %s161, 0
      %p492 = por %p490, %p491
      %s494 = sadd.s32 %s493, 1
      %p497 = scmp.eq.s32.totalorder %s155, 1
      %p498 = scmp.ne.s32.totalorder %s493, %s495
      %p499 = scmp.eq.s32.totalorder %s155, 0
      %p500 = por %p498, %p499
      %p501 = scmp.ne.s32.totalorder %s493, %s495
      %p502 = scmp.eq.s32.totalorder %s160, 1
      %p503 = por %p501, %p502
      %p504 = scmp.ne.s32.totalorder %s495, %s496
      %p505 = scmp.eq.s32.totalorder %s160, 0
      %p506 = por %p504, %p505
      %p507 = scmp.ne.s32.totalorder %s495, %s496
      %p508 = scmp.eq.s32.totalorder %s161, 1
      %p509 = por %p507, %p508
      %p511 = scmp.ne.s32.totalorder %s496, %s510
      %p512 = scmp.eq.s32.totalorder %s161, 0
      %p513 = por %p511, %p512
      %s515 = sadd.s32 %s514, 1
      %p518 = scmp.eq.s32.totalorder %s155, 1
      %p519 = scmp.ne.s32.totalorder %s514, %s516
      %p520 = scmp.eq.s32.totalorder %s155, 0
      %p521 = por %p519, %p520
      %p522 = scmp.ne.s32.totalorder %s514, %s516
      %p523 = scmp.eq.s32.totalorder %s160, 1
      %p524 = por %p522, %p523
      %p525 = scmp.ne.s32.totalorder %s516, %s517
      %p526 = scmp.eq.s32.totalorder %s160, 0
      %p527 = por %p525, %p526
      %p528 = scmp.ne.s32.totalorder %s516, %s517
      %p529 = scmp.eq.s32.totalorder %s161, 1
      %p530 = por %p528, %p529
      %p532 = scmp.ne.s32.totalorder %s517, %s531
      %p533 = scmp.eq.s32.totalorder %s161, 0
      %p534 = por %p532, %p533
      %s536 = sadd.s32 %s535, 1
      %p539 = scmp.eq.s32.totalorder %s155, 1
      %p540 = scmp.ne.s32.totalorder %s535, %s537
      %p541 = scmp.eq.s32.totalorder %s155, 0
      %p542 = por %p540, %p541
      %p543 = scmp.ne.s32.totalorder %s535, %s537
      %p544 = scmp.eq.s32.totalorder %s160, 1
      %p545 = por %p543, %p544
      %p546 = scmp.ne.s32.totalorder %s537, %s538
      %p547 = scmp.eq.s32.totalorder %s160, 0
      %p548 = por %p546, %p547
      %p549 = scmp.ne.s32.totalorder %s537, %s538
      %p550 = scmp.eq.s32.totalorder %s161, 1
      %p551 = por %p549, %p550
      %p553 = scmp.ne.s32.totalorder %s538, %s552
      %p554 = scmp.eq.s32.totalorder %s161, 0
      %p555 = por %p553, %p554
      %s557 = sadd.s32 %s556, 1
      %p560 = scmp.eq.s32.totalorder %s155, 1
      %p561 = scmp.ne.s32.totalorder %s556, %s558
      %p562 = scmp.eq.s32.totalorder %s155, 0
      %p563 = por %p561, %p562
      %p564 = scmp.ne.s32.totalorder %s556, %s558
      %p565 = scmp.eq.s32.totalorder %s160, 1
      %p566 = por %p564, %p565
      %p567 = scmp.ne.s32.totalorder %s558, %s559
      %p568 = scmp.eq.s32.totalorder %s160, 0
      %p569 = por %p567, %p568
      %p570 = scmp.ne.s32.totalorder %s558, %s559
      %p571 = scmp.eq.s32.totalorder %s161, 1
      %p572 = por %p570, %p571
      %p574 = scmp.ne.s32.totalorder %s559, %s573
      %p575 = scmp.eq.s32.totalorder %s161, 0
      %p576 = por %p574, %p575
      %s578 = sadd.s32 %s577, 1
      %p581 = scmp.eq.s32.totalorder %s155, 1
      %p582 = scmp.ne.s32.totalorder %s577, %s579
      %p583 = scmp.eq.s32.totalorder %s155, 0
      %p584 = por %p582, %p583
      %p585 = scmp.ne.s32.totalorder %s577, %s579
      %p586 = scmp.eq.s32.totalorder %s160, 1
      %p587 = por %p585, %p586
      %p588 = scmp.ne.s32.totalorder %s579, %s580
      %p589 = scmp.eq.s32.totalorder %s160, 0
      %p590 = por %p588, %p589
      %p591 = scmp.ne.s32.totalorder %s579, %s580
      %p592 = scmp.eq.s32.totalorder %s161, 1
      %p593 = por %p591, %p592
      %p595 = scmp.ne.s32.totalorder %s580, %s594
      %p596 = scmp.eq.s32.totalorder %s161, 0
      %p597 = por %p595, %p596
      %s599 = sadd.s32 %s598, 1
      %p602 = scmp.eq.s32.totalorder %s155, 1
      %p603 = scmp.ne.s32.totalorder %s598, %s600
      %p604 = scmp.eq.s32.totalorder %s155, 0
      %p605 = por %p603, %p604
      %p606 = scmp.ne.s32.totalorder %s598, %s600
      %p607 = scmp.eq.s32.totalorder %s160, 1
      %p608 = por %p606, %p607
      %p609 = scmp.ne.s32.totalorder %s600, %s601
      %p610 = scmp.eq.s32.totalorder %s160, 0
      %p611 = por %p609, %p610
      %p612 = scmp.ne.s32.totalorder %s600, %s601
      %p613 = scmp.eq.s32.totalorder %s161, 1
      %p614 = por %p612, %p613
      %p616 = scmp.ne.s32.totalorder %s601, %s615
      %p617 = scmp.eq.s32.totalorder %s161, 0
      %p618 = por %p616, %p617
      %s620 = sadd.s32 %s619, 1
      %p623 = scmp.eq.s32.totalorder %s155, 1
      %p624 = scmp.ne.s32.totalorder %s619, %s621
      %p625 = scmp.eq.s32.totalorder %s155, 0
      %p626 = por %p624, %p625
      %p627 = scmp.ne.s32.totalorder %s619, %s621
      %p628 = scmp.eq.s32.totalorder %s160, 1
      %p629 = por %p627, %p628
      %p630 = scmp.ne.s32.totalorder %s621, %s622
      %p631 = scmp.eq.s32.totalorder %s160, 0
      %p632 = por %p630, %p631
      %p633 = scmp.ne.s32.totalorder %s621, %s622
      %p634 = scmp.eq.s32.totalorder %s161, 1
      %p635 = por %p633, %p634
      %p637 = scmp.ne.s32.totalorder %s622, %s636
      %p638 = scmp.eq.s32.totalorder %s161, 0
      %p639 = por %p637, %p638
      %s641 = sadd.s32 %s640, 1
      %p644 = scmp.eq.s32.totalorder %s155, 1
      %p645 = scmp.ne.s32.totalorder %s640, %s642
      %p646 = scmp.eq.s32.totalorder %s155, 0
      %p647 = por %p645, %p646
      %p648 = scmp.ne.s32.totalorder %s640, %s642
      %p649 = scmp.eq.s32.totalorder %s160, 1
      %p650 = por %p648, %p649
      %p651 = scmp.ne.s32.totalorder %s642, %s643
      %p652 = scmp.eq.s32.totalorder %s160, 0
      %p653 = por %p651, %p652
      %p654 = scmp.ne.s32.totalorder %s642, %s643
      %p655 = scmp.eq.s32.totalorder %s161, 1
      %p656 = por %p654, %p655
      %p658 = scmp.ne.s32.totalorder %s643, %s657
      %p659 = scmp.eq.s32.totalorder %s161, 0
      %p660 = por %p658, %p659
      %s662 = sadd.s32 %s661, 1
      %p665 = scmp.eq.s32.totalorder %s155, 1
      %p666 = scmp.ne.s32.totalorder %s661, %s663
      %p667 = scmp.eq.s32.totalorder %s155, 0
      %p668 = por %p666, %p667
      %p669 = scmp.ne.s32.totalorder %s661, %s663
      %p670 = scmp.eq.s32.totalorder %s160, 1
      %p671 = por %p669, %p670
      %p672 = scmp.ne.s32.totalorder %s663, %s664
      %p673 = scmp.eq.s32.totalorder %s160, 0
      %p674 = por %p672, %p673
      %p675 = scmp.ne.s32.totalorder %s663, %s664
      %p676 = scmp.eq.s32.totalorder %s161, 1
      %p677 = por %p675, %p676
      %p679 = scmp.ne.s32.totalorder %s664, %s678
      %p680 = scmp.eq.s32.totalorder %s161, 0
      %p681 = por %p679, %p680
      %s683 = sadd.s32 %s682, 1
      %p686 = scmp.eq.s32.totalorder %s155, 1
      %p687 = scmp.ne.s32.totalorder %s682, %s684
      %p688 = scmp.eq.s32.totalorder %s155, 0
      %p689 = por %p687, %p688
      %p690 = scmp.ne.s32.totalorder %s682, %s684
      %p691 = scmp.eq.s32.totalorder %s160, 1
      %p692 = por %p690, %p691
      %p693 = scmp.ne.s32.totalorder %s684, %s685
      %p694 = scmp.eq.s32.totalorder %s160, 0
      %p695 = por %p693, %p694
      %p696 = scmp.ne.s32.totalorder %s684, %s685
      %p697 = scmp.eq.s32.totalorder %s161, 1
      %p698 = por %p696, %p697
      %p700 = scmp.ne.s32.totalorder %s685, %s699
      %p701 = scmp.eq.s32.totalorder %s161, 0
      %p702 = por %p700, %p701
      %s704 = sadd.s32 %s703, 1
      %p707 = scmp.eq.s32.totalorder %s155, 1
      %p708 = scmp.ne.s32.totalorder %s703, %s705
      %p709 = scmp.eq.s32.totalorder %s155, 0
      %p710 = por %p708, %p709
      %p711 = scmp.ne.s32.totalorder %s703, %s705
      %p712 = scmp.eq.s32.totalorder %s160, 1
      %p713 = por %p711, %p712
      %p714 = scmp.ne.s32.totalorder %s705, %s706
      %p715 = scmp.eq.s32.totalorder %s160, 0
      %p716 = por %p714, %p715
      %p717 = scmp.ne.s32.totalorder %s705, %s706
      %p718 = scmp.eq.s32.totalorder %s161, 1
      %p719 = por %p717, %p718
      %p721 = scmp.ne.s32.totalorder %s706, %s720
      %p722 = scmp.eq.s32.totalorder %s161, 0
      %p723 = por %p721, %p722
      %s725 = sadd.s32 %s724, 1
      %p728 = scmp.eq.s32.totalorder %s155, 1
      %p729 = scmp.ne.s32.totalorder %s724, %s726
      %p730 = scmp.eq.s32.totalorder %s155, 0
      %p731 = por %p729, %p730
      %p732 = scmp.ne.s32.totalorder %s724, %s726
      %p733 = scmp.eq.s32.totalorder %s160, 1
      %p734 = por %p732, %p733
      %p735 = scmp.ne.s32.totalorder %s726, %s727
      %p736 = scmp.eq.s32.totalorder %s160, 0
      %p737 = por %p735, %p736
      %p738 = scmp.ne.s32.totalorder %s726, %s727
      %p739 = scmp.eq.s32.totalorder %s161, 1
      %p740 = por %p738, %p739
      %p742 = scmp.ne.s32.totalorder %s727, %s741
      %p743 = scmp.eq.s32.totalorder %s161, 0
      %p744 = por %p742, %p743
      %s746 = sadd.s32 %s745, 1
      %p749 = scmp.eq.s32.totalorder %s155, 1
      %p750 = scmp.ne.s32.totalorder %s745, %s747
      %p751 = scmp.eq.s32.totalorder %s155, 0
      %p752 = por %p750, %p751
      %p753 = scmp.ne.s32.totalorder %s745, %s747
      %p754 = scmp.eq.s32.totalorder %s160, 1
      %p755 = por %p753, %p754
      %p756 = scmp.ne.s32.totalorder %s747, %s748
      %p757 = scmp.eq.s32.totalorder %s160, 0
      %p758 = por %p756, %p757
      %p759 = scmp.ne.s32.totalorder %s747, %s748
      %p760 = scmp.eq.s32.totalorder %s161, 1
      %p761 = por %p759, %p760
      %p763 = scmp.ne.s32.totalorder %s748, %s762
      %p764 = scmp.eq.s32.totalorder %s161, 0
      %p765 = por %p763, %p764
      %s767 = sadd.s32 %s766, 1
      %p770 = scmp.eq.s32.totalorder %s155, 1
      %p771 = scmp.ne.s32.totalorder %s766, %s768
      %p772 = scmp.eq.s32.totalorder %s155, 0
      %p773 = por %p771, %p772
      %p774 = scmp.ne.s32.totalorder %s766, %s768
      %p775 = scmp.eq.s32.totalorder %s160, 1
      %p776 = por %p774, %p775
      %p777 = scmp.ne.s32.totalorder %s768, %s769
      %p778 = scmp.eq.s32.totalorder %s160, 0
      %p779 = por %p777, %p778
      %p780 = scmp.ne.s32.totalorder %s768, %s769
      %p781 = scmp.eq.s32.totalorder %s161, 1
      %p782 = por %p780, %p781
      %p784 = scmp.ne.s32.totalorder %s769, %s783
      %p785 = scmp.eq.s32.totalorder %s161, 0
      %p786 = por %p784, %p785
      %s788 = sadd.s32 %s787, 1
      %p791 = scmp.eq.s32.totalorder %s155, 1
      %p792 = scmp.ne.s32.totalorder %s787, %s789
      %p793 = scmp.eq.s32.totalorder %s155, 0
      %p794 = por %p792, %p793
      %p795 = scmp.ne.s32.totalorder %s787, %s789
      %p796 = scmp.eq.s32.totalorder %s160, 1
      %p797 = por %p795, %p796
      %p798 = scmp.ne.s32.totalorder %s789, %s790
      %p799 = scmp.eq.s32.totalorder %s160, 0
      %p800 = por %p798, %p799
      %p801 = scmp.ne.s32.totalorder %s789, %s790
      %p802 = scmp.eq.s32.totalorder %s161, 1
      %p803 = por %p801, %p802
      %p805 = scmp.ne.s32.totalorder %s790, %s804
      %p806 = scmp.eq.s32.totalorder %s161, 0
      %p807 = por %p805, %p806
      %s809 = sadd.s32 %s808, 1
      %p812 = scmp.eq.s32.totalorder %s155, 1
      %p813 = scmp.ne.s32.totalorder %s808, %s810
      %p814 = scmp.eq.s32.totalorder %s155, 0
      %p815 = por %p813, %p814
      %p816 = scmp.ne.s32.totalorder %s808, %s810
      %p817 = scmp.eq.s32.totalorder %s160, 1
      %p818 = por %p816, %p817
      %p819 = scmp.ne.s32.totalorder %s810, %s811
      %p820 = scmp.eq.s32.totalorder %s160, 0
      %p821 = por %p819, %p820
      %p822 = scmp.ne.s32.totalorder %s810, %s811
      %p823 = scmp.eq.s32.totalorder %s161, 1
      %p824 = por %p822, %p823
      %p826 = scmp.ne.s32.totalorder %s811, %s825
      %p827 = scmp.eq.s32.totalorder %s161, 0
      %p828 = por %p826, %p827
      %s830 = sadd.s32 %s829, 1
      %p833 = scmp.eq.s32.totalorder %s155, 1
      %p834 = scmp.ne.s32.totalorder %s829, %s831
      %p835 = scmp.eq.s32.totalorder %s155, 0
      %p836 = por %p834, %p835
      %p837 = scmp.ne.s32.totalorder %s829, %s831
      %p838 = scmp.eq.s32.totalorder %s160, 1
      %p839 = por %p837, %p838
      %p840 = scmp.ne.s32.totalorder %s831, %s832
      %p841 = scmp.eq.s32.totalorder %s160, 0
      %p842 = por %p840, %p841
      %p843 = scmp.ne.s32.totalorder %s831, %s832
      %p844 = scmp.eq.s32.totalorder %s161, 1
      %p845 = por %p843, %p844
      %p847 = scmp.ne.s32.totalorder %s832, %s846
      %p848 = scmp.eq.s32.totalorder %s161, 0
      %p849 = por %p847, %p848
      %s851 = sadd.s32 %s850, 1
      %p854 = scmp.eq.s32.totalorder %s155, 1
      %p855 = scmp.ne.s32.totalorder %s850, %s852
      %p856 = scmp.eq.s32.totalorder %s155, 0
      %p857 = por %p855, %p856
      %p858 = scmp.ne.s32.totalorder %s850, %s852
      %p859 = scmp.eq.s32.totalorder %s160, 1
      %p860 = por %p858, %p859
      %p861 = scmp.ne.s32.totalorder %s852, %s853
      %p862 = scmp.eq.s32.totalorder %s160, 0
      %p863 = por %p861, %p862
      %p864 = scmp.ne.s32.totalorder %s852, %s853
      %p865 = scmp.eq.s32.totalorder %s161, 1
      %p866 = por %p864, %p865
      %p868 = scmp.ne.s32.totalorder %s853, %s867
      %p869 = scmp.eq.s32.totalorder %s161, 0
      %p870 = por %p868, %p869
      %s872 = sadd.s32 %s871, 1
      %p875 = scmp.eq.s32.totalorder %s155, 1
      %p876 = scmp.ne.s32.totalorder %s871, %s873
      %p877 = scmp.eq.s32.totalorder %s155, 0
      %p878 = por %p876, %p877
      %p879 = scmp.ne.s32.totalorder %s871, %s873
      %p880 = scmp.eq.s32.totalorder %s160, 1
      %p881 = por %p879, %p880
      %p882 = scmp.ne.s32.totalorder %s873, %s874
      %p883 = scmp.eq.s32.totalorder %s160, 0
      %p884 = por %p882, %p883
      %p885 = scmp.ne.s32.totalorder %s873, %s874
      %p886 = scmp.eq.s32.totalorder %s161, 1
      %p887 = por %p885, %p886
      %p889 = scmp.ne.s32.totalorder %s874, %s888
      %p890 = scmp.eq.s32.totalorder %s161, 0
      %p891 = por %p889, %p890
      %s893 = sadd.s32 %s892, 1
      %p896 = scmp.eq.s32.totalorder %s155, 1
      %p897 = scmp.ne.s32.totalorder %s892, %s894
      %p898 = scmp.eq.s32.totalorder %s155, 0
      %p899 = por %p897, %p898
      %p900 = scmp.ne.s32.totalorder %s892, %s894
      %p901 = scmp.eq.s32.totalorder %s160, 1
      %p902 = por %p900, %p901
      %p903 = scmp.ne.s32.totalorder %s894, %s895
      %p904 = scmp.eq.s32.totalorder %s160, 0
      %p905 = por %p903, %p904
      %p906 = scmp.ne.s32.totalorder %s894, %s895
      %p907 = scmp.eq.s32.totalorder %s161, 1
      %p908 = por %p906, %p907
      %p910 = scmp.ne.s32.totalorder %s895, %s909
      %p911 = scmp.eq.s32.totalorder %s161, 0
      %p912 = por %p910, %p911
      %s914 = sadd.s32 %s913, 1
      %p917 = scmp.eq.s32.totalorder %s155, 1
      %p918 = scmp.ne.s32.totalorder %s913, %s915
      %p919 = scmp.eq.s32.totalorder %s155, 0
      %p920 = por %p918, %p919
      %p921 = scmp.ne.s32.totalorder %s913, %s915
      %p922 = scmp.eq.s32.totalorder %s160, 1
      %p923 = por %p921, %p922
      %p924 = scmp.ne.s32.totalorder %s915, %s916
      %p925 = scmp.eq.s32.totalorder %s160, 0
      %p926 = por %p924, %p925
      %p927 = scmp.ne.s32.totalorder %s915, %s916
      %p928 = scmp.eq.s32.totalorder %s161, 1
      %p929 = por %p927, %p928
      %p931 = scmp.ne.s32.totalorder %s916, %s930
      %p932 = scmp.eq.s32.totalorder %s161, 0
      %p933 = por %p931, %p932
      %s935 = sadd.s32 %s934, 1
      %p938 = scmp.eq.s32.totalorder %s155, 1
      %p939 = scmp.ne.s32.totalorder %s934, %s936
      %p940 = scmp.eq.s32.totalorder %s155, 0
      %p941 = por %p939, %p940
      %p942 = scmp.ne.s32.totalorder %s934, %s936
      %p943 = scmp.eq.s32.totalorder %s160, 1
      %p944 = por %p942, %p943
      %p945 = scmp.ne.s32.totalorder %s936, %s937
      %p946 = scmp.eq.s32.totalorder %s160, 0
      %p947 = por %p945, %p946
      %p948 = scmp.ne.s32.totalorder %s936, %s937
      %p949 = scmp.eq.s32.totalorder %s161, 1
      %p950 = por %p948, %p949
      %p952 = scmp.ne.s32.totalorder %s937, %s951
      %p953 = scmp.eq.s32.totalorder %s161, 0
      %p954 = por %p952, %p953
      %s956 = sadd.s32 %s955, 1
      %p959 = scmp.eq.s32.totalorder %s155, 1
      %p960 = scmp.ne.s32.totalorder %s955, %s957
      %p961 = scmp.eq.s32.totalorder %s155, 0
      %p962 = por %p960, %p961
      %p963 = scmp.ne.s32.totalorder %s955, %s957
      %p964 = scmp.eq.s32.totalorder %s160, 1
      %p965 = por %p963, %p964
      %p966 = scmp.ne.s32.totalorder %s957, %s958
      %p967 = scmp.eq.s32.totalorder %s160, 0
      %p968 = por %p966, %p967
      %p969 = scmp.ne.s32.totalorder %s957, %s958
      %p970 = scmp.eq.s32.totalorder %s161, 1
      %p971 = por %p969, %p970
      %p973 = scmp.ne.s32.totalorder %s958, %s972
      %p974 = scmp.eq.s32.totalorder %s161, 0
      %p975 = por %p973, %p974
      %s977 = sadd.s32 %s976, 1
      %p980 = scmp.eq.s32.totalorder %s155, 1
      %p981 = scmp.ne.s32.totalorder %s976, %s978
      %p982 = scmp.eq.s32.totalorder %s155, 0
      %p983 = por %p981, %p982
      %p984 = scmp.ne.s32.totalorder %s976, %s978
      %p985 = scmp.eq.s32.totalorder %s160, 1
      %p986 = por %p984, %p985
      %p987 = scmp.ne.s32.totalorder %s978, %s979
      %p988 = scmp.eq.s32.totalorder %s160, 0
      %p989 = por %p987, %p988
      %p990 = scmp.ne.s32.totalorder %s978, %s979
      %p991 = scmp.eq.s32.totalorder %s161, 1
      %p992 = por %p990, %p991
      %p994 = scmp.ne.s32.totalorder %s979, %s993
      %p995 = scmp.eq.s32.totalorder %s161, 0
      %p996 = por %p994, %p995
      %s998 = sadd.s32 %s997, 1
      %p1001 = scmp.eq.s32.totalorder %s155, 1
      %p1002 = scmp.ne.s32.totalorder %s997, %s999
      %p1003 = scmp.eq.s32.totalorder %s155, 0
      %p1004 = por %p1002, %p1003
      %p1005 = scmp.ne.s32.totalorder %s997, %s999
      %p1006 = scmp.eq.s32.totalorder %s160, 1
      %p1007 = por %p1005, %p1006
      %p1008 = scmp.ne.s32.totalorder %s999, %s1000
      %p1009 = scmp.eq.s32.totalorder %s160, 0
      %p1010 = por %p1008, %p1009
      %p1011 = scmp.ne.s32.totalorder %s999, %s1000
      %p1012 = scmp.eq.s32.totalorder %s161, 1
      %p1013 = por %p1011, %p1012
      %p1015 = scmp.ne.s32.totalorder %s1000, %s1014
      %p1016 = scmp.eq.s32.totalorder %s161, 0
      %p1017 = por %p1015, %p1016
      %s1019 = sadd.s32 %s1018, 1
      %p1022 = scmp.eq.s32.totalorder %s155, 1
      %p1023 = scmp.ne.s32.totalorder %s1018, %s1020
      %p1024 = scmp.eq.s32.totalorder %s155, 0
      %p1025 = por %p1023, %p1024
      %p1026 = scmp.ne.s32.totalorder %s1018, %s1020
      %p1027 = scmp.eq.s32.totalorder %s160, 1
      %p1028 = por %p1026, %p1027
      %p1029 = scmp.ne.s32.totalorder %s1020, %s1021
      %p1030 = scmp.eq.s32.totalorder %s160, 0
      %p1031 = por %p1029, %p1030
      %p1032 = scmp.ne.s32.totalorder %s1020, %s1021
      %p1033 = scmp.eq.s32.totalorder %s161, 1
      %p1034 = por %p1032, %p1033
      %p1036 = scmp.ne.s32.totalorder %s1021, %s1035
      %p1037 = scmp.eq.s32.totalorder %s161, 0
      %p1038 = por %p1036, %p1037
      %s1040 = sadd.s32 %s1039, 1
      %p1043 = scmp.eq.s32.totalorder %s155, 1
      %p1044 = scmp.ne.s32.totalorder %s1039, %s1041
      %p1045 = scmp.eq.s32.totalorder %s155, 0
      %p1046 = por %p1044, %p1045
      %p1047 = scmp.ne.s32.totalorder %s1039, %s1041
      %p1048 = scmp.eq.s32.totalorder %s160, 1
      %p1049 = por %p1047, %p1048
      %p1050 = scmp.ne.s32.totalorder %s1041, %s1042
      %p1051 = scmp.eq.s32.totalorder %s160, 0
      %p1052 = por %p1050, %p1051
      %p1053 = scmp.ne.s32.totalorder %s1041, %s1042
      %p1054 = scmp.eq.s32.totalorder %s161, 1
      %p1055 = por %p1053, %p1054
      %p1057 = scmp.ne.s32.totalorder %s1042, %s1056
      %p1058 = scmp.eq.s32.totalorder %s161, 0
      %p1059 = por %p1057, %p1058
      %s1061 = sadd.s32 %s1060, 1
      %p1064 = scmp.eq.s32.totalorder %s155, 1
      %p1065 = scmp.ne.s32.totalorder %s1060, %s1062
      %p1066 = scmp.eq.s32.totalorder %s155, 0
      %p1067 = por %p1065, %p1066
      %p1068 = scmp.ne.s32.totalorder %s1060, %s1062
      %p1069 = scmp.eq.s32.totalorder %s160, 1
      %p1070 = por %p1068, %p1069
      %p1071 = scmp.ne.s32.totalorder %s1062, %s1063
      %p1072 = scmp.eq.s32.totalorder %s160, 0
      %p1073 = por %p1071, %p1072
      %p1074 = scmp.ne.s32.totalorder %s1062, %s1063
      %p1075 = scmp.eq.s32.totalorder %s161, 1
      %p1076 = por %p1074, %p1075
      %p1078 = scmp.ne.s32.totalorder %s1063, %s1077
      %p1079 = scmp.eq.s32.totalorder %s161, 0
      %p1080 = por %p1078, %p1079
      %s1082 = sadd.s32 %s1081, 1
      %p1085 = scmp.eq.s32.totalorder %s155, 1
      %p1086 = scmp.ne.s32.totalorder %s1081, %s1083
      %p1087 = scmp.eq.s32.totalorder %s155, 0
      %p1088 = por %p1086, %p1087
      %p1089 = scmp.ne.s32.totalorder %s1081, %s1083
      %p1090 = scmp.eq.s32.totalorder %s160, 1
      %p1091 = por %p1089, %p1090
      %p1092 = scmp.ne.s32.totalorder %s1083, %s1084
      %p1093 = scmp.eq.s32.totalorder %s160, 0
      %p1094 = por %p1092, %p1093
      %p1095 = scmp.ne.s32.totalorder %s1083, %s1084
      %p1096 = scmp.eq.s32.totalorder %s161, 1
      %p1097 = por %p1095, %p1096
      %p1099 = scmp.ne.s32.totalorder %s1084, %s1098
      %p1100 = scmp.eq.s32.totalorder %s161, 0
      %p1101 = por %p1099, %p1100
      %s1103 = sadd.s32 %s1102, 1
      %p1106 = scmp.eq.s32.totalorder %s155, 1
      %p1107 = scmp.ne.s32.totalorder %s1102, %s1104
      %p1108 = scmp.eq.s32.totalorder %s155, 0
      %p1109 = por %p1107, %p1108
      %p1110 = scmp.ne.s32.totalorder %s1102, %s1104
      %p1111 = scmp.eq.s32.totalorder %s160, 1
      %p1112 = por %p1110, %p1111
      %p1113 = scmp.ne.s32.totalorder %s1104, %s1105
      %p1114 = scmp.eq.s32.totalorder %s160, 0
      %p1115 = por %p1113, %p1114
      %p1116 = scmp.ne.s32.totalorder %s1104, %s1105
      %p1117 = scmp.eq.s32.totalorder %s161, 1
      %p1118 = por %p1116, %p1117
      %p1120 = scmp.ne.s32.totalorder %s1105, %s1119
      %p1121 = scmp.eq.s32.totalorder %s161, 0
      %p1122 = por %p1120, %p1121
      %s1124 = sadd.s32 %s1123, 1
      %p1127 = scmp.eq.s32.totalorder %s155, 1
      %p1128 = scmp.ne.s32.totalorder %s1123, %s1125
      %p1129 = scmp.eq.s32.totalorder %s155, 0
      %p1130 = por %p1128, %p1129
      %p1131 = scmp.ne.s32.totalorder %s1123, %s1125
      %p1132 = scmp.eq.s32.totalorder %s160, 1
      %p1133 = por %p1131, %p1132
      %p1134 = scmp.ne.s32.totalorder %s1125, %s1126
      %p1135 = scmp.eq.s32.totalorder %s160, 0
      %p1136 = por %p1134, %p1135
      %p1137 = scmp.ne.s32.totalorder %s1125, %s1126
      %p1138 = scmp.eq.s32.totalorder %s161, 1
      %p1139 = por %p1137, %p1138
      %p1141 = scmp.ne.s32.totalorder %s1126, %s1140
      %p1142 = scmp.eq.s32.totalorder %s161, 0
      %p1143 = por %p1141, %p1142
      %s1145 = sadd.s32 %s1144, 1
      %p1148 = scmp.eq.s32.totalorder %s155, 1
      %p1149 = scmp.ne.s32.totalorder %s1144, %s1146
      %p1150 = scmp.eq.s32.totalorder %s155, 0
      %p1151 = por %p1149, %p1150
      %p1152 = scmp.ne.s32.totalorder %s1144, %s1146
      %p1153 = scmp.eq.s32.totalorder %s160, 1
      %p1154 = por %p1152, %p1153
      %p1155 = scmp.ne.s32.totalorder %s1146, %s1147
      %p1156 = scmp.eq.s32.totalorder %s160, 0
      %p1157 = por %p1155, %p1156
      %p1158 = scmp.ne.s32.totalorder %s1146, %s1147
      %p1159 = scmp.eq.s32.totalorder %s161, 1
      %p1160 = por %p1158, %p1159
      %p1162 = scmp.ne.s32.totalorder %s1147, %s1161
      %p1163 = scmp.eq.s32.totalorder %s161, 0
      %p1164 = por %p1162, %p1163
      %s1166 = sadd.s32 %s1165, 1
      %p1169 = scmp.eq.s32.totalorder %s155, 1
      %p1170 = scmp.ne.s32.totalorder %s1165, %s1167
      %p1171 = scmp.eq.s32.totalorder %s155, 0
      %p1172 = por %p1170, %p1171
      %p1173 = scmp.ne.s32.totalorder %s1165, %s1167
      %p1174 = scmp.eq.s32.totalorder %s160, 1
      %p1175 = por %p1173, %p1174
      %p1176 = scmp.ne.s32.totalorder %s1167, %s1168
      %p1177 = scmp.eq.s32.totalorder %s160, 0
      %p1178 = por %p1176, %p1177
      %p1179 = scmp.ne.s32.totalorder %s1167, %s1168
      %p1180 = scmp.eq.s32.totalorder %s161, 1
      %p1181 = por %p1179, %p1180
      %p1183 = scmp.ne.s32.totalorder %s1168, %s1182
      %p1184 = scmp.eq.s32.totalorder %s161, 0
      %p1185 = por %p1183, %p1184
      %s1187 = sadd.s32 %s1186, 1
      %p1190 = scmp.eq.s32.totalorder %s155, 1
      %p1191 = scmp.ne.s32.totalorder %s1186, %s1188
      %p1192 = scmp.eq.s32.totalorder %s155, 0
      %p1193 = por %p1191, %p1192
      %p1194 = scmp.ne.s32.totalorder %s1186, %s1188
      %p1195 = scmp.eq.s32.totalorder %s160, 1
      %p1196 = por %p1194, %p1195
      %p1197 = scmp.ne.s32.totalorder %s1188, %s1189
      %p1198 = scmp.eq.s32.totalorder %s160, 0
      %p1199 = por %p1197, %p1198
      %p1200 = scmp.ne.s32.totalorder %s1188, %s1189
      %p1201 = scmp.eq.s32.totalorder %s161, 1
      %p1202 = por %p1200, %p1201
      %p1204 = scmp.ne.s32.totalorder %s1189, %s1203
      %p1205 = scmp.eq.s32.totalorder %s161, 0
      %p1206 = por %p1204, %p1205
      %s1208 = sadd.s32 %s1207, 1
      %p1211 = scmp.eq.s32.totalorder %s155, 1
      %p1212 = scmp.ne.s32.totalorder %s1207, %s1209
      %p1213 = scmp.eq.s32.totalorder %s155, 0
      %p1214 = por %p1212, %p1213
      %p1215 = scmp.ne.s32.totalorder %s1207, %s1209
      %p1216 = scmp.eq.s32.totalorder %s160, 1
      %p1217 = por %p1215, %p1216
      %p1218 = scmp.ne.s32.totalorder %s1209, %s1210
      %p1219 = scmp.eq.s32.totalorder %s160, 0
      %p1220 = por %p1218, %p1219
      %p1221 = scmp.ne.s32.totalorder %s1209, %s1210
      %p1222 = scmp.eq.s32.totalorder %s161, 1
      %p1223 = por %p1221, %p1222
      %p1225 = scmp.ne.s32.totalorder %s1210, %s1224
      %p1226 = scmp.eq.s32.totalorder %s161, 0
      %p1227 = por %p1225, %p1226
      %s1229 = sadd.s32 %s1228, 1
      %p1232 = scmp.eq.s32.totalorder %s155, 1
      %p1233 = scmp.ne.s32.totalorder %s1228, %s1230
      %p1234 = scmp.eq.s32.totalorder %s155, 0
      %p1235 = por %p1233, %p1234
      %p1236 = scmp.ne.s32.totalorder %s1228, %s1230
      %p1237 = scmp.eq.s32.totalorder %s160, 1
      %p1238 = por %p1236, %p1237
      %p1239 = scmp.ne.s32.totalorder %s1230, %s1231
      %p1240 = scmp.eq.s32.totalorder %s160, 0
      %p1241 = por %p1239, %p1240
      %p1242 = scmp.ne.s32.totalorder %s1230, %s1231
      %p1243 = scmp.eq.s32.totalorder %s161, 1
      %p1244 = por %p1242, %p1243
      %p1246 = scmp.ne.s32.totalorder %s1231, %s1245
      %p1247 = scmp.eq.s32.totalorder %s161, 0
      %p1248 = por %p1246, %p1247
      %s1250 = sadd.s32 %s1249, 1
      %p1253 = scmp.eq.s32.totalorder %s155, 1
      %p1254 = scmp.ne.s32.totalorder %s1249, %s1251
      %p1255 = scmp.eq.s32.totalorder %s155, 0
      %p1256 = por %p1254, %p1255
      %p1257 = scmp.ne.s32.totalorder %s1249, %s1251
      %p1258 = scmp.eq.s32.totalorder %s160, 1
      %p1259 = por %p1257, %p1258
      %p1260 = scmp.ne.s32.totalorder %s1251, %s1252
      %p1261 = scmp.eq.s32.totalorder %s160, 0
      %p1262 = por %p1260, %p1261
      %p1263 = scmp.ne.s32.totalorder %s1251, %s1252
      %p1264 = scmp.eq.s32.totalorder %s161, 1
      %p1265 = por %p1263, %p1264
      %p1267 = scmp.ne.s32.totalorder %s1252, %s1266
      %p1268 = scmp.eq.s32.totalorder %s161, 0
      %p1269 = por %p1267, %p1268
      %s1271 = sadd.s32 %s1270, 1
      %p1274 = scmp.eq.s32.totalorder %s155, 1
      %p1275 = scmp.ne.s32.totalorder %s1270, %s1272
      %p1276 = scmp.eq.s32.totalorder %s155, 0
      %p1277 = por %p1275, %p1276
      %p1278 = scmp.ne.s32.totalorder %s1270, %s1272
      %p1279 = scmp.eq.s32.totalorder %s160, 1
      %p1280 = por %p1278, %p1279
      %p1281 = scmp.ne.s32.totalorder %s1272, %s1273
      %p1282 = scmp.eq.s32.totalorder %s160, 0
      %p1283 = por %p1281, %p1282
      %p1284 = scmp.ne.s32.totalorder %s1272, %s1273
      %p1285 = scmp.eq.s32.totalorder %s161, 1
      %p1286 = por %p1284, %p1285
      %p1288 = scmp.ne.s32.totalorder %s1273, %s1287
      %p1289 = scmp.eq.s32.totalorder %s161, 0
      %p1290 = por %p1288, %p1289
      %s1292 = sadd.s32 %s1291, 1
      %p1295 = scmp.eq.s32.totalorder %s155, 1
      %p1296 = scmp.ne.s32.totalorder %s1291, %s1293
      %p1297 = scmp.eq.s32.totalorder %s155, 0
      %p1298 = por %p1296, %p1297
      %p1299 = scmp.ne.s32.totalorder %s1291, %s1293
      %p1300 = scmp.eq.s32.totalorder %s160, 1
      %p1301 = por %p1299, %p1300
      %p1302 = scmp.ne.s32.totalorder %s1293, %s1294
      %p1303 = scmp.eq.s32.totalorder %s160, 0
      %p1304 = por %p1302, %p1303
      %p1305 = scmp.ne.s32.totalorder %s1293, %s1294
      %p1306 = scmp.eq.s32.totalorder %s161, 1
      %p1307 = por %p1305, %p1306
      %p1309 = scmp.ne.s32.totalorder %s1294, %s1308
      %p1310 = scmp.eq.s32.totalorder %s161, 0
      %p1311 = por %p1309, %p1310
      %s1313 = sadd.s32 %s1312, 1
      %p1316 = scmp.eq.s32.totalorder %s155, 1
      %p1317 = scmp.ne.s32.totalorder %s1312, %s1314
      %p1318 = scmp.eq.s32.totalorder %s155, 0
      %p1319 = por %p1317, %p1318
      %p1320 = scmp.ne.s32.totalorder %s1312, %s1314
      %p1321 = scmp.eq.s32.totalorder %s160, 1
      %p1322 = por %p1320, %p1321
      %p1323 = scmp.ne.s32.totalorder %s1314, %s1315
      %p1324 = scmp.eq.s32.totalorder %s160, 0
      %p1325 = por %p1323, %p1324
      %p1326 = scmp.ne.s32.totalorder %s1314, %s1315
      %p1327 = scmp.eq.s32.totalorder %s161, 1
      %p1328 = por %p1326, %p1327
      %p1330 = scmp.ne.s32.totalorder %s1315, %s1329
      %p1331 = scmp.eq.s32.totalorder %s161, 0
      %p1332 = por %p1330, %p1331
      %s1334 = sadd.s32 %s1333, 1
      %p1337 = scmp.eq.s32.totalorder %s155, 1
      %p1338 = scmp.ne.s32.totalorder %s1333, %s1335
      %p1339 = scmp.eq.s32.totalorder %s155, 0
      %p1340 = por %p1338, %p1339
      %p1341 = scmp.ne.s32.totalorder %s1333, %s1335
      %p1342 = scmp.eq.s32.totalorder %s160, 1
      %p1343 = por %p1341, %p1342
      %p1344 = scmp.ne.s32.totalorder %s1335, %s1336
      %p1345 = scmp.eq.s32.totalorder %s160, 0
      %p1346 = por %p1344, %p1345
      %p1347 = scmp.ne.s32.totalorder %s1335, %s1336
      %p1348 = scmp.eq.s32.totalorder %s161, 1
      %p1349 = por %p1347, %p1348
      %p1351 = scmp.ne.s32.totalorder %s1336, %s1350
      %p1352 = scmp.eq.s32.totalorder %s161, 0
      %p1353 = por %p1351, %p1352
      %s1355 = sadd.s32 %s1354, 1
      %p1358 = scmp.eq.s32.totalorder %s155, 1
      %p1359 = scmp.ne.s32.totalorder %s1354, %s1356
      %p1360 = scmp.eq.s32.totalorder %s155, 0
      %p1361 = por %p1359, %p1360
      %p1362 = scmp.ne.s32.totalorder %s1354, %s1356
      %p1363 = scmp.eq.s32.totalorder %s160, 1
      %p1364 = por %p1362, %p1363
      %p1365 = scmp.ne.s32.totalorder %s1356, %s1357
      %p1366 = scmp.eq.s32.totalorder %s160, 0
      %p1367 = por %p1365, %p1366
      %p1368 = scmp.ne.s32.totalorder %s1356, %s1357
      %p1369 = scmp.eq.s32.totalorder %s161, 1
      %p1370 = por %p1368, %p1369
      %p1372 = scmp.ne.s32.totalorder %s1357, %s1371
      %p1373 = scmp.eq.s32.totalorder %s161, 0
      %p1374 = por %p1372, %p1373
      %s1376 = sadd.s32 %s1375, 1
      %p1379 = scmp.eq.s32.totalorder %s155, 1
      %p1380 = scmp.ne.s32.totalorder %s1375, %s1377
      %p1381 = scmp.eq.s32.totalorder %s155, 0
      %p1382 = por %p1380, %p1381
      %p1383 = scmp.ne.s32.totalorder %s1375, %s1377
      %p1384 = scmp.eq.s32.totalorder %s160, 1
      %p1385 = por %p1383, %p1384
      %p1386 = scmp.ne.s32.totalorder %s1377, %s1378
      %p1387 = scmp.eq.s32.totalorder %s160, 0
      %p1388 = por %p1386, %p1387
      %p1389 = scmp.ne.s32.totalorder %s1377, %s1378
      %p1390 = scmp.eq.s32.totalorder %s161, 1
      %p1391 = por %p1389, %p1390
      %p1393 = scmp.ne.s32.totalorder %s1378, %s1392
      %p1394 = scmp.eq.s32.totalorder %s161, 0
      %p1395 = por %p1393, %p1394
      %s1397 = sadd.s32 %s1396, 1
      %p1400 = scmp.eq.s32.totalorder %s155, 1
      %p1401 = scmp.ne.s32.totalorder %s1396, %s1398
      %p1402 = scmp.eq.s32.totalorder %s155, 0
      %p1403 = por %p1401, %p1402
      %p1404 = scmp.ne.s32.totalorder %s1396, %s1398
      %p1405 = scmp.eq.s32.totalorder %s160, 1
      %p1406 = por %p1404, %p1405
      %p1407 = scmp.ne.s32.totalorder %s1398, %s1399
      %p1408 = scmp.eq.s32.totalorder %s160, 0
      %p1409 = por %p1407, %p1408
      %p1410 = scmp.ne.s32.totalorder %s1398, %s1399
      %p1411 = scmp.eq.s32.totalorder %s161, 1
      %p1412 = por %p1410, %p1411
      %p1414 = scmp.ne.s32.totalorder %s1399, %s1413
      %p1415 = scmp.eq.s32.totalorder %s161, 0
      %p1416 = por %p1414, %p1415
      %s1418 = sadd.s32 %s1417, 1
      %p1421 = scmp.eq.s32.totalorder %s155, 1
      %p1422 = scmp.ne.s32.totalorder %s1417, %s1419
      %p1423 = scmp.eq.s32.totalorder %s155, 0
      %p1424 = por %p1422, %p1423
      %p1425 = scmp.ne.s32.totalorder %s1417, %s1419
      %p1426 = scmp.eq.s32.totalorder %s160, 1
      %p1427 = por %p1425, %p1426
      %p1428 = scmp.ne.s32.totalorder %s1419, %s1420
      %p1429 = scmp.eq.s32.totalorder %s160, 0
      %p1430 = por %p1428, %p1429
      %p1431 = scmp.ne.s32.totalorder %s1419, %s1420
      %p1432 = scmp.eq.s32.totalorder %s161, 1
      %p1433 = por %p1431, %p1432
      %p1435 = scmp.ne.s32.totalorder %s1420, %s1434
      %p1436 = scmp.eq.s32.totalorder %s161, 0
      %p1437 = por %p1435, %p1436
      %s1439 = sadd.s32 %s1438, 1
      %p1442 = scmp.eq.s32.totalorder %s155, 1
      %p1443 = scmp.ne.s32.totalorder %s1438, %s1440
      %p1444 = scmp.eq.s32.totalorder %s155, 0
      %p1445 = por %p1443, %p1444
      %p1446 = scmp.ne.s32.totalorder %s1438, %s1440
      %p1447 = scmp.eq.s32.totalorder %s160, 1
      %p1448 = por %p1446, %p1447
      %p1449 = scmp.ne.s32.totalorder %s1440, %s1441
      %p1450 = scmp.eq.s32.totalorder %s160, 0
      %p1451 = por %p1449, %p1450
      %p1452 = scmp.ne.s32.totalorder %s1440, %s1441
      %p1453 = scmp.eq.s32.totalorder %s161, 1
      %p1454 = por %p1452, %p1453
      %p1456 = scmp.ne.s32.totalorder %s1441, %s1455
      %p1457 = scmp.eq.s32.totalorder %s161, 0
      %p1458 = por %p1456, %p1457
      %s1460 = sadd.s32 %s1459, 1
      %p1463 = scmp.eq.s32.totalorder %s155, 1
      %p1464 = scmp.ne.s32.totalorder %s1459, %s1461
      %p1465 = scmp.eq.s32.totalorder %s155, 0
      %p1466 = por %p1464, %p1465
      %p1467 = scmp.ne.s32.totalorder %s1459, %s1461
      %p1468 = scmp.eq.s32.totalorder %s160, 1
      %p1469 = por %p1467, %p1468
      %p1470 = scmp.ne.s32.totalorder %s1461, %s1462
      %p1471 = scmp.eq.s32.totalorder %s160, 0
      %p1472 = por %p1470, %p1471
      %p1473 = scmp.ne.s32.totalorder %s1461, %s1462
      %p1474 = scmp.eq.s32.totalorder %s161, 1
      %p1475 = por %p1473, %p1474
      %p1477 = scmp.ne.s32.totalorder %s1462, %s1476
      %p1478 = scmp.eq.s32.totalorder %s161, 0
      %p1479 = por %p1477, %p1478
      %s1481 = sadd.s32 %s1480, 1
      %p1484 = scmp.eq.s32.totalorder %s155, 1
      %p1485 = scmp.ne.s32.totalorder %s1480, %s1482
      %p1486 = scmp.eq.s32.totalorder %s155, 0
      %p1487 = por %p1485, %p1486
      %p1488 = scmp.ne.s32.totalorder %s1480, %s1482
      %p1489 = scmp.eq.s32.totalorder %s160, 1
      %p1490 = por %p1488, %p1489
      %p1491 = scmp.ne.s32.totalorder %s1482, %s1483
      %p1492 = scmp.eq.s32.totalorder %s160, 0
      %p1493 = por %p1491, %p1492
      %p1494 = scmp.ne.s32.totalorder %s1482, %s1483
      %p1495 = scmp.eq.s32.totalorder %s161, 1
      %p1496 = por %p1494, %p1495
      %p1498 = scmp.ne.s32.totalorder %s1483, %s1497
      %p1499 = scmp.eq.s32.totalorder %s161, 0
      %p1500 = por %p1498, %p1499
      %s1502 = sadd.s32 %s1501, 1
      %p1505 = scmp.eq.s32.totalorder %s155, 1
      %p1506 = scmp.ne.s32.totalorder %s1501, %s1503
      %p1507 = scmp.eq.s32.totalorder %s155, 0
      %p1508 = por %p1506, %p1507
      %p1509 = scmp.ne.s32.totalorder %s1501, %s1503
      %p1510 = scmp.eq.s32.totalorder %s160, 1
      %p1511 = por %p1509, %p1510
      %p1512 = scmp.ne.s32.totalorder %s1503, %s1504
      %p1513 = scmp.eq.s32.totalorder %s160, 0
      %p1514 = por %p1512, %p1513
      %p1515 = scmp.ne.s32.totalorder %s1503, %s1504
      %p1516 = scmp.eq.s32.totalorder %s161, 1
      %p1517 = por %p1515, %p1516
      %p1519 = scmp.ne.s32.totalorder %s1504, %s1518
      %p1520 = scmp.eq.s32.totalorder %s161, 0
      %p1521 = por %p1519, %p1520
      %s1523 = sadd.s32 %s1522, 1
      %p1526 = scmp.eq.s32.totalorder %s155, 1
      %p1527 = scmp.ne.s32.totalorder %s1522, %s1524
      %p1528 = scmp.eq.s32.totalorder %s155, 0
      %p1529 = por %p1527, %p1528
      %p1530 = scmp.ne.s32.totalorder %s1522, %s1524
      %p1531 = scmp.eq.s32.totalorder %s160, 1
      %p1532 = por %p1530, %p1531
      %p1533 = scmp.ne.s32.totalorder %s1524, %s1525
      %p1534 = scmp.eq.s32.totalorder %s160, 0
      %p1535 = por %p1533, %p1534
      %p1536 = scmp.ne.s32.totalorder %s1524, %s1525
      %p1537 = scmp.eq.s32.totalorder %s161, 1
      %p1538 = por %p1536, %p1537
      %p1540 = scmp.ne.s32.totalorder %s1525, %s1539
      %p1541 = scmp.eq.s32.totalorder %s161, 0
      %p1542 = por %p1540, %p1541
      %s1544 = sadd.s32 %s1543, 1
      %p1547 = scmp.eq.s32.totalorder %s155, 1
      %p1548 = scmp.ne.s32.totalorder %s1543, %s1545
      %p1549 = scmp.eq.s32.totalorder %s155, 0
      %p1550 = por %p1548, %p1549
      %p1551 = scmp.ne.s32.totalorder %s1543, %s1545
      %p1552 = scmp.eq.s32.totalorder %s160, 1
      %p1553 = por %p1551, %p1552
      %p1554 = scmp.ne.s32.totalorder %s1545, %s1546
      %p1555 = scmp.eq.s32.totalorder %s160, 0
      %p1556 = por %p1554, %p1555
      %p1557 = scmp.ne.s32.totalorder %s1545, %s1546
      %p1558 = scmp.eq.s32.totalorder %s161, 1
      %p1559 = por %p1557, %p1558
      %p1561 = scmp.ne.s32.totalorder %s1546, %s1560
      %p1562 = scmp.eq.s32.totalorder %s161, 0
      %p1563 = por %p1561, %p1562
      %s1565 = sadd.s32 %s1564, 1
      %p1568 = scmp.eq.s32.totalorder %s155, 1
      %p1569 = scmp.ne.s32.totalorder %s1564, %s1566
      %p1570 = scmp.eq.s32.totalorder %s155, 0
      %p1571 = por %p1569, %p1570
      %p1572 = scmp.ne.s32.totalorder %s1564, %s1566
      %p1573 = scmp.eq.s32.totalorder %s160, 1
      %p1574 = por %p1572, %p1573
      %p1575 = scmp.ne.s32.totalorder %s1566, %s1567
      %p1576 = scmp.eq.s32.totalorder %s160, 0
      %p1577 = por %p1575, %p1576
      %p1578 = scmp.ne.s32.totalorder %s1566, %s1567
      %p1579 = scmp.eq.s32.totalorder %s161, 1
      %p1580 = por %p1578, %p1579
      %p1582 = scmp.ne.s32.totalorder %s1567, %s1581
      %p1583 = scmp.eq.s32.totalorder %s161, 0
      %p1584 = por %p1582, %p1583
      %s1586 = sadd.s32 %s1585, 1
      %p1589 = scmp.eq.s32.totalorder %s155, 1
      %p1590 = scmp.ne.s32.totalorder %s1585, %s1587
      %p1591 = scmp.eq.s32.totalorder %s155, 0
      %p1592 = por %p1590, %p1591
      %p1593 = scmp.ne.s32.totalorder %s1585, %s1587
      %p1594 = scmp.eq.s32.totalorder %s160, 1
      %p1595 = por %p1593, %p1594
      %p1596 = scmp.ne.s32.totalorder %s1587, %s1588
      %p1597 = scmp.eq.s32.totalorder %s160, 0
      %p1598 = por %p1596, %p1597
      %p1599 = scmp.ne.s32.totalorder %s1587, %s1588
      %p1600 = scmp.eq.s32.totalorder %s161, 1
      %p1601 = por %p1599, %p1600
      %p1603 = scmp.ne.s32.totalorder %s1588, %s1602
      %p1604 = scmp.eq.s32.totalorder %s161, 0
      %p1605 = por %p1603, %p1604
      %s1607 = sadd.s32 %s1606, 1
      %p1610 = scmp.eq.s32.totalorder %s155, 1
      %p1611 = scmp.ne.s32.totalorder %s1606, %s1608
      %p1612 = scmp.eq.s32.totalorder %s155, 0
      %p1613 = por %p1611, %p1612
      %p1614 = scmp.ne.s32.totalorder %s1606, %s1608
      %p1615 = scmp.eq.s32.totalorder %s160, 1
      %p1616 = por %p1614, %p1615
      %p1617 = scmp.ne.s32.totalorder %s1608, %s1609
      %p1618 = scmp.eq.s32.totalorder %s160, 0
      %p1619 = por %p1617, %p1618
      %p1620 = scmp.ne.s32.totalorder %s1608, %s1609
      %p1621 = scmp.eq.s32.totalorder %s161, 1
      %p1622 = por %p1620, %p1621
      %p1624 = scmp.ne.s32.totalorder %s1609, %s1623
      %p1625 = scmp.eq.s32.totalorder %s161, 0
      %p1626 = por %p1624, %p1625
      %s1628 = sadd.s32 %s1627, 1
      %p1631 = scmp.eq.s32.totalorder %s155, 1
      %p1632 = scmp.ne.s32.totalorder %s1627, %s1629
      %p1633 = scmp.eq.s32.totalorder %s155, 0
      %p1634 = por %p1632, %p1633
      %p1635 = scmp.ne.s32.totalorder %s1627, %s1629
      %p1636 = scmp.eq.s32.totalorder %s160, 1
      %p1637 = por %p1635, %p1636
      %p1638 = scmp.ne.s32.totalorder %s1629, %s1630
      %p1639 = scmp.eq.s32.totalorder %s160, 0
      %p1640 = por %p1638, %p1639
      %p1641 = scmp.ne.s32.totalorder %s1629, %s1630
      %p1642 = scmp.eq.s32.totalorder %s161, 1
      %p1643 = por %p1641, %p1642
      %p1645 = scmp.ne.s32.totalorder %s1630, %s1644
      %p1646 = scmp.eq.s32.totalorder %s161, 0
      %p1647 = por %p1645, %p1646
      %s1649 = sadd.s32 %s1648, 1
      %p1652 = scmp.eq.s32.totalorder %s155, 1
      %p1653 = scmp.ne.s32.totalorder %s1648, %s1650
      %p1654 = scmp.eq.s32.totalorder %s155, 0
      %p1655 = por %p1653, %p1654
      %p1656 = scmp.ne.s32.totalorder %s1648, %s1650
      %p1657 = scmp.eq.s32.totalorder %s160, 1
      %p1658 = por %p1656, %p1657
      %p1659 = scmp.ne.s32.totalorder %s1650, %s1651
      %p1660 = scmp.eq.s32.totalorder %s160, 0
      %p1661 = por %p1659, %p1660
      %p1662 = scmp.ne.s32.totalorder %s1650, %s1651
      %p1663 = scmp.eq.s32.totalorder %s161, 1
      %p1664 = por %p1662, %p1663
      %p1666 = scmp.ne.s32.totalorder %s1651, %s1665
      %p1667 = scmp.eq.s32.totalorder %s161, 0
      %p1668 = por %p1666, %p1667
      %s1669 = ssub.s32 %s155, %s162
      %p1670 = scmp.eq.s32.totalorder %s1669, 0
      %s1672 = sadd.s32 %s1671, 1
      %s1673 = scalar_select %p1670, %s1671, %s1672
      %p1676 = pneg %p1670
      %p1677 = scmp.eq.s32.totalorder %s155, 1
      %p1678 = por %p1676, %p1677
      %p1679 = scmp.ne.s32.totalorder %s1671, %s1674
      %p1680 = scmp.eq.s32.totalorder %s155, 0
      %p1681 = por %p1679, %p1680
      %p1682 = scmp.ne.s32.totalorder %s1671, %s1674
      %p1683 = scmp.eq.s32.totalorder %s160, 1
      %p1684 = por %p1682, %p1683
      %p1685 = scmp.ne.s32.totalorder %s1674, %s1675
      %p1686 = scmp.eq.s32.totalorder %s160, 0
      %p1687 = por %p1685, %p1686
      %p1688 = scmp.ne.s32.totalorder %s1674, %s1675
      %p1689 = scmp.eq.s32.totalorder %s161, 1
      %p1690 = por %p1688, %p1689
      %p1692 = scmp.ne.s32.totalorder %s1675, %s1691
      %p1693 = scmp.eq.s32.totalorder %s161, 0
      %p1694 = por %p1692, %p1693
      %p1695 = scmp.le.s32.totalorder 1, %s155
      %p1696 = scmp.lt.s32.totalorder %s155, 3
      %p1697 = pnand %p1695, %p1696
      %p1698 = pneg %p1697
      // Predicated region
      $region9: #{forward.1} parent=5 // pred_check
        _
      $region10: #{forward.1} parent=5 // pred_check_branch
        %1700 = sbr.rel (%p1697) target = $region12
      $region11: #{forward.1} parent=5 // pred_region
        %s1701 = ssub.s32 %s155, 1
        // Predicated region
        $region13: #{forward.1} parent=11 // pred_check
          %p1702 = pneg %p254
        $region14: #{forward.1} parent=11 // pred_check_branch
          %1704 = sbr.rel (%p1702) target = $region16
        $region15: #{forward.1} parent=11 // pred_region
          _
        $region16: #{forward.1} parent=11 // pred_fallthru
          _
        // Predicated region
        $region17: #{forward.1} parent=11 // pred_check
          %p1705 = pneg %p275
        $region18: #{forward.1} parent=11 // pred_check_branch
          %1707 = sbr.rel (%p1705) target = $region20
        $region19: #{forward.1} parent=11 // pred_region
          _
        $region20: #{forward.1} parent=11 // pred_fallthru
          _
        // Predicated region
        $region21: #{forward.1} parent=11 // pred_check
          %p1708 = pneg %p296
        $region22: #{forward.1} parent=11 // pred_check_branch
          %1710 = sbr.rel (%p1708) target = $region24
        $region23: #{forward.1} parent=11 // pred_region
          _
        $region24: #{forward.1} parent=11 // pred_fallthru
          _
        // Predicated region
        $region25: #{forward.1} parent=11 // pred_check
          %p1711 = pneg %p317
        $region26: #{forward.1} parent=11 // pred_check_branch
          %1713 = sbr.rel (%p1711) target = $region28
        $region27: #{forward.1} parent=11 // pred_region
          _
        $region28: #{forward.1} parent=11 // pred_fallthru
          _
        // Predicated region
        $region29: #{forward.1} parent=11 // pred_check
          %p1714 = pneg %p338
        $region30: #{forward.1} parent=11 // pred_check_branch
          %1716 = sbr.rel (%p1714) target = $region32
        $region31: #{forward.1} parent=11 // pred_region
          _
        $region32: #{forward.1} parent=11 // pred_fallthru
          _
        // Predicated region
        $region33: #{forward.1} parent=11 // pred_check
          %p1717 = pneg %p359
        $region34: #{forward.1} parent=11 // pred_check_branch
          %1719 = sbr.rel (%p1717) target = $region36
        $region35: #{forward.1} parent=11 // pred_region
          _
        $region36: #{forward.1} parent=11 // pred_fallthru
          _
        // Predicated region
        $region37: #{forward.1} parent=11 // pred_check
          %p1720 = pneg %p380
        $region38: #{forward.1} parent=11 // pred_check_branch
          %1722 = sbr.rel (%p1720) target = $region40
        $region39: #{forward.1} parent=11 // pred_region
          _
        $region40: #{forward.1} parent=11 // pred_fallthru
          _
        // Predicated region
        $region41: #{forward.1} parent=11 // pred_check
          %p1723 = pneg %p401
        $region42: #{forward.1} parent=11 // pred_check_branch
          %1725 = sbr.rel (%p1723) target = $region44
        $region43: #{forward.1} parent=11 // pred_region
          _
        $region44: #{forward.1} parent=11 // pred_fallthru
          _
        // Predicated region
        $region45: #{forward.1} parent=11 // pred_check
          %p1726 = pneg %p422
        $region46: #{forward.1} parent=11 // pred_check_branch
          %1728 = sbr.rel (%p1726) target = $region48
        $region47: #{forward.1} parent=11 // pred_region
          _
        $region48: #{forward.1} parent=11 // pred_fallthru
          _
        // Predicated region
        $region49: #{forward.1} parent=11 // pred_check
          %p1729 = pneg %p443
        $region50: #{forward.1} parent=11 // pred_check_branch
          %1731 = sbr.rel (%p1729) target = $region52
        $region51: #{forward.1} parent=11 // pred_region
          _
        $region52: #{forward.1} parent=11 // pred_fallthru
          _
        // Predicated region
        $region53: #{forward.1} parent=11 // pred_check
          %p1732 = pneg %p464
        $region54: #{forward.1} parent=11 // pred_check_branch
          %1734 = sbr.rel (%p1732) target = $region56
        $region55: #{forward.1} parent=11 // pred_region
          _
        $region56: #{forward.1} parent=11 // pred_fallthru
          _
        // Predicated region
        $region57: #{forward.1} parent=11 // pred_check
          %p1735 = pneg %p485
        $region58: #{forward.1} parent=11 // pred_check_branch
          %1737 = sbr.rel (%p1735) target = $region60
        $region59: #{forward.1} parent=11 // pred_region
          _
        $region60: #{forward.1} parent=11 // pred_fallthru
          _
        // Predicated region
        $region61: #{forward.1} parent=11 // pred_check
          %p1738 = pneg %p506
        $region62: #{forward.1} parent=11 // pred_check_branch
          %1740 = sbr.rel (%p1738) target = $region64
        $region63: #{forward.1} parent=11 // pred_region
          _
        $region64: #{forward.1} parent=11 // pred_fallthru
          _
        // Predicated region
        $region65: #{forward.1} parent=11 // pred_check
          %p1741 = pneg %p527
        $region66: #{forward.1} parent=11 // pred_check_branch
          %1743 = sbr.rel (%p1741) target = $region68
        $region67: #{forward.1} parent=11 // pred_region
          _
        $region68: #{forward.1} parent=11 // pred_fallthru
          _
        // Predicated region
        $region69: #{forward.1} parent=11 // pred_check
          %p1744 = pneg %p548
        $region70: #{forward.1} parent=11 // pred_check_branch
          %1746 = sbr.rel (%p1744) target = $region72
        $region71: #{forward.1} parent=11 // pred_region
          _
        $region72: #{forward.1} parent=11 // pred_fallthru
          _
        // Predicated region
        $region73: #{forward.1} parent=11 // pred_check
          %p1747 = pneg %p569
        $region74: #{forward.1} parent=11 // pred_check_branch
          %1749 = sbr.rel (%p1747) target = $region76
        $region75: #{forward.1} parent=11 // pred_region
          _
        $region76: #{forward.1} parent=11 // pred_fallthru
          _
        // Predicated region
        $region77: #{forward.1} parent=11 // pred_check
          %p1750 = pneg %p590
        $region78: #{forward.1} parent=11 // pred_check_branch
          %1752 = sbr.rel (%p1750) target = $region80
        $region79: #{forward.1} parent=11 // pred_region
          _
        $region80: #{forward.1} parent=11 // pred_fallthru
          _
        // Predicated region
        $region81: #{forward.1} parent=11 // pred_check
          %p1753 = pneg %p611
        $region82: #{forward.1} parent=11 // pred_check_branch
          %1755 = sbr.rel (%p1753) target = $region84
        $region83: #{forward.1} parent=11 // pred_region
          _
        $region84: #{forward.1} parent=11 // pred_fallthru
          _
        // Predicated region
        $region85: #{forward.1} parent=11 // pred_check
          %p1756 = pneg %p632
        $region86: #{forward.1} parent=11 // pred_check_branch
          %1758 = sbr.rel (%p1756) target = $region88
        $region87: #{forward.1} parent=11 // pred_region
          _
        $region88: #{forward.1} parent=11 // pred_fallthru
          _
        // Predicated region
        $region89: #{forward.1} parent=11 // pred_check
          %p1759 = pneg %p653
        $region90: #{forward.1} parent=11 // pred_check_branch
          %1761 = sbr.rel (%p1759) target = $region92
        $region91: #{forward.1} parent=11 // pred_region
          _
        $region92: #{forward.1} parent=11 // pred_fallthru
          _
        // Predicated region
        $region93: #{forward.1} parent=11 // pred_check
          %p1762 = pneg %p674
        $region94: #{forward.1} parent=11 // pred_check_branch
          %1764 = sbr.rel (%p1762) target = $region96
        $region95: #{forward.1} parent=11 // pred_region
          _
        $region96: #{forward.1} parent=11 // pred_fallthru
          _
        // Predicated region
        $region97: #{forward.1} parent=11 // pred_check
          %p1765 = pneg %p695
        $region98: #{forward.1} parent=11 // pred_check_branch
          %1767 = sbr.rel (%p1765) target = $region100
        $region99: #{forward.1} parent=11 // pred_region
          _
        $region100: #{forward.1} parent=11 // pred_fallthru
          _
        // Predicated region
        $region101: #{forward.1} parent=11 // pred_check
          %p1768 = pneg %p716
        $region102: #{forward.1} parent=11 // pred_check_branch
          %1770 = sbr.rel (%p1768) target = $region104
        $region103: #{forward.1} parent=11 // pred_region
          _
        $region104: #{forward.1} parent=11 // pred_fallthru
          _
        // Predicated region
        $region105: #{forward.1} parent=11 // pred_check
          %p1771 = pneg %p737
        $region106: #{forward.1} parent=11 // pred_check_branch
          %1773 = sbr.rel (%p1771) target = $region108
        $region107: #{forward.1} parent=11 // pred_region
          _
        $region108: #{forward.1} parent=11 // pred_fallthru
          _
        // Predicated region
        $region109: #{forward.1} parent=11 // pred_check
          %p1774 = pneg %p758
        $region110: #{forward.1} parent=11 // pred_check_branch
          %1776 = sbr.rel (%p1774) target = $region112
        $region111: #{forward.1} parent=11 // pred_region
          _
        $region112: #{forward.1} parent=11 // pred_fallthru
          _
        // Predicated region
        $region113: #{forward.1} parent=11 // pred_check
          %p1777 = pneg %p779
        $region114: #{forward.1} parent=11 // pred_check_branch
          %1779 = sbr.rel (%p1777) target = $region116
        $region115: #{forward.1} parent=11 // pred_region
          _
        $region116: #{forward.1} parent=11 // pred_fallthru
          _
        // Predicated region
        $region117: #{forward.1} parent=11 // pred_check
          %p1780 = pneg %p800
        $region118: #{forward.1} parent=11 // pred_check_branch
          %1782 = sbr.rel (%p1780) target = $region120
        $region119: #{forward.1} parent=11 // pred_region
          _
        $region120: #{forward.1} parent=11 // pred_fallthru
          _
        // Predicated region
        $region121: #{forward.1} parent=11 // pred_check
          %p1783 = pneg %p821
        $region122: #{forward.1} parent=11 // pred_check_branch
          %1785 = sbr.rel (%p1783) target = $region124
        $region123: #{forward.1} parent=11 // pred_region
          _
        $region124: #{forward.1} parent=11 // pred_fallthru
          _
        // Predicated region
        $region125: #{forward.1} parent=11 // pred_check
          %p1786 = pneg %p842
        $region126: #{forward.1} parent=11 // pred_check_branch
          %1788 = sbr.rel (%p1786) target = $region128
        $region127: #{forward.1} parent=11 // pred_region
          _
        $region128: #{forward.1} parent=11 // pred_fallthru
          _
        // Predicated region
        $region129: #{forward.1} parent=11 // pred_check
          %p1789 = pneg %p863
        $region130: #{forward.1} parent=11 // pred_check_branch
          %1791 = sbr.rel (%p1789) target = $region132
        $region131: #{forward.1} parent=11 // pred_region
          _
        $region132: #{forward.1} parent=11 // pred_fallthru
          _
        // Predicated region
        $region133: #{forward.1} parent=11 // pred_check
          %p1792 = pneg %p884
        $region134: #{forward.1} parent=11 // pred_check_branch
          %1794 = sbr.rel (%p1792) target = $region136
        $region135: #{forward.1} parent=11 // pred_region
          _
        $region136: #{forward.1} parent=11 // pred_fallthru
          _
        // Predicated region
        $region137: #{forward.1} parent=11 // pred_check
          %p1795 = pneg %p905
        $region138: #{forward.1} parent=11 // pred_check_branch
          %1797 = sbr.rel (%p1795) target = $region140
        $region139: #{forward.1} parent=11 // pred_region
          _
        $region140: #{forward.1} parent=11 // pred_fallthru
          _
        // Predicated region
        $region141: #{forward.1} parent=11 // pred_check
          %p1798 = pneg %p926
        $region142: #{forward.1} parent=11 // pred_check_branch
          %1800 = sbr.rel (%p1798) target = $region144
        $region143: #{forward.1} parent=11 // pred_region
          _
        $region144: #{forward.1} parent=11 // pred_fallthru
          _
        // Predicated region
        $region145: #{forward.1} parent=11 // pred_check
          %p1801 = pneg %p947
        $region146: #{forward.1} parent=11 // pred_check_branch
          %1803 = sbr.rel (%p1801) target = $region148
        $region147: #{forward.1} parent=11 // pred_region
          _
        $region148: #{forward.1} parent=11 // pred_fallthru
          _
        // Predicated region
        $region149: #{forward.1} parent=11 // pred_check
          %p1804 = pneg %p968
        $region150: #{forward.1} parent=11 // pred_check_branch
          %1806 = sbr.rel (%p1804) target = $region152
        $region151: #{forward.1} parent=11 // pred_region
          _
        $region152: #{forward.1} parent=11 // pred_fallthru
          _
        // Predicated region
        $region153: #{forward.1} parent=11 // pred_check
          %p1807 = pneg %p989
        $region154: #{forward.1} parent=11 // pred_check_branch
          %1809 = sbr.rel (%p1807) target = $region156
        $region155: #{forward.1} parent=11 // pred_region
          _
        $region156: #{forward.1} parent=11 // pred_fallthru
          _
        // Predicated region
        $region157: #{forward.1} parent=11 // pred_check
          %p1810 = pneg %p1010
        $region158: #{forward.1} parent=11 // pred_check_branch
          %1812 = sbr.rel (%p1810) target = $region160
        $region159: #{forward.1} parent=11 // pred_region
          _
        $region160: #{forward.1} parent=11 // pred_fallthru
          _
        // Predicated region
        $region161: #{forward.1} parent=11 // pred_check
          %p1813 = pneg %p1031
        $region162: #{forward.1} parent=11 // pred_check_branch
          %1815 = sbr.rel (%p1813) target = $region164
        $region163: #{forward.1} parent=11 // pred_region
          _
        $region164: #{forward.1} parent=11 // pred_fallthru
          _
        // Predicated region
        $region165: #{forward.1} parent=11 // pred_check
          %p1816 = pneg %p1052
        $region166: #{forward.1} parent=11 // pred_check_branch
          %1818 = sbr.rel (%p1816) target = $region168
        $region167: #{forward.1} parent=11 // pred_region
          _
        $region168: #{forward.1} parent=11 // pred_fallthru
          _
        // Predicated region
        $region169: #{forward.1} parent=11 // pred_check
          %p1819 = pneg %p1073
        $region170: #{forward.1} parent=11 // pred_check_branch
          %1821 = sbr.rel (%p1819) target = $region172
        $region171: #{forward.1} parent=11 // pred_region
          _
        $region172: #{forward.1} parent=11 // pred_fallthru
          _
        // Predicated region
        $region173: #{forward.1} parent=11 // pred_check
          %p1822 = pneg %p1094
        $region174: #{forward.1} parent=11 // pred_check_branch
          %1824 = sbr.rel (%p1822) target = $region176
        $region175: #{forward.1} parent=11 // pred_region
          _
        $region176: #{forward.1} parent=11 // pred_fallthru
          _
        // Predicated region
        $region177: #{forward.1} parent=11 // pred_check
          %p1825 = pneg %p1115
        $region178: #{forward.1} parent=11 // pred_check_branch
          %1827 = sbr.rel (%p1825) target = $region180
        $region179: #{forward.1} parent=11 // pred_region
          _
        $region180: #{forward.1} parent=11 // pred_fallthru
          _
        // Predicated region
        $region181: #{forward.1} parent=11 // pred_check
          %p1828 = pneg %p1136
        $region182: #{forward.1} parent=11 // pred_check_branch
          %1830 = sbr.rel (%p1828) target = $region184
        $region183: #{forward.1} parent=11 // pred_region
          _
        $region184: #{forward.1} parent=11 // pred_fallthru
          _
        // Predicated region
        $region185: #{forward.1} parent=11 // pred_check
          %p1831 = pneg %p1157
        $region186: #{forward.1} parent=11 // pred_check_branch
          %1833 = sbr.rel (%p1831) target = $region188
        $region187: #{forward.1} parent=11 // pred_region
          _
        $region188: #{forward.1} parent=11 // pred_fallthru
          _
        // Predicated region
        $region189: #{forward.1} parent=11 // pred_check
          %p1834 = pneg %p1178
        $region190: #{forward.1} parent=11 // pred_check_branch
          %1836 = sbr.rel (%p1834) target = $region192
        $region191: #{forward.1} parent=11 // pred_region
          _
        $region192: #{forward.1} parent=11 // pred_fallthru
          _
        // Predicated region
        $region193: #{forward.1} parent=11 // pred_check
          %p1837 = pneg %p1199
        $region194: #{forward.1} parent=11 // pred_check_branch
          %1839 = sbr.rel (%p1837) target = $region196
        $region195: #{forward.1} parent=11 // pred_region
          _
        $region196: #{forward.1} parent=11 // pred_fallthru
          _
        // Predicated region
        $region197: #{forward.1} parent=11 // pred_check
          %p1840 = pneg %p1220
        $region198: #{forward.1} parent=11 // pred_check_branch
          %1842 = sbr.rel (%p1840) target = $region200
        $region199: #{forward.1} parent=11 // pred_region
          _
        $region200: #{forward.1} parent=11 // pred_fallthru
          _
        // Predicated region
        $region201: #{forward.1} parent=11 // pred_check
          %p1843 = pneg %p1241
        $region202: #{forward.1} parent=11 // pred_check_branch
          %1845 = sbr.rel (%p1843) target = $region204
        $region203: #{forward.1} parent=11 // pred_region
          _
        $region204: #{forward.1} parent=11 // pred_fallthru
          _
        // Predicated region
        $region205: #{forward.1} parent=11 // pred_check
          %p1846 = pneg %p1262
        $region206: #{forward.1} parent=11 // pred_check_branch
          %1848 = sbr.rel (%p1846) target = $region208
        $region207: #{forward.1} parent=11 // pred_region
          _
        $region208: #{forward.1} parent=11 // pred_fallthru
          _
        // Predicated region
        $region209: #{forward.1} parent=11 // pred_check
          %p1849 = pneg %p1283
        $region210: #{forward.1} parent=11 // pred_check_branch
          %1851 = sbr.rel (%p1849) target = $region212
        $region211: #{forward.1} parent=11 // pred_region
          _
        $region212: #{forward.1} parent=11 // pred_fallthru
          _
        // Predicated region
        $region213: #{forward.1} parent=11 // pred_check
          %p1852 = pneg %p1304
        $region214: #{forward.1} parent=11 // pred_check_branch
          %1854 = sbr.rel (%p1852) target = $region216
        $region215: #{forward.1} parent=11 // pred_region
          _
        $region216: #{forward.1} parent=11 // pred_fallthru
          _
        // Predicated region
        $region217: #{forward.1} parent=11 // pred_check
          %p1855 = pneg %p1325
        $region218: #{forward.1} parent=11 // pred_check_branch
          %1857 = sbr.rel (%p1855) target = $region220
        $region219: #{forward.1} parent=11 // pred_region
          _
        $region220: #{forward.1} parent=11 // pred_fallthru
          _
        // Predicated region
        $region221: #{forward.1} parent=11 // pred_check
          %p1858 = pneg %p1346
        $region222: #{forward.1} parent=11 // pred_check_branch
          %1860 = sbr.rel (%p1858) target = $region224
        $region223: #{forward.1} parent=11 // pred_region
          _
        $region224: #{forward.1} parent=11 // pred_fallthru
          _
        // Predicated region
        $region225: #{forward.1} parent=11 // pred_check
          %p1861 = pneg %p1367
        $region226: #{forward.1} parent=11 // pred_check_branch
          %1863 = sbr.rel (%p1861) target = $region228
        $region227: #{forward.1} parent=11 // pred_region
          _
        $region228: #{forward.1} parent=11 // pred_fallthru
          _
        // Predicated region
        $region229: #{forward.1} parent=11 // pred_check
          %p1864 = pneg %p1388
        $region230: #{forward.1} parent=11 // pred_check_branch
          %1866 = sbr.rel (%p1864) target = $region232
        $region231: #{forward.1} parent=11 // pred_region
          _
        $region232: #{forward.1} parent=11 // pred_fallthru
          _
        // Predicated region
        $region233: #{forward.1} parent=11 // pred_check
          %p1867 = pneg %p1409
        $region234: #{forward.1} parent=11 // pred_check_branch
          %1869 = sbr.rel (%p1867) target = $region236
        $region235: #{forward.1} parent=11 // pred_region
          _
        $region236: #{forward.1} parent=11 // pred_fallthru
          _
        // Predicated region
        $region237: #{forward.1} parent=11 // pred_check
          %p1870 = pneg %p1430
        $region238: #{forward.1} parent=11 // pred_check_branch
          %1872 = sbr.rel (%p1870) target = $region240
        $region239: #{forward.1} parent=11 // pred_region
          _
        $region240: #{forward.1} parent=11 // pred_fallthru
          _
        // Predicated region
        $region241: #{forward.1} parent=11 // pred_check
          %p1873 = pneg %p1451
        $region242: #{forward.1} parent=11 // pred_check_branch
          %1875 = sbr.rel (%p1873) target = $region244
        $region243: #{forward.1} parent=11 // pred_region
          _
        $region244: #{forward.1} parent=11 // pred_fallthru
          _
        // Predicated region
        $region245: #{forward.1} parent=11 // pred_check
          %p1876 = pneg %p1472
        $region246: #{forward.1} parent=11 // pred_check_branch
          %1878 = sbr.rel (%p1876) target = $region248
        $region247: #{forward.1} parent=11 // pred_region
          _
        $region248: #{forward.1} parent=11 // pred_fallthru
          _
        // Predicated region
        $region249: #{forward.1} parent=11 // pred_check
          %p1879 = pneg %p1493
        $region250: #{forward.1} parent=11 // pred_check_branch
          %1881 = sbr.rel (%p1879) target = $region252
        $region251: #{forward.1} parent=11 // pred_region
          %1883 = vsyncadd [#allocation3], 0
          %s1885 = sshll.u32 %s125, 4
          %s1886 = int_to_ptr.hbm [resolvable:$true] %s1885
          %s1887 = sshll.u32 [#allocation2], 4
          %s1888 = int_to_ptr.vmem [resolvable:$true] %s1887
          %1890 = dma.hbm_to_vmem [thread:$0]  %s1886, 16, %s1888, [#allocation3]
        $region252: #{forward.1} parent=11 // pred_fallthru
          _
        // Predicated region
        $region253: #{forward.1} parent=11 // pred_check
          %p1891 = pneg %p1514
        $region254: #{forward.1} parent=11 // pred_check_branch
          %1893 = sbr.rel (%p1891) target = $region256
        $region255: #{forward.1} parent=11 // pred_region
          %1895 = vsyncadd [#allocation6], 0
          %s1897 = sshll.u32 %s127, 4
          %s1898 = int_to_ptr.hbm [resolvable:$true] %s1897
          %s1899 = sshll.u32 [#allocation5], 4
          %s1900 = int_to_ptr.vmem [resolvable:$true] %s1899
          %1902 = dma.hbm_to_vmem [thread:$0]  %s1898, 16, %s1900, [#allocation6]
        $region256: #{forward.1} parent=11 // pred_fallthru
          _
        // Predicated region
        $region257: #{forward.1} parent=11 // pred_check
          %p1903 = pneg %p1535
        $region258: #{forward.1} parent=11 // pred_check_branch
          %1905 = sbr.rel (%p1903) target = $region260
        $region259: #{forward.1} parent=11 // pred_region
          %1907 = vsyncadd [#allocation6], 0
          %s1909 = sshll.u32 %s129, 4
          %s1910 = int_to_ptr.hbm [resolvable:$true] %s1909
          %s1911 = sshll.u32 [#allocation7], 4
          %s1912 = int_to_ptr.vmem [resolvable:$true] %s1911
          %1914 = dma.hbm_to_vmem [thread:$0]  %s1910, 16, %s1912, [#allocation6]
        $region260: #{forward.1} parent=11 // pred_fallthru
          _
        // Predicated region
        $region261: #{forward.1} parent=11 // pred_check
          %p1915 = pneg %p1556
        $region262: #{forward.1} parent=11 // pred_check_branch
          %1917 = sbr.rel (%p1915) target = $region264
        $region263: #{forward.1} parent=11 // pred_region
          _
        $region264: #{forward.1} parent=11 // pred_fallthru
          _
        // Predicated region
        $region265: #{forward.1} parent=11 // pred_check
          %p1918 = pneg %p1577
        $region266: #{forward.1} parent=11 // pred_check_branch
          %1920 = sbr.rel (%p1918) target = $region268
        $region267: #{forward.1} parent=11 // pred_region
          _
        $region268: #{forward.1} parent=11 // pred_fallthru
          _
        // Predicated region
        $region269: #{forward.1} parent=11 // pred_check
          %p1921 = pneg %p1598
        $region270: #{forward.1} parent=11 // pred_check_branch
          %1923 = sbr.rel (%p1921) target = $region272
        $region271: #{forward.1} parent=11 // pred_region
          %1925 = vsyncadd [#allocation9], 0
          %s1927 = sshll.u32 %s135, 4
          %s1928 = int_to_ptr.hbm [resolvable:$true] %s1927
          %s1929 = sshll.u32 [#allocation8], 4
          %s1930 = int_to_ptr.vmem [resolvable:$true] %s1929
          %1932 = dma.hbm_to_vmem [thread:$0]  %s1928, 16, %s1930, [#allocation9]
        $region272: #{forward.1} parent=11 // pred_fallthru
          _
        // Predicated region
        $region273: #{forward.1} parent=11 // pred_check
          %p1933 = pneg %p1619
        $region274: #{forward.1} parent=11 // pred_check_branch
          %1935 = sbr.rel (%p1933) target = $region276
        $region275: #{forward.1} parent=11 // pred_region
          _
        $region276: #{forward.1} parent=11 // pred_fallthru
          _
        // Predicated region
        $region277: #{forward.1} parent=11 // pred_check
          %p1936 = pneg %p1640
        $region278: #{forward.1} parent=11 // pred_check_branch
          %1938 = sbr.rel (%p1936) target = $region280
        $region279: #{forward.1} parent=11 // pred_region
          %1940 = vsyncadd [#allocation9], 0
          %s1942 = sshll.u32 %s139, 4
          %s1943 = int_to_ptr.hbm [resolvable:$true] %s1942
          %s1944 = sshll.u32 [#allocation10], 4
          %s1945 = int_to_ptr.vmem [resolvable:$true] %s1944
          %1947 = dma.hbm_to_vmem [thread:$0]  %s1943, 16, %s1945, [#allocation9]
        $region280: #{forward.1} parent=11 // pred_fallthru
          _
        // Predicated region
        $region281: #{forward.1} parent=11 // pred_check
          %p1948 = pneg %p1661
        $region282: #{forward.1} parent=11 // pred_check_branch
          %1950 = sbr.rel (%p1948) target = $region284
        $region283: #{forward.1} parent=11 // pred_region
          _
        $region284: #{forward.1} parent=11 // pred_fallthru
          _
      $region12: #{forward.1} parent=5 // pred_fallthru
        _
      %p1951 = scmp.lt.s32.totalorder %s155, 2
      // Predicated region
      $region285: #{forward.1} parent=5 // pred_check
        %p1952 = pneg %p1951
      $region286: #{forward.1} parent=5 // pred_check_branch
        %1954 = sbr.rel (%p1952) target = $region288
      $region287: #{forward.1} parent=5 // pred_region
        // Predicated region
        $region289: #{forward.1} parent=287 // pred_check
          %p1955 = pneg %p175
        $region290: #{forward.1} parent=287 // pred_check_branch
          %1957 = sbr.rel (%p1955) target = $region292
        $region291: #{forward.1} parent=287 // pred_region
          %p1958 = scmp.lt.s32.totalorder %s155, 1
          %s1959 = scalar_select %p1958, %s155, 1
          %s1960 = smul.addr %s1959, 4
          %s1961 = scalar_lea.vmem %s1, %s1960
        $region292: #{forward.1} parent=287 // pred_fallthru
          _
        // Predicated region
        $region293: #{forward.1} parent=287 // pred_check
          %p1962 = pneg %p201
        $region294: #{forward.1} parent=287 // pred_check_branch
          %1964 = sbr.rel (%p1962) target = $region296
        $region295: #{forward.1} parent=287 // pred_region
          %p1965 = scmp.lt.s32.totalorder %s155, 1
          %s1966 = scalar_select %p1965, %s155, 1
          %s1967 = smul.addr %s1966, 4
          %s1968 = scalar_lea.vmem %s3, %s1967
        $region296: #{forward.1} parent=287 // pred_fallthru
          _
        // Predicated region
        $region297: #{forward.1} parent=287 // pred_check
          %p1969 = pneg %p227
        $region298: #{forward.1} parent=287 // pred_check_branch
          %1971 = sbr.rel (%p1969) target = $region300
        $region299: #{forward.1} parent=287 // pred_region
          %p1972 = scmp.lt.s32.totalorder %s155, 1
          %s1973 = scalar_select %p1972, %s155, 1
          %s1974 = smul.addr %s1973, 8
          %s1975 = scalar_lea.vmem %s5, %s1974
        $region300: #{forward.1} parent=287 // pred_fallthru
          _
      $region288: #{forward.1} parent=5 // pred_fallthru
        _
      %p1976 = scmp.le.s32.totalorder 1, %s155
      %p1977 = scmp.lt.s32.totalorder %s155, 3
      %p1978 = pnand %p1976, %p1977
      %p1979 = pneg %p1978
      // Predicated region
      $region301: #{forward.1} parent=5 // pred_check
        _
      $region302: #{forward.1} parent=5 // pred_check_branch
        %1981 = sbr.rel (%p1978) target = $region304
      $region303: #{forward.1} parent=5 // pred_region
        %s1982 = ssub.s32 %s155, 1
        // Predicated region
        $region305: #{forward.1} parent=303 // pred_check
          %p1983 = pneg %p1493
        $region306: #{forward.1} parent=303 // pred_check_branch
          %1985 = sbr.rel (%p1983) target = $region308
        $region307: #{forward.1} parent=303 // pred_region
          %1987 = dma.done [#allocation3], 16
        $region308: #{forward.1} parent=303 // pred_fallthru
          _
        // Predicated region
        $region309: #{forward.1} parent=303 // pred_check
          %p1988 = pneg %p1514
        $region310: #{forward.1} parent=303 // pred_check_branch
          %1990 = sbr.rel (%p1988) target = $region312
        $region311: #{forward.1} parent=303 // pred_region
          %1992 = dma.done [#allocation6], 16
        $region312: #{forward.1} parent=303 // pred_fallthru
          _
        // Predicated region
        $region313: #{forward.1} parent=303 // pred_check
          %p1993 = pneg %p1535
        $region314: #{forward.1} parent=303 // pred_check_branch
          %1995 = sbr.rel (%p1993) target = $region316
        $region315: #{forward.1} parent=303 // pred_region
          %1997 = dma.done [#allocation6], 16
        $region316: #{forward.1} parent=303 // pred_fallthru
          _
        // Predicated region
        $region317: #{forward.1} parent=303 // pred_check
          %p1998 = pneg %p1598
        $region318: #{forward.1} parent=303 // pred_check_branch
          %2000 = sbr.rel (%p1998) target = $region320
        $region319: #{forward.1} parent=303 // pred_region
          %2002 = dma.done [#allocation9], 16
        $region320: #{forward.1} parent=303 // pred_fallthru
          _
        // Predicated region
        $region321: #{forward.1} parent=303 // pred_check
          %p2003 = pneg %p1640
        $region322: #{forward.1} parent=303 // pred_check_branch
          %2005 = sbr.rel (%p2003) target = $region324
        $region323: #{forward.1} parent=303 // pred_region
          %2007 = dma.done [#allocation9], 16
        $region324: #{forward.1} parent=303 // pred_fallthru
          _
        %p2008 = scmp.lt.s32.totalorder %s160, 1
        %s2009 = scalar_select %p2008, %s160, 1
        %s2010 = smul.addr %s2009, 4
        %s2011 = scalar_lea.vmem %s1, %s2010
        %p2012 = pneg %p181
        %p2013 = pneg %p178
        %p2014 = scmp.lt.s32.totalorder %s160, 1
        %s2015 = scalar_select %p2014, %s160, 1
        %s2016 = smul.addr %s2015, 4
        %s2017 = scalar_lea.vmem %s3, %s2016
        %p2018 = pneg %p207
        %p2019 = pneg %p204
        %p2020 = scmp.lt.s32.totalorder %s160, 1
        %s2021 = scalar_select %p2020, %s160, 1
        %s2022 = smul.addr %s2021, 8
        %s2023 = scalar_lea.vmem %s5, %s2022
        %p2024 = pneg %p233
        %p2025 = pneg %p230
        %p2026 = pneg %p254
        %p2027 = pneg %p251
        %p2028 = pneg %p275
        %p2029 = pneg %p272
        %p2030 = pneg %p296
        %p2031 = pneg %p293
        %p2032 = pneg %p317
        %p2033 = pneg %p314
        %p2034 = pneg %p338
        %p2035 = pneg %p335
        %p2036 = pneg %p359
        %p2037 = pneg %p356
        %p2038 = pneg %p380
        %p2039 = pneg %p377
        %p2040 = pneg %p401
        %p2041 = pneg %p398
        %p2042 = pneg %p422
        %p2043 = pneg %p419
        %p2044 = pneg %p443
        %p2045 = pneg %p440
        %p2046 = pneg %p464
        %p2047 = pneg %p461
        %p2048 = pneg %p485
        %p2049 = pneg %p482
        %p2050 = pneg %p506
        %p2051 = pneg %p503
        %p2052 = pneg %p527
        %p2053 = pneg %p524
        %p2054 = pneg %p548
        %p2055 = pneg %p545
        %p2056 = pneg %p569
        %p2057 = pneg %p566
        %p2058 = pneg %p590
        %p2059 = pneg %p587
        %p2060 = pneg %p611
        %p2061 = pneg %p608
        %p2062 = pneg %p632
        %p2063 = pneg %p629
        %p2064 = pneg %p653
        %p2065 = pneg %p650
        %p2066 = pneg %p674
        %p2067 = pneg %p671
        %p2068 = pneg %p695
        %p2069 = pneg %p692
        %p2070 = pneg %p716
        %p2071 = pneg %p713
        %p2072 = pneg %p737
        %p2073 = pneg %p734
        %p2074 = pneg %p758
        %p2075 = pneg %p755
        %p2076 = pneg %p779
        %p2077 = pneg %p776
        %p2078 = pneg %p800
        %p2079 = pneg %p797
        %p2080 = pneg %p821
        %p2081 = pneg %p818
        %p2082 = pneg %p842
        %p2083 = pneg %p839
        %p2084 = pneg %p863
        %p2085 = pneg %p860
        %p2086 = pneg %p884
        %p2087 = pneg %p881
        %p2088 = pneg %p905
        %p2089 = pneg %p902
        %p2090 = pneg %p926
        %p2091 = pneg %p923
        %p2092 = pneg %p947
        %p2093 = pneg %p944
        %p2094 = pneg %p968
        %p2095 = pneg %p965
        %p2096 = pneg %p989
        %p2097 = pneg %p986
        %p2098 = pneg %p1010
        %p2099 = pneg %p1007
        %p2100 = pneg %p1031
        %p2101 = pneg %p1028
        %p2102 = pneg %p1052
        %p2103 = pneg %p1049
        %p2104 = pneg %p1073
        %p2105 = pneg %p1070
        %p2106 = pneg %p1094
        %p2107 = pneg %p1091
        %p2108 = pneg %p1115
        %p2109 = pneg %p1112
        %p2110 = pneg %p1136
        %p2111 = pneg %p1133
        %p2112 = pneg %p1157
        %p2113 = pneg %p1154
        %p2114 = pneg %p1178
        %p2115 = pneg %p1175
        %p2116 = pneg %p1199
        %p2117 = pneg %p1196
        %p2118 = pneg %p1220
        %p2119 = pneg %p1217
        %p2120 = pneg %p1241
        %p2121 = pneg %p1238
        %p2122 = pneg %p1262
        %p2123 = pneg %p1259
        %p2124 = pneg %p1283
        %p2125 = pneg %p1280
        %p2126 = pneg %p1304
        %p2127 = pneg %p1301
        %p2128 = pneg %p1325
        %p2129 = pneg %p1322
        %p2130 = pneg %p1346
        %p2131 = pneg %p1343
        %p2132 = pneg %p1367
        %p2133 = pneg %p1364
        %p2134 = pneg %p1388
        %p2135 = pneg %p1385
        %p2136 = pneg %p1409
        %p2137 = pneg %p1406
        %p2138 = pneg %p1430
        %p2139 = pneg %p1427
        %p2140 = pneg %p1451
        %p2141 = pneg %p1448
        %p2142 = pneg %p1472
        %p2143 = pneg %p1469
        %p2144 = pneg %p1493
        %p2145 = pneg %p1490
        %p2146 = pneg %p1514
        %p2147 = pneg %p1511
        %p2148 = pneg %p1535
        %p2149 = pneg %p1532
        %p2150 = pneg %p1556
        %p2151 = pneg %p1553
        %p2152 = pneg %p1577
        %p2153 = pneg %p1574
        %p2154 = pneg %p1598
        %p2155 = pneg %p1595
        %p2156 = pneg %p1619
        %p2157 = pneg %p1616
        %p2158 = pneg %p1640
        %p2159 = pneg %p1637
        %p2160 = pneg %p1661
        %p2161 = pneg %p1658
        %p2162 = pneg %p1687
        %p2163 = pneg %p1684
        %s2164 = sand.u32 %s1674, 1
        %s2165 = scalar_lea.sflag [#allocation4], %s2164
        %s2166 = sand.u32 %s1674, 1
        %s2167 = smul.addr %s2166, 8
        %s2168 = scalar_lea.vmem [#allocation11], %s2167
        %p2169 = scmp.lt.s32.totalorder %s160, 1
        %s2170 = scalar_select %p2169, %s160, 1
        %s2171 = smul.addr %s2170, 4
        %s2172 = scalar_lea.vmem %s1, %s2171
        %p2173 = scmp.lt.s32.totalorder %s160, 1
        %s2174 = scalar_select %p2173, %s160, 1
        %s2175 = smul.addr %s2174, 4
        %s2176 = scalar_lea.vmem %s3, %s2175
        %p2177 = scmp.lt.s32.totalorder %s160, 1
        %s2178 = scalar_select %p2177, %s160, 1
        %s2179 = smul.addr %s2178, 8
        %s2180 = scalar_lea.vmem %s5, %s2179
        %v2182 = vld [vmem:[%s2172] sm:$0xf]
        %v2183 = vld [vmem:[%s2176] sm:$0xf]
        %v2184 = vld [vmem:[%s2180] sm:$0xff]
        %2186 = vrot.lane.b32.xlu0 %v2183, 32
        %v2187 = vpop.permute.xlu0 %2186
        %vm2189 = vcmask 261120
        %v2190 = vsel %vm2189, %v2182, %v2187
        %vm2191 = vcmask 519168
        %v2192 = vsel %vm2191, %v2190, 0.0
        %v2193 = vrot.slane %v2192, 4
        %v2194 = vadd.f32 %v2192, %v2193
        %v2195 = vrot.slane %v2194, 2
        %v2196 = vadd.f32 %v2194, %v2195
        %v2197 = vrot.slane %v2196, 1
        %v2198 = vadd.f32 %v2196, %v2197
        %v2199 = vrcp.pop 4.0
        %v2200 = vmul.f32 4.0, %v2199
        %v2201 = vsub.f32 1.0, %v2200
        %v2202 = vmul.f32 %v2199, %v2201
        %v2203 = vadd.f32 %v2199, %v2202
        %vm2204 = vweird.f32 %v2199
        %v2205 = vsel %vm2204, %v2199, %v2203
        %v2206 = vmul.f32 %v2198, %v2205
        %v2207 = vld [vmem:[%s141] sm:$0xf]
        %v2208 = vld [vmem:[%s141 + $0x4] sm:$0xf]
        %v2209 = vld [vmem:[%s141 + $0x8] sm:$0xf]
        %v2210 = vld [vmem:[%s141 + $0xc] sm:$0xf]
        %v2211 = vld [vmem:[%s141 + $0x10] sm:$0xf]
        %v2212 = vld [vmem:[%s141 + $0x14] sm:$0xf]
        %v2213 = vld [vmem:[%s141 + $0x18] sm:$0xf]
        %v2214 = vld [vmem:[%s141 + $0x1c] sm:$0xf]
        %v2215 = vpack.c.bf16 %v2206, %v2206
        %v2216 = vld [vmem:[#allocation10] sm:$0x1]
        %v2225 = vunpack.c.l.b16 %v2207
        %v2226 = vunpack.c.l.b16 %v2208
        %v2227 = vunpack.c.l.b16 %v2209
        %v2228 = vunpack.c.l.b16 %v2210
        %v2229 = vunpack.c.l.b16 %v2211
        %v2230 = vunpack.c.l.b16 %v2212
        %v2231 = vunpack.c.l.b16 %v2213
        %v2232 = vunpack.c.l.b16 %v2214
        %v2233 = vpack.c.b16 %v2226, %v2225
        %v2234 = vpack.c.b16 %v2228, %v2227
        %v2235 = vpack.c.b16 %v2230, %v2229
        %v2236 = vpack.c.b16 %v2232, %v2231
        %vm2241 = vcmask 523264
        %v2243 = vsel %vm2241, %v2215, 0
        %2245 = vmatpush.bf16.msra.mxu0 0
        %2246 = vmatpush.bf16.msra.mxu0 0
        %2247 = vmatpush.bf16.msra.mxu0 0
        %2248 = vmatpush.bf16.msra.mxu0 0
        %2249 = vmatpush.bf16.msra.mxu0 %v2236
        %2250 = vmatpush.bf16.msra.mxu0 %v2235
        %2251 = vmatpush.bf16.msra.mxu0 %v2234
        %2252 = vmatpush.bf16.msra.mxu0 %v2233
        %2253 = vmatmul.bf16.gmra.mxu0 %v2243
        %v2254 = vpop.f32.mrf.mxu0
        %v2255 = vadd.f32 %v2216, %v2254
        %v2256 = vpop.f32.mrf.mxu0
        %2257 = vdwg.mxu0
        %v2258 = vrot.slane %v2183, 4
        %vm2260 = vcmask 1043456
        %v2261 = vsel %vm2260, %v2182, %v2258
        %v2262 = vld [vmem:[%s87] sm:$0x1]
        %v2263 = vld [vmem:[%s89] sm:$0xf]
        %v2264 = vld [vmem:[%s89 + $0x4] sm:$0xf]
        %v2265 = vld [vmem:[%s89 + $0x8] sm:$0xf]
        %v2266 = vld [vmem:[%s89 + $0xc] sm:$0xf]
        %v2267 = vld [vmem:[%s91] sm:$0x1]
        %v2268 = vld [vmem:[%s93] sm:$0xf]
        %v2269 = vld [vmem:[%s93 + $0x4] sm:$0xf]
        %v2270 = vld [vmem:[%s93 + $0x8] sm:$0xf]
        %v2271 = vld [vmem:[%s93 + $0xc] sm:$0xf]
        %v2272 = vld [vmem:[%s93 + $0x10] sm:$0xf]
        %v2273 = vld [vmem:[%s93 + $0x14] sm:$0xf]
        %v2274 = vld [vmem:[%s93 + $0x18] sm:$0xf]
        %v2275 = vld [vmem:[%s93 + $0x1c] sm:$0xf]
        %v2276 = vld [vmem:[%s95] sm:$0x1]
        %v2277 = vld [vmem:[%s97] sm:$0x1]
        %v2278 = vld [vmem:[%s99] sm:$0x1]
        %v2279 = vld [vmem:[%s101] sm:$0x1]
        %v2280 = vld [vmem:[%s103] sm:$0x1]
        %v2281 = vld [vmem:[%s105] sm:$0x1]
        %v2282 = vld [vmem:[%s107] sm:$0xf]
        %v2283 = vld [vmem:[%s107 + $0x4] sm:$0xf]
        %v2284 = vld [vmem:[%s107 + $0x8] sm:$0xf]
        %v2285 = vld [vmem:[%s107 + $0xc] sm:$0xf]
        %v2286 = vld [vmem:[%s109] sm:$0xf]
        %v2287 = vld [vmem:[%s109 + $0x4] sm:$0xf]
        %v2288 = vld [vmem:[%s109 + $0x8] sm:$0xf]
        %v2289 = vld [vmem:[%s109 + $0xc] sm:$0xf]
        %v2290 = vpack.c.bf16 %v2261, %v2261
        %v2292 = vperm.slane %v2281, 0
        %v2298 = vunpack.c.l.b16 %v2286
        %v2299 = vunpack.c.l.b16 %v2287
        %v2300 = vunpack.c.l.b16 %v2288
        %v2301 = vunpack.c.l.b16 %v2289
        %v2302 = vpack.c.b16 %v2299, %v2298
        %v2303 = vpack.c.b16 %v2301, %v2300
        %v2307 = vsel %vm2189, %v2290, 0
        %2309 = vmatpush.bf16.msra.mxu0 0
        %2310 = vmatpush.bf16.msra.mxu0 0
        %2311 = vmatpush.bf16.msra.mxu0 0
        %2312 = vmatpush.bf16.msra.mxu0 0
        %2313 = vmatpush.bf16.msra.mxu0 0
        %2314 = vmatpush.bf16.msra.mxu0 0
        %2315 = vmatpush.bf16.msra.mxu0 %v2303
        %2316 = vmatpush.bf16.msra.mxu0 %v2302
        %2317 = vmatmul.bf16.gmra.mxu0 %v2307
        %v2318 = vpop.f32.mrf.mxu0
        %v2319 = vadd.f32 %v2292, %v2318
        %v2320 = vpop.f32.mrf.mxu0
        %2321 = vdwg.mxu0
        %v2322 = vpack.c.bf16 %v2319, %v2319
        %2324 = vrot.lane.b32.xlu0 %v2322, 96
        %v2325 = vpop.permute.xlu0 %2324
        %vm2326 = vcmask 64512
        %v2328 = vsel %vm2326, %v2322, 0
        %v2331 = vsel %vm2326, %v2325, 0
        %2333 = vmatpush.bf16.xpose.msra.mxu0 0
        %2334 = vmatpush.bf16.xpose.msra.mxu0 0
        %2335 = vmatpush.bf16.xpose.msra.mxu0 0
        %2336 = vmatpush.bf16.xpose.msra.mxu0 0
        %2337 = vmatpush.bf16.xpose.msra.mxu0 0
        %2338 = vmatpush.bf16.xpose.msra.mxu0 0
        %2339 = vmatpush.bf16.xpose.msra.mxu0 0
        %2340 = vmatpush.bf16.xpose.msra.mxu0 %v2331
        %2341 = vmatmul.bf16.gmra.mxu0 %v2328
        %v2342 = vpop.f32.mrf.mxu0
        %v2343 = vadd.f32 0.0, %v2342
        %v2344 = vpop.f32.mrf.mxu0
        %2345 = vdwg.mxu0
        %v2346 = vmul.f32 %v2343, 0.35355338
        %v2347 = vsel %vm2326, %v2346, -inf
        %2348 = vmax.xlane.f32.xlu0 %v2347
        %v2349 = vpop.xlane.xlu0 %2348
        %v2350 = vsub.f32 %v2346, %v2349
        %v2351 = vmul.f32 %v2350, 1.442695
        %v2352 = vpow.pop %v2351
        %v2353 = vsel %vm2326, %v2352, 0.0
        %2354 = vadd.xlane.f32.xlu0 %v2353
        %v2355 = vpop.xlane.xlu0 %2354
        %v2356 = vrcp.pop %v2355
        %v2357 = vmul.f32 %v2352, %v2356
        %v2358 = vpack.c.bf16 %v2357, %v2357
        %2359 = vrot.lane.b32.xlu0 %v2322, 64
        %v2360 = vpop.permute.xlu0 %2359
        %v2362 = vsel %vm2326, %v2358, 0
        %v2365 = vsel %vm2260, %v2360, 0
        %2367 = vmatpush.bf16.msra.mxu0 0
        %2368 = vmatpush.bf16.msra.mxu0 0
        %2369 = vmatpush.bf16.msra.mxu0 0
        %2370 = vmatpush.bf16.msra.mxu0 0
        %2371 = vmatpush.bf16.msra.mxu0 0
        %2372 = vmatpush.bf16.msra.mxu0 0
        %2373 = vmatpush.bf16.msra.mxu0 0
        %2374 = vmatpush.bf16.msra.mxu0 %v2365
        %2375 = vmatmul.bf16.gmra.mxu0 %v2362
        %v2376 = vpop.f32.mrf.mxu0
        %v2377 = vadd.f32 0.0, %v2376
        %v2378 = vpop.f32.mrf.mxu0
        %2379 = vdwg.mxu0
        %2380 = vrot.lane.b32.xlu0 %v2322, 120
        %v2381 = vpop.permute.xlu0 %2380
        %2382 = vrot.lane.b32.xlu0 %v2322, 88
        %v2383 = vpop.permute.xlu0 %2382
        %v2385 = vsel %vm2326, %v2381, 0
        %v2388 = vsel %vm2326, %v2383, 0
        %2390 = vmatpush.bf16.xpose.msra.mxu0 0
        %2391 = vmatpush.bf16.xpose.msra.mxu0 0
        %2392 = vmatpush.bf16.xpose.msra.mxu0 0
        %2393 = vmatpush.bf16.xpose.msra.mxu0 0
        %2394 = vmatpush.bf16.xpose.msra.mxu0 0
        %2395 = vmatpush.bf16.xpose.msra.mxu0 0
        %2396 = vmatpush.bf16.xpose.msra.mxu0 0
        %2397 = vmatpush.bf16.xpose.msra.mxu0 %v2388
        %2398 = vmatmul.bf16.gmra.mxu0 %v2385
        %v2399 = vpop.f32.mrf.mxu0
        %v2400 = vadd.f32 0.0, %v2399
        %v2401 = vpop.f32.mrf.mxu0
        %2402 = vdwg.mxu0
        %v2403 = vmul.f32 %v2400, 0.35355338
        %v2404 = vsel %vm2326, %v2403, -inf
        %2405 = vmax.xlane.f32.xlu0 %v2404
        %v2406 = vpop.xlane.xlu0 %2405
        %v2407 = vsub.f32 %v2403, %v2406
        %v2408 = vmul.f32 %v2407, 1.442695
        %v2409 = vpow.pop %v2408
        %v2410 = vsel %vm2326, %v2409, 0.0
        %2411 = vadd.xlane.f32.xlu0 %v2410
        %v2412 = vpop.xlane.xlu0 %2411
        %v2413 = vrcp.pop %v2412
        %v2414 = vmul.f32 %v2409, %v2413
        %v2415 = vpack.c.bf16 %v2414, %v2414
        %2416 = vrot.lane.b32.xlu0 %v2322, 56
        %v2417 = vpop.permute.xlu0 %2416
        %v2419 = vsel %vm2326, %v2415, 0
        %v2422 = vsel %vm2260, %v2417, 0
        %2424 = vmatpush.bf16.msra.mxu0 0
        %2425 = vmatpush.bf16.msra.mxu0 0
        %2426 = vmatpush.bf16.msra.mxu0 0
        %2427 = vmatpush.bf16.msra.mxu0 0
        %2428 = vmatpush.bf16.msra.mxu0 0
        %2429 = vmatpush.bf16.msra.mxu0 0
        %2430 = vmatpush.bf16.msra.mxu0 0
        %2431 = vmatpush.bf16.msra.mxu0 %v2422
        %2432 = vmatmul.bf16.gmra.mxu0 %v2419
        %v2433 = vpop.f32.mrf.mxu0
        %v2434 = vadd.f32 0.0, %v2433
        %v2435 = vpop.f32.mrf.mxu0
        %2436 = vdwg.mxu0
        %2437 = vrot.lane.b32.xlu0 %v2322, 112
        %v2438 = vpop.permute.xlu0 %2437
        %2439 = vrot.lane.b32.xlu0 %v2322, 80
        %v2440 = vpop.permute.xlu0 %2439
        %v2442 = vsel %vm2326, %v2438, 0
        %v2445 = vsel %vm2326, %v2440, 0
        %2447 = vmatpush.bf16.xpose.msra.mxu0 0
        %2448 = vmatpush.bf16.xpose.msra.mxu0 0
        %2449 = vmatpush.bf16.xpose.msra.mxu0 0
        %2450 = vmatpush.bf16.xpose.msra.mxu0 0
        %2451 = vmatpush.bf16.xpose.msra.mxu0 0
        %2452 = vmatpush.bf16.xpose.msra.mxu0 0
        %2453 = vmatpush.bf16.xpose.msra.mxu0 0
        %2454 = vmatpush.bf16.xpose.msra.mxu0 %v2445
        %2455 = vmatmul.bf16.gmra.mxu0 %v2442
        %v2456 = vpop.f32.mrf.mxu0
        %v2457 = vadd.f32 0.0, %v2456
        %v2458 = vpop.f32.mrf.mxu0
        %2459 = vdwg.mxu0
        %v2460 = vmul.f32 %v2457, 0.35355338
        %v2461 = vsel %vm2326, %v2460, -inf
        %2462 = vmax.xlane.f32.xlu0 %v2461
        %v2463 = vpop.xlane.xlu0 %2462
        %v2464 = vsub.f32 %v2460, %v2463
        %v2465 = vmul.f32 %v2464, 1.442695
        %v2466 = vpow.pop %v2465
        %v2467 = vsel %vm2326, %v2466, 0.0
        %2468 = vadd.xlane.f32.xlu0 %v2467
        %v2469 = vpop.xlane.xlu0 %2468
        %v2470 = vrcp.pop %v2469
        %v2471 = vmul.f32 %v2466, %v2470
        %v2472 = vpack.c.bf16 %v2471, %v2471
        %2473 = vrot.lane.b32.xlu0 %v2322, 48
        %v2474 = vpop.permute.xlu0 %2473
        %v2476 = vsel %vm2326, %v2472, 0
        %v2479 = vsel %vm2260, %v2474, 0
        %2481 = vmatpush.bf16.msra.mxu0 0
        %2482 = vmatpush.bf16.msra.mxu0 0
        %2483 = vmatpush.bf16.msra.mxu0 0
        %2484 = vmatpush.bf16.msra.mxu0 0
        %2485 = vmatpush.bf16.msra.mxu0 0
        %2486 = vmatpush.bf16.msra.mxu0 0
        %2487 = vmatpush.bf16.msra.mxu0 0
        %2488 = vmatpush.bf16.msra.mxu0 %v2479
        %2489 = vmatmul.bf16.gmra.mxu0 %v2476
        %v2490 = vpop.f32.mrf.mxu0
        %v2491 = vadd.f32 0.0, %v2490
        %v2492 = vpop.f32.mrf.mxu0
        %2493 = vdwg.mxu0
        %2494 = vrot.lane.b32.xlu0 %v2322, 104
        %v2495 = vpop.permute.xlu0 %2494
        %2496 = vrot.lane.b32.xlu0 %v2322, 72
        %v2497 = vpop.permute.xlu0 %2496
        %v2499 = vsel %vm2326, %v2495, 0
        %v2502 = vsel %vm2326, %v2497, 0
        %2504 = vmatpush.bf16.xpose.msra.mxu0 0
        %2505 = vmatpush.bf16.xpose.msra.mxu0 0
        %2506 = vmatpush.bf16.xpose.msra.mxu0 0
        %2507 = vmatpush.bf16.xpose.msra.mxu0 0
        %2508 = vmatpush.bf16.xpose.msra.mxu0 0
        %2509 = vmatpush.bf16.xpose.msra.mxu0 0
        %2510 = vmatpush.bf16.xpose.msra.mxu0 0
        %2511 = vmatpush.bf16.xpose.msra.mxu0 %v2502
        %2512 = vmatmul.bf16.gmra.mxu0 %v2499
        %v2513 = vpop.f32.mrf.mxu0
        %v2514 = vadd.f32 0.0, %v2513
        %v2515 = vpop.f32.mrf.mxu0
        %2516 = vdwg.mxu0
        %v2517 = vmul.f32 %v2514, 0.35355338
        %v2518 = vsel %vm2326, %v2517, -inf
        %2519 = vmax.xlane.f32.xlu0 %v2518
        %v2520 = vpop.xlane.xlu0 %2519
        %v2521 = vsub.f32 %v2517, %v2520
        %v2522 = vmul.f32 %v2521, 1.442695
        %v2523 = vpow.pop %v2522
        %v2524 = vsel %vm2326, %v2523, 0.0
        %2525 = vadd.xlane.f32.xlu0 %v2524
        %v2526 = vpop.xlane.xlu0 %2525
        %v2527 = vrcp.pop %v2526
        %v2528 = vmul.f32 %v2523, %v2527
        %v2529 = vpack.c.bf16 %v2528, %v2528
        %2530 = vrot.lane.b32.xlu0 %v2322, 40
        %v2531 = vpop.permute.xlu0 %2530
        %v2533 = vsel %vm2326, %v2529, 0
        %v2536 = vsel %vm2260, %v2531, 0
        %2538 = vmatpush.bf16.msra.mxu0 0
        %2539 = vmatpush.bf16.msra.mxu0 0
        %2540 = vmatpush.bf16.msra.mxu0 0
        %2541 = vmatpush.bf16.msra.mxu0 0
        %2542 = vmatpush.bf16.msra.mxu0 0
        %2543 = vmatpush.bf16.msra.mxu0 0
        %2544 = vmatpush.bf16.msra.mxu0 0
        %2545 = vmatpush.bf16.msra.mxu0 %v2536
        %2546 = vmatmul.bf16.gmra.mxu0 %v2533
        %v2547 = vpop.f32.mrf.mxu0
        %v2548 = vadd.f32 0.0, %v2547
        %v2549 = vpop.f32.mrf.mxu0
        %2550 = vdwg.mxu0
        %2552 = vrot.lane.b32.xlu0 %v2434, 8
        %v2553 = vpop.permute.xlu0 %2552
        %2556 = vrot.lane.b32.xlu0 %v2491, 16
        %v2557 = vpop.permute.xlu0 %2556
        %2560 = vrot.lane.b32.xlu0 %v2548, 24
        %v2561 = vpop.permute.xlu0 %2560
        %v2563 = vsel %vm2326, %v2377, %v2553
        %vm2564 = vcmask 130048
        %v2565 = vsel %vm2564, %v2563, %v2557
        %vm2566 = vcmask 195584
        %v2567 = vsel %vm2566, %v2565, %v2561
        %v2568 = vpack.c.bf16 %v2567, %v2567
        %v2570 = vperm.slane %v2280, 0
        %v2576 = vunpack.c.l.b16 %v2282
        %v2577 = vunpack.c.l.b16 %v2283
        %v2578 = vunpack.c.l.b16 %v2284
        %v2579 = vunpack.c.l.b16 %v2285
        %v2580 = vpack.c.b16 %v2577, %v2576
        %v2581 = vpack.c.b16 %v2579, %v2578
        %v2585 = vsel %vm2189, %v2568, 0
        %2587 = vmatpush.bf16.msra.mxu0 0
        %2588 = vmatpush.bf16.msra.mxu0 0
        %2589 = vmatpush.bf16.msra.mxu0 0
        %2590 = vmatpush.bf16.msra.mxu0 0
        %2591 = vmatpush.bf16.msra.mxu0 0
        %2592 = vmatpush.bf16.msra.mxu0 0
        %2593 = vmatpush.bf16.msra.mxu0 %v2581
        %2594 = vmatpush.bf16.msra.mxu0 %v2580
        %2595 = vmatmul.bf16.gmra.mxu0 %v2585
        %v2596 = vpop.f32.mrf.mxu0
        %v2597 = vadd.f32 %v2570, %v2596
        %v2598 = vpop.f32.mrf.mxu0
        %2599 = vdwg.mxu0
        %v2600 = vadd.f32 %v2261, %v2597
        %v2601 = vsel %vm2189, %v2600, 0.0
        %2602 = vadd.xlane.f32.xlu0 %v2601
        %v2603 = vpop.xlane.xlu0 %2602
        %v2604 = vrcp.pop 32.0
        %v2605 = vmul.f32 32.0, %v2604
        %v2606 = vsub.f32 1.0, %v2605
        %v2607 = vmul.f32 %v2604, %v2606
        %v2608 = vadd.f32 %v2604, %v2607
        %vm2609 = vweird.f32 %v2604
        %v2610 = vsel %vm2609, %v2604, %v2608
        %v2611 = vmul.f32 %v2603, %v2610
        %v2612 = vsub.f32 %v2600, %v2611
        %v2613 = vmul.f32 %v2612, %v2612
        %v2614 = vsel %vm2189, %v2613, 0.0
        %2615 = vadd.xlane.f32.xlu0 %v2614
        %v2616 = vpop.xlane.xlu0 %2615
        %v2617 = vmul.f32 %v2616, %v2610
        %v2618 = vadd.f32 %v2617, 1e-05
        %v2619 = vrsqrt.pop %v2618
        %v2620 = vmul.f32 %v2619, %v2618
        %v2621 = vmul.f32 %v2620, %v2619
        %v2622 = vmul.f32 0.5, %v2621
        %v2623 = vsub.f32 1.5, %v2622
        %v2624 = vmul.f32 %v2619, %v2623
        %vm2625 = vweird.f32 %v2618
        %vm2626 = vweird.f32 %v2619
        %vm2627 = vmor %vm2625, %vm2626
        %v2628 = vsel %vm2627, %v2619, %v2624
        %v2629 = vmul.f32 %v2612, %v2628
        %v2631 = vperm.slane %v2277, 0
        %v2633 = vmul.f32 %v2629, %v2631
        %v2635 = vperm.slane %v2276, 0
        %v2637 = vadd.f32 %v2633, %v2635
        %v2638 = vpack.c.bf16 %v2637, %v2637
        %v2640 = vperm.slane %v2262, 0
        %v2646 = vunpack.c.l.b16 %v2263
        %v2647 = vunpack.c.l.b16 %v2264
        %v2648 = vunpack.c.l.b16 %v2265
        %v2649 = vunpack.c.l.b16 %v2266
        %v2650 = vpack.c.b16 %v2647, %v2646
        %v2651 = vpack.c.b16 %v2649, %v2648
        %v2655 = vsel %vm2189, %v2638, 0
        %2657 = vmatpush.bf16.msra.mxu0 0
        %2658 = vmatpush.bf16.msra.mxu0 0
        %2659 = vmatpush.bf16.msra.mxu0 0
        %2660 = vmatpush.bf16.msra.mxu0 0
        %2661 = vmatpush.bf16.msra.mxu0 0
        %2662 = vmatpush.bf16.msra.mxu0 0
        %2663 = vmatpush.bf16.msra.mxu0 %v2651
        %2664 = vmatpush.bf16.msra.mxu0 %v2650
        %2665 = vmatmul.bf16.gmra.mxu0 %v2655
        %v2666 = vpop.f32.mrf.mxu0
        %v2667 = vadd.f32 %v2640, %v2666
        %v2668 = vpop.f32.mrf.mxu0
        %2669 = vdwg.mxu0
        %v2670 = vmax.f32 %v2667, 0.0
        %v2671 = vpack.c.bf16 %v2670, %v2670
        %v2673 = vperm.slane %v2267, 0
        %v2683 = vunpack.c.l.b16 %v2268
        %v2684 = vunpack.c.l.b16 %v2269
        %v2685 = vunpack.c.l.b16 %v2270
        %v2686 = vunpack.c.l.b16 %v2271
        %v2687 = vunpack.c.l.b16 %v2272
        %v2688 = vunpack.c.l.b16 %v2273
        %v2689 = vunpack.c.l.b16 %v2274
        %v2690 = vunpack.c.l.b16 %v2275
        %v2691 = vpack.c.b16 %v2684, %v2683
        %v2692 = vpack.c.b16 %v2686, %v2685
        %v2693 = vpack.c.b16 %v2688, %v2687
        %v2694 = vpack.c.b16 %v2690, %v2689
        %v2700 = vsel %vm2241, %v2671, 0
        %2702 = vmatpush.bf16.msra.mxu0 0
        %2703 = vmatpush.bf16.msra.mxu0 0
        %2704 = vmatpush.bf16.msra.mxu0 0
        %2705 = vmatpush.bf16.msra.mxu0 0
        %2706 = vmatpush.bf16.msra.mxu0 %v2694
        %2707 = vmatpush.bf16.msra.mxu0 %v2693
        %2708 = vmatpush.bf16.msra.mxu0 %v2692
        %2709 = vmatpush.bf16.msra.mxu0 %v2691
        %2710 = vmatmul.bf16.gmra.mxu0 %v2700
        %v2711 = vpop.f32.mrf.mxu0
        %v2712 = vadd.f32 %v2673, %v2711
        %v2713 = vpop.f32.mrf.mxu0
        %2714 = vdwg.mxu0
        %v2715 = vadd.f32 %v2637, %v2712
        %v2716 = vsel %vm2189, %v2715, 0.0
        %2717 = vadd.xlane.f32.xlu0 %v2716
        %v2718 = vpop.xlane.xlu0 %2717
        %v2719 = vmul.f32 %v2718, %v2610
        %v2720 = vsub.f32 %v2715, %v2719
        %v2721 = vmul.f32 %v2720, %v2720
        %v2722 = vsel %vm2189, %v2721, 0.0
        %2723 = vadd.xlane.f32.xlu0 %v2722
        %v2724 = vpop.xlane.xlu0 %2723
        %v2725 = vmul.f32 %v2724, %v2610
        %v2726 = vadd.f32 %v2725, 1e-05
        %v2727 = vrsqrt.pop %v2726
        %v2728 = vmul.f32 %v2727, %v2726
        %v2729 = vmul.f32 %v2728, %v2727
        %v2730 = vmul.f32 0.5, %v2729
        %v2731 = vsub.f32 1.5, %v2730
        %v2732 = vmul.f32 %v2727, %v2731
        %vm2733 = vweird.f32 %v2726
        %vm2734 = vweird.f32 %v2727
        %vm2735 = vmor %vm2733, %vm2734
        %v2736 = vsel %vm2735, %v2727, %v2732
        %v2737 = vmul.f32 %v2720, %v2736
        %v2739 = vperm.slane %v2279, 0
        %v2741 = vmul.f32 %v2737, %v2739
        %v2743 = vperm.slane %v2278, 0
        %v2745 = vadd.f32 %v2741, %v2743
        %v2746 = vld [vmem:[%s111] sm:$0x1]
        %v2747 = vld [vmem:[%s113] sm:$0xf]
        %v2748 = vld [vmem:[%s113 + $0x4] sm:$0xf]
        %v2749 = vld [vmem:[%s113 + $0x8] sm:$0xf]
        %v2750 = vld [vmem:[%s113 + $0xc] sm:$0xf]
        %v2751 = vld [vmem:[%s115] sm:$0x1]
        %v2752 = vld [vmem:[%s117] sm:$0xf]
        %v2753 = vld [vmem:[%s117 + $0x4] sm:$0xf]
        %v2754 = vld [vmem:[%s117 + $0x8] sm:$0xf]
        %v2755 = vld [vmem:[%s117 + $0xc] sm:$0xf]
        %v2756 = vld [vmem:[%s117 + $0x10] sm:$0xf]
        %v2757 = vld [vmem:[%s117 + $0x14] sm:$0xf]
        %v2758 = vld [vmem:[%s117 + $0x18] sm:$0xf]
        %v2759 = vld [vmem:[%s117 + $0x1c] sm:$0xf]
        %v2760 = vld [vmem:[%s119] sm:$0x1]
        %v2761 = vld [vmem:[%s121] sm:$0x1]
        %v2762 = vld [vmem:[%s123] sm:$0x1]
        %v2763 = vld [vmem:[#allocation2] sm:$0x1]
        %v2764 = vld [vmem:[#allocation5] sm:$0x1]
        %v2765 = vld [vmem:[#allocation7] sm:$0x1]
        %v2766 = vld [vmem:[%s131] sm:$0xf]
        %v2767 = vld [vmem:[%s131 + $0x4] sm:$0xf]
        %v2768 = vld [vmem:[%s131 + $0x8] sm:$0xf]
        %v2769 = vld [vmem:[%s131 + $0xc] sm:$0xf]
        %v2770 = vld [vmem:[%s133] sm:$0xf]
        %v2771 = vld [vmem:[%s133 + $0x4] sm:$0xf]
        %v2772 = vld [vmem:[%s133 + $0x8] sm:$0xf]
        %v2773 = vld [vmem:[%s133 + $0xc] sm:$0xf]
        %v2774 = vpack.c.bf16 %v2745, %v2745
        %v2776 = vperm.slane %v2765, 0
        %v2782 = vunpack.c.l.b16 %v2770
        %v2783 = vunpack.c.l.b16 %v2771
        %v2784 = vunpack.c.l.b16 %v2772
        %v2785 = vunpack.c.l.b16 %v2773
        %v2786 = vpack.c.b16 %v2783, %v2782
        %v2787 = vpack.c.b16 %v2785, %v2784
        %v2791 = vsel %vm2189, %v2774, 0
        %2793 = vmatpush.bf16.msra.mxu0 0
        %2794 = vmatpush.bf16.msra.mxu0 0
        %2795 = vmatpush.bf16.msra.mxu0 0
        %2796 = vmatpush.bf16.msra.mxu0 0
        %2797 = vmatpush.bf16.msra.mxu0 0
        %2798 = vmatpush.bf16.msra.mxu0 0
        %2799 = vmatpush.bf16.msra.mxu0 %v2787
        %2800 = vmatpush.bf16.msra.mxu0 %v2786
        %2801 = vmatmul.bf16.gmra.mxu0 %v2791
        %v2802 = vpop.f32.mrf.mxu0
        %v2803 = vadd.f32 %v2776, %v2802
        %v2804 = vpop.f32.mrf.mxu0
        %2805 = vdwg.mxu0
        %v2806 = vpack.c.bf16 %v2803, %v2803
        %2808 = vrot.lane.b32.xlu0 %v2806, 96
        %v2809 = vpop.permute.xlu0 %2808
        %v2811 = vsel %vm2326, %v2806, 0
        %v2814 = vsel %vm2326, %v2809, 0
        %2816 = vmatpush.bf16.xpose.msra.mxu0 0
        %2817 = vmatpush.bf16.xpose.msra.mxu0 0
        %2818 = vmatpush.bf16.xpose.msra.mxu0 0
        %2819 = vmatpush.bf16.xpose.msra.mxu0 0
        %2820 = vmatpush.bf16.xpose.msra.mxu0 0
        %2821 = vmatpush.bf16.xpose.msra.mxu0 0
        %2822 = vmatpush.bf16.xpose.msra.mxu0 0
        %2823 = vmatpush.bf16.xpose.msra.mxu0 %v2814
        %2824 = vmatmul.bf16.gmra.mxu0 %v2811
        %v2825 = vpop.f32.mrf.mxu0
        %v2826 = vadd.f32 0.0, %v2825
        %v2827 = vpop.f32.mrf.mxu0
        %2828 = vdwg.mxu0
        %v2829 = vmul.f32 %v2826, 0.35355338
        %v2830 = vsel %vm2326, %v2829, -inf
        %2831 = vmax.xlane.f32.xlu0 %v2830
        %v2832 = vpop.xlane.xlu0 %2831
        %v2833 = vsub.f32 %v2829, %v2832
        %v2834 = vmul.f32 %v2833, 1.442695
        %v2835 = vpow.pop %v2834
        %v2836 = vsel %vm2326, %v2835, 0.0
        %2837 = vadd.xlane.f32.xlu0 %v2836
        %v2838 = vpop.xlane.xlu0 %2837
        %v2839 = vrcp.pop %v2838
        %v2840 = vmul.f32 %v2835, %v2839
        %v2841 = vpack.c.bf16 %v2840, %v2840
        %2842 = vrot.lane.b32.xlu0 %v2806, 64
        %v2843 = vpop.permute.xlu0 %2842
        %v2845 = vsel %vm2326, %v2841, 0
        %v2848 = vsel %vm2260, %v2843, 0
        %2850 = vmatpush.bf16.msra.mxu0 0
        %2851 = vmatpush.bf16.msra.mxu0 0
        %2852 = vmatpush.bf16.msra.mxu0 0
        %2853 = vmatpush.bf16.msra.mxu0 0
        %2854 = vmatpush.bf16.msra.mxu0 0
        %2855 = vmatpush.bf16.msra.mxu0 0
        %2856 = vmatpush.bf16.msra.mxu0 0
        %2857 = vmatpush.bf16.msra.mxu0 %v2848
        %2858 = vmatmul.bf16.gmra.mxu0 %v2845
        %v2859 = vpop.f32.mrf.mxu0
        %v2860 = vadd.f32 0.0, %v2859
        %v2861 = vpop.f32.mrf.mxu0
        %2862 = vdwg.mxu0
        %2863 = vrot.lane.b32.xlu0 %v2806, 120
        %v2864 = vpop.permute.xlu0 %2863
        %2865 = vrot.lane.b32.xlu0 %v2806, 88
        %v2866 = vpop.permute.xlu0 %2865
        %v2868 = vsel %vm2326, %v2864, 0
        %v2871 = vsel %vm2326, %v2866, 0
        %2873 = vmatpush.bf16.xpose.msra.mxu0 0
        %2874 = vmatpush.bf16.xpose.msra.mxu0 0
        %2875 = vmatpush.bf16.xpose.msra.mxu0 0
        %2876 = vmatpush.bf16.xpose.msra.mxu0 0
        %2877 = vmatpush.bf16.xpose.msra.mxu0 0
        %2878 = vmatpush.bf16.xpose.msra.mxu0 0
        %2879 = vmatpush.bf16.xpose.msra.mxu0 0
        %2880 = vmatpush.bf16.xpose.msra.mxu0 %v2871
        %2881 = vmatmul.bf16.gmra.mxu0 %v2868
        %v2882 = vpop.f32.mrf.mxu0
        %v2883 = vadd.f32 0.0, %v2882
        %v2884 = vpop.f32.mrf.mxu0
        %2885 = vdwg.mxu0
        %v2886 = vmul.f32 %v2883, 0.35355338
        %v2887 = vsel %vm2326, %v2886, -inf
        %2888 = vmax.xlane.f32.xlu0 %v2887
        %v2889 = vpop.xlane.xlu0 %2888
        %v2890 = vsub.f32 %v2886, %v2889
        %v2891 = vmul.f32 %v2890, 1.442695
        %v2892 = vpow.pop %v2891
        %v2893 = vsel %vm2326, %v2892, 0.0
        %2894 = vadd.xlane.f32.xlu0 %v2893
        %v2895 = vpop.xlane.xlu0 %2894
        %v2896 = vrcp.pop %v2895
        %v2897 = vmul.f32 %v2892, %v2896
        %v2898 = vpack.c.bf16 %v2897, %v2897
        %2899 = vrot.lane.b32.xlu0 %v2806, 56
        %v2900 = vpop.permute.xlu0 %2899
        %v2902 = vsel %vm2326, %v2898, 0
        %v2905 = vsel %vm2260, %v2900, 0
        %2907 = vmatpush.bf16.msra.mxu0 0
        %2908 = vmatpush.bf16.msra.mxu0 0
        %2909 = vmatpush.bf16.msra.mxu0 0
        %2910 = vmatpush.bf16.msra.mxu0 0
        %2911 = vmatpush.bf16.msra.mxu0 0
        %2912 = vmatpush.bf16.msra.mxu0 0
        %2913 = vmatpush.bf16.msra.mxu0 0
        %2914 = vmatpush.bf16.msra.mxu0 %v2905
        %2915 = vmatmul.bf16.gmra.mxu0 %v2902
        %v2916 = vpop.f32.mrf.mxu0
        %v2917 = vadd.f32 0.0, %v2916
        %v2918 = vpop.f32.mrf.mxu0
        %2919 = vdwg.mxu0
        %2920 = vrot.lane.b32.xlu0 %v2806, 112
        %v2921 = vpop.permute.xlu0 %2920
        %2922 = vrot.lane.b32.xlu0 %v2806, 80
        %v2923 = vpop.permute.xlu0 %2922
        %v2925 = vsel %vm2326, %v2921, 0
        %v2928 = vsel %vm2326, %v2923, 0
        %2930 = vmatpush.bf16.xpose.msra.mxu0 0
        %2931 = vmatpush.bf16.xpose.msra.mxu0 0
        %2932 = vmatpush.bf16.xpose.msra.mxu0 0
        %2933 = vmatpush.bf16.xpose.msra.mxu0 0
        %2934 = vmatpush.bf16.xpose.msra.mxu0 0
        %2935 = vmatpush.bf16.xpose.msra.mxu0 0
        %2936 = vmatpush.bf16.xpose.msra.mxu0 0
        %2937 = vmatpush.bf16.xpose.msra.mxu0 %v2928
        %2938 = vmatmul.bf16.gmra.mxu0 %v2925
        %v2939 = vpop.f32.mrf.mxu0
        %v2940 = vadd.f32 0.0, %v2939
        %v2941 = vpop.f32.mrf.mxu0
        %2942 = vdwg.mxu0
        %v2943 = vmul.f32 %v2940, 0.35355338
        %v2944 = vsel %vm2326, %v2943, -inf
        %2945 = vmax.xlane.f32.xlu0 %v2944
        %v2946 = vpop.xlane.xlu0 %2945
        %v2947 = vsub.f32 %v2943, %v2946
        %v2948 = vmul.f32 %v2947, 1.442695
        %v2949 = vpow.pop %v2948
        %v2950 = vsel %vm2326, %v2949, 0.0
        %2951 = vadd.xlane.f32.xlu0 %v2950
        %v2952 = vpop.xlane.xlu0 %2951
        %v2953 = vrcp.pop %v2952
        %v2954 = vmul.f32 %v2949, %v2953
        %v2955 = vpack.c.bf16 %v2954, %v2954
        %2956 = vrot.lane.b32.xlu0 %v2806, 48
        %v2957 = vpop.permute.xlu0 %2956
        %v2959 = vsel %vm2326, %v2955, 0
        %v2962 = vsel %vm2260, %v2957, 0
        %2964 = vmatpush.bf16.msra.mxu0 0
        %2965 = vmatpush.bf16.msra.mxu0 0
        %2966 = vmatpush.bf16.msra.mxu0 0
        %2967 = vmatpush.bf16.msra.mxu0 0
        %2968 = vmatpush.bf16.msra.mxu0 0
        %2969 = vmatpush.bf16.msra.mxu0 0
        %2970 = vmatpush.bf16.msra.mxu0 0
        %2971 = vmatpush.bf16.msra.mxu0 %v2962
        %2972 = vmatmul.bf16.gmra.mxu0 %v2959
        %v2973 = vpop.f32.mrf.mxu0
        %v2974 = vadd.f32 0.0, %v2973
        %v2975 = vpop.f32.mrf.mxu0
        %2976 = vdwg.mxu0
        %2977 = vrot.lane.b32.xlu0 %v2806, 104
        %v2978 = vpop.permute.xlu0 %2977
        %2979 = vrot.lane.b32.xlu0 %v2806, 72
        %v2980 = vpop.permute.xlu0 %2979
        %v2982 = vsel %vm2326, %v2978, 0
        %v2985 = vsel %vm2326, %v2980, 0
        %2987 = vmatpush.bf16.xpose.msra.mxu0 0
        %2988 = vmatpush.bf16.xpose.msra.mxu0 0
        %2989 = vmatpush.bf16.xpose.msra.mxu0 0
        %2990 = vmatpush.bf16.xpose.msra.mxu0 0
        %2991 = vmatpush.bf16.xpose.msra.mxu0 0
        %2992 = vmatpush.bf16.xpose.msra.mxu0 0
        %2993 = vmatpush.bf16.xpose.msra.mxu0 0
        %2994 = vmatpush.bf16.xpose.msra.mxu0 %v2985
        %2995 = vmatmul.bf16.gmra.mxu0 %v2982
        %v2996 = vpop.f32.mrf.mxu0
        %v2997 = vadd.f32 0.0, %v2996
        %v2998 = vpop.f32.mrf.mxu0
        %2999 = vdwg.mxu0
        %v3000 = vmul.f32 %v2997, 0.35355338
        %v3001 = vsel %vm2326, %v3000, -inf
        %3002 = vmax.xlane.f32.xlu0 %v3001
        %v3003 = vpop.xlane.xlu0 %3002
        %v3004 = vsub.f32 %v3000, %v3003
        %v3005 = vmul.f32 %v3004, 1.442695
        %v3006 = vpow.pop %v3005
        %v3007 = vsel %vm2326, %v3006, 0.0
        %3008 = vadd.xlane.f32.xlu0 %v3007
        %v3009 = vpop.xlane.xlu0 %3008
        %v3010 = vrcp.pop %v3009
        %v3011 = vmul.f32 %v3006, %v3010
        %v3012 = vpack.c.bf16 %v3011, %v3011
        %3013 = vrot.lane.b32.xlu0 %v2806, 40
        %v3014 = vpop.permute.xlu0 %3013
        %v3016 = vsel %vm2326, %v3012, 0
        %v3019 = vsel %vm2260, %v3014, 0
        %3021 = vmatpush.bf16.msra.mxu0 0
        %3022 = vmatpush.bf16.msra.mxu0 0
        %3023 = vmatpush.bf16.msra.mxu0 0
        %3024 = vmatpush.bf16.msra.mxu0 0
        %3025 = vmatpush.bf16.msra.mxu0 0
        %3026 = vmatpush.bf16.msra.mxu0 0
        %3027 = vmatpush.bf16.msra.mxu0 0
        %3028 = vmatpush.bf16.msra.mxu0 %v3019
        %3029 = vmatmul.bf16.gmra.mxu0 %v3016
        %v3030 = vpop.f32.mrf.mxu0
        %v3031 = vadd.f32 0.0, %v3030
        %v3032 = vpop.f32.mrf.mxu0
        %3033 = vdwg.mxu0
        %3035 = vrot.lane.b32.xlu0 %v2917, 8
        %v3036 = vpop.permute.xlu0 %3035
        %3039 = vrot.lane.b32.xlu0 %v2974, 16
        %v3040 = vpop.permute.xlu0 %3039
        %3043 = vrot.lane.b32.xlu0 %v3031, 24
        %v3044 = vpop.permute.xlu0 %3043
        %v3046 = vsel %vm2326, %v2860, %v3036
        %v3047 = vsel %vm2564, %v3046, %v3040
        %v3048 = vsel %vm2566, %v3047, %v3044
        %v3049 = vpack.c.bf16 %v3048, %v3048
        %v3051 = vperm.slane %v2764, 0
        %v3057 = vunpack.c.l.b16 %v2766
        %v3058 = vunpack.c.l.b16 %v2767
        %v3059 = vunpack.c.l.b16 %v2768
        %v3060 = vunpack.c.l.b16 %v2769
        %v3061 = vpack.c.b16 %v3058, %v3057
        %v3062 = vpack.c.b16 %v3060, %v3059
        %v3066 = vsel %vm2189, %v3049, 0
        %3068 = vmatpush.bf16.msra.mxu0 0
        %3069 = vmatpush.bf16.msra.mxu0 0
        %3070 = vmatpush.bf16.msra.mxu0 0
        %3071 = vmatpush.bf16.msra.mxu0 0
        %3072 = vmatpush.bf16.msra.mxu0 0
        %3073 = vmatpush.bf16.msra.mxu0 0
        %3074 = vmatpush.bf16.msra.mxu0 %v3062
        %3075 = vmatpush.bf16.msra.mxu0 %v3061
        %3076 = vmatmul.bf16.gmra.mxu0 %v3066
        %v3077 = vpop.f32.mrf.mxu0
        %v3078 = vadd.f32 %v3051, %v3077
        %v3079 = vpop.f32.mrf.mxu0
        %3080 = vdwg.mxu0
        %v3081 = vadd.f32 %v2745, %v3078
        %v3082 = vsel %vm2189, %v3081, 0.0
        %3083 = vadd.xlane.f32.xlu0 %v3082
        %v3084 = vpop.xlane.xlu0 %3083
        %v3085 = vmul.f32 %v3084, %v2610
        %v3086 = vsub.f32 %v3081, %v3085
        %v3087 = vmul.f32 %v3086, %v3086
        %v3088 = vsel %vm2189, %v3087, 0.0
        %3089 = vadd.xlane.f32.xlu0 %v3088
        %v3090 = vpop.xlane.xlu0 %3089
        %v3091 = vmul.f32 %v3090, %v2610
        %v3092 = vadd.f32 %v3091, 1e-05
        %v3093 = vrsqrt.pop %v3092
        %v3094 = vmul.f32 %v3093, %v3092
        %v3095 = vmul.f32 %v3094, %v3093
        %v3096 = vmul.f32 0.5, %v3095
        %v3097 = vsub.f32 1.5, %v3096
        %v3098 = vmul.f32 %v3093, %v3097
        %vm3099 = vweird.f32 %v3092
        %vm3100 = vweird.f32 %v3093
        %vm3101 = vmor %vm3099, %vm3100
        %v3102 = vsel %vm3101, %v3093, %v3098
        %v3103 = vmul.f32 %v3086, %v3102
        %v3105 = vperm.slane %v2761, 0
        %v3107 = vmul.f32 %v3103, %v3105
        %v3109 = vperm.slane %v2760, 0
        %v3111 = vadd.f32 %v3107, %v3109
        %v3112 = vpack.c.bf16 %v3111, %v3111
        %v3114 = vperm.slane %v2746, 0
        %v3120 = vunpack.c.l.b16 %v2747
        %v3121 = vunpack.c.l.b16 %v2748
        %v3122 = vunpack.c.l.b16 %v2749
        %v3123 = vunpack.c.l.b16 %v2750
        %v3124 = vpack.c.b16 %v3121, %v3120
        %v3125 = vpack.c.b16 %v3123, %v3122
        %v3129 = vsel %vm2189, %v3112, 0
        %3131 = vmatpush.bf16.msra.mxu0 0
        %3132 = vmatpush.bf16.msra.mxu0 0
        %3133 = vmatpush.bf16.msra.mxu0 0
        %3134 = vmatpush.bf16.msra.mxu0 0
        %3135 = vmatpush.bf16.msra.mxu0 0
        %3136 = vmatpush.bf16.msra.mxu0 0
        %3137 = vmatpush.bf16.msra.mxu0 %v3125
        %3138 = vmatpush.bf16.msra.mxu0 %v3124
        %3139 = vmatmul.bf16.gmra.mxu0 %v3129
        %v3140 = vpop.f32.mrf.mxu0
        %v3141 = vadd.f32 %v3114, %v3140
        %v3142 = vpop.f32.mrf.mxu0
        %3143 = vdwg.mxu0
        %v3144 = vmax.f32 %v3141, 0.0
        %v3145 = vpack.c.bf16 %v3144, %v3144
        %v3147 = vperm.slane %v2751, 0
        %v3157 = vunpack.c.l.b16 %v2752
        %v3158 = vunpack.c.l.b16 %v2753
        %v3159 = vunpack.c.l.b16 %v2754
        %v3160 = vunpack.c.l.b16 %v2755
        %v3161 = vunpack.c.l.b16 %v2756
        %v3162 = vunpack.c.l.b16 %v2757
        %v3163 = vunpack.c.l.b16 %v2758
        %v3164 = vunpack.c.l.b16 %v2759
        %v3165 = vpack.c.b16 %v3158, %v3157
        %v3166 = vpack.c.b16 %v3160, %v3159
        %v3167 = vpack.c.b16 %v3162, %v3161
        %v3168 = vpack.c.b16 %v3164, %v3163
        %v3174 = vsel %vm2241, %v3145, 0
        %3176 = vmatpush.bf16.msra.mxu0 0
        %3177 = vmatpush.bf16.msra.mxu0 0
        %3178 = vmatpush.bf16.msra.mxu0 0
        %3179 = vmatpush.bf16.msra.mxu0 0
        %3180 = vmatpush.bf16.msra.mxu0 %v3168
        %3181 = vmatpush.bf16.msra.mxu0 %v3167
        %3182 = vmatpush.bf16.msra.mxu0 %v3166
        %3183 = vmatpush.bf16.msra.mxu0 %v3165
        %3184 = vmatmul.bf16.gmra.mxu0 %v3174
        %v3185 = vpop.f32.mrf.mxu0
        %v3186 = vadd.f32 %v3147, %v3185
        %v3187 = vpop.f32.mrf.mxu0
        %3188 = vdwg.mxu0
        %v3189 = vadd.f32 %v3111, %v3186
        %v3190 = vsel %vm2189, %v3189, 0.0
        %3191 = vadd.xlane.f32.xlu0 %v3190
        %v3192 = vpop.xlane.xlu0 %3191
        %v3193 = vmul.f32 %v3192, %v2610
        %v3194 = vsub.f32 %v3189, %v3193
        %v3195 = vmul.f32 %v3194, %v3194
        %v3196 = vsel %vm2189, %v3195, 0.0
        %3197 = vadd.xlane.f32.xlu0 %v3196
        %v3198 = vpop.xlane.xlu0 %3197
        %v3199 = vmul.f32 %v3198, %v2610
        %v3200 = vadd.f32 %v3199, 1e-05
        %v3201 = vrsqrt.pop %v3200
        %v3202 = vmul.f32 %v3201, %v3200
        %v3203 = vmul.f32 %v3202, %v3201
        %v3204 = vmul.f32 0.5, %v3203
        %v3205 = vsub.f32 1.5, %v3204
        %v3206 = vmul.f32 %v3201, %v3205
        %vm3207 = vweird.f32 %v3200
        %vm3208 = vweird.f32 %v3201
        %vm3209 = vmor %vm3207, %vm3208
        %v3210 = vsel %vm3209, %v3201, %v3206
        %v3211 = vmul.f32 %v3194, %v3210
        %v3213 = vperm.slane %v2763, 0
        %v3215 = vmul.f32 %v3211, %v3213
        %v3217 = vperm.slane %v2762, 0
        %v3219 = vadd.f32 %v3215, %v3217
        %v3220 = vperm.slane %v2255, 0
        %v3221 = vadd.f32 %v3219, %v3220
        %v3222 = vld [vmem:[%s7] sm:$0x1]
        %v3223 = vld [vmem:[%s9] sm:$0x1]
        %v3224 = vld [vmem:[%s11] sm:$0x1]
        %v3225 = vld [vmem:[%s13] sm:$0xf]
        %v3226 = vld [vmem:[%s13 + $0x4] sm:$0xf]
        %v3227 = vld [vmem:[%s13 + $0x8] sm:$0xf]
        %v3228 = vld [vmem:[%s13 + $0xc] sm:$0xf]
        %v3229 = vld [vmem:[%s15] sm:$0xf]
        %v3230 = vld [vmem:[%s15 + $0x4] sm:$0xf]
        %v3231 = vld [vmem:[%s15 + $0x8] sm:$0xf]
        %v3232 = vld [vmem:[%s15 + $0xc] sm:$0xf]
        %v3233 = vld [vmem:[%s17] sm:$0xf]
        %v3234 = vld [vmem:[%s17 + $0x4] sm:$0xf]
        %v3235 = vld [vmem:[%s17 + $0x8] sm:$0xf]
        %v3236 = vld [vmem:[%s17 + $0xc] sm:$0xf]
        %v3237 = vld [vmem:[%s19] sm:$0x1]
        %v3238 = vld [vmem:[%s21] sm:$0xf]
        %v3239 = vld [vmem:[%s21 + $0x4] sm:$0xf]
        %v3240 = vld [vmem:[%s21 + $0x8] sm:$0xf]
        %v3241 = vld [vmem:[%s21 + $0xc] sm:$0xf]
        %v3242 = vld [vmem:[%s23] sm:$0x1]
        %v3243 = vld [vmem:[%s25] sm:$0xf]
        %v3244 = vld [vmem:[%s25 + $0x4] sm:$0xf]
        %v3245 = vld [vmem:[%s25 + $0x8] sm:$0xf]
        %v3246 = vld [vmem:[%s25 + $0xc] sm:$0xf]
        %v3247 = vld [vmem:[%s25 + $0x10] sm:$0xf]
        %v3248 = vld [vmem:[%s25 + $0x14] sm:$0xf]
        %v3249 = vld [vmem:[%s25 + $0x18] sm:$0xf]
        %v3250 = vld [vmem:[%s25 + $0x1c] sm:$0xf]
        %v3251 = vld [vmem:[%s27] sm:$0x1]
        %v3252 = vld [vmem:[%s29] sm:$0x1]
        %v3253 = vld [vmem:[%s31] sm:$0x1]
        %v3254 = vld [vmem:[%s33] sm:$0x1]
        %v3255 = vld [vmem:[%s35] sm:$0x1]
        %v3256 = vld [vmem:[%s37] sm:$0x1]
        %v3257 = vld [vmem:[%s39] sm:$0x1]
        %v3258 = vld [vmem:[%s41] sm:$0x1]
        %v3259 = vld [vmem:[%s43] sm:$0xf]
        %v3260 = vld [vmem:[%s43 + $0x4] sm:$0xf]
        %v3261 = vld [vmem:[%s43 + $0x8] sm:$0xf]
        %v3262 = vld [vmem:[%s43 + $0xc] sm:$0xf]
        %v3263 = vld [vmem:[%s45] sm:$0xf]
        %v3264 = vld [vmem:[%s45 + $0x4] sm:$0xf]
        %v3265 = vld [vmem:[%s45 + $0x8] sm:$0xf]
        %v3266 = vld [vmem:[%s45 + $0xc] sm:$0xf]
        %v3267 = vpack.c.bf16 %v2184, %v2184
        %v3269 = vperm.slane %v3258, 0
        %v3275 = vunpack.c.l.b16 %v3263
        %v3276 = vunpack.c.l.b16 %v3264
        %v3277 = vunpack.c.l.b16 %v3265
        %v3278 = vunpack.c.l.b16 %v3266
        %v3279 = vpack.c.b16 %v3276, %v3275
        %v3280 = vpack.c.b16 %v3278, %v3277
        %v3284 = vsel %vm2189, %v3267, 0
        %3286 = vmatpush.bf16.msra.mxu0 0
        %3287 = vmatpush.bf16.msra.mxu0 0
        %3288 = vmatpush.bf16.msra.mxu0 0
        %3289 = vmatpush.bf16.msra.mxu0 0
        %3290 = vmatpush.bf16.msra.mxu0 0
        %3291 = vmatpush.bf16.msra.mxu0 0
        %3292 = vmatpush.bf16.msra.mxu0 %v3280
        %3293 = vmatpush.bf16.msra.mxu0 %v3279
        %3294 = vmatmul.bf16.gmra.mxu0 %v3284
        %v3295 = vpop.f32.mrf.mxu0
        %v3296 = vadd.f32 %v3269, %v3295
        %v3297 = vpop.f32.mrf.mxu0
        %3298 = vdwg.mxu0
        %v3299 = vpack.c.bf16 %v3296, %v3296
        %3301 = vrot.lane.b32.xlu0 %v3299, 96
        %v3302 = vpop.permute.xlu0 %3301
        %v3304 = vsel %vm2326, %v3299, 0
        %v3307 = vsel %vm2326, %v3302, 0
        %3309 = vmatpush.bf16.xpose.msra.mxu0 0
        %3310 = vmatpush.bf16.xpose.msra.mxu0 0
        %3311 = vmatpush.bf16.xpose.msra.mxu0 0
        %3312 = vmatpush.bf16.xpose.msra.mxu0 0
        %3313 = vmatpush.bf16.xpose.msra.mxu0 0
        %3314 = vmatpush.bf16.xpose.msra.mxu0 0
        %3315 = vmatpush.bf16.xpose.msra.mxu0 0
        %3316 = vmatpush.bf16.xpose.msra.mxu0 %v3307
        %3317 = vmatmul.bf16.gmra.mxu0 %v3304
        %v3318 = vpop.f32.mrf.mxu0
        %v3319 = vadd.f32 0.0, %v3318
        %v3320 = vpop.f32.mrf.mxu0
        %3321 = vdwg.mxu0
        %v3322 = vmul.f32 %v3319, 0.35355338
        %v3323 = vsel %vm2326, %v3322, -inf
        %3324 = vmax.xlane.f32.xlu0 %v3323
        %v3325 = vpop.xlane.xlu0 %3324
        %v3326 = vsub.f32 %v3322, %v3325
        %v3327 = vmul.f32 %v3326, 1.442695
        %v3328 = vpow.pop %v3327
        %v3329 = vsel %vm2326, %v3328, 0.0
        %3330 = vadd.xlane.f32.xlu0 %v3329
        %v3331 = vpop.xlane.xlu0 %3330
        %v3332 = vrcp.pop %v3331
        %v3333 = vmul.f32 %v3328, %v3332
        %v3334 = vpack.c.bf16 %v3333, %v3333
        %3335 = vrot.lane.b32.xlu0 %v3299, 64
        %v3336 = vpop.permute.xlu0 %3335
        %v3338 = vsel %vm2326, %v3334, 0
        %v3341 = vsel %vm2260, %v3336, 0
        %3343 = vmatpush.bf16.msra.mxu0 0
        %3344 = vmatpush.bf16.msra.mxu0 0
        %3345 = vmatpush.bf16.msra.mxu0 0
        %3346 = vmatpush.bf16.msra.mxu0 0
        %3347 = vmatpush.bf16.msra.mxu0 0
        %3348 = vmatpush.bf16.msra.mxu0 0
        %3349 = vmatpush.bf16.msra.mxu0 0
        %3350 = vmatpush.bf16.msra.mxu0 %v3341
        %3351 = vmatmul.bf16.gmra.mxu0 %v3338
        %v3352 = vpop.f32.mrf.mxu0
        %v3353 = vadd.f32 0.0, %v3352
        %v3354 = vpop.f32.mrf.mxu0
        %3355 = vdwg.mxu0
        %3356 = vrot.lane.b32.xlu0 %v3299, 120
        %v3357 = vpop.permute.xlu0 %3356
        %3358 = vrot.lane.b32.xlu0 %v3299, 88
        %v3359 = vpop.permute.xlu0 %3358
        %v3361 = vsel %vm2326, %v3357, 0
        %v3364 = vsel %vm2326, %v3359, 0
        %3366 = vmatpush.bf16.xpose.msra.mxu0 0
        %3367 = vmatpush.bf16.xpose.msra.mxu0 0
        %3368 = vmatpush.bf16.xpose.msra.mxu0 0
        %3369 = vmatpush.bf16.xpose.msra.mxu0 0
        %3370 = vmatpush.bf16.xpose.msra.mxu0 0
        %3371 = vmatpush.bf16.xpose.msra.mxu0 0
        %3372 = vmatpush.bf16.xpose.msra.mxu0 0
        %3373 = vmatpush.bf16.xpose.msra.mxu0 %v3364
        %3374 = vmatmul.bf16.gmra.mxu0 %v3361
        %v3375 = vpop.f32.mrf.mxu0
        %v3376 = vadd.f32 0.0, %v3375
        %v3377 = vpop.f32.mrf.mxu0
        %3378 = vdwg.mxu0
        %v3379 = vmul.f32 %v3376, 0.35355338
        %v3380 = vsel %vm2326, %v3379, -inf
        %3381 = vmax.xlane.f32.xlu0 %v3380
        %v3382 = vpop.xlane.xlu0 %3381
        %v3383 = vsub.f32 %v3379, %v3382
        %v3384 = vmul.f32 %v3383, 1.442695
        %v3385 = vpow.pop %v3384
        %v3386 = vsel %vm2326, %v3385, 0.0
        %3387 = vadd.xlane.f32.xlu0 %v3386
        %v3388 = vpop.xlane.xlu0 %3387
        %v3389 = vrcp.pop %v3388
        %v3390 = vmul.f32 %v3385, %v3389
        %v3391 = vpack.c.bf16 %v3390, %v3390
        %3392 = vrot.lane.b32.xlu0 %v3299, 56
        %v3393 = vpop.permute.xlu0 %3392
        %v3395 = vsel %vm2326, %v3391, 0
        %v3398 = vsel %vm2260, %v3393, 0
        %3400 = vmatpush.bf16.msra.mxu0 0
        %3401 = vmatpush.bf16.msra.mxu0 0
        %3402 = vmatpush.bf16.msra.mxu0 0
        %3403 = vmatpush.bf16.msra.mxu0 0
        %3404 = vmatpush.bf16.msra.mxu0 0
        %3405 = vmatpush.bf16.msra.mxu0 0
        %3406 = vmatpush.bf16.msra.mxu0 0
        %3407 = vmatpush.bf16.msra.mxu0 %v3398
        %3408 = vmatmul.bf16.gmra.mxu0 %v3395
        %v3409 = vpop.f32.mrf.mxu0
        %v3410 = vadd.f32 0.0, %v3409
        %v3411 = vpop.f32.mrf.mxu0
        %3412 = vdwg.mxu0
        %3413 = vrot.lane.b32.xlu0 %v3299, 112
        %v3414 = vpop.permute.xlu0 %3413
        %3415 = vrot.lane.b32.xlu0 %v3299, 80
        %v3416 = vpop.permute.xlu0 %3415
        %v3418 = vsel %vm2326, %v3414, 0
        %v3421 = vsel %vm2326, %v3416, 0
        %3423 = vmatpush.bf16.xpose.msra.mxu0 0
        %3424 = vmatpush.bf16.xpose.msra.mxu0 0
        %3425 = vmatpush.bf16.xpose.msra.mxu0 0
        %3426 = vmatpush.bf16.xpose.msra.mxu0 0
        %3427 = vmatpush.bf16.xpose.msra.mxu0 0
        %3428 = vmatpush.bf16.xpose.msra.mxu0 0
        %3429 = vmatpush.bf16.xpose.msra.mxu0 0
        %3430 = vmatpush.bf16.xpose.msra.mxu0 %v3421
        %3431 = vmatmul.bf16.gmra.mxu0 %v3418
        %v3432 = vpop.f32.mrf.mxu0
        %v3433 = vadd.f32 0.0, %v3432
        %v3434 = vpop.f32.mrf.mxu0
        %3435 = vdwg.mxu0
        %v3436 = vmul.f32 %v3433, 0.35355338
        %v3437 = vsel %vm2326, %v3436, -inf
        %3438 = vmax.xlane.f32.xlu0 %v3437
        %v3439 = vpop.xlane.xlu0 %3438
        %v3440 = vsub.f32 %v3436, %v3439
        %v3441 = vmul.f32 %v3440, 1.442695
        %v3442 = vpow.pop %v3441
        %v3443 = vsel %vm2326, %v3442, 0.0
        %3444 = vadd.xlane.f32.xlu0 %v3443
        %v3445 = vpop.xlane.xlu0 %3444
        %v3446 = vrcp.pop %v3445
        %v3447 = vmul.f32 %v3442, %v3446
        %v3448 = vpack.c.bf16 %v3447, %v3447
        %3449 = vrot.lane.b32.xlu0 %v3299, 48
        %v3450 = vpop.permute.xlu0 %3449
        %v3452 = vsel %vm2326, %v3448, 0
        %v3455 = vsel %vm2260, %v3450, 0
        %3457 = vmatpush.bf16.msra.mxu0 0
        %3458 = vmatpush.bf16.msra.mxu0 0
        %3459 = vmatpush.bf16.msra.mxu0 0
        %3460 = vmatpush.bf16.msra.mxu0 0
        %3461 = vmatpush.bf16.msra.mxu0 0
        %3462 = vmatpush.bf16.msra.mxu0 0
        %3463 = vmatpush.bf16.msra.mxu0 0
        %3464 = vmatpush.bf16.msra.mxu0 %v3455
        %3465 = vmatmul.bf16.gmra.mxu0 %v3452
        %v3466 = vpop.f32.mrf.mxu0
        %v3467 = vadd.f32 0.0, %v3466
        %v3468 = vpop.f32.mrf.mxu0
        %3469 = vdwg.mxu0
        %3470 = vrot.lane.b32.xlu0 %v3299, 104
        %v3471 = vpop.permute.xlu0 %3470
        %3472 = vrot.lane.b32.xlu0 %v3299, 72
        %v3473 = vpop.permute.xlu0 %3472
        %v3475 = vsel %vm2326, %v3471, 0
        %v3478 = vsel %vm2326, %v3473, 0
        %3480 = vmatpush.bf16.xpose.msra.mxu0 0
        %3481 = vmatpush.bf16.xpose.msra.mxu0 0
        %3482 = vmatpush.bf16.xpose.msra.mxu0 0
        %3483 = vmatpush.bf16.xpose.msra.mxu0 0
        %3484 = vmatpush.bf16.xpose.msra.mxu0 0
        %3485 = vmatpush.bf16.xpose.msra.mxu0 0
        %3486 = vmatpush.bf16.xpose.msra.mxu0 0
        %3487 = vmatpush.bf16.xpose.msra.mxu0 %v3478
        %3488 = vmatmul.bf16.gmra.mxu0 %v3475
        %v3489 = vpop.f32.mrf.mxu0
        %v3490 = vadd.f32 0.0, %v3489
        %v3491 = vpop.f32.mrf.mxu0
        %3492 = vdwg.mxu0
        %v3493 = vmul.f32 %v3490, 0.35355338
        %v3494 = vsel %vm2326, %v3493, -inf
        %3495 = vmax.xlane.f32.xlu0 %v3494
        %v3496 = vpop.xlane.xlu0 %3495
        %v3497 = vsub.f32 %v3493, %v3496
        %v3498 = vmul.f32 %v3497, 1.442695
        %v3499 = vpow.pop %v3498
        %v3500 = vsel %vm2326, %v3499, 0.0
        %3501 = vadd.xlane.f32.xlu0 %v3500
        %v3502 = vpop.xlane.xlu0 %3501
        %v3503 = vrcp.pop %v3502
        %v3504 = vmul.f32 %v3499, %v3503
        %v3505 = vpack.c.bf16 %v3504, %v3504
        %3506 = vrot.lane.b32.xlu0 %v3299, 40
        %v3507 = vpop.permute.xlu0 %3506
        %v3509 = vsel %vm2326, %v3505, 0
        %v3512 = vsel %vm2260, %v3507, 0
        %3514 = vmatpush.bf16.msra.mxu0 0
        %3515 = vmatpush.bf16.msra.mxu0 0
        %3516 = vmatpush.bf16.msra.mxu0 0
        %3517 = vmatpush.bf16.msra.mxu0 0
        %3518 = vmatpush.bf16.msra.mxu0 0
        %3519 = vmatpush.bf16.msra.mxu0 0
        %3520 = vmatpush.bf16.msra.mxu0 0
        %3521 = vmatpush.bf16.msra.mxu0 %v3512
        %3522 = vmatmul.bf16.gmra.mxu0 %v3509
        %v3523 = vpop.f32.mrf.mxu0
        %v3524 = vadd.f32 0.0, %v3523
        %v3525 = vpop.f32.mrf.mxu0
        %3526 = vdwg.mxu0
        %3528 = vrot.lane.b32.xlu0 %v3410, 8
        %v3529 = vpop.permute.xlu0 %3528
        %3532 = vrot.lane.b32.xlu0 %v3467, 16
        %v3533 = vpop.permute.xlu0 %3532
        %3536 = vrot.lane.b32.xlu0 %v3524, 24
        %v3537 = vpop.permute.xlu0 %3536
        %v3539 = vsel %vm2326, %v3353, %v3529
        %v3540 = vsel %vm2564, %v3539, %v3533
        %v3541 = vsel %vm2566, %v3540, %v3537
        %v3542 = vpack.c.bf16 %v3541, %v3541
        %v3544 = vperm.slane %v3257, 0
        %v3550 = vunpack.c.l.b16 %v3259
        %v3551 = vunpack.c.l.b16 %v3260
        %v3552 = vunpack.c.l.b16 %v3261
        %v3553 = vunpack.c.l.b16 %v3262
        %v3554 = vpack.c.b16 %v3551, %v3550
        %v3555 = vpack.c.b16 %v3553, %v3552
        %v3559 = vsel %vm2189, %v3542, 0
        %3561 = vmatpush.bf16.msra.mxu0 0
        %3562 = vmatpush.bf16.msra.mxu0 0
        %3563 = vmatpush.bf16.msra.mxu0 0
        %3564 = vmatpush.bf16.msra.mxu0 0
        %3565 = vmatpush.bf16.msra.mxu0 0
        %3566 = vmatpush.bf16.msra.mxu0 0
        %3567 = vmatpush.bf16.msra.mxu0 %v3555
        %3568 = vmatpush.bf16.msra.mxu0 %v3554
        %3569 = vmatmul.bf16.gmra.mxu0 %v3559
        %v3570 = vpop.f32.mrf.mxu0
        %v3571 = vadd.f32 %v3544, %v3570
        %v3572 = vpop.f32.mrf.mxu0
        %3573 = vdwg.mxu0
        %v3574 = vadd.f32 %v2184, %v3571
        %v3575 = vsel %vm2189, %v3574, 0.0
        %3576 = vadd.xlane.f32.xlu0 %v3575
        %v3577 = vpop.xlane.xlu0 %3576
        %v3578 = vmul.f32 %v3577, %v2610
        %v3579 = vsub.f32 %v3574, %v3578
        %v3580 = vmul.f32 %v3579, %v3579
        %v3581 = vsel %vm2189, %v3580, 0.0
        %3582 = vadd.xlane.f32.xlu0 %v3581
        %v3583 = vpop.xlane.xlu0 %3582
        %v3584 = vmul.f32 %v3583, %v2610
        %v3585 = vadd.f32 %v3584, 1e-05
        %v3586 = vrsqrt.pop %v3585
        %v3587 = vmul.f32 %v3586, %v3585
        %v3588 = vmul.f32 %v3587, %v3586
        %v3589 = vmul.f32 0.5, %v3588
        %v3590 = vsub.f32 1.5, %v3589
        %v3591 = vmul.f32 %v3586, %v3590
        %vm3592 = vweird.f32 %v3585
        %vm3593 = vweird.f32 %v3586
        %vm3594 = vmor %vm3592, %vm3593
        %v3595 = vsel %vm3594, %v3586, %v3591
        %v3596 = vmul.f32 %v3579, %v3595
        %v3598 = vperm.slane %v3252, 0
        %v3600 = vmul.f32 %v3596, %v3598
        %v3602 = vperm.slane %v3251, 0
        %v3604 = vadd.f32 %v3600, %v3602
        %v3605 = vpack.c.bf16 %v3604, %v3604
        %v3607 = vperm.slane %v3224, 0
        %v3613 = vunpack.c.l.b16 %v3233
        %v3614 = vunpack.c.l.b16 %v3234
        %v3615 = vunpack.c.l.b16 %v3235
        %v3616 = vunpack.c.l.b16 %v3236
        %v3617 = vpack.c.b16 %v3614, %v3613
        %v3618 = vpack.c.b16 %v3616, %v3615
        %v3622 = vsel %vm2189, %v3605, 0
        %3624 = vmatpush.bf16.msra.mxu0 0
        %3625 = vmatpush.bf16.msra.mxu0 0
        %3626 = vmatpush.bf16.msra.mxu0 0
        %3627 = vmatpush.bf16.msra.mxu0 0
        %3628 = vmatpush.bf16.msra.mxu0 0
        %3629 = vmatpush.bf16.msra.mxu0 0
        %3630 = vmatpush.bf16.msra.mxu0 %v3618
        %3631 = vmatpush.bf16.msra.mxu0 %v3617
        %3632 = vmatmul.bf16.gmra.mxu0 %v3622
        %v3633 = vpop.f32.mrf.mxu0
        %v3634 = vadd.f32 %v3607, %v3633
        %v3635 = vpop.f32.mrf.mxu0
        %3636 = vdwg.mxu0
        %v3637 = vpack.c.bf16 %v3221, %v3221
        %v3639 = vperm.slane %v3222, 0
        %v3645 = vunpack.c.l.b16 %v3225
        %v3646 = vunpack.c.l.b16 %v3226
        %v3647 = vunpack.c.l.b16 %v3227
        %v3648 = vunpack.c.l.b16 %v3228
        %v3649 = vpack.c.b16 %v3646, %v3645
        %v3650 = vpack.c.b16 %v3648, %v3647
        %v3654 = vsel %vm2189, %v3637, 0
        %3656 = vmatpush.bf16.msra.mxu0 0
        %3657 = vmatpush.bf16.msra.mxu0 0
        %3658 = vmatpush.bf16.msra.mxu0 0
        %3659 = vmatpush.bf16.msra.mxu0 0
        %3660 = vmatpush.bf16.msra.mxu0 0
        %3661 = vmatpush.bf16.msra.mxu0 0
        %3662 = vmatpush.bf16.msra.mxu0 %v3650
        %3663 = vmatpush.bf16.msra.mxu0 %v3649
        %3664 = vmatmul.bf16.gmra.mxu0 %v3654
        %v3665 = vpop.f32.mrf.mxu0
        %v3666 = vadd.f32 %v3639, %v3665
        %v3667 = vpop.f32.mrf.mxu0
        %3668 = vdwg.mxu0
        %v3669 = vpack.c.bf16 %v3634, %v3634
        %v3670 = vpack.c.bf16 %v3666, %v3666
        %v3672 = vsel %vm2326, %v3669, 0
        %v3675 = vsel %vm2326, %v3670, 0
        %3677 = vmatpush.bf16.xpose.msra.mxu0 0
        %3678 = vmatpush.bf16.xpose.msra.mxu0 0
        %3679 = vmatpush.bf16.xpose.msra.mxu0 0
        %3680 = vmatpush.bf16.xpose.msra.mxu0 0
        %3681 = vmatpush.bf16.xpose.msra.mxu0 0
        %3682 = vmatpush.bf16.xpose.msra.mxu0 0
        %3683 = vmatpush.bf16.xpose.msra.mxu0 0
        %3684 = vmatpush.bf16.xpose.msra.mxu0 %v3675
        %3685 = vmatmul.bf16.gmra.mxu0 %v3672
        %v3686 = vpop.f32.mrf.mxu0
        %v3687 = vadd.f32 0.0, %v3686
        %v3688 = vpop.f32.mrf.mxu0
        %3689 = vdwg.mxu0
        %v3690 = vmul.f32 %v3687, 0.35355338
        %v3691 = vsel %vm2326, %v3690, -inf
        %3692 = vmax.xlane.f32.xlu0 %v3691
        %v3693 = vpop.xlane.xlu0 %3692
        %v3694 = vsub.f32 %v3690, %v3693
        %v3695 = vmul.f32 %v3694, 1.442695
        %v3696 = vpow.pop %v3695
        %v3697 = vsel %vm2326, %v3696, 0.0
        %3698 = vadd.xlane.f32.xlu0 %v3697
        %v3699 = vpop.xlane.xlu0 %3698
        %v3700 = vrcp.pop %v3699
        %v3701 = vmul.f32 %v3696, %v3700
        %v3702 = vpack.c.bf16 %v3701, %v3701
        %3704 = vrot.lane.b32.xlu0 %v3670, 96
        %v3705 = vpop.permute.xlu0 %3704
        %v3707 = vsel %vm2326, %v3702, 0
        %v3710 = vsel %vm2260, %v3705, 0
        %3712 = vmatpush.bf16.msra.mxu0 0
        %3713 = vmatpush.bf16.msra.mxu0 0
        %3714 = vmatpush.bf16.msra.mxu0 0
        %3715 = vmatpush.bf16.msra.mxu0 0
        %3716 = vmatpush.bf16.msra.mxu0 0
        %3717 = vmatpush.bf16.msra.mxu0 0
        %3718 = vmatpush.bf16.msra.mxu0 0
        %3719 = vmatpush.bf16.msra.mxu0 %v3710
        %3720 = vmatmul.bf16.gmra.mxu0 %v3707
        %v3721 = vpop.f32.mrf.mxu0
        %v3722 = vadd.f32 0.0, %v3721
        %v3723 = vpop.f32.mrf.mxu0
        %3724 = vdwg.mxu0
        %3726 = vrot.lane.b32.xlu0 %v3669, 120
        %v3727 = vpop.permute.xlu0 %3726
        %3728 = vrot.lane.b32.xlu0 %v3670, 120
        %v3729 = vpop.permute.xlu0 %3728
        %v3731 = vsel %vm2326, %v3727, 0
        %v3734 = vsel %vm2326, %v3729, 0
        %3736 = vmatpush.bf16.xpose.msra.mxu0 0
        %3737 = vmatpush.bf16.xpose.msra.mxu0 0
        %3738 = vmatpush.bf16.xpose.msra.mxu0 0
        %3739 = vmatpush.bf16.xpose.msra.mxu0 0
        %3740 = vmatpush.bf16.xpose.msra.mxu0 0
        %3741 = vmatpush.bf16.xpose.msra.mxu0 0
        %3742 = vmatpush.bf16.xpose.msra.mxu0 0
        %3743 = vmatpush.bf16.xpose.msra.mxu0 %v3734
        %3744 = vmatmul.bf16.gmra.mxu0 %v3731
        %v3745 = vpop.f32.mrf.mxu0
        %v3746 = vadd.f32 0.0, %v3745
        %v3747 = vpop.f32.mrf.mxu0
        %3748 = vdwg.mxu0
        %v3749 = vmul.f32 %v3746, 0.35355338
        %v3750 = vsel %vm2326, %v3749, -inf
        %3751 = vmax.xlane.f32.xlu0 %v3750
        %v3752 = vpop.xlane.xlu0 %3751
        %v3753 = vsub.f32 %v3749, %v3752
        %v3754 = vmul.f32 %v3753, 1.442695
        %v3755 = vpow.pop %v3754
        %v3756 = vsel %vm2326, %v3755, 0.0
        %3757 = vadd.xlane.f32.xlu0 %v3756
        %v3758 = vpop.xlane.xlu0 %3757
        %v3759 = vrcp.pop %v3758
        %v3760 = vmul.f32 %v3755, %v3759
        %v3761 = vpack.c.bf16 %v3760, %v3760
        %3762 = vrot.lane.b32.xlu0 %v3670, 88
        %v3763 = vpop.permute.xlu0 %3762
        %v3765 = vsel %vm2326, %v3761, 0
        %v3768 = vsel %vm2260, %v3763, 0
        %3770 = vmatpush.bf16.msra.mxu0 0
        %3771 = vmatpush.bf16.msra.mxu0 0
        %3772 = vmatpush.bf16.msra.mxu0 0
        %3773 = vmatpush.bf16.msra.mxu0 0
        %3774 = vmatpush.bf16.msra.mxu0 0
        %3775 = vmatpush.bf16.msra.mxu0 0
        %3776 = vmatpush.bf16.msra.mxu0 0
        %3777 = vmatpush.bf16.msra.mxu0 %v3768
        %3778 = vmatmul.bf16.gmra.mxu0 %v3765
        %v3779 = vpop.f32.mrf.mxu0
        %v3780 = vadd.f32 0.0, %v3779
        %v3781 = vpop.f32.mrf.mxu0
        %3782 = vdwg.mxu0
        %3783 = vrot.lane.b32.xlu0 %v3669, 112
        %v3784 = vpop.permute.xlu0 %3783
        %3785 = vrot.lane.b32.xlu0 %v3670, 112
        %v3786 = vpop.permute.xlu0 %3785
        %v3788 = vsel %vm2326, %v3784, 0
        %v3791 = vsel %vm2326, %v3786, 0
        %3793 = vmatpush.bf16.xpose.msra.mxu0 0
        %3794 = vmatpush.bf16.xpose.msra.mxu0 0
        %3795 = vmatpush.bf16.xpose.msra.mxu0 0
        %3796 = vmatpush.bf16.xpose.msra.mxu0 0
        %3797 = vmatpush.bf16.xpose.msra.mxu0 0
        %3798 = vmatpush.bf16.xpose.msra.mxu0 0
        %3799 = vmatpush.bf16.xpose.msra.mxu0 0
        %3800 = vmatpush.bf16.xpose.msra.mxu0 %v3791
        %3801 = vmatmul.bf16.gmra.mxu0 %v3788
        %v3802 = vpop.f32.mrf.mxu0
        %v3803 = vadd.f32 0.0, %v3802
        %v3804 = vpop.f32.mrf.mxu0
        %3805 = vdwg.mxu0
        %v3806 = vmul.f32 %v3803, 0.35355338
        %v3807 = vsel %vm2326, %v3806, -inf
        %3808 = vmax.xlane.f32.xlu0 %v3807
        %v3809 = vpop.xlane.xlu0 %3808
        %v3810 = vsub.f32 %v3806, %v3809
        %v3811 = vmul.f32 %v3810, 1.442695
        %v3812 = vpow.pop %v3811
        %v3813 = vsel %vm2326, %v3812, 0.0
        %3814 = vadd.xlane.f32.xlu0 %v3813
        %v3815 = vpop.xlane.xlu0 %3814
        %v3816 = vrcp.pop %v3815
        %v3817 = vmul.f32 %v3812, %v3816
        %v3818 = vpack.c.bf16 %v3817, %v3817
        %3819 = vrot.lane.b32.xlu0 %v3670, 80
        %v3820 = vpop.permute.xlu0 %3819
        %v3822 = vsel %vm2326, %v3818, 0
        %v3825 = vsel %vm2260, %v3820, 0
        %3827 = vmatpush.bf16.msra.mxu0 0
        %3828 = vmatpush.bf16.msra.mxu0 0
        %3829 = vmatpush.bf16.msra.mxu0 0
        %3830 = vmatpush.bf16.msra.mxu0 0
        %3831 = vmatpush.bf16.msra.mxu0 0
        %3832 = vmatpush.bf16.msra.mxu0 0
        %3833 = vmatpush.bf16.msra.mxu0 0
        %3834 = vmatpush.bf16.msra.mxu0 %v3825
        %3835 = vmatmul.bf16.gmra.mxu0 %v3822
        %v3836 = vpop.f32.mrf.mxu0
        %v3837 = vadd.f32 0.0, %v3836
        %v3838 = vpop.f32.mrf.mxu0
        %3839 = vdwg.mxu0
        %3840 = vrot.lane.b32.xlu0 %v3669, 104
        %v3841 = vpop.permute.xlu0 %3840
        %3842 = vrot.lane.b32.xlu0 %v3670, 104
        %v3843 = vpop.permute.xlu0 %3842
        %v3845 = vsel %vm2326, %v3841, 0
        %v3848 = vsel %vm2326, %v3843, 0
        %3850 = vmatpush.bf16.xpose.msra.mxu0 0
        %3851 = vmatpush.bf16.xpose.msra.mxu0 0
        %3852 = vmatpush.bf16.xpose.msra.mxu0 0
        %3853 = vmatpush.bf16.xpose.msra.mxu0 0
        %3854 = vmatpush.bf16.xpose.msra.mxu0 0
        %3855 = vmatpush.bf16.xpose.msra.mxu0 0
        %3856 = vmatpush.bf16.xpose.msra.mxu0 0
        %3857 = vmatpush.bf16.xpose.msra.mxu0 %v3848
        %3858 = vmatmul.bf16.gmra.mxu0 %v3845
        %v3859 = vpop.f32.mrf.mxu0
        %v3860 = vadd.f32 0.0, %v3859
        %v3861 = vpop.f32.mrf.mxu0
        %3862 = vdwg.mxu0
        %v3863 = vmul.f32 %v3860, 0.35355338
        %v3864 = vsel %vm2326, %v3863, -inf
        %3865 = vmax.xlane.f32.xlu0 %v3864
        %v3866 = vpop.xlane.xlu0 %3865
        %v3867 = vsub.f32 %v3863, %v3866
        %v3868 = vmul.f32 %v3867, 1.442695
        %v3869 = vpow.pop %v3868
        %v3870 = vsel %vm2326, %v3869, 0.0
        %3871 = vadd.xlane.f32.xlu0 %v3870
        %v3872 = vpop.xlane.xlu0 %3871
        %v3873 = vrcp.pop %v3872
        %v3874 = vmul.f32 %v3869, %v3873
        %v3875 = vpack.c.bf16 %v3874, %v3874
        %3876 = vrot.lane.b32.xlu0 %v3670, 72
        %v3877 = vpop.permute.xlu0 %3876
        %v3879 = vsel %vm2326, %v3875, 0
        %v3882 = vsel %vm2260, %v3877, 0
        %3884 = vmatpush.bf16.msra.mxu0 0
        %3885 = vmatpush.bf16.msra.mxu0 0
        %3886 = vmatpush.bf16.msra.mxu0 0
        %3887 = vmatpush.bf16.msra.mxu0 0
        %3888 = vmatpush.bf16.msra.mxu0 0
        %3889 = vmatpush.bf16.msra.mxu0 0
        %3890 = vmatpush.bf16.msra.mxu0 0
        %3891 = vmatpush.bf16.msra.mxu0 %v3882
        %3892 = vmatmul.bf16.gmra.mxu0 %v3879
        %v3893 = vpop.f32.mrf.mxu0
        %v3894 = vadd.f32 0.0, %v3893
        %v3895 = vpop.f32.mrf.mxu0
        %3896 = vdwg.mxu0
        %3898 = vrot.lane.b32.xlu0 %v3780, 8
        %v3899 = vpop.permute.xlu0 %3898
        %3902 = vrot.lane.b32.xlu0 %v3837, 16
        %v3903 = vpop.permute.xlu0 %3902
        %3906 = vrot.lane.b32.xlu0 %v3894, 24
        %v3907 = vpop.permute.xlu0 %3906
        %v3909 = vsel %vm2326, %v3722, %v3899
        %v3910 = vsel %vm2564, %v3909, %v3903
        %v3911 = vsel %vm2566, %v3910, %v3907
        %v3912 = vpack.c.bf16 %v3911, %v3911
        %v3914 = vperm.slane %v3223, 0
        %v3920 = vunpack.c.l.b16 %v3229
        %v3921 = vunpack.c.l.b16 %v3230
        %v3922 = vunpack.c.l.b16 %v3231
        %v3923 = vunpack.c.l.b16 %v3232
        %v3924 = vpack.c.b16 %v3921, %v3920
        %v3925 = vpack.c.b16 %v3923, %v3922
        %v3929 = vsel %vm2189, %v3912, 0
        %3931 = vmatpush.bf16.msra.mxu0 0
        %3932 = vmatpush.bf16.msra.mxu0 0
        %3933 = vmatpush.bf16.msra.mxu0 0
        %3934 = vmatpush.bf16.msra.mxu0 0
        %3935 = vmatpush.bf16.msra.mxu0 0
        %3936 = vmatpush.bf16.msra.mxu0 0
        %3937 = vmatpush.bf16.msra.mxu0 %v3925
        %3938 = vmatpush.bf16.msra.mxu0 %v3924
        %3939 = vmatmul.bf16.gmra.mxu0 %v3929
        %v3940 = vpop.f32.mrf.mxu0
        %v3941 = vadd.f32 %v3914, %v3940
        %v3942 = vpop.f32.mrf.mxu0
        %3943 = vdwg.mxu0
        %v3944 = vadd.f32 %v3604, %v3941
        %v3945 = vsel %vm2189, %v3944, 0.0
        %3946 = vadd.xlane.f32.xlu0 %v3945
        %v3947 = vpop.xlane.xlu0 %3946
        %v3948 = vmul.f32 %v3947, %v2610
        %v3949 = vsub.f32 %v3944, %v3948
        %v3950 = vmul.f32 %v3949, %v3949
        %v3951 = vsel %vm2189, %v3950, 0.0
        %3952 = vadd.xlane.f32.xlu0 %v3951
        %v3953 = vpop.xlane.xlu0 %3952
        %v3954 = vmul.f32 %v3953, %v2610
        %v3955 = vadd.f32 %v3954, 1e-05
        %v3956 = vrsqrt.pop %v3955
        %v3957 = vmul.f32 %v3956, %v3955
        %v3958 = vmul.f32 %v3957, %v3956
        %v3959 = vmul.f32 0.5, %v3958
        %v3960 = vsub.f32 1.5, %v3959
        %v3961 = vmul.f32 %v3956, %v3960
        %vm3962 = vweird.f32 %v3955
        %vm3963 = vweird.f32 %v3956
        %vm3964 = vmor %vm3962, %vm3963
        %v3965 = vsel %vm3964, %v3956, %v3961
        %v3966 = vmul.f32 %v3949, %v3965
        %v3968 = vperm.slane %v3254, 0
        %v3970 = vmul.f32 %v3966, %v3968
        %v3972 = vperm.slane %v3253, 0
        %v3974 = vadd.f32 %v3970, %v3972
        %v3975 = vpack.c.bf16 %v3974, %v3974
        %v3977 = vperm.slane %v3237, 0
        %v3983 = vunpack.c.l.b16 %v3238
        %v3984 = vunpack.c.l.b16 %v3239
        %v3985 = vunpack.c.l.b16 %v3240
        %v3986 = vunpack.c.l.b16 %v3241
        %v3987 = vpack.c.b16 %v3984, %v3983
        %v3988 = vpack.c.b16 %v3986, %v3985
        %v3992 = vsel %vm2189, %v3975, 0
        %3994 = vmatpush.bf16.msra.mxu0 0
        %3995 = vmatpush.bf16.msra.mxu0 0
        %3996 = vmatpush.bf16.msra.mxu0 0
        %3997 = vmatpush.bf16.msra.mxu0 0
        %3998 = vmatpush.bf16.msra.mxu0 0
        %3999 = vmatpush.bf16.msra.mxu0 0
        %4000 = vmatpush.bf16.msra.mxu0 %v3988
        %4001 = vmatpush.bf16.msra.mxu0 %v3987
        %4002 = vmatmul.bf16.gmra.mxu0 %v3992
        %v4003 = vpop.f32.mrf.mxu0
        %v4004 = vadd.f32 %v3977, %v4003
        %v4005 = vpop.f32.mrf.mxu0
        %4006 = vdwg.mxu0
        %v4007 = vmax.f32 %v4004, 0.0
        %v4008 = vpack.c.bf16 %v4007, %v4007
        %v4010 = vperm.slane %v3242, 0
        %v4020 = vunpack.c.l.b16 %v3243
        %v4021 = vunpack.c.l.b16 %v3244
        %v4022 = vunpack.c.l.b16 %v3245
        %v4023 = vunpack.c.l.b16 %v3246
        %v4024 = vunpack.c.l.b16 %v3247
        %v4025 = vunpack.c.l.b16 %v3248
        %v4026 = vunpack.c.l.b16 %v3249
        %v4027 = vunpack.c.l.b16 %v3250
        %v4028 = vpack.c.b16 %v4021, %v4020
        %v4029 = vpack.c.b16 %v4023, %v4022
        %v4030 = vpack.c.b16 %v4025, %v4024
        %v4031 = vpack.c.b16 %v4027, %v4026
        %v4037 = vsel %vm2241, %v4008, 0
        %4039 = vmatpush.bf16.msra.mxu0 0
        %4040 = vmatpush.bf16.msra.mxu0 0
        %4041 = vmatpush.bf16.msra.mxu0 0
        %4042 = vmatpush.bf16.msra.mxu0 0
        %4043 = vmatpush.bf16.msra.mxu0 %v4031
        %4044 = vmatpush.bf16.msra.mxu0 %v4030
        %4045 = vmatpush.bf16.msra.mxu0 %v4029
        %4046 = vmatpush.bf16.msra.mxu0 %v4028
        %4047 = vmatmul.bf16.gmra.mxu0 %v4037
        %v4048 = vpop.f32.mrf.mxu0
        %v4049 = vadd.f32 %v4010, %v4048
        %v4050 = vpop.f32.mrf.mxu0
        %4051 = vdwg.mxu0
        %v4052 = vadd.f32 %v3974, %v4049
        %v4053 = vsel %vm2189, %v4052, 0.0
        %4054 = vadd.xlane.f32.xlu0 %v4053
        %v4055 = vpop.xlane.xlu0 %4054
        %v4056 = vmul.f32 %v4055, %v2610
        %v4057 = vsub.f32 %v4052, %v4056
        %v4058 = vmul.f32 %v4057, %v4057
        %v4059 = vsel %vm2189, %v4058, 0.0
        %4060 = vadd.xlane.f32.xlu0 %v4059
        %v4061 = vpop.xlane.xlu0 %4060
        %v4062 = vmul.f32 %v4061, %v2610
        %v4063 = vadd.f32 %v4062, 1e-05
        %v4064 = vrsqrt.pop %v4063
        %v4065 = vmul.f32 %v4064, %v4063
        %v4066 = vmul.f32 %v4065, %v4064
        %v4067 = vmul.f32 0.5, %v4066
        %v4068 = vsub.f32 1.5, %v4067
        %v4069 = vmul.f32 %v4064, %v4068
        %vm4070 = vweird.f32 %v4063
        %vm4071 = vweird.f32 %v4064
        %vm4072 = vmor %vm4070, %vm4071
        %v4073 = vsel %vm4072, %v4064, %v4069
        %v4074 = vmul.f32 %v4057, %v4073
        %v4076 = vperm.slane %v3256, 0
        %v4078 = vmul.f32 %v4074, %v4076
        %v4080 = vperm.slane %v3255, 0
        %v4082 = vadd.f32 %v4078, %v4080
        %v4083 = vld [vmem:[%s47] sm:$0x1]
        %v4084 = vld [vmem:[%s49] sm:$0x1]
        %v4085 = vld [vmem:[%s51] sm:$0x1]
        %v4086 = vld [vmem:[%s53] sm:$0xf]
        %v4087 = vld [vmem:[%s53 + $0x4] sm:$0xf]
        %v4088 = vld [vmem:[%s53 + $0x8] sm:$0xf]
        %v4089 = vld [vmem:[%s53 + $0xc] sm:$0xf]
        %v4090 = vld [vmem:[%s55] sm:$0xf]
        %v4091 = vld [vmem:[%s55 + $0x4] sm:$0xf]
        %v4092 = vld [vmem:[%s55 + $0x8] sm:$0xf]
        %v4093 = vld [vmem:[%s55 + $0xc] sm:$0xf]
        %v4094 = vld [vmem:[%s57] sm:$0xf]
        %v4095 = vld [vmem:[%s57 + $0x4] sm:$0xf]
        %v4096 = vld [vmem:[%s57 + $0x8] sm:$0xf]
        %v4097 = vld [vmem:[%s57 + $0xc] sm:$0xf]
        %v4098 = vld [vmem:[%s59] sm:$0x1]
        %v4099 = vld [vmem:[%s61] sm:$0xf]
        %v4100 = vld [vmem:[%s61 + $0x4] sm:$0xf]
        %v4101 = vld [vmem:[%s61 + $0x8] sm:$0xf]
        %v4102 = vld [vmem:[%s61 + $0xc] sm:$0xf]
        %v4103 = vld [vmem:[%s63] sm:$0x1]
        %v4104 = vld [vmem:[%s65] sm:$0xf]
        %v4105 = vld [vmem:[%s65 + $0x4] sm:$0xf]
        %v4106 = vld [vmem:[%s65 + $0x8] sm:$0xf]
        %v4107 = vld [vmem:[%s65 + $0xc] sm:$0xf]
        %v4108 = vld [vmem:[%s65 + $0x10] sm:$0xf]
        %v4109 = vld [vmem:[%s65 + $0x14] sm:$0xf]
        %v4110 = vld [vmem:[%s65 + $0x18] sm:$0xf]
        %v4111 = vld [vmem:[%s65 + $0x1c] sm:$0xf]
        %v4112 = vld [vmem:[%s67] sm:$0x1]
        %v4113 = vld [vmem:[%s69] sm:$0x1]
        %v4114 = vld [vmem:[%s71] sm:$0x1]
        %v4115 = vld [vmem:[%s73] sm:$0x1]
        %v4116 = vld [vmem:[%s75] sm:$0x1]
        %v4117 = vld [vmem:[%s77] sm:$0x1]
        %v4118 = vld [vmem:[%s79] sm:$0x1]
        %v4119 = vld [vmem:[%s81] sm:$0x1]
        %v4120 = vld [vmem:[%s83] sm:$0xf]
        %v4121 = vld [vmem:[%s83 + $0x4] sm:$0xf]
        %v4122 = vld [vmem:[%s83 + $0x8] sm:$0xf]
        %v4123 = vld [vmem:[%s83 + $0xc] sm:$0xf]
        %v4124 = vld [vmem:[%s85] sm:$0xf]
        %v4125 = vld [vmem:[%s85 + $0x4] sm:$0xf]
        %v4126 = vld [vmem:[%s85 + $0x8] sm:$0xf]
        %v4127 = vld [vmem:[%s85 + $0xc] sm:$0xf]
        %v4128 = vpack.c.bf16 %v4082, %v4082
        %v4130 = vperm.slane %v4119, 0
        %v4136 = vunpack.c.l.b16 %v4124
        %v4137 = vunpack.c.l.b16 %v4125
        %v4138 = vunpack.c.l.b16 %v4126
        %v4139 = vunpack.c.l.b16 %v4127
        %v4140 = vpack.c.b16 %v4137, %v4136
        %v4141 = vpack.c.b16 %v4139, %v4138
        %v4145 = vsel %vm2189, %v4128, 0
        %4147 = vmatpush.bf16.msra.mxu0 0
        %4148 = vmatpush.bf16.msra.mxu0 0
        %4149 = vmatpush.bf16.msra.mxu0 0
        %4150 = vmatpush.bf16.msra.mxu0 0
        %4151 = vmatpush.bf16.msra.mxu0 0
        %4152 = vmatpush.bf16.msra.mxu0 0
        %4153 = vmatpush.bf16.msra.mxu0 %v4141
        %4154 = vmatpush.bf16.msra.mxu0 %v4140
        %4155 = vmatmul.bf16.gmra.mxu0 %v4145
        %v4156 = vpop.f32.mrf.mxu0
        %v4157 = vadd.f32 %v4130, %v4156
        %v4158 = vpop.f32.mrf.mxu0
        %4159 = vdwg.mxu0
        %v4160 = vpack.c.bf16 %v4157, %v4157
        %4162 = vrot.lane.b32.xlu0 %v4160, 96
        %v4163 = vpop.permute.xlu0 %4162
        %v4165 = vsel %vm2326, %v4160, 0
        %v4168 = vsel %vm2326, %v4163, 0
        %4170 = vmatpush.bf16.xpose.msra.mxu0 0
        %4171 = vmatpush.bf16.xpose.msra.mxu0 0
        %4172 = vmatpush.bf16.xpose.msra.mxu0 0
        %4173 = vmatpush.bf16.xpose.msra.mxu0 0
        %4174 = vmatpush.bf16.xpose.msra.mxu0 0
        %4175 = vmatpush.bf16.xpose.msra.mxu0 0
        %4176 = vmatpush.bf16.xpose.msra.mxu0 0
        %4177 = vmatpush.bf16.xpose.msra.mxu0 %v4168
        %4178 = vmatmul.bf16.gmra.mxu0 %v4165
        %v4179 = vpop.f32.mrf.mxu0
        %v4180 = vadd.f32 0.0, %v4179
        %v4181 = vpop.f32.mrf.mxu0
        %4182 = vdwg.mxu0
        %v4183 = vmul.f32 %v4180, 0.35355338
        %v4184 = vsel %vm2326, %v4183, -inf
        %4185 = vmax.xlane.f32.xlu0 %v4184
        %v4186 = vpop.xlane.xlu0 %4185
        %v4187 = vsub.f32 %v4183, %v4186
        %v4188 = vmul.f32 %v4187, 1.442695
        %v4189 = vpow.pop %v4188
        %v4190 = vsel %vm2326, %v4189, 0.0
        %4191 = vadd.xlane.f32.xlu0 %v4190
        %v4192 = vpop.xlane.xlu0 %4191
        %v4193 = vrcp.pop %v4192
        %v4194 = vmul.f32 %v4189, %v4193
        %v4195 = vpack.c.bf16 %v4194, %v4194
        %4196 = vrot.lane.b32.xlu0 %v4160, 64
        %v4197 = vpop.permute.xlu0 %4196
        %v4199 = vsel %vm2326, %v4195, 0
        %v4202 = vsel %vm2260, %v4197, 0
        %4204 = vmatpush.bf16.msra.mxu0 0
        %4205 = vmatpush.bf16.msra.mxu0 0
        %4206 = vmatpush.bf16.msra.mxu0 0
        %4207 = vmatpush.bf16.msra.mxu0 0
        %4208 = vmatpush.bf16.msra.mxu0 0
        %4209 = vmatpush.bf16.msra.mxu0 0
        %4210 = vmatpush.bf16.msra.mxu0 0
        %4211 = vmatpush.bf16.msra.mxu0 %v4202
        %4212 = vmatmul.bf16.gmra.mxu0 %v4199
        %v4213 = vpop.f32.mrf.mxu0
        %v4214 = vadd.f32 0.0, %v4213
        %v4215 = vpop.f32.mrf.mxu0
        %4216 = vdwg.mxu0
        %4217 = vrot.lane.b32.xlu0 %v4160, 120
        %v4218 = vpop.permute.xlu0 %4217
        %4219 = vrot.lane.b32.xlu0 %v4160, 88
        %v4220 = vpop.permute.xlu0 %4219
        %v4222 = vsel %vm2326, %v4218, 0
        %v4225 = vsel %vm2326, %v4220, 0
        %4227 = vmatpush.bf16.xpose.msra.mxu0 0
        %4228 = vmatpush.bf16.xpose.msra.mxu0 0
        %4229 = vmatpush.bf16.xpose.msra.mxu0 0
        %4230 = vmatpush.bf16.xpose.msra.mxu0 0
        %4231 = vmatpush.bf16.xpose.msra.mxu0 0
        %4232 = vmatpush.bf16.xpose.msra.mxu0 0
        %4233 = vmatpush.bf16.xpose.msra.mxu0 0
        %4234 = vmatpush.bf16.xpose.msra.mxu0 %v4225
        %4235 = vmatmul.bf16.gmra.mxu0 %v4222
        %v4236 = vpop.f32.mrf.mxu0
        %v4237 = vadd.f32 0.0, %v4236
        %v4238 = vpop.f32.mrf.mxu0
        %4239 = vdwg.mxu0
        %v4240 = vmul.f32 %v4237, 0.35355338
        %v4241 = vsel %vm2326, %v4240, -inf
        %4242 = vmax.xlane.f32.xlu0 %v4241
        %v4243 = vpop.xlane.xlu0 %4242
        %v4244 = vsub.f32 %v4240, %v4243
        %v4245 = vmul.f32 %v4244, 1.442695
        %v4246 = vpow.pop %v4245
        %v4247 = vsel %vm2326, %v4246, 0.0
        %4248 = vadd.xlane.f32.xlu0 %v4247
        %v4249 = vpop.xlane.xlu0 %4248
        %v4250 = vrcp.pop %v4249
        %v4251 = vmul.f32 %v4246, %v4250
        %v4252 = vpack.c.bf16 %v4251, %v4251
        %4253 = vrot.lane.b32.xlu0 %v4160, 56
        %v4254 = vpop.permute.xlu0 %4253
        %v4256 = vsel %vm2326, %v4252, 0
        %v4259 = vsel %vm2260, %v4254, 0
        %4261 = vmatpush.bf16.msra.mxu0 0
        %4262 = vmatpush.bf16.msra.mxu0 0
        %4263 = vmatpush.bf16.msra.mxu0 0
        %4264 = vmatpush.bf16.msra.mxu0 0
        %4265 = vmatpush.bf16.msra.mxu0 0
        %4266 = vmatpush.bf16.msra.mxu0 0
        %4267 = vmatpush.bf16.msra.mxu0 0
        %4268 = vmatpush.bf16.msra.mxu0 %v4259
        %4269 = vmatmul.bf16.gmra.mxu0 %v4256
        %v4270 = vpop.f32.mrf.mxu0
        %v4271 = vadd.f32 0.0, %v4270
        %v4272 = vpop.f32.mrf.mxu0
        %4273 = vdwg.mxu0
        %4274 = vrot.lane.b32.xlu0 %v4160, 112
        %v4275 = vpop.permute.xlu0 %4274
        %4276 = vrot.lane.b32.xlu0 %v4160, 80
        %v4277 = vpop.permute.xlu0 %4276
        %v4279 = vsel %vm2326, %v4275, 0
        %v4282 = vsel %vm2326, %v4277, 0
        %4284 = vmatpush.bf16.xpose.msra.mxu0 0
        %4285 = vmatpush.bf16.xpose.msra.mxu0 0
        %4286 = vmatpush.bf16.xpose.msra.mxu0 0
        %4287 = vmatpush.bf16.xpose.msra.mxu0 0
        %4288 = vmatpush.bf16.xpose.msra.mxu0 0
        %4289 = vmatpush.bf16.xpose.msra.mxu0 0
        %4290 = vmatpush.bf16.xpose.msra.mxu0 0
        %4291 = vmatpush.bf16.xpose.msra.mxu0 %v4282
        %4292 = vmatmul.bf16.gmra.mxu0 %v4279
        %v4293 = vpop.f32.mrf.mxu0
        %v4294 = vadd.f32 0.0, %v4293
        %v4295 = vpop.f32.mrf.mxu0
        %4296 = vdwg.mxu0
        %v4297 = vmul.f32 %v4294, 0.35355338
        %v4298 = vsel %vm2326, %v4297, -inf
        %4299 = vmax.xlane.f32.xlu0 %v4298
        %v4300 = vpop.xlane.xlu0 %4299
        %v4301 = vsub.f32 %v4297, %v4300
        %v4302 = vmul.f32 %v4301, 1.442695
        %v4303 = vpow.pop %v4302
        %v4304 = vsel %vm2326, %v4303, 0.0
        %4305 = vadd.xlane.f32.xlu0 %v4304
        %v4306 = vpop.xlane.xlu0 %4305
        %v4307 = vrcp.pop %v4306
        %v4308 = vmul.f32 %v4303, %v4307
        %v4309 = vpack.c.bf16 %v4308, %v4308
        %4310 = vrot.lane.b32.xlu0 %v4160, 48
        %v4311 = vpop.permute.xlu0 %4310
        %v4313 = vsel %vm2326, %v4309, 0
        %v4316 = vsel %vm2260, %v4311, 0
        %4318 = vmatpush.bf16.msra.mxu0 0
        %4319 = vmatpush.bf16.msra.mxu0 0
        %4320 = vmatpush.bf16.msra.mxu0 0
        %4321 = vmatpush.bf16.msra.mxu0 0
        %4322 = vmatpush.bf16.msra.mxu0 0
        %4323 = vmatpush.bf16.msra.mxu0 0
        %4324 = vmatpush.bf16.msra.mxu0 0
        %4325 = vmatpush.bf16.msra.mxu0 %v4316
        %4326 = vmatmul.bf16.gmra.mxu0 %v4313
        %v4327 = vpop.f32.mrf.mxu0
        %v4328 = vadd.f32 0.0, %v4327
        %v4329 = vpop.f32.mrf.mxu0
        %4330 = vdwg.mxu0
        %4331 = vrot.lane.b32.xlu0 %v4160, 104
        %v4332 = vpop.permute.xlu0 %4331
        %4333 = vrot.lane.b32.xlu0 %v4160, 72
        %v4334 = vpop.permute.xlu0 %4333
        %v4336 = vsel %vm2326, %v4332, 0
        %v4339 = vsel %vm2326, %v4334, 0
        %4341 = vmatpush.bf16.xpose.msra.mxu0 0
        %4342 = vmatpush.bf16.xpose.msra.mxu0 0
        %4343 = vmatpush.bf16.xpose.msra.mxu0 0
        %4344 = vmatpush.bf16.xpose.msra.mxu0 0
        %4345 = vmatpush.bf16.xpose.msra.mxu0 0
        %4346 = vmatpush.bf16.xpose.msra.mxu0 0
        %4347 = vmatpush.bf16.xpose.msra.mxu0 0
        %4348 = vmatpush.bf16.xpose.msra.mxu0 %v4339
        %4349 = vmatmul.bf16.gmra.mxu0 %v4336
        %v4350 = vpop.f32.mrf.mxu0
        %v4351 = vadd.f32 0.0, %v4350
        %v4352 = vpop.f32.mrf.mxu0
        %4353 = vdwg.mxu0
        %v4354 = vmul.f32 %v4351, 0.35355338
        %v4355 = vsel %vm2326, %v4354, -inf
        %4356 = vmax.xlane.f32.xlu0 %v4355
        %v4357 = vpop.xlane.xlu0 %4356
        %v4358 = vsub.f32 %v4354, %v4357
        %v4359 = vmul.f32 %v4358, 1.442695
        %v4360 = vpow.pop %v4359
        %v4361 = vsel %vm2326, %v4360, 0.0
        %4362 = vadd.xlane.f32.xlu0 %v4361
        %v4363 = vpop.xlane.xlu0 %4362
        %v4364 = vrcp.pop %v4363
        %v4365 = vmul.f32 %v4360, %v4364
        %v4366 = vpack.c.bf16 %v4365, %v4365
        %4367 = vrot.lane.b32.xlu0 %v4160, 40
        %v4368 = vpop.permute.xlu0 %4367
        %v4370 = vsel %vm2326, %v4366, 0
        %v4373 = vsel %vm2260, %v4368, 0
        %4375 = vmatpush.bf16.msra.mxu0 0
        %4376 = vmatpush.bf16.msra.mxu0 0
        %4377 = vmatpush.bf16.msra.mxu0 0
        %4378 = vmatpush.bf16.msra.mxu0 0
        %4379 = vmatpush.bf16.msra.mxu0 0
        %4380 = vmatpush.bf16.msra.mxu0 0
        %4381 = vmatpush.bf16.msra.mxu0 0
        %4382 = vmatpush.bf16.msra.mxu0 %v4373
        %4383 = vmatmul.bf16.gmra.mxu0 %v4370
        %v4384 = vpop.f32.mrf.mxu0
        %v4385 = vadd.f32 0.0, %v4384
        %v4386 = vpop.f32.mrf.mxu0
        %4387 = vdwg.mxu0
        %4389 = vrot.lane.b32.xlu0 %v4271, 8
        %v4390 = vpop.permute.xlu0 %4389
        %4393 = vrot.lane.b32.xlu0 %v4328, 16
        %v4394 = vpop.permute.xlu0 %4393
        %4397 = vrot.lane.b32.xlu0 %v4385, 24
        %v4398 = vpop.permute.xlu0 %4397
        %v4400 = vsel %vm2326, %v4214, %v4390
        %v4401 = vsel %vm2564, %v4400, %v4394
        %v4402 = vsel %vm2566, %v4401, %v4398
        %v4403 = vpack.c.bf16 %v4402, %v4402
        %v4405 = vperm.slane %v4118, 0
        %v4411 = vunpack.c.l.b16 %v4120
        %v4412 = vunpack.c.l.b16 %v4121
        %v4413 = vunpack.c.l.b16 %v4122
        %v4414 = vunpack.c.l.b16 %v4123
        %v4415 = vpack.c.b16 %v4412, %v4411
        %v4416 = vpack.c.b16 %v4414, %v4413
        %v4420 = vsel %vm2189, %v4403, 0
        %4422 = vmatpush.bf16.msra.mxu0 0
        %4423 = vmatpush.bf16.msra.mxu0 0
        %4424 = vmatpush.bf16.msra.mxu0 0
        %4425 = vmatpush.bf16.msra.mxu0 0
        %4426 = vmatpush.bf16.msra.mxu0 0
        %4427 = vmatpush.bf16.msra.mxu0 0
        %4428 = vmatpush.bf16.msra.mxu0 %v4416
        %4429 = vmatpush.bf16.msra.mxu0 %v4415
        %4430 = vmatmul.bf16.gmra.mxu0 %v4420
        %v4431 = vpop.f32.mrf.mxu0
        %v4432 = vadd.f32 %v4405, %v4431
        %v4433 = vpop.f32.mrf.mxu0
        %4434 = vdwg.mxu0
        %v4435 = vadd.f32 %v4082, %v4432
        %v4436 = vsel %vm2189, %v4435, 0.0
        %4437 = vadd.xlane.f32.xlu0 %v4436
        %v4438 = vpop.xlane.xlu0 %4437
        %v4439 = vmul.f32 %v4438, %v2610
        %v4440 = vsub.f32 %v4435, %v4439
        %v4441 = vmul.f32 %v4440, %v4440
        %v4442 = vsel %vm2189, %v4441, 0.0
        %4443 = vadd.xlane.f32.xlu0 %v4442
        %v4444 = vpop.xlane.xlu0 %4443
        %v4445 = vmul.f32 %v4444, %v2610
        %v4446 = vadd.f32 %v4445, 1e-05
        %v4447 = vrsqrt.pop %v4446
        %v4448 = vmul.f32 %v4447, %v4446
        %v4449 = vmul.f32 %v4448, %v4447
        %v4450 = vmul.f32 0.5, %v4449
        %v4451 = vsub.f32 1.5, %v4450
        %v4452 = vmul.f32 %v4447, %v4451
        %vm4453 = vweird.f32 %v4446
        %vm4454 = vweird.f32 %v4447
        %vm4455 = vmor %vm4453, %vm4454
        %v4456 = vsel %vm4455, %v4447, %v4452
        %v4457 = vmul.f32 %v4440, %v4456
        %v4459 = vperm.slane %v4113, 0
        %v4461 = vmul.f32 %v4457, %v4459
        %v4463 = vperm.slane %v4112, 0
        %v4465 = vadd.f32 %v4461, %v4463
        %v4466 = vpack.c.bf16 %v4465, %v4465
        %v4468 = vperm.slane %v4085, 0
        %v4474 = vunpack.c.l.b16 %v4094
        %v4475 = vunpack.c.l.b16 %v4095
        %v4476 = vunpack.c.l.b16 %v4096
        %v4477 = vunpack.c.l.b16 %v4097
        %v4478 = vpack.c.b16 %v4475, %v4474
        %v4479 = vpack.c.b16 %v4477, %v4476
        %v4483 = vsel %vm2189, %v4466, 0
        %4485 = vmatpush.bf16.msra.mxu0 0
        %4486 = vmatpush.bf16.msra.mxu0 0
        %4487 = vmatpush.bf16.msra.mxu0 0
        %4488 = vmatpush.bf16.msra.mxu0 0
        %4489 = vmatpush.bf16.msra.mxu0 0
        %4490 = vmatpush.bf16.msra.mxu0 0
        %4491 = vmatpush.bf16.msra.mxu0 %v4479
        %4492 = vmatpush.bf16.msra.mxu0 %v4478
        %4493 = vmatmul.bf16.gmra.mxu0 %v4483
        %v4494 = vpop.f32.mrf.mxu0
        %v4495 = vadd.f32 %v4468, %v4494
        %v4496 = vpop.f32.mrf.mxu0
        %4497 = vdwg.mxu0
        %v4499 = vperm.slane %v4083, 0
        %v4505 = vunpack.c.l.b16 %v4086
        %v4506 = vunpack.c.l.b16 %v4087
        %v4507 = vunpack.c.l.b16 %v4088
        %v4508 = vunpack.c.l.b16 %v4089
        %v4509 = vpack.c.b16 %v4506, %v4505
        %v4510 = vpack.c.b16 %v4508, %v4507
        %4513 = vmatpush.bf16.msra.mxu0 0
        %4514 = vmatpush.bf16.msra.mxu0 0
        %4515 = vmatpush.bf16.msra.mxu0 0
        %4516 = vmatpush.bf16.msra.mxu0 0
        %4517 = vmatpush.bf16.msra.mxu0 0
        %4518 = vmatpush.bf16.msra.mxu0 0
        %4519 = vmatpush.bf16.msra.mxu0 %v4510
        %4520 = vmatpush.bf16.msra.mxu0 %v4509
        %4521 = vmatmul.bf16.gmra.mxu0 %v3654
        %v4522 = vpop.f32.mrf.mxu0
        %v4523 = vadd.f32 %v4499, %v4522
        %v4524 = vpop.f32.mrf.mxu0
        %4525 = vdwg.mxu0
        %v4526 = vpack.c.bf16 %v4495, %v4495
        %v4527 = vpack.c.bf16 %v4523, %v4523
        %v4529 = vsel %vm2326, %v4526, 0
        %v4532 = vsel %vm2326, %v4527, 0
        %4534 = vmatpush.bf16.xpose.msra.mxu0 0
        %4535 = vmatpush.bf16.xpose.msra.mxu0 0
        %4536 = vmatpush.bf16.xpose.msra.mxu0 0
        %4537 = vmatpush.bf16.xpose.msra.mxu0 0
        %4538 = vmatpush.bf16.xpose.msra.mxu0 0
        %4539 = vmatpush.bf16.xpose.msra.mxu0 0
        %4540 = vmatpush.bf16.xpose.msra.mxu0 0
        %4541 = vmatpush.bf16.xpose.msra.mxu0 %v4532
        %4542 = vmatmul.bf16.gmra.mxu0 %v4529
        %v4543 = vpop.f32.mrf.mxu0
        %v4544 = vadd.f32 0.0, %v4543
        %v4545 = vpop.f32.mrf.mxu0
        %4546 = vdwg.mxu0
        %v4547 = vmul.f32 %v4544, 0.35355338
        %v4548 = vsel %vm2326, %v4547, -inf
        %4549 = vmax.xlane.f32.xlu0 %v4548
        %v4550 = vpop.xlane.xlu0 %4549
        %v4551 = vsub.f32 %v4547, %v4550
        %v4552 = vmul.f32 %v4551, 1.442695
        %v4553 = vpow.pop %v4552
        %v4554 = vsel %vm2326, %v4553, 0.0
        %4555 = vadd.xlane.f32.xlu0 %v4554
        %v4556 = vpop.xlane.xlu0 %4555
        %v4557 = vrcp.pop %v4556
        %v4558 = vmul.f32 %v4553, %v4557
        %v4559 = vpack.c.bf16 %v4558, %v4558
        %4561 = vrot.lane.b32.xlu0 %v4527, 96
        %v4562 = vpop.permute.xlu0 %4561
        %v4564 = vsel %vm2326, %v4559, 0
        %v4567 = vsel %vm2260, %v4562, 0
        %4569 = vmatpush.bf16.msra.mxu0 0
        %4570 = vmatpush.bf16.msra.mxu0 0
        %4571 = vmatpush.bf16.msra.mxu0 0
        %4572 = vmatpush.bf16.msra.mxu0 0
        %4573 = vmatpush.bf16.msra.mxu0 0
        %4574 = vmatpush.bf16.msra.mxu0 0
        %4575 = vmatpush.bf16.msra.mxu0 0
        %4576 = vmatpush.bf16.msra.mxu0 %v4567
        %4577 = vmatmul.bf16.gmra.mxu0 %v4564
        %v4578 = vpop.f32.mrf.mxu0
        %v4579 = vadd.f32 0.0, %v4578
        %v4580 = vpop.f32.mrf.mxu0
        %4581 = vdwg.mxu0
        %4583 = vrot.lane.b32.xlu0 %v4526, 120
        %v4584 = vpop.permute.xlu0 %4583
        %4585 = vrot.lane.b32.xlu0 %v4527, 120
        %v4586 = vpop.permute.xlu0 %4585
        %v4588 = vsel %vm2326, %v4584, 0
        %v4591 = vsel %vm2326, %v4586, 0
        %4593 = vmatpush.bf16.xpose.msra.mxu0 0
        %4594 = vmatpush.bf16.xpose.msra.mxu0 0
        %4595 = vmatpush.bf16.xpose.msra.mxu0 0
        %4596 = vmatpush.bf16.xpose.msra.mxu0 0
        %4597 = vmatpush.bf16.xpose.msra.mxu0 0
        %4598 = vmatpush.bf16.xpose.msra.mxu0 0
        %4599 = vmatpush.bf16.xpose.msra.mxu0 0
        %4600 = vmatpush.bf16.xpose.msra.mxu0 %v4591
        %4601 = vmatmul.bf16.gmra.mxu0 %v4588
        %v4602 = vpop.f32.mrf.mxu0
        %v4603 = vadd.f32 0.0, %v4602
        %v4604 = vpop.f32.mrf.mxu0
        %4605 = vdwg.mxu0
        %v4606 = vmul.f32 %v4603, 0.35355338
        %v4607 = vsel %vm2326, %v4606, -inf
        %4608 = vmax.xlane.f32.xlu0 %v4607
        %v4609 = vpop.xlane.xlu0 %4608
        %v4610 = vsub.f32 %v4606, %v4609
        %v4611 = vmul.f32 %v4610, 1.442695
        %v4612 = vpow.pop %v4611
        %v4613 = vsel %vm2326, %v4612, 0.0
        %4614 = vadd.xlane.f32.xlu0 %v4613
        %v4615 = vpop.xlane.xlu0 %4614
        %v4616 = vrcp.pop %v4615
        %v4617 = vmul.f32 %v4612, %v4616
        %v4618 = vpack.c.bf16 %v4617, %v4617
        %4619 = vrot.lane.b32.xlu0 %v4527, 88
        %v4620 = vpop.permute.xlu0 %4619
        %v4622 = vsel %vm2326, %v4618, 0
        %v4625 = vsel %vm2260, %v4620, 0
        %4627 = vmatpush.bf16.msra.mxu0 0
        %4628 = vmatpush.bf16.msra.mxu0 0
        %4629 = vmatpush.bf16.msra.mxu0 0
        %4630 = vmatpush.bf16.msra.mxu0 0
        %4631 = vmatpush.bf16.msra.mxu0 0
        %4632 = vmatpush.bf16.msra.mxu0 0
        %4633 = vmatpush.bf16.msra.mxu0 0
        %4634 = vmatpush.bf16.msra.mxu0 %v4625
        %4635 = vmatmul.bf16.gmra.mxu0 %v4622
        %v4636 = vpop.f32.mrf.mxu0
        %v4637 = vadd.f32 0.0, %v4636
        %v4638 = vpop.f32.mrf.mxu0
        %4639 = vdwg.mxu0
        %4640 = vrot.lane.b32.xlu0 %v4526, 112
        %v4641 = vpop.permute.xlu0 %4640
        %4642 = vrot.lane.b32.xlu0 %v4527, 112
        %v4643 = vpop.permute.xlu0 %4642
        %v4645 = vsel %vm2326, %v4641, 0
        %v4648 = vsel %vm2326, %v4643, 0
        %4650 = vmatpush.bf16.xpose.msra.mxu0 0
        %4651 = vmatpush.bf16.xpose.msra.mxu0 0
        %4652 = vmatpush.bf16.xpose.msra.mxu0 0
        %4653 = vmatpush.bf16.xpose.msra.mxu0 0
        %4654 = vmatpush.bf16.xpose.msra.mxu0 0
        %4655 = vmatpush.bf16.xpose.msra.mxu0 0
        %4656 = vmatpush.bf16.xpose.msra.mxu0 0
        %4657 = vmatpush.bf16.xpose.msra.mxu0 %v4648
        %4658 = vmatmul.bf16.gmra.mxu0 %v4645
        %v4659 = vpop.f32.mrf.mxu0
        %v4660 = vadd.f32 0.0, %v4659
        %v4661 = vpop.f32.mrf.mxu0
        %4662 = vdwg.mxu0
        %v4663 = vmul.f32 %v4660, 0.35355338
        %v4664 = vsel %vm2326, %v4663, -inf
        %4665 = vmax.xlane.f32.xlu0 %v4664
        %v4666 = vpop.xlane.xlu0 %4665
        %v4667 = vsub.f32 %v4663, %v4666
        %v4668 = vmul.f32 %v4667, 1.442695
        %v4669 = vpow.pop %v4668
        %v4670 = vsel %vm2326, %v4669, 0.0
        %4671 = vadd.xlane.f32.xlu0 %v4670
        %v4672 = vpop.xlane.xlu0 %4671
        %v4673 = vrcp.pop %v4672
        %v4674 = vmul.f32 %v4669, %v4673
        %v4675 = vpack.c.bf16 %v4674, %v4674
        %4676 = vrot.lane.b32.xlu0 %v4527, 80
        %v4677 = vpop.permute.xlu0 %4676
        %v4679 = vsel %vm2326, %v4675, 0
        %v4682 = vsel %vm2260, %v4677, 0
        %4684 = vmatpush.bf16.msra.mxu0 0
        %4685 = vmatpush.bf16.msra.mxu0 0
        %4686 = vmatpush.bf16.msra.mxu0 0
        %4687 = vmatpush.bf16.msra.mxu0 0
        %4688 = vmatpush.bf16.msra.mxu0 0
        %4689 = vmatpush.bf16.msra.mxu0 0
        %4690 = vmatpush.bf16.msra.mxu0 0
        %4691 = vmatpush.bf16.msra.mxu0 %v4682
        %4692 = vmatmul.bf16.gmra.mxu0 %v4679
        %v4693 = vpop.f32.mrf.mxu0
        %v4694 = vadd.f32 0.0, %v4693
        %v4695 = vpop.f32.mrf.mxu0
        %4696 = vdwg.mxu0
        %4697 = vrot.lane.b32.xlu0 %v4526, 104
        %v4698 = vpop.permute.xlu0 %4697
        %4699 = vrot.lane.b32.xlu0 %v4527, 104
        %v4700 = vpop.permute.xlu0 %4699
        %v4702 = vsel %vm2326, %v4698, 0
        %v4705 = vsel %vm2326, %v4700, 0
        %4707 = vmatpush.bf16.xpose.msra.mxu0 0
        %4708 = vmatpush.bf16.xpose.msra.mxu0 0
        %4709 = vmatpush.bf16.xpose.msra.mxu0 0
        %4710 = vmatpush.bf16.xpose.msra.mxu0 0
        %4711 = vmatpush.bf16.xpose.msra.mxu0 0
        %4712 = vmatpush.bf16.xpose.msra.mxu0 0
        %4713 = vmatpush.bf16.xpose.msra.mxu0 0
        %4714 = vmatpush.bf16.xpose.msra.mxu0 %v4705
        %4715 = vmatmul.bf16.gmra.mxu0 %v4702
        %v4716 = vpop.f32.mrf.mxu0
        %v4717 = vadd.f32 0.0, %v4716
        %v4718 = vpop.f32.mrf.mxu0
        %4719 = vdwg.mxu0
        %v4720 = vmul.f32 %v4717, 0.35355338
        %v4721 = vsel %vm2326, %v4720, -inf
        %4722 = vmax.xlane.f32.xlu0 %v4721
        %v4723 = vpop.xlane.xlu0 %4722
        %v4724 = vsub.f32 %v4720, %v4723
        %v4725 = vmul.f32 %v4724, 1.442695
        %v4726 = vpow.pop %v4725
        %v4727 = vsel %vm2326, %v4726, 0.0
        %4728 = vadd.xlane.f32.xlu0 %v4727
        %v4729 = vpop.xlane.xlu0 %4728
        %v4730 = vrcp.pop %v4729
        %v4731 = vmul.f32 %v4726, %v4730
        %v4732 = vpack.c.bf16 %v4731, %v4731
        %4733 = vrot.lane.b32.xlu0 %v4527, 72
        %v4734 = vpop.permute.xlu0 %4733
        %v4736 = vsel %vm2326, %v4732, 0
        %v4739 = vsel %vm2260, %v4734, 0
        %4741 = vmatpush.bf16.msra.mxu0 0
        %4742 = vmatpush.bf16.msra.mxu0 0
        %4743 = vmatpush.bf16.msra.mxu0 0
        %4744 = vmatpush.bf16.msra.mxu0 0
        %4745 = vmatpush.bf16.msra.mxu0 0
        %4746 = vmatpush.bf16.msra.mxu0 0
        %4747 = vmatpush.bf16.msra.mxu0 0
        %4748 = vmatpush.bf16.msra.mxu0 %v4739
        %4749 = vmatmul.bf16.gmra.mxu0 %v4736
        %v4750 = vpop.f32.mrf.mxu0
        %v4751 = vadd.f32 0.0, %v4750
        %v4752 = vpop.f32.mrf.mxu0
        %4753 = vdwg.mxu0
        %4755 = vrot.lane.b32.xlu0 %v4637, 8
        %v4756 = vpop.permute.xlu0 %4755
        %4759 = vrot.lane.b32.xlu0 %v4694, 16
        %v4760 = vpop.permute.xlu0 %4759
        %4763 = vrot.lane.b32.xlu0 %v4751, 24
        %v4764 = vpop.permute.xlu0 %4763
        %v4766 = vsel %vm2326, %v4579, %v4756
        %v4767 = vsel %vm2564, %v4766, %v4760
        %v4768 = vsel %vm2566, %v4767, %v4764
        %v4769 = vpack.c.bf16 %v4768, %v4768
        %v4771 = vperm.slane %v4084, 0
        %v4777 = vunpack.c.l.b16 %v4090
        %v4778 = vunpack.c.l.b16 %v4091
        %v4779 = vunpack.c.l.b16 %v4092
        %v4780 = vunpack.c.l.b16 %v4093
        %v4781 = vpack.c.b16 %v4778, %v4777
        %v4782 = vpack.c.b16 %v4780, %v4779
        %v4786 = vsel %vm2189, %v4769, 0
        %4788 = vmatpush.bf16.msra.mxu0 0
        %4789 = vmatpush.bf16.msra.mxu0 0
        %4790 = vmatpush.bf16.msra.mxu0 0
        %4791 = vmatpush.bf16.msra.mxu0 0
        %4792 = vmatpush.bf16.msra.mxu0 0
        %4793 = vmatpush.bf16.msra.mxu0 0
        %4794 = vmatpush.bf16.msra.mxu0 %v4782
        %4795 = vmatpush.bf16.msra.mxu0 %v4781
        %4796 = vmatmul.bf16.gmra.mxu0 %v4786
        %v4797 = vpop.f32.mrf.mxu0
        %v4798 = vadd.f32 %v4771, %v4797
        %v4799 = vpop.f32.mrf.mxu0
        %4800 = vdwg.mxu0
        %v4801 = vadd.f32 %v4465, %v4798
        %v4802 = vsel %vm2189, %v4801, 0.0
        %4803 = vadd.xlane.f32.xlu0 %v4802
        %v4804 = vpop.xlane.xlu0 %4803
        %v4805 = vmul.f32 %v4804, %v2610
        %v4806 = vsub.f32 %v4801, %v4805
        %v4807 = vmul.f32 %v4806, %v4806
        %v4808 = vsel %vm2189, %v4807, 0.0
        %4809 = vadd.xlane.f32.xlu0 %v4808
        %v4810 = vpop.xlane.xlu0 %4809
        %v4811 = vmul.f32 %v4810, %v2610
        %v4812 = vadd.f32 %v4811, 1e-05
        %v4813 = vrsqrt.pop %v4812
        %v4814 = vmul.f32 %v4813, %v4812
        %v4815 = vmul.f32 %v4814, %v4813
        %v4816 = vmul.f32 0.5, %v4815
        %v4817 = vsub.f32 1.5, %v4816
        %v4818 = vmul.f32 %v4813, %v4817
        %vm4819 = vweird.f32 %v4812
        %vm4820 = vweird.f32 %v4813
        %vm4821 = vmor %vm4819, %vm4820
        %v4822 = vsel %vm4821, %v4813, %v4818
        %v4823 = vmul.f32 %v4806, %v4822
        %v4825 = vperm.slane %v4115, 0
        %v4827 = vmul.f32 %v4823, %v4825
        %v4829 = vperm.slane %v4114, 0
        %v4831 = vadd.f32 %v4827, %v4829
        %v4832 = vpack.c.bf16 %v4831, %v4831
        %v4834 = vperm.slane %v4098, 0
        %v4840 = vunpack.c.l.b16 %v4099
        %v4841 = vunpack.c.l.b16 %v4100
        %v4842 = vunpack.c.l.b16 %v4101
        %v4843 = vunpack.c.l.b16 %v4102
        %v4844 = vpack.c.b16 %v4841, %v4840
        %v4845 = vpack.c.b16 %v4843, %v4842
        %v4849 = vsel %vm2189, %v4832, 0
        %4851 = vmatpush.bf16.msra.mxu0 0
        %4852 = vmatpush.bf16.msra.mxu0 0
        %4853 = vmatpush.bf16.msra.mxu0 0
        %4854 = vmatpush.bf16.msra.mxu0 0
        %4855 = vmatpush.bf16.msra.mxu0 0
        %4856 = vmatpush.bf16.msra.mxu0 0
        %4857 = vmatpush.bf16.msra.mxu0 %v4845
        %4858 = vmatpush.bf16.msra.mxu0 %v4844
        %4859 = vmatmul.bf16.gmra.mxu0 %v4849
        %v4860 = vpop.f32.mrf.mxu0
        %v4861 = vadd.f32 %v4834, %v4860
        %v4862 = vpop.f32.mrf.mxu0
        %4863 = vdwg.mxu0
        %v4864 = vmax.f32 %v4861, 0.0
        %v4865 = vpack.c.bf16 %v4864, %v4864
        %v4867 = vperm.slane %v4103, 0
        %v4877 = vunpack.c.l.b16 %v4104
        %v4878 = vunpack.c.l.b16 %v4105
        %v4879 = vunpack.c.l.b16 %v4106
        %v4880 = vunpack.c.l.b16 %v4107
        %v4881 = vunpack.c.l.b16 %v4108
        %v4882 = vunpack.c.l.b16 %v4109
        %v4883 = vunpack.c.l.b16 %v4110
        %v4884 = vunpack.c.l.b16 %v4111
        %v4885 = vpack.c.b16 %v4878, %v4877
        %v4886 = vpack.c.b16 %v4880, %v4879
        %v4887 = vpack.c.b16 %v4882, %v4881
        %v4888 = vpack.c.b16 %v4884, %v4883
        %v4894 = vsel %vm2241, %v4865, 0
        %4896 = vmatpush.bf16.msra.mxu0 0
        %4897 = vmatpush.bf16.msra.mxu0 0
        %4898 = vmatpush.bf16.msra.mxu0 0
        %4899 = vmatpush.bf16.msra.mxu0 0
        %4900 = vmatpush.bf16.msra.mxu0 %v4888
        %4901 = vmatpush.bf16.msra.mxu0 %v4887
        %4902 = vmatpush.bf16.msra.mxu0 %v4886
        %4903 = vmatpush.bf16.msra.mxu0 %v4885
        %4904 = vmatmul.bf16.gmra.mxu0 %v4894
        %v4905 = vpop.f32.mrf.mxu0
        %v4906 = vadd.f32 %v4867, %v4905
        %v4907 = vpop.f32.mrf.mxu0
        %4908 = vdwg.mxu0
        %v4909 = vadd.f32 %v4831, %v4906
        %v4910 = vsel %vm2189, %v4909, 0.0
        %4911 = vadd.xlane.f32.xlu0 %v4910
        %v4912 = vpop.xlane.xlu0 %4911
        %v4913 = vmul.f32 %v4912, %v2610
        %v4914 = vsub.f32 %v4909, %v4913
        %v4915 = vmul.f32 %v4914, %v4914
        %v4916 = vsel %vm2189, %v4915, 0.0
        %4917 = vadd.xlane.f32.xlu0 %v4916
        %v4918 = vpop.xlane.xlu0 %4917
        %v4919 = vmul.f32 %v4918, %v2610
        %v4920 = vadd.f32 %v4919, 1e-05
        %v4921 = vrsqrt.pop %v4920
        %v4922 = vmul.f32 %v4921, %v4920
        %v4923 = vmul.f32 %v4922, %v4921
        %v4924 = vmul.f32 0.5, %v4923
        %v4925 = vsub.f32 1.5, %v4924
        %v4926 = vmul.f32 %v4921, %v4925
        %vm4927 = vweird.f32 %v4920
        %vm4928 = vweird.f32 %v4921
        %vm4929 = vmor %vm4927, %vm4928
        %v4930 = vsel %vm4929, %v4921, %v4926
        %v4931 = vmul.f32 %v4914, %v4930
        %v4933 = vperm.slane %v4117, 0
        %v4935 = vmul.f32 %v4931, %v4933
        %v4937 = vperm.slane %v4116, 0
        %v4939 = vadd.f32 %v4935, %v4937
        %v4940 = vld [vmem:[%s137] sm:$0xf]
        %v4941 = vld [vmem:[%s137 + $0x4] sm:$0xf]
        %v4942 = vld [vmem:[%s137 + $0x8] sm:$0xf]
        %v4943 = vld [vmem:[%s137 + $0xc] sm:$0xf]
        %v4944 = vpack.c.bf16 %v4939, %v4939
        %v4945 = vld [vmem:[#allocation8] sm:$0x1]
        %v4947 = vperm.slane %v4945, 0
        %v4953 = vunpack.c.l.b16 %v4940
        %v4954 = vunpack.c.l.b16 %v4941
        %v4955 = vunpack.c.l.b16 %v4942
        %v4956 = vunpack.c.l.b16 %v4943
        %v4957 = vpack.c.b16 %v4954, %v4953
        %v4958 = vpack.c.b16 %v4956, %v4955
        %v4962 = vsel %vm2189, %v4944, 0
        %4964 = vmatpush.bf16.msra.mxu0 0
        %4965 = vmatpush.bf16.msra.mxu0 0
        %4966 = vmatpush.bf16.msra.mxu0 0
        %4967 = vmatpush.bf16.msra.mxu0 0
        %4968 = vmatpush.bf16.msra.mxu0 0
        %4969 = vmatpush.bf16.msra.mxu0 0
        %4970 = vmatpush.bf16.msra.mxu0 %v4958
        %4971 = vmatpush.bf16.msra.mxu0 %v4957
        %4972 = vmatmul.bf16.gmra.mxu0 %v4962
        %v4973 = vpop.f32.mrf.mxu0
        %v4974 = vadd.f32 %v4947, %v4973
        %v4975 = vpop.f32.mrf.mxu0
        %4976 = vdwg.mxu0
        %4977 = vst.msk [vmem:[%s2168] sm:$0xff] %vm2189, %v4974
        %s4978 = sand.u32 %s1674, 1
        %s4979 = scalar_lea.sflag [#allocation4], %s4978
        %s4980 = sand.u32 %s1674, 1
        %s4981 = smul.addr %s4980, 8
        %s4982 = scalar_lea.vmem [#allocation11], %s4981
        // Predicated region
        $region325: #{forward.1} parent=303 // pred_check
          %p4983 = pneg %p1684
        $region326: #{forward.1} parent=303 // pred_check_branch
          %4985 = sbr.rel (%p4983) target = $region328
        $region327: #{forward.1} parent=303 // pred_region
          %4987 = vsyncadd %s4979, 0
          %s4988 = smul.addr %s160, 8
          %s4989 = scalar_lea.hbm %s143, %s4988
          %s4991 = sshll.u32 %s4982, 4
          %s4992 = int_to_ptr.vmem [resolvable:$true] %s4991
          %s4993 = sshll.u32 %s4989, 4
          %s4994 = int_to_ptr.hbm [resolvable:$true] %s4993
          %4996 = dma.vmem_to_hbm [thread:$0]  %s4992, 128, %s4994, %s4979
        $region328: #{forward.1} parent=303 // pred_fallthru
          _
      $region304: #{forward.1} parent=5 // pred_fallthru
        _
      %p4997 = scmp.le.s32.totalorder 2, %s155
      // Predicated region
      $region329: #{forward.1} parent=5 // pred_check
        %p4998 = pneg %p4997
      $region330: #{forward.1} parent=5 // pred_check_branch
        %5000 = sbr.rel (%p4998) target = $region332
      $region331: #{forward.1} parent=5 // pred_region
        %s5001 = ssub.s32 %s155, 2
        // Predicated region
        $region333: #{forward.1} parent=331 // pred_check
          %p5002 = pneg %p1690
        $region334: #{forward.1} parent=331 // pred_check_branch
          %5004 = sbr.rel (%p5002) target = $region336
        $region335: #{forward.1} parent=331 // pred_region
          %s5005 = sand.u32 %s1675, 1
          %s5006 = scalar_lea.sflag [#allocation4], %s5005
          %s5007 = sand.u32 %s1675, 1
          %s5008 = smul.addr %s5007, 8
          %s5009 = scalar_lea.vmem [#allocation11], %s5008
          %5011 = dma.done %s5006, 128
        $region336: #{forward.1} parent=331 // pred_fallthru
          _
      $region332: #{forward.1} parent=5 // pred_fallthru
        _
    $region6: #{forward.1} parent=1 // loop_footer
      %s159 = sadd.s32 1, %s155
    $region7: #{forward.1} parent=1 // loop_footer_branch
      %154 = sbr.rel target = $region3
    $region8: #{forward.1} parent=1 // loop_exit
      _
    %5012 = vsyncpa [#allocation3], 1
    %s5013 = scalar_lea.sflag [#allocation3], 1
    %5014 = vsyncpa %s5013, 1
    %5015 = vsyncpa [#allocation6], 1
    %5016 = vsyncpa [#allocation9], 1
    %5017 = vsyncpa [#allocation4], 1
    %s5018 = scalar_lea.sflag [#allocation4], 1
    %5019 = vsyncpa %s5018, 1

</llo_original>
